<compile_context>
chip_gen: v5e
topology: v5e:2x2
jax: 0.10.0
libtpu: 0.0.40
codegen_flags: <defaults>
</compile_context>

<pallas_src>
import functools

import jax
import jax.numpy as jnp
from jax.experimental import pallas as pl
from jax.experimental.pallas import tpu as pltpu


def _fcos_head_kernel(x_ref, w_trunk_ref, b_trunk_ref, gamma_ref, beta_ref,
                      gmat_ref, w_head_ref, b_head_ref, o_ref, xpad_ref, *,
                      H, W, C, num_convs, groups, eps=1e-5):
    """One image per grid step.

    x_ref:       (1, H, W, C)      bf16 NHWC input feature map
    w_trunk_ref: (L, 9C, C)        bf16 flattened trunk conv weights
    b_trunk_ref: (L, 1, C)         f32 trunk conv biases
    gamma_ref:   (L, 1, C)         f32 GroupNorm scales
    beta_ref:    (L, 1, C)         f32 GroupNorm shifts
    gmat_ref:    (C, C)            f32 group-aggregation matrix (same-group = 1)
    w_head_ref:  (9C, 8)           bf16 merged head weights (bbox:0..3, ctr:4)
    b_head_ref:  (1, 8)            f32 merged head bias
    o_ref:       (1, H, W, 8)      f32 merged head output
    xpad_ref:    (H+2, W+2, C)     f32 VMEM scratch: padded activation buffer
    """
    # Zero the padded activation buffer once (1-px halo stays zero for every
    # layer) and copy this image's feature map into the interior.
    xpad_ref[...] = jnp.zeros((H + 2, W + 2, C), jnp.float32)
    xpad_ref[1:H + 1, 1:W + 1, :] = x_ref[0].astype(jnp.float32)

    def im2col():
        # (H*W, 9*C) patch matrix: 9 shifted views of the padded activation,
        # concatenated along channels, cast once to bf16 for the MXU.
        cols = []
        for dy in range(3):
            for dx in range(3):
                cols.append(xpad_ref[dy:dy + H, dx:dx + W, :].reshape(H * W, C))
        return jnp.concatenate(cols, axis=1).astype(jnp.bfloat16)

    gmat = gmat_ref[...]                              # (C, C)
    cs = C // groups
    inv_count = 1.0 / float(H * W * cs)               # compile-time constant

    for layer in range(num_convs):                    # static unroll (3 layers)
        patches = im2col()                                            # (HW, 9C) bf16
        acc = jnp.dot(patches, w_trunk_ref[layer],
                      preferred_element_type=jnp.float32)             # (HW, C) f32
        acc = acc + b_trunk_ref[layer]                                # (1, C) bcast

        # GroupNorm(groups, C): per-channel sums -> per-group stats via gmat.
        s1 = jnp.sum(acc, axis=0, keepdims=True)                      # (1, C)
        s2 = jnp.sum(acc * acc, axis=0, keepdims=True)                # (1, C)
        gs1 = jnp.dot(s1, gmat, preferred_element_type=jnp.float32)
        gs2 = jnp.dot(s2, gmat, preferred_element_type=jnp.float32)
        mean = gs1 * inv_count
        var = jnp.maximum(gs2 * inv_count - mean * mean, 0.0)         # cancellation guard
        inv = jax.lax.rsqrt(var + eps)
        acc = (acc - mean) * inv * gamma_ref[layer] + beta_ref[layer]
        acc = jnp.maximum(acc, 0.0)                                   # ReLU

        # Write back into the interior of the padded scratch for the next conv.
        xpad_ref[1:H + 1, 1:W + 1, :] = acc.reshape(H, W, C)

    # Merged heads: single conv C -> 8 (0..3 bbox w/ ReLU, 4 ctrness, 5..7 zero).
    patches = im2col()
    head = jnp.dot(patches, w_head_ref[...],
                   preferred_element_type=jnp.float32)                # (HW, 8)
    head = head + b_head_ref[...]
    col = jax.lax.broadcasted_iota(jnp.int32, head.shape, 1)
    head = jnp.where(col < 4, jnp.maximum(head, 0.0), head)           # ReLU bbox only
    o_ref[0] = head.reshape(H, W, 8)


def _run_level(x_nhwc, w_trunk, b_trunk, gamma, beta, gmat, w_head, b_head,
               *, num_convs, groups):
    """Fused FCOS regression head for one pyramid level (NHWC in, (N,H,W,8) out)."""
    N, H, W, C = x_nhwc.shape
    L = num_convs
    kernel = functools.partial(_fcos_head_kernel, H=H, W=W, C=C,
                               num_convs=L, groups=groups)
    return pl.pallas_call(
        kernel,
        out_shape=jax.ShapeDtypeStruct((N, H, W, 8), jnp.float32),
        grid=(N,),
        in_specs=[
            pl.BlockSpec((1, H, W, C), lambda n: (n, 0, 0, 0)),      # x
            pl.BlockSpec((L, 9 * C, C), lambda n: (0, 0, 0)),        # trunk weights
            pl.BlockSpec((L, 1, C), lambda n: (0, 0, 0)),            # trunk bias
            pl.BlockSpec((L, 1, C), lambda n: (0, 0, 0)),            # GN gamma
            pl.BlockSpec((L, 1, C), lambda n: (0, 0, 0)),            # GN beta
            pl.BlockSpec((C, C), lambda n: (0, 0)),                  # gmat
            pl.BlockSpec((9 * C, 8), lambda n: (0, 0)),              # head weights
            pl.BlockSpec((1, 8), lambda n: (0, 0)),                  # head bias
        ],
        out_specs=pl.BlockSpec((1, H, W, 8), lambda n: (n, 0, 0, 0)),
        scratch_shapes=[pltpu.VMEM((H + 2, W + 2, C), jnp.float32)],
        compiler_params=pltpu.CompilerParams(
            dimension_semantics=("parallel",)),
    )(x_nhwc, w_trunk, b_trunk, gamma, beta, gmat, w_head, b_head)


class FCOSRegressionHeadPallas:
    """Deterministic in-script parameters matching the PyTorch module's init:
    conv weights ~ N(0, 0.01^2), conv biases = 0, GroupNorm affine = identity."""

    def __init__(self, in_channels, num_convs=3, *, groups=16, key):
        assert in_channels % groups == 0, "GroupNorm(16, C) requires C % 16 == 0"
        C = in_channels
        self.in_channels = C
        self.num_convs = num_convs
        self.groups = groups
        keys = jax.random.split(key, num_convs + 2)

        # Trunk conv weights: HWIO (3,3,C,C) flattened to (9C, C) so each conv is
        # a single im2col matmul; pre-cast to bf16 for the MXU.
        w_trunk = [
            (0.01 * jax.random.normal(keys[i], (3, 3, C, C), jnp.float32)
             ).reshape(9 * C, C)
            for i in range(num_convs)
        ]
        self.w_trunk = jnp.stack(w_trunk).astype(jnp.bfloat16)        # (L, 9C, C)
        self.b_trunk = jnp.zeros((num_convs, 1, C), jnp.float32)
        self.gamma = jnp.ones((num_convs, 1, C), jnp.float32)         # GN weight
        self.beta = jnp.zeros((num_convs, 1, C), jnp.float32)         # GN bias

        # Merged head weights: cols 0..3 bbox_reg (C->4), col 4 ctrness (C->1),
        # cols 5..7 zero padding (keeps one fused conv + one fused output write).
        w_reg = (0.01 * jax.random.normal(keys[num_convs], (3, 3, C, 4),
                                          jnp.float32)).reshape(9 * C, 4)
        w_ctr = (0.01 * jax.random.normal(keys[num_convs + 1], (3, 3, C, 1),
                                          jnp.float32)).reshape(9 * C, 1)
        self.w_head = jnp.concatenate(
            [w_reg, w_ctr, jnp.zeros((9 * C, 3), jnp.float32)],
            axis=1).astype(jnp.bfloat16)                              # (9C, 8)
        self.b_head = jnp.zeros((1, 8), jnp.float32)

        # GroupNorm group-aggregation matrix (hoisted out of the kernel):
        # gmat[i, j] = 1 iff channels i and j are in the same group.
        cs = C // groups
        ch = jnp.arange(C)
        self.gmat = (ch[:, None] // cs == ch[None, :] // cs).astype(jnp.float32)

    def __call__(self, features_nchw):
        """features_nchw: list of (N, C, H, W) arrays (pyramid levels).
        Returns (bbox_outputs, ctr_outputs): lists of (N, H, W, 4) / (N, H, W, 1),
        i.e. already in PyTorch's post-.permute(0, 2, 3, 1) layout."""
        bbox_outputs, ctr_outputs = [], []
        for feat in features_nchw:
            # NCHW -> NHWC once; bf16 halves the HBM->VMEM DMA bytes.
            x = jnp.transpose(feat, (0, 2, 3, 1)).astype(jnp.bfloat16)
            out8 = _run_level(x, self.w_trunk, self.b_trunk, self.gamma,
                              self.beta, self.gmat, self.w_head, self.b_head,
                              num_convs=self.num_convs, groups=self.groups)
            bbox_outputs.append(out8[..., :4])
            ctr_outputs.append(out8[..., 4:5])
        return bbox_outputs, ctr_outputs


if __name__ == "__main__":
    key = jax.random.PRNGKey(0)
    k_param, k_x0, k_x1 = jax.random.split(key, 3)

    in_channels = 32  # must be divisible by 16 for GroupNorm(16, C)
    head = FCOSRegressionHeadPallas(in_channels, num_convs=3, key=k_param)

    # Small FPN-like input: two pyramid levels, NCHW as in PyTorch.
    x0 = jax.random.normal(k_x0, (2, in_channels, 16, 16), jnp.float32)
    x1 = jax.random.normal(k_x1, (2, in_channels, 8, 8), jnp.float32)

    bbox_outputs, ctr_outputs = head([x0, x1])
    for t in bbox_outputs + ctr_outputs:
        jax.block_until_ready(t)

    assert bbox_outputs[0].shape == (2, 16, 16, 4)
    assert bbox_outputs[1].shape == (2, 8, 8, 4)
    assert ctr_outputs[0].shape == (2, 16, 16, 1)
    assert ctr_outputs[1].shape == (2, 8, 8, 1)
    assert all(bool(jnp.isfinite(t).all()) for t in bbox_outputs + ctr_outputs)

    print("KERNEL_OK")
</pallas_src>

<mosaic_0001>
module attributes {stable_mosaic.version = 11 : i64} {
  func.func @_fcos_head_kernel(%arg0: i32, %arg1: memref<1x16x16x32xbf16, #tpu.memory_space<vmem>>, %arg2: memref<3x288x32xbf16, #tpu.memory_space<vmem>>, %arg3: memref<3x1x32xf32, #tpu.memory_space<vmem>>, %arg4: memref<3x1x32xf32, #tpu.memory_space<vmem>>, %arg5: memref<3x1x32xf32, #tpu.memory_space<vmem>>, %arg6: memref<32x32xf32, #tpu.memory_space<vmem>>, %arg7: memref<288x8xbf16, #tpu.memory_space<vmem>>, %arg8: memref<1x8xf32, #tpu.memory_space<vmem>>, %arg9: memref<1x16x16x8xf32, #tpu.memory_space<vmem>>, %arg10: memref<18x18x32xf32, #tpu.memory_space<vmem>>) attributes {dimension_semantics = [#tpu.dimension_semantics<parallel>], iteration_bounds = array<i64: 2>, scalar_prefetch = 0 : i64, scratch_operands = 1 : i64, tpu.core_type = #tpu.core_type<tc>, window_params = [{transform_indices = @transform_0, window_bounds = array<i64: 1, 16, 16, 32>}, {pipeline_mode = #tpu.pipeline_mode<synchronous>, transform_indices = @transform_1, window_bounds = array<i64: 3, 288, 32>}, {pipeline_mode = #tpu.pipeline_mode<synchronous>, transform_indices = @transform_2, window_bounds = array<i64: 3, 1, 32>}, {pipeline_mode = #tpu.pipeline_mode<synchronous>, transform_indices = @transform_3, window_bounds = array<i64: 3, 1, 32>}, {pipeline_mode = #tpu.pipeline_mode<synchronous>, transform_indices = @transform_4, window_bounds = array<i64: 3, 1, 32>}, {pipeline_mode = #tpu.pipeline_mode<synchronous>, transform_indices = @transform_5, window_bounds = array<i64: 32, 32>}, {pipeline_mode = #tpu.pipeline_mode<synchronous>, transform_indices = @transform_6, window_bounds = array<i64: 288, 8>}, {pipeline_mode = #tpu.pipeline_mode<synchronous>, transform_indices = @transform_7, window_bounds = array<i64: 1, 8>}, {transform_indices = @transform_8, window_bounds = array<i64: 1, 16, 16, 8>}]} {
    %cst = arith.constant 0.000000e+00 : f32
    %0 = vector.broadcast %cst : f32 to vector<18x18x32xf32>
    %c0 = arith.constant 0 : index
    %c0_0 = arith.constant 0 : index
    %c0_1 = arith.constant 0 : index
    %1 = vector.load %arg10[%c0, %c0_0, %c0_1] : memref<18x18x32xf32, #tpu.memory_space<vmem>>, vector<18x18x32xf32>
    tpu.vector_store %arg10[%c0, %c0_0, %c0_1], %0 {strides = array<i32>} : memref<18x18x32xf32, #tpu.memory_space<vmem>>, vector<18x18x32xf32>,
    %c0_2 = arith.constant 0 : index
    %c0_3 = arith.constant 0 : index
    %c0_4 = arith.constant 0 : index
    %c0_5 = arith.constant 0 : index
    %2 = vector.load %arg1[%c0_2, %c0_3, %c0_4, %c0_5] : memref<1x16x16x32xbf16, #tpu.memory_space<vmem>>, vector<1x16x16x32xbf16>
    %3 = vector.shape_cast %2 : vector<1x16x16x32xbf16> to vector<16x16x32xbf16>
    %4 = arith.extf %3 : vector<16x16x32xbf16> to vector<16x16x32xf32>
    %c1 = arith.constant 1 : index
    %c1_6 = arith.constant 1 : index
    %c0_7 = arith.constant 0 : index
    %5 = vector.load %arg10[%c1, %c1_6, %c0_7] : memref<18x18x32xf32, #tpu.memory_space<vmem>>, vector<16x16x32xf32>
    tpu.vector_store %arg10[%c1, %c1_6, %c0_7], %4 {strides = array<i32>} : memref<18x18x32xf32, #tpu.memory_space<vmem>>, vector<16x16x32xf32>,
    %c0_8 = arith.constant 0 : index
    %c0_9 = arith.constant 0 : index
    %6 = vector.load %arg6[%c0_8, %c0_9] : memref<32x32xf32, #tpu.memory_space<vmem>>, vector<32x32xf32>
    %c0_10 = arith.constant 0 : index
    %c0_11 = arith.constant 0 : index
    %c0_12 = arith.constant 0 : index
    %7 = vector.load %arg10[%c0_10, %c0_11, %c0_12] : memref<18x18x32xf32, #tpu.memory_space<vmem>>, vector<16x16x32xf32>
    %8 = vector.shape_cast %7 : vector<16x16x32xf32> to vector<256x32xf32>
    %c0_13 = arith.constant 0 : index
    %c1_14 = arith.constant 1 : index
    %c0_15 = arith.constant 0 : index
    %9 = vector.load %arg10[%c0_13, %c1_14, %c0_15] : memref<18x18x32xf32, #tpu.memory_space<vmem>>, vector<16x16x32xf32>
    %10 = vector.shape_cast %9 : vector<16x16x32xf32> to vector<256x32xf32>
    %c0_16 = arith.constant 0 : index
    %c2 = arith.constant 2 : index
    %c0_17 = arith.constant 0 : index
    %11 = vector.load %arg10[%c0_16, %c2, %c0_17] : memref<18x18x32xf32, #tpu.memory_space<vmem>>, vector<16x16x32xf32>
    %12 = vector.shape_cast %11 : vector<16x16x32xf32> to vector<256x32xf32>
    %c1_18 = arith.constant 1 : index
    %c0_19 = arith.constant 0 : index
    %c0_20 = arith.constant 0 : index
    %13 = vector.load %arg10[%c1_18, %c0_19, %c0_20] : memref<18x18x32xf32, #tpu.memory_space<vmem>>, vector<16x16x32xf32>
    %14 = vector.shape_cast %13 : vector<16x16x32xf32> to vector<256x32xf32>
    %c1_21 = arith.constant 1 : index
    %c1_22 = arith.constant 1 : index
    %c0_23 = arith.constant 0 : index
    %15 = vector.load %arg10[%c1_21, %c1_22, %c0_23] : memref<18x18x32xf32, #tpu.memory_space<vmem>>, vector<16x16x32xf32>
    %16 = vector.shape_cast %15 : vector<16x16x32xf32> to vector<256x32xf32>
    %c1_24 = arith.constant 1 : index
    %c2_25 = arith.constant 2 : index
    %c0_26 = arith.constant 0 : index
    %17 = vector.load %arg10[%c1_24, %c2_25, %c0_26] : memref<18x18x32xf32, #tpu.memory_space<vmem>>, vector<16x16x32xf32>
    %18 = vector.shape_cast %17 : vector<16x16x32xf32> to vector<256x32xf32>
    %c2_27 = arith.constant 2 : index
    %c0_28 = arith.constant 0 : index
    %c0_29 = arith.constant 0 : index
    %19 = vector.load %arg10[%c2_27, %c0_28, %c0_29] : memref<18x18x32xf32, #tpu.memory_space<vmem>>, vector<16x16x32xf32>
    %20 = vector.shape_cast %19 : vector<16x16x32xf32> to vector<256x32xf32>
    %c2_30 = arith.constant 2 : index
    %c1_31 = arith.constant 1 : index
    %c0_32 = arith.constant 0 : index
    %21 = vector.load %arg10[%c2_30, %c1_31, %c0_32] : memref<18x18x32xf32, #tpu.memory_space<vmem>>, vector<16x16x32xf32>
    %22 = vector.shape_cast %21 : vector<16x16x32xf32> to vector<256x32xf32>
    %c2_33 = arith.constant 2 : index
    %c2_34 = arith.constant 2 : index
    %c0_35 = arith.constant 0 : index
    %23 = vector.load %arg10[%c2_33, %c2_34, %c0_35] : memref<18x18x32xf32, #tpu.memory_space<vmem>>, vector<16x16x32xf32>
    %24 = vector.shape_cast %23 : vector<16x16x32xf32> to vector<256x32xf32>
    %25 = tpu.concatenate %8, %10, %12, %14, %16, %18, %20, %22, %24 in 1 : vector<256x32xf32>, vector<256x32xf32>, vector<256x32xf32>, vector<256x32xf32>, vector<256x32xf32>, vector<256x32xf32>, vector<256x32xf32>, vector<256x32xf32>, vector<256x32xf32> -> vector<256x288xf32>
    %26 = arith.truncf %25 : vector<256x288xf32> to vector<256x288xbf16>
    %c0_36 = arith.constant 0 : index
    %c0_37 = arith.constant 0 : index
    %c0_38 = arith.constant 0 : index
    %27 = vector.load %arg2[%c0_36, %c0_37, %c0_38] : memref<3x288x32xbf16, #tpu.memory_space<vmem>>, vector<1x288x32xbf16>
    %28 = vector.shape_cast %27 : vector<1x288x32xbf16> to vector<288x32xbf16>
    %cst_39 = arith.constant dense<0.000000e+00> : vector<256x32xf32>
    %29 = tpu.matmul %26, %28, %cst_39 {dimension_numbers = #tpu.dot_dimension_numbers<[1], [0], [0], [1], [0, 0, 1, 1], [], []>} : vector<256x288xbf16>, vector<288x32xbf16>, vector<256x32xf32> -> vector<256x32xf32>
    %c0_40 = arith.constant 0 : index
    %c0_41 = arith.constant 0 : index
    %c0_42 = arith.constant 0 : index
    %30 = vector.load %arg3[%c0_40, %c0_41, %c0_42] : memref<3x1x32xf32, #tpu.memory_space<vmem>>, vector<1x1x32xf32>
    %31 = vector.shape_cast %30 : vector<1x1x32xf32> to vector<1x32xf32>
    %32 = vector.broadcast %31 : vector<1x32xf32> to vector<256x32xf32>
    %33 = arith.addf %29, %32 : vector<256x32xf32>
    %cst_43 = arith.constant dense<0.000000e+00> : vector<32xf32>
    %34 = vector.multi_reduction <add>, %33, %cst_43 [0] : vector<256x32xf32> to vector<32xf32>
    %35 = vector.shape_cast %34 : vector<32xf32> to vector<1x32xf32>
    %36 = arith.mulf %33, %33 : vector<256x32xf32>
    %cst_44 = arith.constant dense<0.000000e+00> : vector<32xf32>
    %37 = vector.multi_reduction <add>, %36, %cst_44 [0] : vector<256x32xf32> to vector<32xf32>
    %38 = vector.shape_cast %37 : vector<32xf32> to vector<1x32xf32>
    %cst_45 = arith.constant dense<0.000000e+00> : vector<1x32xf32>
    %39 = tpu.matmul %35, %6, %cst_45 {dimension_numbers = #tpu.dot_dimension_numbers<[1], [0], [0], [1], [0, 0, 1, 1], [], []>} : vector<1x32xf32>, vector<32x32xf32>, vector<1x32xf32> -> vector<1x32xf32>
    %cst_46 = arith.constant dense<0.000000e+00> : vector<1x32xf32>
    %40 = tpu.matmul %38, %6, %cst_46 {dimension_numbers = #tpu.dot_dimension_numbers<[1], [0], [0], [1], [0, 0, 1, 1], [], []>} : vector<1x32xf32>, vector<32x32xf32>, vector<1x32xf32> -> vector<1x32xf32>
    %cst_47 = arith.constant 0.001953125 : f32
    %41 = vector.broadcast %cst_47 : f32 to vector<1x32xf32>
    %42 = arith.mulf %39, %41 : vector<1x32xf32>
    %cst_48 = arith.constant 0.001953125 : f32
    %43 = vector.broadcast %cst_48 : f32 to vector<1x32xf32>
    %44 = arith.mulf %40, %43 : vector<1x32xf32>
    %45 = arith.mulf %42, %42 : vector<1x32xf32>
    %46 = arith.subf %44, %45 : vector<1x32xf32>
    %cst_49 = arith.constant 0.000000e+00 : f32
    %47 = vector.broadcast %cst_49 : f32 to vector<1x32xf32>
    %48 = arith.maximumf %46, %47 : vector<1x32xf32>
    %cst_50 = arith.constant 9.99999974E-6 : f32
    %49 = vector.broadcast %cst_50 : f32 to vector<1x32xf32>
    %50 = arith.addf %48, %49 : vector<1x32xf32>
    %51 = math.rsqrt %50 : vector<1x32xf32>
    %52 = vector.broadcast %42 : vector<1x32xf32> to vector<256x32xf32>
    %53 = arith.subf %33, %52 : vector<256x32xf32>
    %54 = vector.broadcast %51 : vector<1x32xf32> to vector<256x32xf32>
    %55 = arith.mulf %53, %54 : vector<256x32xf32>
    %c0_51 = arith.constant 0 : index
    %c0_52 = arith.constant 0 : index
    %c0_53 = arith.constant 0 : index
    %56 = vector.load %arg4[%c0_51, %c0_52, %c0_53] : memref<3x1x32xf32, #tpu.memory_space<vmem>>, vector<1x1x32xf32>
    %57 = vector.shape_cast %56 : vector<1x1x32xf32> to vector<1x32xf32>
    %58 = vector.broadcast %57 : vector<1x32xf32> to vector<256x32xf32>
    %59 = arith.mulf %55, %58 : vector<256x32xf32>
    %c0_54 = arith.constant 0 : index
    %c0_55 = arith.constant 0 : index
    %c0_56 = arith.constant 0 : index
    %60 = vector.load %arg5[%c0_54, %c0_55, %c0_56] : memref<3x1x32xf32, #tpu.memory_space<vmem>>, vector<1x1x32xf32>
    %61 = vector.shape_cast %60 : vector<1x1x32xf32> to vector<1x32xf32>
    %62 = vector.broadcast %61 : vector<1x32xf32> to vector<256x32xf32>
    %63 = arith.addf %59, %62 : vector<256x32xf32>
    %cst_57 = arith.constant 0.000000e+00 : f32
    %64 = vector.broadcast %cst_57 : f32 to vector<256x32xf32>
    %65 = arith.maximumf %63, %64 : vector<256x32xf32>
    %66 = vector.shape_cast %65 : vector<256x32xf32> to vector<16x16x32xf32>
    %c1_58 = arith.constant 1 : index
    %c1_59 = arith.constant 1 : index
    %c0_60 = arith.constant 0 : index
    %67 = vector.load %arg10[%c1_58, %c1_59, %c0_60] : memref<18x18x32xf32, #tpu.memory_space<vmem>>, vector<16x16x32xf32>
    tpu.vector_store %arg10[%c1_58, %c1_59, %c0_60], %66 {strides = array<i32>} : memref<18x18x32xf32, #tpu.memory_space<vmem>>, vector<16x16x32xf32>,
    %c0_61 = arith.constant 0 : index
    %c0_62 = arith.constant 0 : index
    %c0_63 = arith.constant 0 : index
    %68 = vector.load %arg10[%c0_61, %c0_62, %c0_63] : memref<18x18x32xf32, #tpu.memory_space<vmem>>, vector<16x16x32xf32>
    %69 = vector.shape_cast %68 : vector<16x16x32xf32> to vector<256x32xf32>
    %c0_64 = arith.constant 0 : index
    %c1_65 = arith.constant 1 : index
    %c0_66 = arith.constant 0 : index
    %70 = vector.load %arg10[%c0_64, %c1_65, %c0_66] : memref<18x18x32xf32, #tpu.memory_space<vmem>>, vector<16x16x32xf32>
    %71 = vector.shape_cast %70 : vector<16x16x32xf32> to vector<256x32xf32>
    %c0_67 = arith.constant 0 : index
    %c2_68 = arith.constant 2 : index
    %c0_69 = arith.constant 0 : index
    %72 = vector.load %arg10[%c0_67, %c2_68, %c0_69] : memref<18x18x32xf32, #tpu.memory_space<vmem>>, vector<16x16x32xf32>
    %73 = vector.shape_cast %72 : vector<16x16x32xf32> to vector<256x32xf32>
    %c1_70 = arith.constant 1 : index
    %c0_71 = arith.constant 0 : index
    %c0_72 = arith.constant 0 : index
    %74 = vector.load %arg10[%c1_70, %c0_71, %c0_72] : memref<18x18x32xf32, #tpu.memory_space<vmem>>, vector<16x16x32xf32>
    %75 = vector.shape_cast %74 : vector<16x16x32xf32> to vector<256x32xf32>
    %c1_73 = arith.constant 1 : index
    %c1_74 = arith.constant 1 : index
    %c0_75 = arith.constant 0 : index
    %76 = vector.load %arg10[%c1_73, %c1_74, %c0_75] : memref<18x18x32xf32, #tpu.memory_space<vmem>>, vector<16x16x32xf32>
    %77 = vector.shape_cast %76 : vector<16x16x32xf32> to vector<256x32xf32>
    %c1_76 = arith.constant 1 : index
    %c2_77 = arith.constant 2 : index
    %c0_78 = arith.constant 0 : index
    %78 = vector.load %arg10[%c1_76, %c2_77, %c0_78] : memref<18x18x32xf32, #tpu.memory_space<vmem>>, vector<16x16x32xf32>
    %79 = vector.shape_cast %78 : vector<16x16x32xf32> to vector<256x32xf32>
    %c2_79 = arith.constant 2 : index
    %c0_80 = arith.constant 0 : index
    %c0_81 = arith.constant 0 : index
    %80 = vector.load %arg10[%c2_79, %c0_80, %c0_81] : memref<18x18x32xf32, #tpu.memory_space<vmem>>, vector<16x16x32xf32>
    %81 = vector.shape_cast %80 : vector<16x16x32xf32> to vector<256x32xf32>
    %c2_82 = arith.constant 2 : index
    %c1_83 = arith.constant 1 : index
    %c0_84 = arith.constant 0 : index
    %82 = vector.load %arg10[%c2_82, %c1_83, %c0_84] : memref<18x18x32xf32, #tpu.memory_space<vmem>>, vector<16x16x32xf32>
    %83 = vector.shape_cast %82 : vector<16x16x32xf32> to vector<256x32xf32>
    %c2_85 = arith.constant 2 : index
    %c2_86 = arith.constant 2 : index
    %c0_87 = arith.constant 0 : index
    %84 = vector.load %arg10[%c2_85, %c2_86, %c0_87] : memref<18x18x32xf32, #tpu.memory_space<vmem>>, vector<16x16x32xf32>
    %85 = vector.shape_cast %84 : vector<16x16x32xf32> to vector<256x32xf32>
    %86 = tpu.concatenate %69, %71, %73, %75, %77, %79, %81, %83, %85 in 1 : vector<256x32xf32>, vector<256x32xf32>, vector<256x32xf32>, vector<256x32xf32>, vector<256x32xf32>, vector<256x32xf32>, vector<256x32xf32>, vector<256x32xf32>, vector<256x32xf32> -> vector<256x288xf32>
    %87 = arith.truncf %86 : vector<256x288xf32> to vector<256x288xbf16>
    %c1_88 = arith.constant 1 : index
    %c0_89 = arith.constant 0 : index
    %c0_90 = arith.constant 0 : index
    %88 = vector.load %arg2[%c1_88, %c0_89, %c0_90] : memref<3x288x32xbf16, #tpu.memory_space<vmem>>, vector<1x288x32xbf16>
    %89 = vector.shape_cast %88 : vector<1x288x32xbf16> to vector<288x32xbf16>
    %cst_91 = arith.constant dense<0.000000e+00> : vector<256x32xf32>
    %90 = tpu.matmul %87, %89, %cst_91 {dimension_numbers = #tpu.dot_dimension_numbers<[1], [0], [0], [1], [0, 0, 1, 1], [], []>} : vector<256x288xbf16>, vector<288x32xbf16>, vector<256x32xf32> -> vector<256x32xf32>
    %c1_92 = arith.constant 1 : index
    %c0_93 = arith.constant 0 : index
    %c0_94 = arith.constant 0 : index
    %91 = vector.load %arg3[%c1_92, %c0_93, %c0_94] : memref<3x1x32xf32, #tpu.memory_space<vmem>>, vector<1x1x32xf32>
    %92 = vector.shape_cast %91 : vector<1x1x32xf32> to vector<1x32xf32>
    %93 = vector.broadcast %92 : vector<1x32xf32> to vector<256x32xf32>
    %94 = arith.addf %90, %93 : vector<256x32xf32>
    %cst_95 = arith.constant dense<0.000000e+00> : vector<32xf32>
    %95 = vector.multi_reduction <add>, %94, %cst_95 [0] : vector<256x32xf32> to vector<32xf32>
    %96 = vector.shape_cast %95 : vector<32xf32> to vector<1x32xf32>
    %97 = arith.mulf %94, %94 : vector<256x32xf32>
    %cst_96 = arith.constant dense<0.000000e+00> : vector<32xf32>
    %98 = vector.multi_reduction <add>, %97, %cst_96 [0] : vector<256x32xf32> to vector<32xf32>
    %99 = vector.shape_cast %98 : vector<32xf32> to vector<1x32xf32>
    %cst_97 = arith.constant dense<0.000000e+00> : vector<1x32xf32>
    %100 = tpu.matmul %96, %6, %cst_97 {dimension_numbers = #tpu.dot_dimension_numbers<[1], [0], [0], [1], [0, 0, 1, 1], [], []>} : vector<1x32xf32>, vector<32x32xf32>, vector<1x32xf32> -> vector<1x32xf32>
    %cst_98 = arith.constant dense<0.000000e+00> : vector<1x32xf32>
    %101 = tpu.matmul %99, %6, %cst_98 {dimension_numbers = #tpu.dot_dimension_numbers<[1], [0], [0], [1], [0, 0, 1, 1], [], []>} : vector<1x32xf32>, vector<32x32xf32>, vector<1x32xf32> -> vector<1x32xf32>
    %cst_99 = arith.constant 0.001953125 : f32
    %102 = vector.broadcast %cst_99 : f32 to vector<1x32xf32>
    %103 = arith.mulf %100, %102 : vector<1x32xf32>
    %cst_100 = arith.constant 0.001953125 : f32
    %104 = vector.broadcast %cst_100 : f32 to vector<1x32xf32>
    %105 = arith.mulf %101, %104 : vector<1x32xf32>
    %106 = arith.mulf %103, %103 : vector<1x32xf32>
    %107 = arith.subf %105, %106 : vector<1x32xf32>
    %cst_101 = arith.constant 0.000000e+00 : f32
    %108 = vector.broadcast %cst_101 : f32 to vector<1x32xf32>
    %109 = arith.maximumf %107, %108 : vector<1x32xf32>
    %cst_102 = arith.constant 9.99999974E-6 : f32
    %110 = vector.broadcast %cst_102 : f32 to vector<1x32xf32>
    %111 = arith.addf %109, %110 : vector<1x32xf32>
    %112 = math.rsqrt %111 : vector<1x32xf32>
    %113 = vector.broadcast %103 : vector<1x32xf32> to vector<256x32xf32>
    %114 = arith.subf %94, %113 : vector<256x32xf32>
    %115 = vector.broadcast %112 : vector<1x32xf32> to vector<256x32xf32>
    %116 = arith.mulf %114, %115 : vector<256x32xf32>
    %c1_103 = arith.constant 1 : index
    %c0_104 = arith.constant 0 : index
    %c0_105 = arith.constant 0 : index
    %117 = vector.load %arg4[%c1_103, %c0_104, %c0_105] : memref<3x1x32xf32, #tpu.memory_space<vmem>>, vector<1x1x32xf32>
    %118 = vector.shape_cast %117 : vector<1x1x32xf32> to vector<1x32xf32>
    %119 = vector.broadcast %118 : vector<1x32xf32> to vector<256x32xf32>
    %120 = arith.mulf %116, %119 : vector<256x32xf32>
    %c1_106 = arith.constant 1 : index
    %c0_107 = arith.constant 0 : index
    %c0_108 = arith.constant 0 : index
    %121 = vector.load %arg5[%c1_106, %c0_107, %c0_108] : memref<3x1x32xf32, #tpu.memory_space<vmem>>, vector<1x1x32xf32>
    %122 = vector.shape_cast %121 : vector<1x1x32xf32> to vector<1x32xf32>
    %123 = vector.broadcast %122 : vector<1x32xf32> to vector<256x32xf32>
    %124 = arith.addf %120, %123 : vector<256x32xf32>
    %cst_109 = arith.constant 0.000000e+00 : f32
    %125 = vector.broadcast %cst_109 : f32 to vector<256x32xf32>
    %126 = arith.maximumf %124, %125 : vector<256x32xf32>
    %127 = vector.shape_cast %126 : vector<256x32xf32> to vector<16x16x32xf32>
    %c1_110 = arith.constant 1 : index
    %c1_111 = arith.constant 1 : index
    %c0_112 = arith.constant 0 : index
    %128 = vector.load %arg10[%c1_110, %c1_111, %c0_112] : memref<18x18x32xf32, #tpu.memory_space<vmem>>, vector<16x16x32xf32>
    tpu.vector_store %arg10[%c1_110, %c1_111, %c0_112], %127 {strides = array<i32>} : memref<18x18x32xf32, #tpu.memory_space<vmem>>, vector<16x16x32xf32>,
    %c0_113 = arith.constant 0 : index
    %c0_114 = arith.constant 0 : index
    %c0_115 = arith.constant 0 : index
    %129 = vector.load %arg10[%c0_113, %c0_114, %c0_115] : memref<18x18x32xf32, #tpu.memory_space<vmem>>, vector<16x16x32xf32>
    %130 = vector.shape_cast %129 : vector<16x16x32xf32> to vector<256x32xf32>
    %c0_116 = arith.constant 0 : index
    %c1_117 = arith.constant 1 : index
    %c0_118 = arith.constant 0 : index
    %131 = vector.load %arg10[%c0_116, %c1_117, %c0_118] : memref<18x18x32xf32, #tpu.memory_space<vmem>>, vector<16x16x32xf32>
    %132 = vector.shape_cast %131 : vector<16x16x32xf32> to vector<256x32xf32>
    %c0_119 = arith.constant 0 : index
    %c2_120 = arith.constant 2 : index
    %c0_121 = arith.constant 0 : index
    %133 = vector.load %arg10[%c0_119, %c2_120, %c0_121] : memref<18x18x32xf32, #tpu.memory_space<vmem>>, vector<16x16x32xf32>
    %134 = vector.shape_cast %133 : vector<16x16x32xf32> to vector<256x32xf32>
    %c1_122 = arith.constant 1 : index
    %c0_123 = arith.constant 0 : index
    %c0_124 = arith.constant 0 : index
    %135 = vector.load %arg10[%c1_122, %c0_123, %c0_124] : memref<18x18x32xf32, #tpu.memory_space<vmem>>, vector<16x16x32xf32>
    %136 = vector.shape_cast %135 : vector<16x16x32xf32> to vector<256x32xf32>
    %c1_125 = arith.constant 1 : index
    %c1_126 = arith.constant 1 : index
    %c0_127 = arith.constant 0 : index
    %137 = vector.load %arg10[%c1_125, %c1_126, %c0_127] : memref<18x18x32xf32, #tpu.memory_space<vmem>>, vector<16x16x32xf32>
    %138 = vector.shape_cast %137 : vector<16x16x32xf32> to vector<256x32xf32>
    %c1_128 = arith.constant 1 : index
    %c2_129 = arith.constant 2 : index
    %c0_130 = arith.constant 0 : index
    %139 = vector.load %arg10[%c1_128, %c2_129, %c0_130] : memref<18x18x32xf32, #tpu.memory_space<vmem>>, vector<16x16x32xf32>
    %140 = vector.shape_cast %139 : vector<16x16x32xf32> to vector<256x32xf32>
    %c2_131 = arith.constant 2 : index
    %c0_132 = arith.constant 0 : index
    %c0_133 = arith.constant 0 : index
    %141 = vector.load %arg10[%c2_131, %c0_132, %c0_133] : memref<18x18x32xf32, #tpu.memory_space<vmem>>, vector<16x16x32xf32>
    %142 = vector.shape_cast %141 : vector<16x16x32xf32> to vector<256x32xf32>
    %c2_134 = arith.constant 2 : index
    %c1_135 = arith.constant 1 : index
    %c0_136 = arith.constant 0 : index
    %143 = vector.load %arg10[%c2_134, %c1_135, %c0_136] : memref<18x18x32xf32, #tpu.memory_space<vmem>>, vector<16x16x32xf32>
    %144 = vector.shape_cast %143 : vector<16x16x32xf32> to vector<256x32xf32>
    %c2_137 = arith.constant 2 : index
    %c2_138 = arith.constant 2 : index
    %c0_139 = arith.constant 0 : index
    %145 = vector.load %arg10[%c2_137, %c2_138, %c0_139] : memref<18x18x32xf32, #tpu.memory_space<vmem>>, vector<16x16x32xf32>
    %146 = vector.shape_cast %145 : vector<16x16x32xf32> to vector<256x32xf32>
    %147 = tpu.concatenate %130, %132, %134, %136, %138, %140, %142, %144, %146 in 1 : vector<256x32xf32>, vector<256x32xf32>, vector<256x32xf32>, vector<256x32xf32>, vector<256x32xf32>, vector<256x32xf32>, vector<256x32xf32>, vector<256x32xf32>, vector<256x32xf32> -> vector<256x288xf32>
    %148 = arith.truncf %147 : vector<256x288xf32> to vector<256x288xbf16>
    %c2_140 = arith.constant 2 : index
    %c0_141 = arith.constant 0 : index
    %c0_142 = arith.constant 0 : index
    %149 = vector.load %arg2[%c2_140, %c0_141, %c0_142] : memref<3x288x32xbf16, #tpu.memory_space<vmem>>, vector<1x288x32xbf16>
    %150 = vector.shape_cast %149 : vector<1x288x32xbf16> to vector<288x32xbf16>
    %cst_143 = arith.constant dense<0.000000e+00> : vector<256x32xf32>
    %151 = tpu.matmul %148, %150, %cst_143 {dimension_numbers = #tpu.dot_dimension_numbers<[1], [0], [0], [1], [0, 0, 1, 1], [], []>} : vector<256x288xbf16>, vector<288x32xbf16>, vector<256x32xf32> -> vector<256x32xf32>
    %c2_144 = arith.constant 2 : index
    %c0_145 = arith.constant 0 : index
    %c0_146 = arith.constant 0 : index
    %152 = vector.load %arg3[%c2_144, %c0_145, %c0_146] : memref<3x1x32xf32, #tpu.memory_space<vmem>>, vector<1x1x32xf32>
    %153 = vector.shape_cast %152 : vector<1x1x32xf32> to vector<1x32xf32>
    %154 = vector.broadcast %153 : vector<1x32xf32> to vector<256x32xf32>
    %155 = arith.addf %151, %154 : vector<256x32xf32>
    %cst_147 = arith.constant dense<0.000000e+00> : vector<32xf32>
    %156 = vector.multi_reduction <add>, %155, %cst_147 [0] : vector<256x32xf32> to vector<32xf32>
    %157 = vector.shape_cast %156 : vector<32xf32> to vector<1x32xf32>
    %158 = arith.mulf %155, %155 : vector<256x32xf32>
    %cst_148 = arith.constant dense<0.000000e+00> : vector<32xf32>
    %159 = vector.multi_reduction <add>, %158, %cst_148 [0] : vector<256x32xf32> to vector<32xf32>
    %160 = vector.shape_cast %159 : vector<32xf32> to vector<1x32xf32>
    %cst_149 = arith.constant dense<0.000000e+00> : vector<1x32xf32>
    %161 = tpu.matmul %157, %6, %cst_149 {dimension_numbers = #tpu.dot_dimension_numbers<[1], [0], [0], [1], [0, 0, 1, 1], [], []>} : vector<1x32xf32>, vector<32x32xf32>, vector<1x32xf32> -> vector<1x32xf32>
    %cst_150 = arith.constant dense<0.000000e+00> : vector<1x32xf32>
    %162 = tpu.matmul %160, %6, %cst_150 {dimension_numbers = #tpu.dot_dimension_numbers<[1], [0], [0], [1], [0, 0, 1, 1], [], []>} : vector<1x32xf32>, vector<32x32xf32>, vector<1x32xf32> -> vector<1x32xf32>
    %cst_151 = arith.constant 0.001953125 : f32
    %163 = vector.broadcast %cst_151 : f32 to vector<1x32xf32>
    %164 = arith.mulf %161, %163 : vector<1x32xf32>
    %cst_152 = arith.constant 0.001953125 : f32
    %165 = vector.broadcast %cst_152 : f32 to vector<1x32xf32>
    %166 = arith.mulf %162, %165 : vector<1x32xf32>
    %167 = arith.mulf %164, %164 : vector<1x32xf32>
    %168 = arith.subf %166, %167 : vector<1x32xf32>
    %cst_153 = arith.constant 0.000000e+00 : f32
    %169 = vector.broadcast %cst_153 : f32 to vector<1x32xf32>
    %170 = arith.maximumf %168, %169 : vector<1x32xf32>
    %cst_154 = arith.constant 9.99999974E-6 : f32
    %171 = vector.broadcast %cst_154 : f32 to vector<1x32xf32>
    %172 = arith.addf %170, %171 : vector<1x32xf32>
    %173 = math.rsqrt %172 : vector<1x32xf32>
    %174 = vector.broadcast %164 : vector<1x32xf32> to vector<256x32xf32>
    %175 = arith.subf %155, %174 : vector<256x32xf32>
    %176 = vector.broadcast %173 : vector<1x32xf32> to vector<256x32xf32>
    %177 = arith.mulf %175, %176 : vector<256x32xf32>
    %c2_155 = arith.constant 2 : index
    %c0_156 = arith.constant 0 : index
    %c0_157 = arith.constant 0 : index
    %178 = vector.load %arg4[%c2_155, %c0_156, %c0_157] : memref<3x1x32xf32, #tpu.memory_space<vmem>>, vector<1x1x32xf32>
    %179 = vector.shape_cast %178 : vector<1x1x32xf32> to vector<1x32xf32>
    %180 = vector.broadcast %179 : vector<1x32xf32> to vector<256x32xf32>
    %181 = arith.mulf %177, %180 : vector<256x32xf32>
    %c2_158 = arith.constant 2 : index
    %c0_159 = arith.constant 0 : index
    %c0_160 = arith.constant 0 : index
    %182 = vector.load %arg5[%c2_158, %c0_159, %c0_160] : memref<3x1x32xf32, #tpu.memory_space<vmem>>, vector<1x1x32xf32>
    %183 = vector.shape_cast %182 : vector<1x1x32xf32> to vector<1x32xf32>
    %184 = vector.broadcast %183 : vector<1x32xf32> to vector<256x32xf32>
    %185 = arith.addf %181, %184 : vector<256x32xf32>
    %cst_161 = arith.constant 0.000000e+00 : f32
    %186 = vector.broadcast %cst_161 : f32 to vector<256x32xf32>
    %187 = arith.maximumf %185, %186 : vector<256x32xf32>
    %188 = vector.shape_cast %187 : vector<256x32xf32> to vector<16x16x32xf32>
    %c1_162 = arith.constant 1 : index
    %c1_163 = arith.constant 1 : index
    %c0_164 = arith.constant 0 : index
    %189 = vector.load %arg10[%c1_162, %c1_163, %c0_164] : memref<18x18x32xf32, #tpu.memory_space<vmem>>, vector<16x16x32xf32>
    tpu.vector_store %arg10[%c1_162, %c1_163, %c0_164], %188 {strides = array<i32>} : memref<18x18x32xf32, #tpu.memory_space<vmem>>, vector<16x16x32xf32>,
    %c0_165 = arith.constant 0 : index
    %c0_166 = arith.constant 0 : index
    %c0_167 = arith.constant 0 : index
    %190 = vector.load %arg10[%c0_165, %c0_166, %c0_167] : memref<18x18x32xf32, #tpu.memory_space<vmem>>, vector<16x16x32xf32>
    %191 = vector.shape_cast %190 : vector<16x16x32xf32> to vector<256x32xf32>
    %c0_168 = arith.constant 0 : index
    %c1_169 = arith.constant 1 : index
    %c0_170 = arith.constant 0 : index
    %192 = vector.load %arg10[%c0_168, %c1_169, %c0_170] : memref<18x18x32xf32, #tpu.memory_space<vmem>>, vector<16x16x32xf32>
    %193 = vector.shape_cast %192 : vector<16x16x32xf32> to vector<256x32xf32>
    %c0_171 = arith.constant 0 : index
    %c2_172 = arith.constant 2 : index
    %c0_173 = arith.constant 0 : index
    %194 = vector.load %arg10[%c0_171, %c2_172, %c0_173] : memref<18x18x32xf32, #tpu.memory_space<vmem>>, vector<16x16x32xf32>
    %195 = vector.shape_cast %194 : vector<16x16x32xf32> to vector<256x32xf32>
    %c1_174 = arith.constant 1 : index
    %c0_175 = arith.constant 0 : index
    %c0_176 = arith.constant 0 : index
    %196 = vector.load %arg10[%c1_174, %c0_175, %c0_176] : memref<18x18x32xf32, #tpu.memory_space<vmem>>, vector<16x16x32xf32>
    %197 = vector.shape_cast %196 : vector<16x16x32xf32> to vector<256x32xf32>
    %c1_177 = arith.constant 1 : index
    %c1_178 = arith.constant 1 : index
    %c0_179 = arith.constant 0 : index
    %198 = vector.load %arg10[%c1_177, %c1_178, %c0_179] : memref<18x18x32xf32, #tpu.memory_space<vmem>>, vector<16x16x32xf32>
    %199 = vector.shape_cast %198 : vector<16x16x32xf32> to vector<256x32xf32>
    %c1_180 = arith.constant 1 : index
    %c2_181 = arith.constant 2 : index
    %c0_182 = arith.constant 0 : index
    %200 = vector.load %arg10[%c1_180, %c2_181, %c0_182] : memref<18x18x32xf32, #tpu.memory_space<vmem>>, vector<16x16x32xf32>
    %201 = vector.shape_cast %200 : vector<16x16x32xf32> to vector<256x32xf32>
    %c2_183 = arith.constant 2 : index
    %c0_184 = arith.constant 0 : index
    %c0_185 = arith.constant 0 : index
    %202 = vector.load %arg10[%c2_183, %c0_184, %c0_185] : memref<18x18x32xf32, #tpu.memory_space<vmem>>, vector<16x16x32xf32>
    %203 = vector.shape_cast %202 : vector<16x16x32xf32> to vector<256x32xf32>
    %c2_186 = arith.constant 2 : index
    %c1_187 = arith.constant 1 : index
    %c0_188 = arith.constant 0 : index
    %204 = vector.load %arg10[%c2_186, %c1_187, %c0_188] : memref<18x18x32xf32, #tpu.memory_space<vmem>>, vector<16x16x32xf32>
    %205 = vector.shape_cast %204 : vector<16x16x32xf32> to vector<256x32xf32>
    %c2_189 = arith.constant 2 : index
    %c2_190 = arith.constant 2 : index
    %c0_191 = arith.constant 0 : index
    %206 = vector.load %arg10[%c2_189, %c2_190, %c0_191] : memref<18x18x32xf32, #tpu.memory_space<vmem>>, vector<16x16x32xf32>
    %207 = vector.shape_cast %206 : vector<16x16x32xf32> to vector<256x32xf32>
    %208 = tpu.concatenate %191, %193, %195, %197, %199, %201, %203, %205, %207 in 1 : vector<256x32xf32>, vector<256x32xf32>, vector<256x32xf32>, vector<256x32xf32>, vector<256x32xf32>, vector<256x32xf32>, vector<256x32xf32>, vector<256x32xf32>, vector<256x32xf32> -> vector<256x288xf32>
    %209 = arith.truncf %208 : vector<256x288xf32> to vector<256x288xbf16>
    %c0_192 = arith.constant 0 : index
    %c0_193 = arith.constant 0 : index
    %210 = vector.load %arg7[%c0_192, %c0_193] : memref<288x8xbf16, #tpu.memory_space<vmem>>, vector<288x8xbf16>
    %cst_194 = arith.constant dense<0.000000e+00> : vector<256x8xf32>
    %211 = tpu.matmul %209, %210, %cst_194 {dimension_numbers = #tpu.dot_dimension_numbers<[1], [0], [0], [1], [0, 0, 1, 1], [], []>} : vector<256x288xbf16>, vector<288x8xbf16>, vector<256x8xf32> -> vector<256x8xf32>
    %c0_195 = arith.constant 0 : index
    %c0_196 = arith.constant 0 : index
    %212 = vector.load %arg8[%c0_195, %c0_196] : memref<1x8xf32, #tpu.memory_space<vmem>>, vector<1x8xf32>
    %213 = vector.broadcast %212 : vector<1x8xf32> to vector<256x8xf32>
    %214 = arith.addf %211, %213 : vector<256x8xf32>
    %215 = tpu.iota {dimensions = array<i32: 1>} : vector<256x8xi32>
    %c4_i32 = arith.constant 4 : i32
    %216 = vector.broadcast %c4_i32 : i32 to vector<256x8xi32>
    %217 = arith.cmpi slt, %215, %216 : vector<256x8xi32>
    %cst_197 = arith.constant 0.000000e+00 : f32
    %218 = vector.broadcast %cst_197 : f32 to vector<256x8xf32>
    %219 = arith.maximumf %214, %218 : vector<256x8xf32>
    %220 = arith.select %217, %219, %214 : vector<256x8xi1>, vector<256x8xf32>
    %221 = vector.shape_cast %220 : vector<256x8xf32> to vector<16x16x8xf32>
    %c0_198 = arith.constant 0 : index
    %c0_199 = arith.constant 0 : index
    %c0_200 = arith.constant 0 : index
    %c0_201 = arith.constant 0 : index
    %222 = vector.load %arg9[%c0_198, %c0_199, %c0_200, %c0_201] : memref<1x16x16x8xf32, #tpu.memory_space<vmem>>, vector<1x16x16x8xf32>
    %223 = vector.shape_cast %222 : vector<1x16x16x8xf32> to vector<16x16x8xf32>
    %224 = vector.shape_cast %221 : vector<16x16x8xf32> to vector<1x16x16x8xf32>
    tpu.vector_store %arg9[%c0_198, %c0_199, %c0_200, %c0_201], %224 {strides = array<i32>} : memref<1x16x16x8xf32, #tpu.memory_space<vmem>>, vector<1x16x16x8xf32>,
    return
  }
  func.func @transform_0(%arg0: i32) -> (i32, i32, i32, i32) {
    %c0_i32 = arith.constant 0 : i32
    %c0_i32_0 = arith.constant 0 : i32
    %c0_i32_1 = arith.constant 0 : i32
    %c0_i32_2 = arith.constant 0 : i32
    return %arg0, %c0_i32, %c0_i32_0, %c0_i32_1 : i32, i32, i32, i32
  }
  func.func @transform_1(%arg0: i32) -> (i32, i32, i32) {
    %c0_i32 = arith.constant 0 : i32
    %c0_i32_0 = arith.constant 0 : i32
    %c0_i32_1 = arith.constant 0 : i32
    %c0_i32_2 = arith.constant 0 : i32
    return %c0_i32, %c0_i32_0, %c0_i32_1 : i32, i32, i32
  }
  func.func @transform_2(%arg0: i32) -> (i32, i32, i32) {
    %c0_i32 = arith.constant 0 : i32
    %c0_i32_0 = arith.constant 0 : i32
    %c0_i32_1 = arith.constant 0 : i32
    %c0_i32_2 = arith.constant 0 : i32
    return %c0_i32, %c0_i32_0, %c0_i32_1 : i32, i32, i32
  }
  func.func @transform_3(%arg0: i32) -> (i32, i32, i32) {
    %c0_i32 = arith.constant 0 : i32
    %c0_i32_0 = arith.constant 0 : i32
    %c0_i32_1 = arith.constant 0 : i32
    %c0_i32_2 = arith.constant 0 : i32
    return %c0_i32, %c0_i32_0, %c0_i32_1 : i32, i32, i32
  }
  func.func @transform_4(%arg0: i32) -> (i32, i32, i32) {
    %c0_i32 = arith.constant 0 : i32
    %c0_i32_0 = arith.constant 0 : i32
    %c0_i32_1 = arith.constant 0 : i32
    %c0_i32_2 = arith.constant 0 : i32
    return %c0_i32, %c0_i32_0, %c0_i32_1 : i32, i32, i32
  }
  func.func @transform_5(%arg0: i32) -> (i32, i32) {
    %c0_i32 = arith.constant 0 : i32
    %c0_i32_0 = arith.constant 0 : i32
    %c0_i32_1 = arith.constant 0 : i32
    return %c0_i32, %c0_i32_0 : i32, i32
  }
  func.func @transform_6(%arg0: i32) -> (i32, i32) {
    %c0_i32 = arith.constant 0 : i32
    %c0_i32_0 = arith.constant 0 : i32
    %c0_i32_1 = arith.constant 0 : i32
    return %c0_i32, %c0_i32_0 : i32, i32
  }
  func.func @transform_7(%arg0: i32) -> (i32, i32) {
    %c0_i32 = arith.constant 0 : i32
    %c0_i32_0 = arith.constant 0 : i32
    %c0_i32_1 = arith.constant 0 : i32
    return %c0_i32, %c0_i32_0 : i32, i32
  }
  func.func @transform_8(%arg0: i32) -> (i32, i32, i32, i32) {
    %c0_i32 = arith.constant 0 : i32
    %c0_i32_0 = arith.constant 0 : i32
    %c0_i32_1 = arith.constant 0 : i32
    %c0_i32_2 = arith.constant 0 : i32
    return %arg0, %c0_i32, %c0_i32_0, %c0_i32_1 : i32, i32, i32, i32
  }
}

</mosaic_0001>

<llo_original>
// kernel: tpu_custom_call.1
$region0: #{tpu_custom_call.1}
  #allocation0 [shape = 'u32[]', space=smem, size = 0x4, offset = 0x4, fixed_abs, tag = 'smem constant byte address 0x4 - core index']
  #allocation1 [shape = 'u32[72,128]{1,0:T(1,128)}', space=vmem, size = 0x9000, scoped, tag = 'internal scratch']
  #allocation2 [shape = 'f32[18,18,32]{2,1,0:T(8,128)}', space=vmem, size = 0x36000, scoped, tag = 'scratch operand']
  %s0 = inlined_call_operand.vmem [shape: bf16[2,16,16,32], index: 0, kind: input, shape index: {}]
  %s1 = inlined_call_operand.vmem [shape: bf16[3,288,32], index: 1, kind: input, shape index: {}]
  %s2 = inlined_call_operand.vmem [shape: f32[3,1,32], index: 2, kind: input, shape index: {}]
  %s3 = inlined_call_operand.vmem [shape: f32[3,1,32], index: 3, kind: input, shape index: {}]
  %s4 = inlined_call_operand.vmem [shape: f32[3,1,32], index: 4, kind: input, shape index: {}]
  %s5 = inlined_call_operand.vmem [shape: f32[32,32], index: 5, kind: input, shape index: {}]
  %s6 = inlined_call_operand.vmem [shape: bf16[288,8], index: 6, kind: input, shape index: {}]
  %s7 = inlined_call_operand.vmem [shape: f32[1,8], index: 7, kind: input, shape index: {}]
  %s8 = inlined_call_operand.vmem [shape: f32[2,16,16,8], index: 8, kind: output, shape index: {}]
  %s9 = sld [smem:[#allocation0]]
  $region65: #{tpu_custom_call.1} parent=0
    _
  %s11 = ssub.s32 1, %s9
  %s12 = scalar_select 0, %s11, %s9
  loop: start=0, step=1, limit=4
  $region2: #{tpu_custom_call.1} parent=0 // loop_pre_header
    _
  $region3: #{tpu_custom_call.1} parent=0 // loop_header
    %s14 = sphi 0, %s18
    %p15 = scmp.ge.s32.totalorder %s14, 4
    %s24 = sphi 0, %s26
    %s27 = sphi 0, %s24
    %s28 = sphi 0, %s27
    %s44 = sphi 0, %s28
    %s48 = sphi 0, %s48
    %s50 = sphi 0, %s48
    %s51 = sphi 0, %s50
    %s65 = sphi 0, %s51
    %s69 = sphi 0, %s69
    %s71 = sphi 0, %s69
    %s72 = sphi 0, %s71
    %s86 = sphi 0, %s72
    %s90 = sphi 0, %s90
    %s92 = sphi 0, %s90
    %s93 = sphi 0, %s92
    %s107 = sphi 0, %s93
    %s111 = sphi 0, %s111
    %s113 = sphi 0, %s111
    %s114 = sphi 0, %s113
    %s128 = sphi 0, %s114
    %s132 = sphi 0, %s132
    %s134 = sphi 0, %s132
    %s135 = sphi 0, %s134
    %s149 = sphi 0, %s135
    %s153 = sphi 0, %s153
    %s155 = sphi 0, %s153
    %s156 = sphi 0, %s155
    %s170 = sphi 0, %s156
    %s174 = sphi 0, %s174
    %s176 = sphi 0, %s174
    %s177 = sphi 0, %s176
    %s191 = sphi 0, %s177
    %s197 = sphi 0, %s199
    %s200 = sphi 0, %s197
    %s201 = sphi 0, %s200
    %s217 = sphi 0, %s201
  $region4: #{tpu_custom_call.1} parent=0 // loop_header_branch
    %17 = sbr.rel (%p15) target = $region8
  $region5: #{tpu_custom_call.1} parent=0 // loop_body
    %s19 = ssub.s32 %s14, 1
    %s20 = ssub.s32 %s14, 2
    %s21 = sadd.s32 %s14, 1
    %s22 = ssub.s32 %s14, %s21
    %p23 = scmp.eq.s32.totalorder %s22, 0
    %s25 = sadd.s32 %s24, 1
    %s26 = scalar_select %p23, %s24, %s25
    %p29 = pneg %p23
    %p30 = scmp.eq.s32.totalorder %s14, 1
    %p31 = por %p29, %p30
    %p32 = scmp.ne.s32.totalorder %s24, %s27
    %p33 = scmp.eq.s32.totalorder %s14, 0
    %p34 = por %p32, %p33
    %p35 = scmp.ne.s32.totalorder %s24, %s27
    %p36 = scmp.eq.s32.totalorder %s19, 1
    %p37 = por %p35, %p36
    %p38 = scmp.ne.s32.totalorder %s27, %s28
    %p39 = scmp.eq.s32.totalorder %s19, 0
    %p40 = por %p38, %p39
    %p41 = scmp.ne.s32.totalorder %s27, %s28
    %p42 = scmp.eq.s32.totalorder %s20, 1
    %p43 = por %p41, %p42
    %p45 = scmp.ne.s32.totalorder %s28, %s44
    %p46 = scmp.eq.s32.totalorder %s20, 0
    %p47 = por %p45, %p46
    %s49 = sadd.s32 %s48, 1
    %p52 = scmp.eq.s32.totalorder %s14, 1
    %p53 = scmp.ne.s32.totalorder %s48, %s50
    %p54 = scmp.eq.s32.totalorder %s14, 0
    %p55 = por %p53, %p54
    %p56 = scmp.ne.s32.totalorder %s48, %s50
    %p57 = scmp.eq.s32.totalorder %s19, 1
    %p58 = por %p56, %p57
    %p59 = scmp.ne.s32.totalorder %s50, %s51
    %p60 = scmp.eq.s32.totalorder %s19, 0
    %p61 = por %p59, %p60
    %p62 = scmp.ne.s32.totalorder %s50, %s51
    %p63 = scmp.eq.s32.totalorder %s20, 1
    %p64 = por %p62, %p63
    %p66 = scmp.ne.s32.totalorder %s51, %s65
    %p67 = scmp.eq.s32.totalorder %s20, 0
    %p68 = por %p66, %p67
    %s70 = sadd.s32 %s69, 1
    %p73 = scmp.eq.s32.totalorder %s14, 1
    %p74 = scmp.ne.s32.totalorder %s69, %s71
    %p75 = scmp.eq.s32.totalorder %s14, 0
    %p76 = por %p74, %p75
    %p77 = scmp.ne.s32.totalorder %s69, %s71
    %p78 = scmp.eq.s32.totalorder %s19, 1
    %p79 = por %p77, %p78
    %p80 = scmp.ne.s32.totalorder %s71, %s72
    %p81 = scmp.eq.s32.totalorder %s19, 0
    %p82 = por %p80, %p81
    %p83 = scmp.ne.s32.totalorder %s71, %s72
    %p84 = scmp.eq.s32.totalorder %s20, 1
    %p85 = por %p83, %p84
    %p87 = scmp.ne.s32.totalorder %s72, %s86
    %p88 = scmp.eq.s32.totalorder %s20, 0
    %p89 = por %p87, %p88
    %s91 = sadd.s32 %s90, 1
    %p94 = scmp.eq.s32.totalorder %s14, 1
    %p95 = scmp.ne.s32.totalorder %s90, %s92
    %p96 = scmp.eq.s32.totalorder %s14, 0
    %p97 = por %p95, %p96
    %p98 = scmp.ne.s32.totalorder %s90, %s92
    %p99 = scmp.eq.s32.totalorder %s19, 1
    %p100 = por %p98, %p99
    %p101 = scmp.ne.s32.totalorder %s92, %s93
    %p102 = scmp.eq.s32.totalorder %s19, 0
    %p103 = por %p101, %p102
    %p104 = scmp.ne.s32.totalorder %s92, %s93
    %p105 = scmp.eq.s32.totalorder %s20, 1
    %p106 = por %p104, %p105
    %p108 = scmp.ne.s32.totalorder %s93, %s107
    %p109 = scmp.eq.s32.totalorder %s20, 0
    %p110 = por %p108, %p109
    %s112 = sadd.s32 %s111, 1
    %p115 = scmp.eq.s32.totalorder %s14, 1
    %p116 = scmp.ne.s32.totalorder %s111, %s113
    %p117 = scmp.eq.s32.totalorder %s14, 0
    %p118 = por %p116, %p117
    %p119 = scmp.ne.s32.totalorder %s111, %s113
    %p120 = scmp.eq.s32.totalorder %s19, 1
    %p121 = por %p119, %p120
    %p122 = scmp.ne.s32.totalorder %s113, %s114
    %p123 = scmp.eq.s32.totalorder %s19, 0
    %p124 = por %p122, %p123
    %p125 = scmp.ne.s32.totalorder %s113, %s114
    %p126 = scmp.eq.s32.totalorder %s20, 1
    %p127 = por %p125, %p126
    %p129 = scmp.ne.s32.totalorder %s114, %s128
    %p130 = scmp.eq.s32.totalorder %s20, 0
    %p131 = por %p129, %p130
    %s133 = sadd.s32 %s132, 1
    %p136 = scmp.eq.s32.totalorder %s14, 1
    %p137 = scmp.ne.s32.totalorder %s132, %s134
    %p138 = scmp.eq.s32.totalorder %s14, 0
    %p139 = por %p137, %p138
    %p140 = scmp.ne.s32.totalorder %s132, %s134
    %p141 = scmp.eq.s32.totalorder %s19, 1
    %p142 = por %p140, %p141
    %p143 = scmp.ne.s32.totalorder %s134, %s135
    %p144 = scmp.eq.s32.totalorder %s19, 0
    %p145 = por %p143, %p144
    %p146 = scmp.ne.s32.totalorder %s134, %s135
    %p147 = scmp.eq.s32.totalorder %s20, 1
    %p148 = por %p146, %p147
    %p150 = scmp.ne.s32.totalorder %s135, %s149
    %p151 = scmp.eq.s32.totalorder %s20, 0
    %p152 = por %p150, %p151
    %s154 = sadd.s32 %s153, 1
    %p157 = scmp.eq.s32.totalorder %s14, 1
    %p158 = scmp.ne.s32.totalorder %s153, %s155
    %p159 = scmp.eq.s32.totalorder %s14, 0
    %p160 = por %p158, %p159
    %p161 = scmp.ne.s32.totalorder %s153, %s155
    %p162 = scmp.eq.s32.totalorder %s19, 1
    %p163 = por %p161, %p162
    %p164 = scmp.ne.s32.totalorder %s155, %s156
    %p165 = scmp.eq.s32.totalorder %s19, 0
    %p166 = por %p164, %p165
    %p167 = scmp.ne.s32.totalorder %s155, %s156
    %p168 = scmp.eq.s32.totalorder %s20, 1
    %p169 = por %p167, %p168
    %p171 = scmp.ne.s32.totalorder %s156, %s170
    %p172 = scmp.eq.s32.totalorder %s20, 0
    %p173 = por %p171, %p172
    %s175 = sadd.s32 %s174, 1
    %p178 = scmp.eq.s32.totalorder %s14, 1
    %p179 = scmp.ne.s32.totalorder %s174, %s176
    %p180 = scmp.eq.s32.totalorder %s14, 0
    %p181 = por %p179, %p180
    %p182 = scmp.ne.s32.totalorder %s174, %s176
    %p183 = scmp.eq.s32.totalorder %s19, 1
    %p184 = por %p182, %p183
    %p185 = scmp.ne.s32.totalorder %s176, %s177
    %p186 = scmp.eq.s32.totalorder %s19, 0
    %p187 = por %p185, %p186
    %p188 = scmp.ne.s32.totalorder %s176, %s177
    %p189 = scmp.eq.s32.totalorder %s20, 1
    %p190 = por %p188, %p189
    %p192 = scmp.ne.s32.totalorder %s177, %s191
    %p193 = scmp.eq.s32.totalorder %s20, 0
    %p194 = por %p192, %p193
    %s195 = ssub.s32 %s14, %s21
    %p196 = scmp.eq.s32.totalorder %s195, 0
    %s198 = sadd.s32 %s197, 1
    %s199 = scalar_select %p196, %s197, %s198
    %p202 = pneg %p196
    %p203 = scmp.eq.s32.totalorder %s14, 1
    %p204 = por %p202, %p203
    %p205 = scmp.ne.s32.totalorder %s197, %s200
    %p206 = scmp.eq.s32.totalorder %s14, 0
    %p207 = por %p205, %p206
    %p208 = scmp.ne.s32.totalorder %s197, %s200
    %p209 = scmp.eq.s32.totalorder %s19, 1
    %p210 = por %p208, %p209
    %p211 = scmp.ne.s32.totalorder %s200, %s201
    %p212 = scmp.eq.s32.totalorder %s19, 0
    %p213 = por %p211, %p212
    %p214 = scmp.ne.s32.totalorder %s200, %s201
    %p215 = scmp.eq.s32.totalorder %s20, 1
    %p216 = por %p214, %p215
    %p218 = scmp.ne.s32.totalorder %s201, %s217
    %p219 = scmp.eq.s32.totalorder %s20, 0
    %p220 = por %p218, %p219
    %p221 = scmp.le.s32.totalorder 1, %s14
    %p222 = scmp.lt.s32.totalorder %s14, 3
    %p223 = pnand %p221, %p222
    %p224 = pneg %p223
    // Predicated region
    $region9: #{tpu_custom_call.1} parent=5 // pred_check
      _
    $region10: #{tpu_custom_call.1} parent=5 // pred_check_branch
      %226 = sbr.rel (%p223) target = $region12
    $region11: #{tpu_custom_call.1} parent=5 // pred_region
      %s227 = ssub.s32 %s14, 1
      // Predicated region
      $region13: #{tpu_custom_call.1} parent=11 // pred_check
        %p228 = pneg %p61
      $region14: #{tpu_custom_call.1} parent=11 // pred_check_branch
        %230 = sbr.rel (%p228) target = $region16
      $region15: #{tpu_custom_call.1} parent=11 // pred_region
        _
      $region16: #{tpu_custom_call.1} parent=11 // pred_fallthru
        _
      // Predicated region
      $region17: #{tpu_custom_call.1} parent=11 // pred_check
        %p231 = pneg %p82
      $region18: #{tpu_custom_call.1} parent=11 // pred_check_branch
        %233 = sbr.rel (%p231) target = $region20
      $region19: #{tpu_custom_call.1} parent=11 // pred_region
        _
      $region20: #{tpu_custom_call.1} parent=11 // pred_fallthru
        _
      // Predicated region
      $region21: #{tpu_custom_call.1} parent=11 // pred_check
        %p234 = pneg %p103
      $region22: #{tpu_custom_call.1} parent=11 // pred_check_branch
        %236 = sbr.rel (%p234) target = $region24
      $region23: #{tpu_custom_call.1} parent=11 // pred_region
        _
      $region24: #{tpu_custom_call.1} parent=11 // pred_fallthru
        _
      // Predicated region
      $region25: #{tpu_custom_call.1} parent=11 // pred_check
        %p237 = pneg %p124
      $region26: #{tpu_custom_call.1} parent=11 // pred_check_branch
        %239 = sbr.rel (%p237) target = $region28
      $region27: #{tpu_custom_call.1} parent=11 // pred_region
        _
      $region28: #{tpu_custom_call.1} parent=11 // pred_fallthru
        _
      // Predicated region
      $region29: #{tpu_custom_call.1} parent=11 // pred_check
        %p240 = pneg %p145
      $region30: #{tpu_custom_call.1} parent=11 // pred_check_branch
        %242 = sbr.rel (%p240) target = $region32
      $region31: #{tpu_custom_call.1} parent=11 // pred_region
        _
      $region32: #{tpu_custom_call.1} parent=11 // pred_fallthru
        _
      // Predicated region
      $region33: #{tpu_custom_call.1} parent=11 // pred_check
        %p243 = pneg %p166
      $region34: #{tpu_custom_call.1} parent=11 // pred_check_branch
        %245 = sbr.rel (%p243) target = $region36
      $region35: #{tpu_custom_call.1} parent=11 // pred_region
        _
      $region36: #{tpu_custom_call.1} parent=11 // pred_fallthru
        _
      // Predicated region
      $region37: #{tpu_custom_call.1} parent=11 // pred_check
        %p246 = pneg %p187
      $region38: #{tpu_custom_call.1} parent=11 // pred_check_branch
        %248 = sbr.rel (%p246) target = $region40
      $region39: #{tpu_custom_call.1} parent=11 // pred_region
        _
      $region40: #{tpu_custom_call.1} parent=11 // pred_fallthru
        _
    $region12: #{tpu_custom_call.1} parent=5 // pred_fallthru
      _
    %p249 = scmp.lt.s32.totalorder %s14, 2
    // Predicated region
    $region41: #{tpu_custom_call.1} parent=5 // pred_check
      %p250 = pneg %p249
    $region42: #{tpu_custom_call.1} parent=5 // pred_check_branch
      %252 = sbr.rel (%p250) target = $region44
    $region43: #{tpu_custom_call.1} parent=5 // pred_region
      // Predicated region
      $region45: #{tpu_custom_call.1} parent=43 // pred_check
        %p253 = pneg %p34
      $region46: #{tpu_custom_call.1} parent=43 // pred_check_branch
        %255 = sbr.rel (%p253) target = $region48
      $region47: #{tpu_custom_call.1} parent=43 // pred_region
        %p256 = scmp.lt.s32.totalorder %s14, 1
        %s257 = scalar_select %p256, %s14, 1
        %s258 = smul.addr %s257, 32
        %s259 = smul.addr %s258, 4
        %s260 = scalar_lea.vmem %s0, %s259
      $region48: #{tpu_custom_call.1} parent=43 // pred_fallthru
        _
    $region44: #{tpu_custom_call.1} parent=5 // pred_fallthru
      _
    %p261 = scmp.le.s32.totalorder 1, %s14
    %p262 = scmp.lt.s32.totalorder %s14, 3
    %p263 = pnand %p261, %p262
    %p264 = pneg %p263
    // Predicated region
    $region49: #{tpu_custom_call.1} parent=5 // pred_check
      _
    $region50: #{tpu_custom_call.1} parent=5 // pred_check_branch
      %266 = sbr.rel (%p263) target = $region52
    $region51: #{tpu_custom_call.1} parent=5 // pred_region
      %s267 = ssub.s32 %s14, 1
      %p268 = scmp.lt.s32.totalorder %s19, 1
      %s269 = scalar_select %p268, %s19, 1
      %s270 = smul.addr %s269, 32
      %s271 = smul.addr %s270, 4
      %s272 = scalar_lea.vmem %s0, %s271
      %p273 = pneg %p40
      %p274 = pneg %p37
      %p275 = pneg %p61
      %p276 = pneg %p58
      %p277 = pneg %p82
      %p278 = pneg %p79
      %p279 = pneg %p103
      %p280 = pneg %p100
      %p281 = pneg %p124
      %p282 = pneg %p121
      %p283 = pneg %p145
      %p284 = pneg %p142
      %p285 = pneg %p166
      %p286 = pneg %p163
      %p287 = pneg %p187
      %p288 = pneg %p184
      %p289 = pneg %p213
      %p290 = pneg %p210
      %p291 = scmp.lt.s32.totalorder %s19, 1
      %s292 = scalar_select %p291, %s19, 1
      %s293 = smul.addr %s292, 32
      %s294 = smul.addr %s293, 8
      %s295 = scalar_lea.vmem %s8, %s294
      %p296 = scmp.lt.s32.totalorder %s19, 1
      %s297 = scalar_select %p296, %s19, 1
      %s298 = smul.addr %s297, 32
      %s299 = smul.addr %s298, 4
      %s300 = scalar_lea.vmem %s0, %s299
      %p301 = scmp.lt.s32.totalorder %s19, 1
      %s302 = scalar_select %p301, %s19, 1
      %s303 = smul.addr %s302, 32
      %s304 = smul.addr %s303, 8
      %s305 = scalar_lea.vmem %s8, %s304
      %vm307 = vcmask 261120
      %308 = vst.msk [vmem:[#allocation2] sm:$0xff] %vm307, 0.0
      %309 = vst.msk [vmem:[#allocation2 + $0x8] sm:$0xff] %vm307, 0.0
      %vm310 = vcmask 254976
      %311 = vst.msk [vmem:[#allocation2 + $0x10] sm:$0x3] %vm310, 0.0
      %312 = vst.msk [vmem:[#allocation2 + $0x18] sm:$0xff] %vm307, 0.0
      %313 = vst.msk [vmem:[#allocation2 + $0x20] sm:$0xff] %vm307, 0.0
      %314 = vst.msk [vmem:[#allocation2 + $0x28] sm:$0x3] %vm310, 0.0
      %315 = vst.msk [vmem:[#allocation2 + $0x30] sm:$0xff] %vm307, 0.0
      %316 = vst.msk [vmem:[#allocation2 + $0x38] sm:$0xff] %vm307, 0.0
      %317 = vst.msk [vmem:[#allocation2 + $0x40] sm:$0x3] %vm310, 0.0
      %318 = vst.msk [vmem:[#allocation2 + $0x48] sm:$0xff] %vm307, 0.0
      %319 = vst.msk [vmem:[#allocation2 + $0x50] sm:$0xff] %vm307, 0.0
      %320 = vst.msk [vmem:[#allocation2 + $0x58] sm:$0x3] %vm310, 0.0
      %321 = vst.msk [vmem:[#allocation2 + $0x60] sm:$0xff] %vm307, 0.0
      %322 = vst.msk [vmem:[#allocation2 + $0x68] sm:$0xff] %vm307, 0.0
      %323 = vst.msk [vmem:[#allocation2 + $0x70] sm:$0x3] %vm310, 0.0
      %324 = vst.msk [vmem:[#allocation2 + $0x78] sm:$0xff] %vm307, 0.0
      %325 = vst.msk [vmem:[#allocation2 + $0x80] sm:$0xff] %vm307, 0.0
      %326 = vst.msk [vmem:[#allocation2 + $0x88] sm:$0x3] %vm310, 0.0
      %327 = vst.msk [vmem:[#allocation2 + $0x90] sm:$0xff] %vm307, 0.0
      %328 = vst.msk [vmem:[#allocation2 + $0x98] sm:$0xff] %vm307, 0.0
      %329 = vst.msk [vmem:[#allocation2 + $0xa0] sm:$0x3] %vm310, 0.0
      %330 = vst.msk [vmem:[#allocation2 + $0xa8] sm:$0xff] %vm307, 0.0
      %331 = vst.msk [vmem:[#allocation2 + $0xb0] sm:$0xff] %vm307, 0.0
      %332 = vst.msk [vmem:[#allocation2 + $0xb8] sm:$0x3] %vm310, 0.0
      %333 = vst.msk [vmem:[#allocation2 + $0xc0] sm:$0xff] %vm307, 0.0
      %334 = vst.msk [vmem:[#allocation2 + $0xc8] sm:$0xff] %vm307, 0.0
      %335 = vst.msk [vmem:[#allocation2 + $0xd0] sm:$0x3] %vm310, 0.0
      %336 = vst.msk [vmem:[#allocation2 + $0xd8] sm:$0xff] %vm307, 0.0
      %337 = vst.msk [vmem:[#allocation2 + $0xe0] sm:$0xff] %vm307, 0.0
      %338 = vst.msk [vmem:[#allocation2 + $0xe8] sm:$0x3] %vm310, 0.0
      %339 = vst.msk [vmem:[#allocation2 + $0xf0] sm:$0xff] %vm307, 0.0
      %340 = vst.msk [vmem:[#allocation2 + $0xf8] sm:$0xff] %vm307, 0.0
      %341 = vst.msk [vmem:[#allocation2 + $0x100] sm:$0x3] %vm310, 0.0
      %342 = vst.msk [vmem:[#allocation2 + $0x108] sm:$0xff] %vm307, 0.0
      %343 = vst.msk [vmem:[#allocation2 + $0x110] sm:$0xff] %vm307, 0.0
      %344 = vst.msk [vmem:[#allocation2 + $0x118] sm:$0x3] %vm310, 0.0
      %345 = vst.msk [vmem:[#allocation2 + $0x120] sm:$0xff] %vm307, 0.0
      %346 = vst.msk [vmem:[#allocation2 + $0x128] sm:$0xff] %vm307, 0.0
      %347 = vst.msk [vmem:[#allocation2 + $0x130] sm:$0x3] %vm310, 0.0
      %348 = vst.msk [vmem:[#allocation2 + $0x138] sm:$0xff] %vm307, 0.0
      %349 = vst.msk [vmem:[#allocation2 + $0x140] sm:$0xff] %vm307, 0.0
      %350 = vst.msk [vmem:[#allocation2 + $0x148] sm:$0x3] %vm310, 0.0
      %351 = vst.msk [vmem:[#allocation2 + $0x150] sm:$0xff] %vm307, 0.0
      %352 = vst.msk [vmem:[#allocation2 + $0x158] sm:$0xff] %vm307, 0.0
      %353 = vst.msk [vmem:[#allocation2 + $0x160] sm:$0x3] %vm310, 0.0
      %354 = vst.msk [vmem:[#allocation2 + $0x168] sm:$0xff] %vm307, 0.0
      %355 = vst.msk [vmem:[#allocation2 + $0x170] sm:$0xff] %vm307, 0.0
      %356 = vst.msk [vmem:[#allocation2 + $0x178] sm:$0x3] %vm310, 0.0
      %357 = vst.msk [vmem:[#allocation2 + $0x180] sm:$0xff] %vm307, 0.0
      %358 = vst.msk [vmem:[#allocation2 + $0x188] sm:$0xff] %vm307, 0.0
      %359 = vst.msk [vmem:[#allocation2 + $0x190] sm:$0x3] %vm310, 0.0
      %360 = vst.msk [vmem:[#allocation2 + $0x198] sm:$0xff] %vm307, 0.0
      %361 = vst.msk [vmem:[#allocation2 + $0x1a0] sm:$0xff] %vm307, 0.0
      %362 = vst.msk [vmem:[#allocation2 + $0x1a8] sm:$0x3] %vm310, 0.0
      %v363 = vld [vmem:[%s300] sm:$0xf]
      %v364 = vld [vmem:[%s300 + $0x4] sm:$0xf]
      %v365 = vld [vmem:[%s300 + $0x8] sm:$0xf]
      %v366 = vld [vmem:[%s300 + $0xc] sm:$0xf]
      %v367 = vld [vmem:[%s300 + $0x10] sm:$0xf]
      %v368 = vld [vmem:[%s300 + $0x14] sm:$0xf]
      %v369 = vld [vmem:[%s300 + $0x18] sm:$0xf]
      %v370 = vld [vmem:[%s300 + $0x1c] sm:$0xf]
      %v371 = vld [vmem:[%s300 + $0x20] sm:$0xf]
      %v372 = vld [vmem:[%s300 + $0x24] sm:$0xf]
      %v373 = vld [vmem:[%s300 + $0x28] sm:$0xf]
      %v374 = vld [vmem:[%s300 + $0x2c] sm:$0xf]
      %v375 = vld [vmem:[%s300 + $0x30] sm:$0xf]
      %v376 = vld [vmem:[%s300 + $0x34] sm:$0xf]
      %v377 = vld [vmem:[%s300 + $0x38] sm:$0xf]
      %v378 = vld [vmem:[%s300 + $0x3c] sm:$0xf]
      %v379 = vld [vmem:[%s300 + $0x40] sm:$0xf]
      %v380 = vld [vmem:[%s300 + $0x44] sm:$0xf]
      %v381 = vld [vmem:[%s300 + $0x48] sm:$0xf]
      %v382 = vld [vmem:[%s300 + $0x4c] sm:$0xf]
      %v383 = vld [vmem:[%s300 + $0x50] sm:$0xf]
      %v384 = vld [vmem:[%s300 + $0x54] sm:$0xf]
      %v385 = vld [vmem:[%s300 + $0x58] sm:$0xf]
      %v386 = vld [vmem:[%s300 + $0x5c] sm:$0xf]
      %v387 = vld [vmem:[%s300 + $0x60] sm:$0xf]
      %v388 = vld [vmem:[%s300 + $0x64] sm:$0xf]
      %v389 = vld [vmem:[%s300 + $0x68] sm:$0xf]
      %v390 = vld [vmem:[%s300 + $0x6c] sm:$0xf]
      %v391 = vld [vmem:[%s300 + $0x70] sm:$0xf]
      %v392 = vld [vmem:[%s300 + $0x74] sm:$0xf]
      %v393 = vld [vmem:[%s300 + $0x78] sm:$0xf]
      %v394 = vld [vmem:[%s300 + $0x7c] sm:$0xf]
      %v395 = vunpack.c.l.bf16 %v363
      %v396 = vunpack.c.l.bf16 %v364
      %v397 = vunpack.c.l.bf16 %v365
      %v398 = vunpack.c.l.bf16 %v366
      %v399 = vunpack.c.l.bf16 %v367
      %v400 = vunpack.c.l.bf16 %v368
      %v401 = vunpack.c.l.bf16 %v369
      %v402 = vunpack.c.l.bf16 %v370
      %v403 = vunpack.c.l.bf16 %v371
      %v404 = vunpack.c.l.bf16 %v372
      %v405 = vunpack.c.l.bf16 %v373
      %v406 = vunpack.c.l.bf16 %v374
      %v407 = vunpack.c.l.bf16 %v375
      %v408 = vunpack.c.l.bf16 %v376
      %v409 = vunpack.c.l.bf16 %v377
      %v410 = vunpack.c.l.bf16 %v378
      %v411 = vunpack.c.l.bf16 %v379
      %v412 = vunpack.c.l.bf16 %v380
      %v413 = vunpack.c.l.bf16 %v381
      %v414 = vunpack.c.l.bf16 %v382
      %v415 = vunpack.c.l.bf16 %v383
      %v416 = vunpack.c.l.bf16 %v384
      %v417 = vunpack.c.l.bf16 %v385
      %v418 = vunpack.c.l.bf16 %v386
      %v419 = vunpack.c.l.bf16 %v387
      %v420 = vunpack.c.l.bf16 %v388
      %v421 = vunpack.c.l.bf16 %v389
      %v422 = vunpack.c.l.bf16 %v390
      %v423 = vunpack.c.l.bf16 %v391
      %v424 = vunpack.c.l.bf16 %v392
      %v425 = vunpack.c.l.bf16 %v393
      %v426 = vunpack.c.l.bf16 %v394
      %s427 = scalar_lea.vmem [#allocation2], 24
      %428 = vst.msk [vmem:[%s427 + $0x1] sm:$0xff] %vm307, %v395
      %429 = vst.msk [vmem:[%s427 + $0x9] sm:$0xff] %vm307, %v396
      %430 = vst.msk [vmem:[%s427 + $0x19] sm:$0xff] %vm307, %v397
      %431 = vst.msk [vmem:[%s427 + $0x21] sm:$0xff] %vm307, %v398
      %432 = vst.msk [vmem:[%s427 + $0x31] sm:$0xff] %vm307, %v399
      %433 = vst.msk [vmem:[%s427 + $0x39] sm:$0xff] %vm307, %v400
      %434 = vst.msk [vmem:[%s427 + $0x49] sm:$0xff] %vm307, %v401
      %435 = vst.msk [vmem:[%s427 + $0x51] sm:$0xff] %vm307, %v402
      %436 = vst.msk [vmem:[%s427 + $0x61] sm:$0xff] %vm307, %v403
      %437 = vst.msk [vmem:[%s427 + $0x69] sm:$0xff] %vm307, %v404
      %438 = vst.msk [vmem:[%s427 + $0x79] sm:$0xff] %vm307, %v405
      %439 = vst.msk [vmem:[%s427 + $0x81] sm:$0xff] %vm307, %v406
      %440 = vst.msk [vmem:[%s427 + $0x91] sm:$0xff] %vm307, %v407
      %441 = vst.msk [vmem:[%s427 + $0x99] sm:$0xff] %vm307, %v408
      %442 = vst.msk [vmem:[%s427 + $0xa9] sm:$0xff] %vm307, %v409
      %443 = vst.msk [vmem:[%s427 + $0xb1] sm:$0xff] %vm307, %v410
      %444 = vst.msk [vmem:[%s427 + $0xc1] sm:$0xff] %vm307, %v411
      %445 = vst.msk [vmem:[%s427 + $0xc9] sm:$0xff] %vm307, %v412
      %446 = vst.msk [vmem:[%s427 + $0xd9] sm:$0xff] %vm307, %v413
      %447 = vst.msk [vmem:[%s427 + $0xe1] sm:$0xff] %vm307, %v414
      %448 = vst.msk [vmem:[%s427 + $0xf1] sm:$0xff] %vm307, %v415
      %449 = vst.msk [vmem:[%s427 + $0xf9] sm:$0xff] %vm307, %v416
      %450 = vst.msk [vmem:[%s427 + $0x109] sm:$0xff] %vm307, %v417
      %451 = vst.msk [vmem:[%s427 + $0x111] sm:$0xff] %vm307, %v418
      %452 = vst.msk [vmem:[%s427 + $0x121] sm:$0xff] %vm307, %v419
      %453 = vst.msk [vmem:[%s427 + $0x129] sm:$0xff] %vm307, %v420
      %454 = vst.msk [vmem:[%s427 + $0x139] sm:$0xff] %vm307, %v421
      %455 = vst.msk [vmem:[%s427 + $0x141] sm:$0xff] %vm307, %v422
      %456 = vst.msk [vmem:[%s427 + $0x151] sm:$0xff] %vm307, %v423
      %457 = vst.msk [vmem:[%s427 + $0x159] sm:$0xff] %vm307, %v424
      %458 = vst.msk [vmem:[%s427 + $0x169] sm:$0xff] %vm307, %v425
      %459 = vst.msk [vmem:[%s427 + $0x171] sm:$0xff] %vm307, %v426
      %v460 = vld [vmem:[%s5] sm:$0xff]
      %v461 = vld [vmem:[%s5 + $0x8] sm:$0xff]
      %v462 = vld [vmem:[%s5 + $0x10] sm:$0xff]
      %v463 = vld [vmem:[%s5 + $0x18] sm:$0xff]
      %v464 = vld [vmem:[#allocation2] sm:$0xff]
      %v465 = vld [vmem:[#allocation2 + $0x8] sm:$0xff]
      %v466 = vld [vmem:[#allocation2 + $0x18] sm:$0xff]
      %v467 = vld [vmem:[#allocation2 + $0x20] sm:$0xff]
      %v468 = vld [vmem:[#allocation2 + $0x30] sm:$0xff]
      %v469 = vld [vmem:[#allocation2 + $0x38] sm:$0xff]
      %v470 = vld [vmem:[#allocation2 + $0x48] sm:$0xff]
      %v471 = vld [vmem:[#allocation2 + $0x50] sm:$0xff]
      %v472 = vld [vmem:[#allocation2 + $0x60] sm:$0xff]
      %v473 = vld [vmem:[#allocation2 + $0x68] sm:$0xff]
      %v474 = vld [vmem:[#allocation2 + $0x78] sm:$0xff]
      %v475 = vld [vmem:[#allocation2 + $0x80] sm:$0xff]
      %v476 = vld [vmem:[#allocation2 + $0x90] sm:$0xff]
      %v477 = vld [vmem:[#allocation2 + $0x98] sm:$0xff]
      %v478 = vld [vmem:[#allocation2 + $0xa8] sm:$0xff]
      %v479 = vld [vmem:[#allocation2 + $0xb0] sm:$0xff]
      %v480 = vld [vmem:[#allocation2 + $0xc0] sm:$0xff]
      %v481 = vld [vmem:[#allocation2 + $0xc8] sm:$0xff]
      %v482 = vld [vmem:[#allocation2 + $0xd8] sm:$0xff]
      %v483 = vld [vmem:[#allocation2 + $0xe0] sm:$0xff]
      %v484 = vld [vmem:[#allocation2 + $0xf0] sm:$0xff]
      %v485 = vld [vmem:[#allocation2 + $0xf8] sm:$0xff]
      %v486 = vld [vmem:[#allocation2 + $0x108] sm:$0xff]
      %v487 = vld [vmem:[#allocation2 + $0x110] sm:$0xff]
      %v488 = vld [vmem:[#allocation2 + $0x120] sm:$0xff]
      %v489 = vld [vmem:[#allocation2 + $0x128] sm:$0xff]
      %v490 = vld [vmem:[#allocation2 + $0x138] sm:$0xff]
      %v491 = vld [vmem:[#allocation2 + $0x140] sm:$0xff]
      %v492 = vld [vmem:[#allocation2 + $0x150] sm:$0xff]
      %v493 = vld [vmem:[#allocation2 + $0x158] sm:$0xff]
      %v494 = vld [vmem:[#allocation2 + $0x168] sm:$0xff]
      %v495 = vld [vmem:[#allocation2 + $0x170] sm:$0xff]
      %v496 = vld [vmem:[#allocation2 + $0x1] sm:$0xff]
      %v497 = vld [vmem:[#allocation2 + $0x9] sm:$0xff]
      %v498 = vld [vmem:[#allocation2 + $0x19] sm:$0xff]
      %v499 = vld [vmem:[#allocation2 + $0x21] sm:$0xff]
      %v500 = vld [vmem:[#allocation2 + $0x31] sm:$0xff]
      %v501 = vld [vmem:[#allocation2 + $0x39] sm:$0xff]
      %v502 = vld [vmem:[#allocation2 + $0x49] sm:$0xff]
      %v503 = vld [vmem:[#allocation2 + $0x51] sm:$0xff]
      %v504 = vld [vmem:[#allocation2 + $0x61] sm:$0xff]
      %v505 = vld [vmem:[#allocation2 + $0x69] sm:$0xff]
      %v506 = vld [vmem:[#allocation2 + $0x79] sm:$0xff]
      %v507 = vld [vmem:[#allocation2 + $0x81] sm:$0xff]
      %v508 = vld [vmem:[#allocation2 + $0x91] sm:$0xff]
      %v509 = vld [vmem:[#allocation2 + $0x99] sm:$0xff]
      %v510 = vld [vmem:[#allocation2 + $0xa9] sm:$0xff]
      %v511 = vld [vmem:[#allocation2 + $0xb1] sm:$0xff]
      %v512 = vld [vmem:[#allocation2 + $0xc1] sm:$0xff]
      %v513 = vld [vmem:[#allocation2 + $0xc9] sm:$0xff]
      %v514 = vld [vmem:[#allocation2 + $0xd9] sm:$0xff]
      %v515 = vld [vmem:[#allocation2 + $0xe1] sm:$0xff]
      %v516 = vld [vmem:[#allocation2 + $0xf1] sm:$0xff]
      %v517 = vld [vmem:[#allocation2 + $0xf9] sm:$0xff]
      %v518 = vld [vmem:[#allocation2 + $0x109] sm:$0xff]
      %v519 = vld [vmem:[#allocation2 + $0x111] sm:$0xff]
      %v520 = vld [vmem:[#allocation2 + $0x121] sm:$0xff]
      %v521 = vld [vmem:[#allocation2 + $0x129] sm:$0xff]
      %v522 = vld [vmem:[#allocation2 + $0x139] sm:$0xff]
      %v523 = vld [vmem:[#allocation2 + $0x141] sm:$0xff]
      %v524 = vld [vmem:[#allocation2 + $0x151] sm:$0xff]
      %v525 = vld [vmem:[#allocation2 + $0x159] sm:$0xff]
      %v526 = vld [vmem:[#allocation2 + $0x169] sm:$0xff]
      %v527 = vld [vmem:[#allocation2 + $0x171] sm:$0xff]
      %v528 = vld [vmem:[#allocation2 + $0x2] sm:$0xff]
      %v529 = vld [vmem:[#allocation2 + $0xa] sm:$0xff]
      %v530 = vld [vmem:[#allocation2 + $0x1a] sm:$0xff]
      %v531 = vld [vmem:[#allocation2 + $0x22] sm:$0xff]
      %v532 = vld [vmem:[#allocation2 + $0x32] sm:$0xff]
      %v533 = vld [vmem:[#allocation2 + $0x3a] sm:$0xff]
      %v534 = vld [vmem:[#allocation2 + $0x4a] sm:$0xff]
      %v535 = vld [vmem:[#allocation2 + $0x52] sm:$0xff]
      %v536 = vld [vmem:[#allocation2 + $0x62] sm:$0xff]
      %v537 = vld [vmem:[#allocation2 + $0x6a] sm:$0xff]
      %v538 = vld [vmem:[#allocation2 + $0x7a] sm:$0xff]
      %v539 = vld [vmem:[#allocation2 + $0x82] sm:$0xff]
      %v540 = vld [vmem:[#allocation2 + $0x92] sm:$0xff]
      %v541 = vld [vmem:[#allocation2 + $0x9a] sm:$0xff]
      %v542 = vld [vmem:[#allocation2 + $0xaa] sm:$0xff]
      %v543 = vld [vmem:[#allocation2 + $0xb2] sm:$0xff]
      %v544 = vld [vmem:[#allocation2 + $0xc2] sm:$0xff]
      %v545 = vld [vmem:[#allocation2 + $0xca] sm:$0xff]
      %v546 = vld [vmem:[#allocation2 + $0xda] sm:$0xff]
      %v547 = vld [vmem:[#allocation2 + $0xe2] sm:$0xff]
      %v548 = vld [vmem:[#allocation2 + $0xf2] sm:$0xff]
      %v549 = vld [vmem:[#allocation2 + $0xfa] sm:$0xff]
      %v550 = vld [vmem:[#allocation2 + $0x10a] sm:$0xff]
      %v551 = vld [vmem:[#allocation2 + $0x112] sm:$0xff]
      %v552 = vld [vmem:[#allocation2 + $0x122] sm:$0xff]
      %v553 = vld [vmem:[#allocation2 + $0x12a] sm:$0xff]
      %v554 = vld [vmem:[#allocation2 + $0x13a] sm:$0xff]
      %v555 = vld [vmem:[#allocation2 + $0x142] sm:$0xff]
      %v556 = vld [vmem:[#allocation2 + $0x152] sm:$0xff]
      %v557 = vld [vmem:[#allocation2 + $0x15a] sm:$0xff]
      %v558 = vld [vmem:[#allocation2 + $0x16a] sm:$0xff]
      %v559 = vld [vmem:[#allocation2 + $0x172] sm:$0xff]
      %v560 = vld [vmem:[%s427] sm:$0xff]
      %v561 = vld [vmem:[%s427 + $0x8] sm:$0xff]
      %v562 = vld [vmem:[%s427 + $0x18] sm:$0xff]
      %v563 = vld [vmem:[%s427 + $0x20] sm:$0xff]
      %v564 = vld [vmem:[%s427 + $0x30] sm:$0xff]
      %v565 = vld [vmem:[%s427 + $0x38] sm:$0xff]
      %v566 = vld [vmem:[%s427 + $0x48] sm:$0xff]
      %v567 = vld [vmem:[%s427 + $0x50] sm:$0xff]
      %v568 = vld [vmem:[%s427 + $0x60] sm:$0xff]
      %v569 = vld [vmem:[%s427 + $0x68] sm:$0xff]
      %v570 = vld [vmem:[%s427 + $0x78] sm:$0xff]
      %v571 = vld [vmem:[%s427 + $0x80] sm:$0xff]
      %v572 = vld [vmem:[%s427 + $0x90] sm:$0xff]
      %v573 = vld [vmem:[%s427 + $0x98] sm:$0xff]
      %v574 = vld [vmem:[%s427 + $0xa8] sm:$0xff]
      %v575 = vld [vmem:[%s427 + $0xb0] sm:$0xff]
      %v576 = vld [vmem:[%s427 + $0xc0] sm:$0xff]
      %v577 = vld [vmem:[%s427 + $0xc8] sm:$0xff]
      %v578 = vld [vmem:[%s427 + $0xd8] sm:$0xff]
      %v579 = vld [vmem:[%s427 + $0xe0] sm:$0xff]
      %v580 = vld [vmem:[%s427 + $0xf0] sm:$0xff]
      %v581 = vld [vmem:[%s427 + $0xf8] sm:$0xff]
      %v582 = vld [vmem:[%s427 + $0x108] sm:$0xff]
      %v583 = vld [vmem:[%s427 + $0x110] sm:$0xff]
      %v584 = vld [vmem:[%s427 + $0x120] sm:$0xff]
      %v585 = vld [vmem:[%s427 + $0x128] sm:$0xff]
      %v586 = vld [vmem:[%s427 + $0x138] sm:$0xff]
      %v587 = vld [vmem:[%s427 + $0x140] sm:$0xff]
      %v588 = vld [vmem:[%s427 + $0x150] sm:$0xff]
      %v589 = vld [vmem:[%s427 + $0x158] sm:$0xff]
      %v590 = vld [vmem:[%s427 + $0x168] sm:$0xff]
      %v591 = vld [vmem:[%s427 + $0x170] sm:$0xff]
      %v592 = vld [vmem:[%s427 + $0x1] sm:$0xff]
      %v593 = vld [vmem:[%s427 + $0x9] sm:$0xff]
      %v594 = vld [vmem:[%s427 + $0x19] sm:$0xff]
      %v595 = vld [vmem:[%s427 + $0x21] sm:$0xff]
      %v596 = vld [vmem:[%s427 + $0x31] sm:$0xff]
      %v597 = vld [vmem:[%s427 + $0x39] sm:$0xff]
      %v598 = vld [vmem:[%s427 + $0x49] sm:$0xff]
      %v599 = vld [vmem:[%s427 + $0x51] sm:$0xff]
      %v600 = vld [vmem:[%s427 + $0x61] sm:$0xff]
      %v601 = vld [vmem:[%s427 + $0x69] sm:$0xff]
      %v602 = vld [vmem:[%s427 + $0x79] sm:$0xff]
      %v603 = vld [vmem:[%s427 + $0x81] sm:$0xff]
      %v604 = vld [vmem:[%s427 + $0x91] sm:$0xff]
      %v605 = vld [vmem:[%s427 + $0x99] sm:$0xff]
      %v606 = vld [vmem:[%s427 + $0xa9] sm:$0xff]
      %v607 = vld [vmem:[%s427 + $0xb1] sm:$0xff]
      %v608 = vld [vmem:[%s427 + $0xc1] sm:$0xff]
      %v609 = vld [vmem:[%s427 + $0xc9] sm:$0xff]
      %v610 = vld [vmem:[%s427 + $0xd9] sm:$0xff]
      %v611 = vld [vmem:[%s427 + $0xe1] sm:$0xff]
      %v612 = vld [vmem:[%s427 + $0xf1] sm:$0xff]
      %v613 = vld [vmem:[%s427 + $0xf9] sm:$0xff]
      %v614 = vld [vmem:[%s427 + $0x109] sm:$0xff]
      %v615 = vld [vmem:[%s427 + $0x111] sm:$0xff]
      %v616 = vld [vmem:[%s427 + $0x121] sm:$0xff]
      %v617 = vld [vmem:[%s427 + $0x129] sm:$0xff]
      %v618 = vld [vmem:[%s427 + $0x139] sm:$0xff]
      %v619 = vld [vmem:[%s427 + $0x141] sm:$0xff]
      %v620 = vld [vmem:[%s427 + $0x151] sm:$0xff]
      %v621 = vld [vmem:[%s427 + $0x159] sm:$0xff]
      %v622 = vld [vmem:[%s427 + $0x169] sm:$0xff]
      %v623 = vld [vmem:[%s427 + $0x171] sm:$0xff]
      %v624 = vld [vmem:[%s427 + $0x2] sm:$0xff]
      %v625 = vld [vmem:[%s427 + $0xa] sm:$0xff]
      %v626 = vld [vmem:[%s427 + $0x1a] sm:$0xff]
      %v627 = vld [vmem:[%s427 + $0x22] sm:$0xff]
      %v628 = vld [vmem:[%s427 + $0x32] sm:$0xff]
      %v629 = vld [vmem:[%s427 + $0x3a] sm:$0xff]
      %v630 = vld [vmem:[%s427 + $0x4a] sm:$0xff]
      %v631 = vld [vmem:[%s427 + $0x52] sm:$0xff]
      %v632 = vld [vmem:[%s427 + $0x62] sm:$0xff]
      %v633 = vld [vmem:[%s427 + $0x6a] sm:$0xff]
      %v634 = vld [vmem:[%s427 + $0x7a] sm:$0xff]
      %v635 = vld [vmem:[%s427 + $0x82] sm:$0xff]
      %v636 = vld [vmem:[%s427 + $0x92] sm:$0xff]
      %v637 = vld [vmem:[%s427 + $0x9a] sm:$0xff]
      %v638 = vld [vmem:[%s427 + $0xaa] sm:$0xff]
      %v639 = vld [vmem:[%s427 + $0xb2] sm:$0xff]
      %v640 = vld [vmem:[%s427 + $0xc2] sm:$0xff]
      %v641 = vld [vmem:[%s427 + $0xca] sm:$0xff]
      %v642 = vld [vmem:[%s427 + $0xda] sm:$0xff]
      %v643 = vld [vmem:[%s427 + $0xe2] sm:$0xff]
      %v644 = vld [vmem:[%s427 + $0xf2] sm:$0xff]
      %v645 = vld [vmem:[%s427 + $0xfa] sm:$0xff]
      %v646 = vld [vmem:[%s427 + $0x10a] sm:$0xff]
      %v647 = vld [vmem:[%s427 + $0x112] sm:$0xff]
      %v648 = vld [vmem:[%s427 + $0x122] sm:$0xff]
      %v649 = vld [vmem:[%s427 + $0x12a] sm:$0xff]
      %v650 = vld [vmem:[%s427 + $0x13a] sm:$0xff]
      %v651 = vld [vmem:[%s427 + $0x142] sm:$0xff]
      %v652 = vld [vmem:[%s427 + $0x152] sm:$0xff]
      %v653 = vld [vmem:[%s427 + $0x15a] sm:$0xff]
      %v654 = vld [vmem:[%s427 + $0x16a] sm:$0xff]
      %v655 = vld [vmem:[%s427 + $0x172] sm:$0xff]
      %s656 = scalar_lea.vmem [#allocation2], 48
      %v657 = vld [vmem:[%s656] sm:$0xff]
      %v658 = vld [vmem:[%s656 + $0x8] sm:$0xff]
      %v659 = vld [vmem:[%s656 + $0x18] sm:$0xff]
      %v660 = vld [vmem:[%s656 + $0x20] sm:$0xff]
      %v661 = vld [vmem:[%s656 + $0x30] sm:$0xff]
      %v662 = vld [vmem:[%s656 + $0x38] sm:$0xff]
      %v663 = vld [vmem:[%s656 + $0x48] sm:$0xff]
      %v664 = vld [vmem:[%s656 + $0x50] sm:$0xff]
      %v665 = vld [vmem:[%s656 + $0x60] sm:$0xff]
      %v666 = vld [vmem:[%s656 + $0x68] sm:$0xff]
      %v667 = vld [vmem:[%s656 + $0x78] sm:$0xff]
      %v668 = vld [vmem:[%s656 + $0x80] sm:$0xff]
      %v669 = vld [vmem:[%s656 + $0x90] sm:$0xff]
      %v670 = vld [vmem:[%s656 + $0x98] sm:$0xff]
      %v671 = vld [vmem:[%s656 + $0xa8] sm:$0xff]
      %v672 = vld [vmem:[%s656 + $0xb0] sm:$0xff]
      %v673 = vld [vmem:[%s656 + $0xc0] sm:$0xff]
      %v674 = vld [vmem:[%s656 + $0xc8] sm:$0xff]
      %v675 = vld [vmem:[%s656 + $0xd8] sm:$0xff]
      %v676 = vld [vmem:[%s656 + $0xe0] sm:$0xff]
      %v677 = vld [vmem:[%s656 + $0xf0] sm:$0xff]
      %v678 = vld [vmem:[%s656 + $0xf8] sm:$0xff]
      %v679 = vld [vmem:[%s656 + $0x108] sm:$0xff]
      %v680 = vld [vmem:[%s656 + $0x110] sm:$0xff]
      %v681 = vld [vmem:[%s656 + $0x120] sm:$0xff]
      %v682 = vld [vmem:[%s656 + $0x128] sm:$0xff]
      %v683 = vld [vmem:[%s656 + $0x138] sm:$0xff]
      %v684 = vld [vmem:[%s656 + $0x140] sm:$0xff]
      %v685 = vld [vmem:[%s656 + $0x150] sm:$0xff]
      %v686 = vld [vmem:[%s656 + $0x158] sm:$0xff]
      %v687 = vld [vmem:[%s656 + $0x168] sm:$0xff]
      %v688 = vld [vmem:[%s656 + $0x170] sm:$0xff]
      %v689 = vld [vmem:[%s656 + $0x1] sm:$0xff]
      %v690 = vld [vmem:[%s656 + $0x9] sm:$0xff]
      %v691 = vld [vmem:[%s656 + $0x19] sm:$0xff]
      %v692 = vld [vmem:[%s656 + $0x21] sm:$0xff]
      %v693 = vld [vmem:[%s656 + $0x31] sm:$0xff]
      %v694 = vld [vmem:[%s656 + $0x39] sm:$0xff]
      %v695 = vld [vmem:[%s656 + $0x49] sm:$0xff]
      %v696 = vld [vmem:[%s656 + $0x51] sm:$0xff]
      %v697 = vld [vmem:[%s656 + $0x61] sm:$0xff]
      %v698 = vld [vmem:[%s656 + $0x69] sm:$0xff]
      %v699 = vld [vmem:[%s656 + $0x79] sm:$0xff]
      %v700 = vld [vmem:[%s656 + $0x81] sm:$0xff]
      %v701 = vld [vmem:[%s656 + $0x91] sm:$0xff]
      %v702 = vld [vmem:[%s656 + $0x99] sm:$0xff]
      %v703 = vld [vmem:[%s656 + $0xa9] sm:$0xff]
      %v704 = vld [vmem:[%s656 + $0xb1] sm:$0xff]
      %v705 = vld [vmem:[%s656 + $0xc1] sm:$0xff]
      %v706 = vld [vmem:[%s656 + $0xc9] sm:$0xff]
      %v707 = vld [vmem:[%s656 + $0xd9] sm:$0xff]
      %v708 = vld [vmem:[%s656 + $0xe1] sm:$0xff]
      %v709 = vld [vmem:[%s656 + $0xf1] sm:$0xff]
      %v710 = vld [vmem:[%s656 + $0xf9] sm:$0xff]
      %v711 = vld [vmem:[%s656 + $0x109] sm:$0xff]
      %v712 = vld [vmem:[%s656 + $0x111] sm:$0xff]
      %v713 = vld [vmem:[%s656 + $0x121] sm:$0xff]
      %v714 = vld [vmem:[%s656 + $0x129] sm:$0xff]
      %v715 = vld [vmem:[%s656 + $0x139] sm:$0xff]
      %v716 = vld [vmem:[%s656 + $0x141] sm:$0xff]
      %v717 = vld [vmem:[%s656 + $0x151] sm:$0xff]
      %v718 = vld [vmem:[%s656 + $0x159] sm:$0xff]
      %v719 = vld [vmem:[%s656 + $0x169] sm:$0xff]
      %v720 = vld [vmem:[%s656 + $0x171] sm:$0xff]
      %v721 = vld [vmem:[%s656 + $0x2] sm:$0xff]
      %v722 = vld [vmem:[%s656 + $0xa] sm:$0xff]
      %v723 = vld [vmem:[%s656 + $0x1a] sm:$0xff]
      %v724 = vld [vmem:[%s656 + $0x22] sm:$0xff]
      %v725 = vld [vmem:[%s656 + $0x32] sm:$0xff]
      %v726 = vld [vmem:[%s656 + $0x3a] sm:$0xff]
      %v727 = vld [vmem:[%s656 + $0x4a] sm:$0xff]
      %v728 = vld [vmem:[%s656 + $0x52] sm:$0xff]
      %v729 = vld [vmem:[%s656 + $0x62] sm:$0xff]
      %v730 = vld [vmem:[%s656 + $0x6a] sm:$0xff]
      %v731 = vld [vmem:[%s656 + $0x7a] sm:$0xff]
      %v732 = vld [vmem:[%s656 + $0x82] sm:$0xff]
      %v733 = vld [vmem:[%s656 + $0x92] sm:$0xff]
      %v734 = vld [vmem:[%s656 + $0x9a] sm:$0xff]
      %v735 = vld [vmem:[%s656 + $0xaa] sm:$0xff]
      %v736 = vld [vmem:[%s656 + $0xb2] sm:$0xff]
      %v737 = vld [vmem:[%s656 + $0xc2] sm:$0xff]
      %v738 = vld [vmem:[%s656 + $0xca] sm:$0xff]
      %v739 = vld [vmem:[%s656 + $0xda] sm:$0xff]
      %v740 = vld [vmem:[%s656 + $0xe2] sm:$0xff]
      %v741 = vld [vmem:[%s656 + $0xf2] sm:$0xff]
      %v742 = vld [vmem:[%s656 + $0xfa] sm:$0xff]
      %v743 = vld [vmem:[%s656 + $0x10a] sm:$0xff]
      %v744 = vld [vmem:[%s656 + $0x112] sm:$0xff]
      %v745 = vld [vmem:[%s656 + $0x122] sm:$0xff]
      %v746 = vld [vmem:[%s656 + $0x12a] sm:$0xff]
      %v747 = vld [vmem:[%s656 + $0x13a] sm:$0xff]
      %v748 = vld [vmem:[%s656 + $0x142] sm:$0xff]
      %v749 = vld [vmem:[%s656 + $0x152] sm:$0xff]
      %v750 = vld [vmem:[%s656 + $0x15a] sm:$0xff]
      %v751 = vld [vmem:[%s656 + $0x16a] sm:$0xff]
      %v752 = vld [vmem:[%s656 + $0x172] sm:$0xff]
      %785 = vrot.lane.b32.xlu0 %v496, 32
      %v786 = vpop.permute.xlu0 %785
      %787 = vrot.lane.b32.xlu0 %v497, 32
      %v788 = vpop.permute.xlu0 %787
      %789 = vrot.lane.b32.xlu0 %v498, 32
      %v790 = vpop.permute.xlu0 %789
      %791 = vrot.lane.b32.xlu0 %v499, 32
      %v792 = vpop.permute.xlu0 %791
      %793 = vrot.lane.b32.xlu0 %v500, 32
      %v794 = vpop.permute.xlu0 %793
      %795 = vrot.lane.b32.xlu0 %v501, 32
      %v796 = vpop.permute.xlu0 %795
      %797 = vrot.lane.b32.xlu0 %v502, 32
      %v798 = vpop.permute.xlu0 %797
      %799 = vrot.lane.b32.xlu0 %v503, 32
      %v800 = vpop.permute.xlu0 %799
      %801 = vrot.lane.b32.xlu0 %v504, 32
      %v802 = vpop.permute.xlu0 %801
      %803 = vrot.lane.b32.xlu0 %v505, 32
      %v804 = vpop.permute.xlu0 %803
      %805 = vrot.lane.b32.xlu0 %v506, 32
      %v806 = vpop.permute.xlu0 %805
      %807 = vrot.lane.b32.xlu0 %v507, 32
      %v808 = vpop.permute.xlu0 %807
      %809 = vrot.lane.b32.xlu0 %v508, 32
      %v810 = vpop.permute.xlu0 %809
      %811 = vrot.lane.b32.xlu0 %v509, 32
      %v812 = vpop.permute.xlu0 %811
      %813 = vrot.lane.b32.xlu0 %v510, 32
      %v814 = vpop.permute.xlu0 %813
      %815 = vrot.lane.b32.xlu0 %v511, 32
      %v816 = vpop.permute.xlu0 %815
      %817 = vrot.lane.b32.xlu0 %v512, 32
      %v818 = vpop.permute.xlu0 %817
      %819 = vrot.lane.b32.xlu0 %v513, 32
      %v820 = vpop.permute.xlu0 %819
      %821 = vrot.lane.b32.xlu0 %v514, 32
      %v822 = vpop.permute.xlu0 %821
      %823 = vrot.lane.b32.xlu0 %v515, 32
      %v824 = vpop.permute.xlu0 %823
      %825 = vrot.lane.b32.xlu0 %v516, 32
      %v826 = vpop.permute.xlu0 %825
      %827 = vrot.lane.b32.xlu0 %v517, 32
      %v828 = vpop.permute.xlu0 %827
      %829 = vrot.lane.b32.xlu0 %v518, 32
      %v830 = vpop.permute.xlu0 %829
      %831 = vrot.lane.b32.xlu0 %v519, 32
      %v832 = vpop.permute.xlu0 %831
      %833 = vrot.lane.b32.xlu0 %v520, 32
      %v834 = vpop.permute.xlu0 %833
      %835 = vrot.lane.b32.xlu0 %v521, 32
      %v836 = vpop.permute.xlu0 %835
      %837 = vrot.lane.b32.xlu0 %v522, 32
      %v838 = vpop.permute.xlu0 %837
      %839 = vrot.lane.b32.xlu0 %v523, 32
      %v840 = vpop.permute.xlu0 %839
      %841 = vrot.lane.b32.xlu0 %v524, 32
      %v842 = vpop.permute.xlu0 %841
      %843 = vrot.lane.b32.xlu0 %v525, 32
      %v844 = vpop.permute.xlu0 %843
      %845 = vrot.lane.b32.xlu0 %v526, 32
      %v846 = vpop.permute.xlu0 %845
      %847 = vrot.lane.b32.xlu0 %v527, 32
      %v848 = vpop.permute.xlu0 %847
      %913 = vrot.lane.b32.xlu0 %v528, 64
      %v914 = vpop.permute.xlu0 %913
      %915 = vrot.lane.b32.xlu0 %v529, 64
      %v916 = vpop.permute.xlu0 %915
      %917 = vrot.lane.b32.xlu0 %v530, 64
      %v918 = vpop.permute.xlu0 %917
      %919 = vrot.lane.b32.xlu0 %v531, 64
      %v920 = vpop.permute.xlu0 %919
      %921 = vrot.lane.b32.xlu0 %v532, 64
      %v922 = vpop.permute.xlu0 %921
      %923 = vrot.lane.b32.xlu0 %v533, 64
      %v924 = vpop.permute.xlu0 %923
      %925 = vrot.lane.b32.xlu0 %v534, 64
      %v926 = vpop.permute.xlu0 %925
      %927 = vrot.lane.b32.xlu0 %v535, 64
      %v928 = vpop.permute.xlu0 %927
      %929 = vrot.lane.b32.xlu0 %v536, 64
      %v930 = vpop.permute.xlu0 %929
      %931 = vrot.lane.b32.xlu0 %v537, 64
      %v932 = vpop.permute.xlu0 %931
      %933 = vrot.lane.b32.xlu0 %v538, 64
      %v934 = vpop.permute.xlu0 %933
      %935 = vrot.lane.b32.xlu0 %v539, 64
      %v936 = vpop.permute.xlu0 %935
      %937 = vrot.lane.b32.xlu0 %v540, 64
      %v938 = vpop.permute.xlu0 %937
      %939 = vrot.lane.b32.xlu0 %v541, 64
      %v940 = vpop.permute.xlu0 %939
      %941 = vrot.lane.b32.xlu0 %v542, 64
      %v942 = vpop.permute.xlu0 %941
      %943 = vrot.lane.b32.xlu0 %v543, 64
      %v944 = vpop.permute.xlu0 %943
      %945 = vrot.lane.b32.xlu0 %v544, 64
      %v946 = vpop.permute.xlu0 %945
      %947 = vrot.lane.b32.xlu0 %v545, 64
      %v948 = vpop.permute.xlu0 %947
      %949 = vrot.lane.b32.xlu0 %v546, 64
      %v950 = vpop.permute.xlu0 %949
      %951 = vrot.lane.b32.xlu0 %v547, 64
      %v952 = vpop.permute.xlu0 %951
      %953 = vrot.lane.b32.xlu0 %v548, 64
      %v954 = vpop.permute.xlu0 %953
      %955 = vrot.lane.b32.xlu0 %v549, 64
      %v956 = vpop.permute.xlu0 %955
      %957 = vrot.lane.b32.xlu0 %v550, 64
      %v958 = vpop.permute.xlu0 %957
      %959 = vrot.lane.b32.xlu0 %v551, 64
      %v960 = vpop.permute.xlu0 %959
      %961 = vrot.lane.b32.xlu0 %v552, 64
      %v962 = vpop.permute.xlu0 %961
      %963 = vrot.lane.b32.xlu0 %v553, 64
      %v964 = vpop.permute.xlu0 %963
      %965 = vrot.lane.b32.xlu0 %v554, 64
      %v966 = vpop.permute.xlu0 %965
      %967 = vrot.lane.b32.xlu0 %v555, 64
      %v968 = vpop.permute.xlu0 %967
      %969 = vrot.lane.b32.xlu0 %v556, 64
      %v970 = vpop.permute.xlu0 %969
      %971 = vrot.lane.b32.xlu0 %v557, 64
      %v972 = vpop.permute.xlu0 %971
      %973 = vrot.lane.b32.xlu0 %v558, 64
      %v974 = vpop.permute.xlu0 %973
      %975 = vrot.lane.b32.xlu0 %v559, 64
      %v976 = vpop.permute.xlu0 %975
      %1041 = vrot.lane.b32.xlu0 %v560, 96
      %v1042 = vpop.permute.xlu0 %1041
      %1043 = vrot.lane.b32.xlu0 %v561, 96
      %v1044 = vpop.permute.xlu0 %1043
      %1045 = vrot.lane.b32.xlu0 %v562, 96
      %v1046 = vpop.permute.xlu0 %1045
      %1047 = vrot.lane.b32.xlu0 %v563, 96
      %v1048 = vpop.permute.xlu0 %1047
      %1049 = vrot.lane.b32.xlu0 %v564, 96
      %v1050 = vpop.permute.xlu0 %1049
      %1051 = vrot.lane.b32.xlu0 %v565, 96
      %v1052 = vpop.permute.xlu0 %1051
      %1053 = vrot.lane.b32.xlu0 %v566, 96
      %v1054 = vpop.permute.xlu0 %1053
      %1055 = vrot.lane.b32.xlu0 %v567, 96
      %v1056 = vpop.permute.xlu0 %1055
      %1057 = vrot.lane.b32.xlu0 %v568, 96
      %v1058 = vpop.permute.xlu0 %1057
      %1059 = vrot.lane.b32.xlu0 %v569, 96
      %v1060 = vpop.permute.xlu0 %1059
      %1061 = vrot.lane.b32.xlu0 %v570, 96
      %v1062 = vpop.permute.xlu0 %1061
      %1063 = vrot.lane.b32.xlu0 %v571, 96
      %v1064 = vpop.permute.xlu0 %1063
      %1065 = vrot.lane.b32.xlu0 %v572, 96
      %v1066 = vpop.permute.xlu0 %1065
      %1067 = vrot.lane.b32.xlu0 %v573, 96
      %v1068 = vpop.permute.xlu0 %1067
      %1069 = vrot.lane.b32.xlu0 %v574, 96
      %v1070 = vpop.permute.xlu0 %1069
      %1071 = vrot.lane.b32.xlu0 %v575, 96
      %v1072 = vpop.permute.xlu0 %1071
      %1073 = vrot.lane.b32.xlu0 %v576, 96
      %v1074 = vpop.permute.xlu0 %1073
      %1075 = vrot.lane.b32.xlu0 %v577, 96
      %v1076 = vpop.permute.xlu0 %1075
      %1077 = vrot.lane.b32.xlu0 %v578, 96
      %v1078 = vpop.permute.xlu0 %1077
      %1079 = vrot.lane.b32.xlu0 %v579, 96
      %v1080 = vpop.permute.xlu0 %1079
      %1081 = vrot.lane.b32.xlu0 %v580, 96
      %v1082 = vpop.permute.xlu0 %1081
      %1083 = vrot.lane.b32.xlu0 %v581, 96
      %v1084 = vpop.permute.xlu0 %1083
      %1085 = vrot.lane.b32.xlu0 %v582, 96
      %v1086 = vpop.permute.xlu0 %1085
      %1087 = vrot.lane.b32.xlu0 %v583, 96
      %v1088 = vpop.permute.xlu0 %1087
      %1089 = vrot.lane.b32.xlu0 %v584, 96
      %v1090 = vpop.permute.xlu0 %1089
      %1091 = vrot.lane.b32.xlu0 %v585, 96
      %v1092 = vpop.permute.xlu0 %1091
      %1093 = vrot.lane.b32.xlu0 %v586, 96
      %v1094 = vpop.permute.xlu0 %1093
      %1095 = vrot.lane.b32.xlu0 %v587, 96
      %v1096 = vpop.permute.xlu0 %1095
      %1097 = vrot.lane.b32.xlu0 %v588, 96
      %v1098 = vpop.permute.xlu0 %1097
      %1099 = vrot.lane.b32.xlu0 %v589, 96
      %v1100 = vpop.permute.xlu0 %1099
      %1101 = vrot.lane.b32.xlu0 %v590, 96
      %v1102 = vpop.permute.xlu0 %1101
      %1103 = vrot.lane.b32.xlu0 %v591, 96
      %v1104 = vpop.permute.xlu0 %1103
      %1169 = vrot.lane.b32.xlu0 %v624, 32
      %v1170 = vpop.permute.xlu0 %1169
      %1171 = vrot.lane.b32.xlu0 %v625, 32
      %v1172 = vpop.permute.xlu0 %1171
      %1173 = vrot.lane.b32.xlu0 %v626, 32
      %v1174 = vpop.permute.xlu0 %1173
      %1175 = vrot.lane.b32.xlu0 %v627, 32
      %v1176 = vpop.permute.xlu0 %1175
      %1177 = vrot.lane.b32.xlu0 %v628, 32
      %v1178 = vpop.permute.xlu0 %1177
      %1179 = vrot.lane.b32.xlu0 %v629, 32
      %v1180 = vpop.permute.xlu0 %1179
      %1181 = vrot.lane.b32.xlu0 %v630, 32
      %v1182 = vpop.permute.xlu0 %1181
      %1183 = vrot.lane.b32.xlu0 %v631, 32
      %v1184 = vpop.permute.xlu0 %1183
      %1185 = vrot.lane.b32.xlu0 %v632, 32
      %v1186 = vpop.permute.xlu0 %1185
      %1187 = vrot.lane.b32.xlu0 %v633, 32
      %v1188 = vpop.permute.xlu0 %1187
      %1189 = vrot.lane.b32.xlu0 %v634, 32
      %v1190 = vpop.permute.xlu0 %1189
      %1191 = vrot.lane.b32.xlu0 %v635, 32
      %v1192 = vpop.permute.xlu0 %1191
      %1193 = vrot.lane.b32.xlu0 %v636, 32
      %v1194 = vpop.permute.xlu0 %1193
      %1195 = vrot.lane.b32.xlu0 %v637, 32
      %v1196 = vpop.permute.xlu0 %1195
      %1197 = vrot.lane.b32.xlu0 %v638, 32
      %v1198 = vpop.permute.xlu0 %1197
      %1199 = vrot.lane.b32.xlu0 %v639, 32
      %v1200 = vpop.permute.xlu0 %1199
      %1201 = vrot.lane.b32.xlu0 %v640, 32
      %v1202 = vpop.permute.xlu0 %1201
      %1203 = vrot.lane.b32.xlu0 %v641, 32
      %v1204 = vpop.permute.xlu0 %1203
      %1205 = vrot.lane.b32.xlu0 %v642, 32
      %v1206 = vpop.permute.xlu0 %1205
      %1207 = vrot.lane.b32.xlu0 %v643, 32
      %v1208 = vpop.permute.xlu0 %1207
      %1209 = vrot.lane.b32.xlu0 %v644, 32
      %v1210 = vpop.permute.xlu0 %1209
      %1211 = vrot.lane.b32.xlu0 %v645, 32
      %v1212 = vpop.permute.xlu0 %1211
      %1213 = vrot.lane.b32.xlu0 %v646, 32
      %v1214 = vpop.permute.xlu0 %1213
      %1215 = vrot.lane.b32.xlu0 %v647, 32
      %v1216 = vpop.permute.xlu0 %1215
      %1217 = vrot.lane.b32.xlu0 %v648, 32
      %v1218 = vpop.permute.xlu0 %1217
      %1219 = vrot.lane.b32.xlu0 %v649, 32
      %v1220 = vpop.permute.xlu0 %1219
      %1221 = vrot.lane.b32.xlu0 %v650, 32
      %v1222 = vpop.permute.xlu0 %1221
      %1223 = vrot.lane.b32.xlu0 %v651, 32
      %v1224 = vpop.permute.xlu0 %1223
      %1225 = vrot.lane.b32.xlu0 %v652, 32
      %v1226 = vpop.permute.xlu0 %1225
      %1227 = vrot.lane.b32.xlu0 %v653, 32
      %v1228 = vpop.permute.xlu0 %1227
      %1229 = vrot.lane.b32.xlu0 %v654, 32
      %v1230 = vpop.permute.xlu0 %1229
      %1231 = vrot.lane.b32.xlu0 %v655, 32
      %v1232 = vpop.permute.xlu0 %1231
      %1297 = vrot.lane.b32.xlu0 %v657, 64
      %v1298 = vpop.permute.xlu0 %1297
      %1299 = vrot.lane.b32.xlu0 %v658, 64
      %v1300 = vpop.permute.xlu0 %1299
      %1301 = vrot.lane.b32.xlu0 %v659, 64
      %v1302 = vpop.permute.xlu0 %1301
      %1303 = vrot.lane.b32.xlu0 %v660, 64
      %v1304 = vpop.permute.xlu0 %1303
      %1305 = vrot.lane.b32.xlu0 %v661, 64
      %v1306 = vpop.permute.xlu0 %1305
      %1307 = vrot.lane.b32.xlu0 %v662, 64
      %v1308 = vpop.permute.xlu0 %1307
      %1309 = vrot.lane.b32.xlu0 %v663, 64
      %v1310 = vpop.permute.xlu0 %1309
      %1311 = vrot.lane.b32.xlu0 %v664, 64
      %v1312 = vpop.permute.xlu0 %1311
      %1313 = vrot.lane.b32.xlu0 %v665, 64
      %v1314 = vpop.permute.xlu0 %1313
      %1315 = vrot.lane.b32.xlu0 %v666, 64
      %v1316 = vpop.permute.xlu0 %1315
      %1317 = vrot.lane.b32.xlu0 %v667, 64
      %v1318 = vpop.permute.xlu0 %1317
      %1319 = vrot.lane.b32.xlu0 %v668, 64
      %v1320 = vpop.permute.xlu0 %1319
      %1321 = vrot.lane.b32.xlu0 %v669, 64
      %v1322 = vpop.permute.xlu0 %1321
      %1323 = vrot.lane.b32.xlu0 %v670, 64
      %v1324 = vpop.permute.xlu0 %1323
      %1325 = vrot.lane.b32.xlu0 %v671, 64
      %v1326 = vpop.permute.xlu0 %1325
      %1327 = vrot.lane.b32.xlu0 %v672, 64
      %v1328 = vpop.permute.xlu0 %1327
      %1329 = vrot.lane.b32.xlu0 %v673, 64
      %v1330 = vpop.permute.xlu0 %1329
      %1331 = vrot.lane.b32.xlu0 %v674, 64
      %v1332 = vpop.permute.xlu0 %1331
      %1333 = vrot.lane.b32.xlu0 %v675, 64
      %v1334 = vpop.permute.xlu0 %1333
      %1335 = vrot.lane.b32.xlu0 %v676, 64
      %v1336 = vpop.permute.xlu0 %1335
      %1337 = vrot.lane.b32.xlu0 %v677, 64
      %v1338 = vpop.permute.xlu0 %1337
      %1339 = vrot.lane.b32.xlu0 %v678, 64
      %v1340 = vpop.permute.xlu0 %1339
      %1341 = vrot.lane.b32.xlu0 %v679, 64
      %v1342 = vpop.permute.xlu0 %1341
      %1343 = vrot.lane.b32.xlu0 %v680, 64
      %v1344 = vpop.permute.xlu0 %1343
      %1345 = vrot.lane.b32.xlu0 %v681, 64
      %v1346 = vpop.permute.xlu0 %1345
      %1347 = vrot.lane.b32.xlu0 %v682, 64
      %v1348 = vpop.permute.xlu0 %1347
      %1349 = vrot.lane.b32.xlu0 %v683, 64
      %v1350 = vpop.permute.xlu0 %1349
      %1351 = vrot.lane.b32.xlu0 %v684, 64
      %v1352 = vpop.permute.xlu0 %1351
      %1353 = vrot.lane.b32.xlu0 %v685, 64
      %v1354 = vpop.permute.xlu0 %1353
      %1355 = vrot.lane.b32.xlu0 %v686, 64
      %v1356 = vpop.permute.xlu0 %1355
      %1357 = vrot.lane.b32.xlu0 %v687, 64
      %v1358 = vpop.permute.xlu0 %1357
      %1359 = vrot.lane.b32.xlu0 %v688, 64
      %v1360 = vpop.permute.xlu0 %1359
      %1425 = vrot.lane.b32.xlu0 %v689, 96
      %v1426 = vpop.permute.xlu0 %1425
      %1427 = vrot.lane.b32.xlu0 %v690, 96
      %v1428 = vpop.permute.xlu0 %1427
      %1429 = vrot.lane.b32.xlu0 %v691, 96
      %v1430 = vpop.permute.xlu0 %1429
      %1431 = vrot.lane.b32.xlu0 %v692, 96
      %v1432 = vpop.permute.xlu0 %1431
      %1433 = vrot.lane.b32.xlu0 %v693, 96
      %v1434 = vpop.permute.xlu0 %1433
      %1435 = vrot.lane.b32.xlu0 %v694, 96
      %v1436 = vpop.permute.xlu0 %1435
      %1437 = vrot.lane.b32.xlu0 %v695, 96
      %v1438 = vpop.permute.xlu0 %1437
      %1439 = vrot.lane.b32.xlu0 %v696, 96
      %v1440 = vpop.permute.xlu0 %1439
      %1441 = vrot.lane.b32.xlu0 %v697, 96
      %v1442 = vpop.permute.xlu0 %1441
      %1443 = vrot.lane.b32.xlu0 %v698, 96
      %v1444 = vpop.permute.xlu0 %1443
      %1445 = vrot.lane.b32.xlu0 %v699, 96
      %v1446 = vpop.permute.xlu0 %1445
      %1447 = vrot.lane.b32.xlu0 %v700, 96
      %v1448 = vpop.permute.xlu0 %1447
      %1449 = vrot.lane.b32.xlu0 %v701, 96
      %v1450 = vpop.permute.xlu0 %1449
      %1451 = vrot.lane.b32.xlu0 %v702, 96
      %v1452 = vpop.permute.xlu0 %1451
      %1453 = vrot.lane.b32.xlu0 %v703, 96
      %v1454 = vpop.permute.xlu0 %1453
      %1455 = vrot.lane.b32.xlu0 %v704, 96
      %v1456 = vpop.permute.xlu0 %1455
      %1457 = vrot.lane.b32.xlu0 %v705, 96
      %v1458 = vpop.permute.xlu0 %1457
      %1459 = vrot.lane.b32.xlu0 %v706, 96
      %v1460 = vpop.permute.xlu0 %1459
      %1461 = vrot.lane.b32.xlu0 %v707, 96
      %v1462 = vpop.permute.xlu0 %1461
      %1463 = vrot.lane.b32.xlu0 %v708, 96
      %v1464 = vpop.permute.xlu0 %1463
      %1465 = vrot.lane.b32.xlu0 %v709, 96
      %v1466 = vpop.permute.xlu0 %1465
      %1467 = vrot.lane.b32.xlu0 %v710, 96
      %v1468 = vpop.permute.xlu0 %1467
      %1469 = vrot.lane.b32.xlu0 %v711, 96
      %v1470 = vpop.permute.xlu0 %1469
      %1471 = vrot.lane.b32.xlu0 %v712, 96
      %v1472 = vpop.permute.xlu0 %1471
      %1473 = vrot.lane.b32.xlu0 %v713, 96
      %v1474 = vpop.permute.xlu0 %1473
      %1475 = vrot.lane.b32.xlu0 %v714, 96
      %v1476 = vpop.permute.xlu0 %1475
      %1477 = vrot.lane.b32.xlu0 %v715, 96
      %v1478 = vpop.permute.xlu0 %1477
      %1479 = vrot.lane.b32.xlu0 %v716, 96
      %v1480 = vpop.permute.xlu0 %1479
      %1481 = vrot.lane.b32.xlu0 %v717, 96
      %v1482 = vpop.permute.xlu0 %1481
      %1483 = vrot.lane.b32.xlu0 %v718, 96
      %v1484 = vpop.permute.xlu0 %1483
      %1485 = vrot.lane.b32.xlu0 %v719, 96
      %v1486 = vpop.permute.xlu0 %1485
      %1487 = vrot.lane.b32.xlu0 %v720, 96
      %v1488 = vpop.permute.xlu0 %1487
      %v1521 = vsel %vm307, %v464, %v786
      %v1522 = vsel %vm307, %v465, %v788
      %v1523 = vsel %vm307, %v466, %v790
      %v1524 = vsel %vm307, %v467, %v792
      %v1525 = vsel %vm307, %v468, %v794
      %v1526 = vsel %vm307, %v469, %v796
      %v1527 = vsel %vm307, %v470, %v798
      %v1528 = vsel %vm307, %v471, %v800
      %v1529 = vsel %vm307, %v472, %v802
      %v1530 = vsel %vm307, %v473, %v804
      %v1531 = vsel %vm307, %v474, %v806
      %v1532 = vsel %vm307, %v475, %v808
      %v1533 = vsel %vm307, %v476, %v810
      %v1534 = vsel %vm307, %v477, %v812
      %v1535 = vsel %vm307, %v478, %v814
      %v1536 = vsel %vm307, %v479, %v816
      %v1537 = vsel %vm307, %v480, %v818
      %v1538 = vsel %vm307, %v481, %v820
      %v1539 = vsel %vm307, %v482, %v822
      %v1540 = vsel %vm307, %v483, %v824
      %v1541 = vsel %vm307, %v484, %v826
      %v1542 = vsel %vm307, %v485, %v828
      %v1543 = vsel %vm307, %v486, %v830
      %v1544 = vsel %vm307, %v487, %v832
      %v1545 = vsel %vm307, %v488, %v834
      %v1546 = vsel %vm307, %v489, %v836
      %v1547 = vsel %vm307, %v490, %v838
      %v1548 = vsel %vm307, %v491, %v840
      %v1549 = vsel %vm307, %v492, %v842
      %v1550 = vsel %vm307, %v493, %v844
      %v1551 = vsel %vm307, %v494, %v846
      %v1552 = vsel %vm307, %v495, %v848
      %vm1553 = vcmask 523264
      %v1554 = vsel %vm1553, %v1521, %v914
      %v1555 = vsel %vm1553, %v1522, %v916
      %v1556 = vsel %vm1553, %v1523, %v918
      %v1557 = vsel %vm1553, %v1524, %v920
      %v1558 = vsel %vm1553, %v1525, %v922
      %v1559 = vsel %vm1553, %v1526, %v924
      %v1560 = vsel %vm1553, %v1527, %v926
      %v1561 = vsel %vm1553, %v1528, %v928
      %v1562 = vsel %vm1553, %v1529, %v930
      %v1563 = vsel %vm1553, %v1530, %v932
      %v1564 = vsel %vm1553, %v1531, %v934
      %v1565 = vsel %vm1553, %v1532, %v936
      %v1566 = vsel %vm1553, %v1533, %v938
      %v1567 = vsel %vm1553, %v1534, %v940
      %v1568 = vsel %vm1553, %v1535, %v942
      %v1569 = vsel %vm1553, %v1536, %v944
      %v1570 = vsel %vm1553, %v1537, %v946
      %v1571 = vsel %vm1553, %v1538, %v948
      %v1572 = vsel %vm1553, %v1539, %v950
      %v1573 = vsel %vm1553, %v1540, %v952
      %v1574 = vsel %vm1553, %v1541, %v954
      %v1575 = vsel %vm1553, %v1542, %v956
      %v1576 = vsel %vm1553, %v1543, %v958
      %v1577 = vsel %vm1553, %v1544, %v960
      %v1578 = vsel %vm1553, %v1545, %v962
      %v1579 = vsel %vm1553, %v1546, %v964
      %v1580 = vsel %vm1553, %v1547, %v966
      %v1581 = vsel %vm1553, %v1548, %v968
      %v1582 = vsel %vm1553, %v1549, %v970
      %v1583 = vsel %vm1553, %v1550, %v972
      %v1584 = vsel %vm1553, %v1551, %v974
      %v1585 = vsel %vm1553, %v1552, %v976
      %vm1586 = vcmask 785408
      %v1587 = vsel %vm1586, %v1554, %v1042
      %v1588 = vsel %vm1586, %v1555, %v1044
      %v1589 = vsel %vm1586, %v1556, %v1046
      %v1590 = vsel %vm1586, %v1557, %v1048
      %v1591 = vsel %vm1586, %v1558, %v1050
      %v1592 = vsel %vm1586, %v1559, %v1052
      %v1593 = vsel %vm1586, %v1560, %v1054
      %v1594 = vsel %vm1586, %v1561, %v1056
      %v1595 = vsel %vm1586, %v1562, %v1058
      %v1596 = vsel %vm1586, %v1563, %v1060
      %v1597 = vsel %vm1586, %v1564, %v1062
      %v1598 = vsel %vm1586, %v1565, %v1064
      %v1599 = vsel %vm1586, %v1566, %v1066
      %v1600 = vsel %vm1586, %v1567, %v1068
      %v1601 = vsel %vm1586, %v1568, %v1070
      %v1602 = vsel %vm1586, %v1569, %v1072
      %v1603 = vsel %vm1586, %v1570, %v1074
      %v1604 = vsel %vm1586, %v1571, %v1076
      %v1605 = vsel %vm1586, %v1572, %v1078
      %v1606 = vsel %vm1586, %v1573, %v1080
      %v1607 = vsel %vm1586, %v1574, %v1082
      %v1608 = vsel %vm1586, %v1575, %v1084
      %v1609 = vsel %vm1586, %v1576, %v1086
      %v1610 = vsel %vm1586, %v1577, %v1088
      %v1611 = vsel %vm1586, %v1578, %v1090
      %v1612 = vsel %vm1586, %v1579, %v1092
      %v1613 = vsel %vm1586, %v1580, %v1094
      %v1614 = vsel %vm1586, %v1581, %v1096
      %v1615 = vsel %vm1586, %v1582, %v1098
      %v1616 = vsel %vm1586, %v1583, %v1100
      %v1617 = vsel %vm1586, %v1584, %v1102
      %v1618 = vsel %vm1586, %v1585, %v1104
      %v1619 = vsel %vm307, %v592, %v1170
      %v1620 = vsel %vm307, %v593, %v1172
      %v1621 = vsel %vm307, %v594, %v1174
      %v1622 = vsel %vm307, %v595, %v1176
      %v1623 = vsel %vm307, %v596, %v1178
      %v1624 = vsel %vm307, %v597, %v1180
      %v1625 = vsel %vm307, %v598, %v1182
      %v1626 = vsel %vm307, %v599, %v1184
      %v1627 = vsel %vm307, %v600, %v1186
      %v1628 = vsel %vm307, %v601, %v1188
      %v1629 = vsel %vm307, %v602, %v1190
      %v1630 = vsel %vm307, %v603, %v1192
      %v1631 = vsel %vm307, %v604, %v1194
      %v1632 = vsel %vm307, %v605, %v1196
      %v1633 = vsel %vm307, %v606, %v1198
      %v1634 = vsel %vm307, %v607, %v1200
      %v1635 = vsel %vm307, %v608, %v1202
      %v1636 = vsel %vm307, %v609, %v1204
      %v1637 = vsel %vm307, %v610, %v1206
      %v1638 = vsel %vm307, %v611, %v1208
      %v1639 = vsel %vm307, %v612, %v1210
      %v1640 = vsel %vm307, %v613, %v1212
      %v1641 = vsel %vm307, %v614, %v1214
      %v1642 = vsel %vm307, %v615, %v1216
      %v1643 = vsel %vm307, %v616, %v1218
      %v1644 = vsel %vm307, %v617, %v1220
      %v1645 = vsel %vm307, %v618, %v1222
      %v1646 = vsel %vm307, %v619, %v1224
      %v1647 = vsel %vm307, %v620, %v1226
      %v1648 = vsel %vm307, %v621, %v1228
      %v1649 = vsel %vm307, %v622, %v1230
      %v1650 = vsel %vm307, %v623, %v1232
      %v1651 = vsel %vm1553, %v1619, %v1298
      %v1652 = vsel %vm1553, %v1620, %v1300
      %v1653 = vsel %vm1553, %v1621, %v1302
      %v1654 = vsel %vm1553, %v1622, %v1304
      %v1655 = vsel %vm1553, %v1623, %v1306
      %v1656 = vsel %vm1553, %v1624, %v1308
      %v1657 = vsel %vm1553, %v1625, %v1310
      %v1658 = vsel %vm1553, %v1626, %v1312
      %v1659 = vsel %vm1553, %v1627, %v1314
      %v1660 = vsel %vm1553, %v1628, %v1316
      %v1661 = vsel %vm1553, %v1629, %v1318
      %v1662 = vsel %vm1553, %v1630, %v1320
      %v1663 = vsel %vm1553, %v1631, %v1322
      %v1664 = vsel %vm1553, %v1632, %v1324
      %v1665 = vsel %vm1553, %v1633, %v1326
      %v1666 = vsel %vm1553, %v1634, %v1328
      %v1667 = vsel %vm1553, %v1635, %v1330
      %v1668 = vsel %vm1553, %v1636, %v1332
      %v1669 = vsel %vm1553, %v1637, %v1334
      %v1670 = vsel %vm1553, %v1638, %v1336
      %v1671 = vsel %vm1553, %v1639, %v1338
      %v1672 = vsel %vm1553, %v1640, %v1340
      %v1673 = vsel %vm1553, %v1641, %v1342
      %v1674 = vsel %vm1553, %v1642, %v1344
      %v1675 = vsel %vm1553, %v1643, %v1346
      %v1676 = vsel %vm1553, %v1644, %v1348
      %v1677 = vsel %vm1553, %v1645, %v1350
      %v1678 = vsel %vm1553, %v1646, %v1352
      %v1679 = vsel %vm1553, %v1647, %v1354
      %v1680 = vsel %vm1553, %v1648, %v1356
      %v1681 = vsel %vm1553, %v1649, %v1358
      %v1682 = vsel %vm1553, %v1650, %v1360
      %v1683 = vsel %vm1586, %v1651, %v1426
      %v1684 = vsel %vm1586, %v1652, %v1428
      %v1685 = vsel %vm1586, %v1653, %v1430
      %v1686 = vsel %vm1586, %v1654, %v1432
      %v1687 = vsel %vm1586, %v1655, %v1434
      %v1688 = vsel %vm1586, %v1656, %v1436
      %v1689 = vsel %vm1586, %v1657, %v1438
      %v1690 = vsel %vm1586, %v1658, %v1440
      %v1691 = vsel %vm1586, %v1659, %v1442
      %v1692 = vsel %vm1586, %v1660, %v1444
      %v1693 = vsel %vm1586, %v1661, %v1446
      %v1694 = vsel %vm1586, %v1662, %v1448
      %v1695 = vsel %vm1586, %v1663, %v1450
      %v1696 = vsel %vm1586, %v1664, %v1452
      %v1697 = vsel %vm1586, %v1665, %v1454
      %v1698 = vsel %vm1586, %v1666, %v1456
      %v1699 = vsel %vm1586, %v1667, %v1458
      %v1700 = vsel %vm1586, %v1668, %v1460
      %v1701 = vsel %vm1586, %v1669, %v1462
      %v1702 = vsel %vm1586, %v1670, %v1464
      %v1703 = vsel %vm1586, %v1671, %v1466
      %v1704 = vsel %vm1586, %v1672, %v1468
      %v1705 = vsel %vm1586, %v1673, %v1470
      %v1706 = vsel %vm1586, %v1674, %v1472
      %v1707 = vsel %vm1586, %v1675, %v1474
      %v1708 = vsel %vm1586, %v1676, %v1476
      %v1709 = vsel %vm1586, %v1677, %v1478
      %v1710 = vsel %vm1586, %v1678, %v1480
      %v1711 = vsel %vm1586, %v1679, %v1482
      %v1712 = vsel %vm1586, %v1680, %v1484
      %v1713 = vsel %vm1586, %v1681, %v1486
      %v1714 = vsel %vm1586, %v1682, %v1488
      %v1715 = vpack.c.bf16 %v1588, %v1587
      %v1716 = vpack.c.bf16 %v1684, %v1683
      %v1717 = vpack.c.bf16 %v722, %v721
      %v1718 = vpack.c.bf16 %v1590, %v1589
      %v1719 = vpack.c.bf16 %v1686, %v1685
      %v1720 = vpack.c.bf16 %v724, %v723
      %v1721 = vpack.c.bf16 %v1592, %v1591
      %v1722 = vpack.c.bf16 %v1688, %v1687
      %v1723 = vpack.c.bf16 %v726, %v725
      %v1724 = vpack.c.bf16 %v1594, %v1593
      %v1725 = vpack.c.bf16 %v1690, %v1689
      %v1726 = vpack.c.bf16 %v728, %v727
      %v1727 = vpack.c.bf16 %v1596, %v1595
      %v1728 = vpack.c.bf16 %v1692, %v1691
      %v1729 = vpack.c.bf16 %v730, %v729
      %v1730 = vpack.c.bf16 %v1598, %v1597
      %v1731 = vpack.c.bf16 %v1694, %v1693
      %v1732 = vpack.c.bf16 %v732, %v731
      %v1733 = vpack.c.bf16 %v1600, %v1599
      %v1734 = vpack.c.bf16 %v1696, %v1695
      %v1735 = vpack.c.bf16 %v734, %v733
      %v1736 = vpack.c.bf16 %v1602, %v1601
      %v1737 = vpack.c.bf16 %v1698, %v1697
      %v1738 = vpack.c.bf16 %v736, %v735
      %v1739 = vpack.c.bf16 %v1604, %v1603
      %v1740 = vpack.c.bf16 %v1700, %v1699
      %v1741 = vpack.c.bf16 %v738, %v737
      %v1742 = vpack.c.bf16 %v1606, %v1605
      %v1743 = vpack.c.bf16 %v1702, %v1701
      %v1744 = vpack.c.bf16 %v740, %v739
      %v1745 = vpack.c.bf16 %v1608, %v1607
      %v1746 = vpack.c.bf16 %v1704, %v1703
      %v1747 = vpack.c.bf16 %v742, %v741
      %v1748 = vpack.c.bf16 %v1610, %v1609
      %v1749 = vpack.c.bf16 %v1706, %v1705
      %v1750 = vpack.c.bf16 %v744, %v743
      %v1751 = vpack.c.bf16 %v1612, %v1611
      %v1752 = vpack.c.bf16 %v1708, %v1707
      %v1753 = vpack.c.bf16 %v746, %v745
      %v1754 = vpack.c.bf16 %v1614, %v1613
      %v1755 = vpack.c.bf16 %v1710, %v1709
      %v1756 = vpack.c.bf16 %v748, %v747
      %v1757 = vpack.c.bf16 %v1616, %v1615
      %v1758 = vpack.c.bf16 %v1712, %v1711
      %v1759 = vpack.c.bf16 %v750, %v749
      %v1760 = vpack.c.bf16 %v1618, %v1617
      %v1761 = vpack.c.bf16 %v1714, %v1713
      %v1762 = vpack.c.bf16 %v752, %v751
      %v1763 = vld [vmem:[%s1] sm:$0xf]
      %v1764 = vld [vmem:[%s1 + $0x4] sm:$0xf]
      %v1765 = vld [vmem:[%s1 + $0x8] sm:$0xf]
      %v1766 = vld [vmem:[%s1 + $0xc] sm:$0xf]
      %v1767 = vld [vmem:[%s1 + $0x10] sm:$0xf]
      %v1768 = vld [vmem:[%s1 + $0x14] sm:$0xf]
      %v1769 = vld [vmem:[%s1 + $0x18] sm:$0xf]
      %v1770 = vld [vmem:[%s1 + $0x1c] sm:$0xf]
      %v1771 = vld [vmem:[%s1 + $0x20] sm:$0xf]
      %v1772 = vld [vmem:[%s1 + $0x24] sm:$0xf]
      %v1773 = vld [vmem:[%s1 + $0x28] sm:$0xf]
      %v1774 = vld [vmem:[%s1 + $0x2c] sm:$0xf]
      %v1775 = vld [vmem:[%s1 + $0x30] sm:$0xf]
      %v1776 = vld [vmem:[%s1 + $0x34] sm:$0xf]
      %v1777 = vld [vmem:[%s1 + $0x38] sm:$0xf]
      %v1778 = vld [vmem:[%s1 + $0x3c] sm:$0xf]
      %v1779 = vld [vmem:[%s1 + $0x40] sm:$0xf]
      %v1780 = vld [vmem:[%s1 + $0x44] sm:$0xf]
      %v1781 = vld [vmem:[%s1 + $0x48] sm:$0xf]
      %v1782 = vld [vmem:[%s1 + $0x4c] sm:$0xf]
      %v1783 = vld [vmem:[%s1 + $0x50] sm:$0xf]
      %v1784 = vld [vmem:[%s1 + $0x54] sm:$0xf]
      %v1785 = vld [vmem:[%s1 + $0x58] sm:$0xf]
      %v1786 = vld [vmem:[%s1 + $0x5c] sm:$0xf]
      %v1787 = vld [vmem:[%s1 + $0x60] sm:$0xf]
      %v1788 = vld [vmem:[%s1 + $0x64] sm:$0xf]
      %v1789 = vld [vmem:[%s1 + $0x68] sm:$0xf]
      %v1790 = vld [vmem:[%s1 + $0x6c] sm:$0xf]
      %v1791 = vld [vmem:[%s1 + $0x70] sm:$0xf]
      %v1792 = vld [vmem:[%s1 + $0x74] sm:$0xf]
      %v1793 = vld [vmem:[%s1 + $0x78] sm:$0xf]
      %v1794 = vld [vmem:[%s1 + $0x7c] sm:$0xf]
      %v1795 = vld [vmem:[%s1 + $0x80] sm:$0xf]
      %v1796 = vld [vmem:[%s1 + $0x84] sm:$0xf]
      %v1797 = vld [vmem:[%s1 + $0x88] sm:$0xf]
      %v1798 = vld [vmem:[%s1 + $0x8c] sm:$0xf]
      %v1799 = vld [vmem:[%s2] sm:$0x1]
      %v1801 = vperm.slane %v1799, 0
      %v1839 = vunpack.c.l.b16 %v1763
      %v1840 = vunpack.c.l.b16 %v1764
      %v1841 = vunpack.c.l.b16 %v1765
      %v1842 = vunpack.c.l.b16 %v1766
      %v1843 = vunpack.c.l.b16 %v1767
      %v1844 = vunpack.c.l.b16 %v1768
      %v1845 = vunpack.c.l.b16 %v1769
      %v1846 = vunpack.c.l.b16 %v1770
      %v1847 = vunpack.c.l.b16 %v1771
      %v1848 = vunpack.c.l.b16 %v1772
      %v1849 = vunpack.c.l.b16 %v1773
      %v1850 = vunpack.c.l.b16 %v1774
      %v1851 = vunpack.c.l.b16 %v1775
      %v1852 = vunpack.c.l.b16 %v1776
      %v1853 = vunpack.c.l.b16 %v1777
      %v1854 = vunpack.c.l.b16 %v1778
      %v1855 = vunpack.c.l.b16 %v1779
      %v1856 = vunpack.c.l.b16 %v1780
      %v1857 = vunpack.c.l.b16 %v1781
      %v1858 = vunpack.c.l.b16 %v1782
      %v1859 = vunpack.c.l.b16 %v1783
      %v1860 = vunpack.c.l.b16 %v1784
      %v1861 = vunpack.c.l.b16 %v1785
      %v1862 = vunpack.c.l.b16 %v1786
      %v1863 = vunpack.c.l.b16 %v1787
      %v1864 = vunpack.c.l.b16 %v1788
      %v1865 = vunpack.c.l.b16 %v1789
      %v1866 = vunpack.c.l.b16 %v1790
      %v1867 = vunpack.c.l.b16 %v1791
      %v1868 = vunpack.c.l.b16 %v1792
      %v1869 = vunpack.c.l.b16 %v1793
      %v1870 = vunpack.c.l.b16 %v1794
      %v1871 = vunpack.c.l.b16 %v1795
      %v1872 = vunpack.c.l.b16 %v1796
      %v1873 = vunpack.c.l.b16 %v1797
      %v1874 = vunpack.c.l.b16 %v1798
      %v1875 = vpack.c.b16 %v1840, %v1839
      %v1876 = vpack.c.b16 %v1842, %v1841
      %v1877 = vpack.c.b16 %v1844, %v1843
      %v1878 = vpack.c.b16 %v1846, %v1845
      %v1879 = vpack.c.b16 %v1848, %v1847
      %v1880 = vpack.c.b16 %v1850, %v1849
      %v1881 = vpack.c.b16 %v1852, %v1851
      %v1882 = vpack.c.b16 %v1854, %v1853
      %v1883 = vpack.c.b16 %v1856, %v1855
      %v1884 = vpack.c.b16 %v1858, %v1857
      %v1885 = vpack.c.b16 %v1860, %v1859
      %v1886 = vpack.c.b16 %v1862, %v1861
      %v1887 = vpack.c.b16 %v1864, %v1863
      %v1888 = vpack.c.b16 %v1866, %v1865
      %v1889 = vpack.c.b16 %v1868, %v1867
      %v1890 = vpack.c.b16 %v1870, %v1869
      %v1891 = vpack.c.b16 %v1872, %v1871
      %v1892 = vpack.c.b16 %v1874, %v1873
      %v1912 = vsel %vm307, %v1717, 0
      %v1915 = vsel %vm307, %v1720, 0
      %v1918 = vsel %vm307, %v1723, 0
      %v1921 = vsel %vm307, %v1726, 0
      %v1924 = vsel %vm307, %v1729, 0
      %v1927 = vsel %vm307, %v1732, 0
      %v1930 = vsel %vm307, %v1735, 0
      %v1933 = vsel %vm307, %v1738, 0
      %v1936 = vsel %vm307, %v1741, 0
      %v1939 = vsel %vm307, %v1744, 0
      %v1942 = vsel %vm307, %v1747, 0
      %v1945 = vsel %vm307, %v1750, 0
      %v1948 = vsel %vm307, %v1753, 0
      %v1951 = vsel %vm307, %v1756, 0
      %v1954 = vsel %vm307, %v1759, 0
      %v1957 = vsel %vm307, %v1762, 0
      %1959 = vmatpush.bf16.msra.mxu0 %v1882
      %1960 = vmatpush.bf16.msra.mxu0 %v1881
      %1961 = vmatpush.bf16.msra.mxu0 %v1880
      %1962 = vmatpush.bf16.msra.mxu0 %v1879
      %1963 = vmatpush.bf16.msra.mxu0 %v1878
      %1964 = vmatpush.bf16.msra.mxu0 %v1877
      %1965 = vmatpush.bf16.msra.mxu0 %v1876
      %1966 = vmatpush.bf16.msra.mxu0 %v1875
      %1967 = vmatmul.bf16.gmra.mxu0 %v1715
      %v1968 = vpop.f32.mrf.mxu0
      %v1969 = vadd.f32 %v1801, %v1968
      %v1970 = vpop.f32.mrf.mxu0
      %v1971 = vadd.f32 %v1801, %v1970
      %1972 = vmatmul.bf16.gmra.mxu0 %v1718
      %v1973 = vpop.f32.mrf.mxu0
      %v1974 = vadd.f32 %v1801, %v1973
      %v1975 = vpop.f32.mrf.mxu0
      %v1976 = vadd.f32 %v1801, %v1975
      %1977 = vmatmul.bf16.gmra.mxu0 %v1721
      %v1978 = vpop.f32.mrf.mxu0
      %v1979 = vadd.f32 %v1801, %v1978
      %v1980 = vpop.f32.mrf.mxu0
      %v1981 = vadd.f32 %v1801, %v1980
      %1982 = vmatmul.bf16.gmra.mxu0 %v1724
      %v1983 = vpop.f32.mrf.mxu0
      %v1984 = vadd.f32 %v1801, %v1983
      %v1985 = vpop.f32.mrf.mxu0
      %v1986 = vadd.f32 %v1801, %v1985
      %1987 = vmatmul.bf16.gmra.mxu0 %v1727
      %v1988 = vpop.f32.mrf.mxu0
      %v1989 = vadd.f32 %v1801, %v1988
      %v1990 = vpop.f32.mrf.mxu0
      %v1991 = vadd.f32 %v1801, %v1990
      %1992 = vmatmul.bf16.gmra.mxu0 %v1730
      %v1993 = vpop.f32.mrf.mxu0
      %v1994 = vadd.f32 %v1801, %v1993
      %v1995 = vpop.f32.mrf.mxu0
      %v1996 = vadd.f32 %v1801, %v1995
      %1997 = vmatmul.bf16.gmra.mxu0 %v1733
      %v1998 = vpop.f32.mrf.mxu0
      %v1999 = vadd.f32 %v1801, %v1998
      %v2000 = vpop.f32.mrf.mxu0
      %v2001 = vadd.f32 %v1801, %v2000
      %2002 = vmatmul.bf16.gmra.mxu0 %v1736
      %v2003 = vpop.f32.mrf.mxu0
      %v2004 = vadd.f32 %v1801, %v2003
      %v2005 = vpop.f32.mrf.mxu0
      %v2006 = vadd.f32 %v1801, %v2005
      %2007 = vmatmul.bf16.gmra.mxu0 %v1739
      %v2008 = vpop.f32.mrf.mxu0
      %v2009 = vadd.f32 %v1801, %v2008
      %v2010 = vpop.f32.mrf.mxu0
      %v2011 = vadd.f32 %v1801, %v2010
      %2012 = vmatmul.bf16.gmra.mxu0 %v1742
      %v2013 = vpop.f32.mrf.mxu0
      %v2014 = vadd.f32 %v1801, %v2013
      %v2015 = vpop.f32.mrf.mxu0
      %v2016 = vadd.f32 %v1801, %v2015
      %2017 = vmatmul.bf16.gmra.mxu0 %v1745
      %v2018 = vpop.f32.mrf.mxu0
      %v2019 = vadd.f32 %v1801, %v2018
      %v2020 = vpop.f32.mrf.mxu0
      %v2021 = vadd.f32 %v1801, %v2020
      %2022 = vmatmul.bf16.gmra.mxu0 %v1748
      %v2023 = vpop.f32.mrf.mxu0
      %v2024 = vadd.f32 %v1801, %v2023
      %v2025 = vpop.f32.mrf.mxu0
      %v2026 = vadd.f32 %v1801, %v2025
      %2027 = vmatmul.bf16.gmra.mxu0 %v1751
      %v2028 = vpop.f32.mrf.mxu0
      %v2029 = vadd.f32 %v1801, %v2028
      %v2030 = vpop.f32.mrf.mxu0
      %v2031 = vadd.f32 %v1801, %v2030
      %2032 = vmatmul.bf16.gmra.mxu0 %v1754
      %v2033 = vpop.f32.mrf.mxu0
      %v2034 = vadd.f32 %v1801, %v2033
      %v2035 = vpop.f32.mrf.mxu0
      %v2036 = vadd.f32 %v1801, %v2035
      %2037 = vmatmul.bf16.gmra.mxu0 %v1757
      %v2038 = vpop.f32.mrf.mxu0
      %v2039 = vadd.f32 %v1801, %v2038
      %v2040 = vpop.f32.mrf.mxu0
      %v2041 = vadd.f32 %v1801, %v2040
      %2042 = vmatmul.bf16.gmra.mxu0 %v1760
      %v2043 = vpop.f32.mrf.mxu0
      %v2044 = vadd.f32 %v1801, %v2043
      %v2045 = vpop.f32.mrf.mxu0
      %v2046 = vadd.f32 %v1801, %v2045
      %2047 = vdwg.mxu0
      %2048 = vmatpush.bf16.msra.mxu0 %v1890
      %2049 = vmatpush.bf16.msra.mxu0 %v1889
      %2050 = vmatpush.bf16.msra.mxu0 %v1888
      %2051 = vmatpush.bf16.msra.mxu0 %v1887
      %2052 = vmatpush.bf16.msra.mxu0 %v1886
      %2053 = vmatpush.bf16.msra.mxu0 %v1885
      %2054 = vmatpush.bf16.msra.mxu0 %v1884
      %2055 = vmatpush.bf16.msra.mxu0 %v1883
      %2056 = vmatmul.bf16.gmra.mxu0 %v1716
      %v2057 = vpop.f32.mrf.mxu0
      %v2058 = vadd.f32 %v1969, %v2057
      %v2059 = vpop.f32.mrf.mxu0
      %v2060 = vadd.f32 %v1971, %v2059
      %2061 = vmatmul.bf16.gmra.mxu0 %v1719
      %v2062 = vpop.f32.mrf.mxu0
      %v2063 = vadd.f32 %v1974, %v2062
      %v2064 = vpop.f32.mrf.mxu0
      %v2065 = vadd.f32 %v1976, %v2064
      %2066 = vmatmul.bf16.gmra.mxu0 %v1722
      %v2067 = vpop.f32.mrf.mxu0
      %v2068 = vadd.f32 %v1979, %v2067
      %v2069 = vpop.f32.mrf.mxu0
      %v2070 = vadd.f32 %v1981, %v2069
      %2071 = vmatmul.bf16.gmra.mxu0 %v1725
      %v2072 = vpop.f32.mrf.mxu0
      %v2073 = vadd.f32 %v1984, %v2072
      %v2074 = vpop.f32.mrf.mxu0
      %v2075 = vadd.f32 %v1986, %v2074
      %2076 = vmatmul.bf16.gmra.mxu0 %v1728
      %v2077 = vpop.f32.mrf.mxu0
      %v2078 = vadd.f32 %v1989, %v2077
      %v2079 = vpop.f32.mrf.mxu0
      %v2080 = vadd.f32 %v1991, %v2079
      %2081 = vmatmul.bf16.gmra.mxu0 %v1731
      %v2082 = vpop.f32.mrf.mxu0
      %v2083 = vadd.f32 %v1994, %v2082
      %v2084 = vpop.f32.mrf.mxu0
      %v2085 = vadd.f32 %v1996, %v2084
      %2086 = vmatmul.bf16.gmra.mxu0 %v1734
      %v2087 = vpop.f32.mrf.mxu0
      %v2088 = vadd.f32 %v1999, %v2087
      %v2089 = vpop.f32.mrf.mxu0
      %v2090 = vadd.f32 %v2001, %v2089
      %2091 = vmatmul.bf16.gmra.mxu0 %v1737
      %v2092 = vpop.f32.mrf.mxu0
      %v2093 = vadd.f32 %v2004, %v2092
      %v2094 = vpop.f32.mrf.mxu0
      %v2095 = vadd.f32 %v2006, %v2094
      %2096 = vmatmul.bf16.gmra.mxu0 %v1740
      %v2097 = vpop.f32.mrf.mxu0
      %v2098 = vadd.f32 %v2009, %v2097
      %v2099 = vpop.f32.mrf.mxu0
      %v2100 = vadd.f32 %v2011, %v2099
      %2101 = vmatmul.bf16.gmra.mxu0 %v1743
      %v2102 = vpop.f32.mrf.mxu0
      %v2103 = vadd.f32 %v2014, %v2102
      %v2104 = vpop.f32.mrf.mxu0
      %v2105 = vadd.f32 %v2016, %v2104
      %2106 = vmatmul.bf16.gmra.mxu0 %v1746
      %v2107 = vpop.f32.mrf.mxu0
      %v2108 = vadd.f32 %v2019, %v2107
      %v2109 = vpop.f32.mrf.mxu0
      %v2110 = vadd.f32 %v2021, %v2109
      %2111 = vmatmul.bf16.gmra.mxu0 %v1749
      %v2112 = vpop.f32.mrf.mxu0
      %v2113 = vadd.f32 %v2024, %v2112
      %v2114 = vpop.f32.mrf.mxu0
      %v2115 = vadd.f32 %v2026, %v2114
      %2116 = vmatmul.bf16.gmra.mxu0 %v1752
      %v2117 = vpop.f32.mrf.mxu0
      %v2118 = vadd.f32 %v2029, %v2117
      %v2119 = vpop.f32.mrf.mxu0
      %v2120 = vadd.f32 %v2031, %v2119
      %2121 = vmatmul.bf16.gmra.mxu0 %v1755
      %v2122 = vpop.f32.mrf.mxu0
      %v2123 = vadd.f32 %v2034, %v2122
      %v2124 = vpop.f32.mrf.mxu0
      %v2125 = vadd.f32 %v2036, %v2124
      %2126 = vmatmul.bf16.gmra.mxu0 %v1758
      %v2127 = vpop.f32.mrf.mxu0
      %v2128 = vadd.f32 %v2039, %v2127
      %v2129 = vpop.f32.mrf.mxu0
      %v2130 = vadd.f32 %v2041, %v2129
      %2131 = vmatmul.bf16.gmra.mxu0 %v1761
      %v2132 = vpop.f32.mrf.mxu0
      %v2133 = vadd.f32 %v2044, %v2132
      %v2134 = vpop.f32.mrf.mxu0
      %v2135 = vadd.f32 %v2046, %v2134
      %2136 = vdwg.mxu0
      %2137 = vmatpush.bf16.msra.mxu0 0
      %2138 = vmatpush.bf16.msra.mxu0 0
      %2139 = vmatpush.bf16.msra.mxu0 0
      %2140 = vmatpush.bf16.msra.mxu0 0
      %2141 = vmatpush.bf16.msra.mxu0 0
      %2142 = vmatpush.bf16.msra.mxu0 0
      %2143 = vmatpush.bf16.msra.mxu0 %v1892
      %2144 = vmatpush.bf16.msra.mxu0 %v1891
      %2145 = vmatmul.bf16.gmra.mxu0 %v1912
      %v2146 = vpop.f32.mrf.mxu0
      %v2147 = vadd.f32 %v2058, %v2146
      %v2148 = vpop.f32.mrf.mxu0
      %v2149 = vadd.f32 %v2060, %v2148
      %2150 = vmatmul.bf16.gmra.mxu0 %v1915
      %v2151 = vpop.f32.mrf.mxu0
      %v2152 = vadd.f32 %v2063, %v2151
      %v2153 = vpop.f32.mrf.mxu0
      %v2154 = vadd.f32 %v2065, %v2153
      %2155 = vmatmul.bf16.gmra.mxu0 %v1918
      %v2156 = vpop.f32.mrf.mxu0
      %v2157 = vadd.f32 %v2068, %v2156
      %v2158 = vpop.f32.mrf.mxu0
      %v2159 = vadd.f32 %v2070, %v2158
      %2160 = vmatmul.bf16.gmra.mxu0 %v1921
      %v2161 = vpop.f32.mrf.mxu0
      %v2162 = vadd.f32 %v2073, %v2161
      %v2163 = vpop.f32.mrf.mxu0
      %v2164 = vadd.f32 %v2075, %v2163
      %2165 = vmatmul.bf16.gmra.mxu0 %v1924
      %v2166 = vpop.f32.mrf.mxu0
      %v2167 = vadd.f32 %v2078, %v2166
      %v2168 = vpop.f32.mrf.mxu0
      %v2169 = vadd.f32 %v2080, %v2168
      %2170 = vmatmul.bf16.gmra.mxu0 %v1927
      %v2171 = vpop.f32.mrf.mxu0
      %v2172 = vadd.f32 %v2083, %v2171
      %v2173 = vpop.f32.mrf.mxu0
      %v2174 = vadd.f32 %v2085, %v2173
      %2175 = vmatmul.bf16.gmra.mxu0 %v1930
      %v2176 = vpop.f32.mrf.mxu0
      %v2177 = vadd.f32 %v2088, %v2176
      %v2178 = vpop.f32.mrf.mxu0
      %v2179 = vadd.f32 %v2090, %v2178
      %2180 = vmatmul.bf16.gmra.mxu0 %v1933
      %v2181 = vpop.f32.mrf.mxu0
      %v2182 = vadd.f32 %v2093, %v2181
      %v2183 = vpop.f32.mrf.mxu0
      %v2184 = vadd.f32 %v2095, %v2183
      %2185 = vmatmul.bf16.gmra.mxu0 %v1936
      %v2186 = vpop.f32.mrf.mxu0
      %v2187 = vadd.f32 %v2098, %v2186
      %v2188 = vpop.f32.mrf.mxu0
      %v2189 = vadd.f32 %v2100, %v2188
      %2190 = vmatmul.bf16.gmra.mxu0 %v1939
      %v2191 = vpop.f32.mrf.mxu0
      %v2192 = vadd.f32 %v2103, %v2191
      %v2193 = vpop.f32.mrf.mxu0
      %v2194 = vadd.f32 %v2105, %v2193
      %2195 = vmatmul.bf16.gmra.mxu0 %v1942
      %v2196 = vpop.f32.mrf.mxu0
      %v2197 = vadd.f32 %v2108, %v2196
      %v2198 = vpop.f32.mrf.mxu0
      %v2199 = vadd.f32 %v2110, %v2198
      %2200 = vmatmul.bf16.gmra.mxu0 %v1945
      %v2201 = vpop.f32.mrf.mxu0
      %v2202 = vadd.f32 %v2113, %v2201
      %v2203 = vpop.f32.mrf.mxu0
      %v2204 = vadd.f32 %v2115, %v2203
      %2205 = vmatmul.bf16.gmra.mxu0 %v1948
      %v2206 = vpop.f32.mrf.mxu0
      %v2207 = vadd.f32 %v2118, %v2206
      %v2208 = vpop.f32.mrf.mxu0
      %v2209 = vadd.f32 %v2120, %v2208
      %2210 = vmatmul.bf16.gmra.mxu0 %v1951
      %v2211 = vpop.f32.mrf.mxu0
      %v2212 = vadd.f32 %v2123, %v2211
      %v2213 = vpop.f32.mrf.mxu0
      %v2214 = vadd.f32 %v2125, %v2213
      %2215 = vmatmul.bf16.gmra.mxu0 %v1954
      %v2216 = vpop.f32.mrf.mxu0
      %v2217 = vadd.f32 %v2128, %v2216
      %v2218 = vpop.f32.mrf.mxu0
      %v2219 = vadd.f32 %v2130, %v2218
      %2220 = vmatmul.bf16.gmra.mxu0 %v1957
      %v2221 = vpop.f32.mrf.mxu0
      %v2222 = vadd.f32 %v2133, %v2221
      %v2223 = vpop.f32.mrf.mxu0
      %v2224 = vadd.f32 %v2135, %v2223
      %2225 = vdwg.mxu0
      %v2226 = vsel %vm307, %v2147, 0.0
      %v2227 = vsel %vm307, %v2149, 0.0
      %v2228 = vadd.f32 %v2226, %v2227
      %v2229 = vsel %vm307, %v2152, 0.0
      %v2230 = vadd.f32 %v2228, %v2229
      %v2231 = vsel %vm307, %v2154, 0.0
      %v2232 = vadd.f32 %v2230, %v2231
      %v2233 = vsel %vm307, %v2157, 0.0
      %v2234 = vadd.f32 %v2232, %v2233
      %v2235 = vsel %vm307, %v2159, 0.0
      %v2236 = vadd.f32 %v2234, %v2235
      %v2237 = vsel %vm307, %v2162, 0.0
      %v2238 = vadd.f32 %v2236, %v2237
      %v2239 = vsel %vm307, %v2164, 0.0
      %v2240 = vadd.f32 %v2238, %v2239
      %v2241 = vsel %vm307, %v2167, 0.0
      %v2242 = vadd.f32 %v2240, %v2241
      %v2243 = vsel %vm307, %v2169, 0.0
      %v2244 = vadd.f32 %v2242, %v2243
      %v2245 = vsel %vm307, %v2172, 0.0
      %v2246 = vadd.f32 %v2244, %v2245
      %v2247 = vsel %vm307, %v2174, 0.0
      %v2248 = vadd.f32 %v2246, %v2247
      %v2249 = vsel %vm307, %v2177, 0.0
      %v2250 = vadd.f32 %v2248, %v2249
      %v2251 = vsel %vm307, %v2179, 0.0
      %v2252 = vadd.f32 %v2250, %v2251
      %v2253 = vsel %vm307, %v2182, 0.0
      %v2254 = vadd.f32 %v2252, %v2253
      %v2255 = vsel %vm307, %v2184, 0.0
      %v2256 = vadd.f32 %v2254, %v2255
      %v2257 = vsel %vm307, %v2187, 0.0
      %v2258 = vadd.f32 %v2256, %v2257
      %v2259 = vsel %vm307, %v2189, 0.0
      %v2260 = vadd.f32 %v2258, %v2259
      %v2261 = vsel %vm307, %v2192, 0.0
      %v2262 = vadd.f32 %v2260, %v2261
      %v2263 = vsel %vm307, %v2194, 0.0
      %v2264 = vadd.f32 %v2262, %v2263
      %v2265 = vsel %vm307, %v2197, 0.0
      %v2266 = vadd.f32 %v2264, %v2265
      %v2267 = vsel %vm307, %v2199, 0.0
      %v2268 = vadd.f32 %v2266, %v2267
      %v2269 = vsel %vm307, %v2202, 0.0
      %v2270 = vadd.f32 %v2268, %v2269
      %v2271 = vsel %vm307, %v2204, 0.0
      %v2272 = vadd.f32 %v2270, %v2271
      %v2273 = vsel %vm307, %v2207, 0.0
      %v2274 = vadd.f32 %v2272, %v2273
      %v2275 = vsel %vm307, %v2209, 0.0
      %v2276 = vadd.f32 %v2274, %v2275
      %v2277 = vsel %vm307, %v2212, 0.0
      %v2278 = vadd.f32 %v2276, %v2277
      %v2279 = vsel %vm307, %v2214, 0.0
      %v2280 = vadd.f32 %v2278, %v2279
      %v2281 = vsel %vm307, %v2217, 0.0
      %v2282 = vadd.f32 %v2280, %v2281
      %v2283 = vsel %vm307, %v2219, 0.0
      %v2284 = vadd.f32 %v2282, %v2283
      %v2285 = vsel %vm307, %v2222, 0.0
      %v2286 = vadd.f32 %v2284, %v2285
      %v2287 = vsel %vm307, %v2224, 0.0
      %v2288 = vadd.f32 %v2286, %v2287
      %v2289 = vrot.slane %v2288, 4
      %v2290 = vadd.f32 %v2288, %v2289
      %v2291 = vrot.slane %v2290, 2
      %v2292 = vadd.f32 %v2290, %v2291
      %v2293 = vrot.slane %v2292, 1
      %v2294 = vadd.f32 %v2292, %v2293
      %v2295 = vmul.f32 %v2147, %v2147
      %v2296 = vmul.f32 %v2149, %v2149
      %v2297 = vmul.f32 %v2152, %v2152
      %v2298 = vmul.f32 %v2154, %v2154
      %v2299 = vmul.f32 %v2157, %v2157
      %v2300 = vmul.f32 %v2159, %v2159
      %v2301 = vmul.f32 %v2162, %v2162
      %v2302 = vmul.f32 %v2164, %v2164
      %v2303 = vmul.f32 %v2167, %v2167
      %v2304 = vmul.f32 %v2169, %v2169
      %v2305 = vmul.f32 %v2172, %v2172
      %v2306 = vmul.f32 %v2174, %v2174
      %v2307 = vmul.f32 %v2177, %v2177
      %v2308 = vmul.f32 %v2179, %v2179
      %v2309 = vmul.f32 %v2182, %v2182
      %v2310 = vmul.f32 %v2184, %v2184
      %v2311 = vmul.f32 %v2187, %v2187
      %v2312 = vmul.f32 %v2189, %v2189
      %v2313 = vmul.f32 %v2192, %v2192
      %v2314 = vmul.f32 %v2194, %v2194
      %v2315 = vmul.f32 %v2197, %v2197
      %v2316 = vmul.f32 %v2199, %v2199
      %v2317 = vmul.f32 %v2202, %v2202
      %v2318 = vmul.f32 %v2204, %v2204
      %v2319 = vmul.f32 %v2207, %v2207
      %v2320 = vmul.f32 %v2209, %v2209
      %v2321 = vmul.f32 %v2212, %v2212
      %v2322 = vmul.f32 %v2214, %v2214
      %v2323 = vmul.f32 %v2217, %v2217
      %v2324 = vmul.f32 %v2219, %v2219
      %v2325 = vmul.f32 %v2222, %v2222
      %v2326 = vmul.f32 %v2224, %v2224
      %v2327 = vsel %vm307, %v2295, 0.0
      %v2328 = vsel %vm307, %v2296, 0.0
      %v2329 = vadd.f32 %v2327, %v2328
      %v2330 = vsel %vm307, %v2297, 0.0
      %v2331 = vadd.f32 %v2329, %v2330
      %v2332 = vsel %vm307, %v2298, 0.0
      %v2333 = vadd.f32 %v2331, %v2332
      %v2334 = vsel %vm307, %v2299, 0.0
      %v2335 = vadd.f32 %v2333, %v2334
      %v2336 = vsel %vm307, %v2300, 0.0
      %v2337 = vadd.f32 %v2335, %v2336
      %v2338 = vsel %vm307, %v2301, 0.0
      %v2339 = vadd.f32 %v2337, %v2338
      %v2340 = vsel %vm307, %v2302, 0.0
      %v2341 = vadd.f32 %v2339, %v2340
      %v2342 = vsel %vm307, %v2303, 0.0
      %v2343 = vadd.f32 %v2341, %v2342
      %v2344 = vsel %vm307, %v2304, 0.0
      %v2345 = vadd.f32 %v2343, %v2344
      %v2346 = vsel %vm307, %v2305, 0.0
      %v2347 = vadd.f32 %v2345, %v2346
      %v2348 = vsel %vm307, %v2306, 0.0
      %v2349 = vadd.f32 %v2347, %v2348
      %v2350 = vsel %vm307, %v2307, 0.0
      %v2351 = vadd.f32 %v2349, %v2350
      %v2352 = vsel %vm307, %v2308, 0.0
      %v2353 = vadd.f32 %v2351, %v2352
      %v2354 = vsel %vm307, %v2309, 0.0
      %v2355 = vadd.f32 %v2353, %v2354
      %v2356 = vsel %vm307, %v2310, 0.0
      %v2357 = vadd.f32 %v2355, %v2356
      %v2358 = vsel %vm307, %v2311, 0.0
      %v2359 = vadd.f32 %v2357, %v2358
      %v2360 = vsel %vm307, %v2312, 0.0
      %v2361 = vadd.f32 %v2359, %v2360
      %v2362 = vsel %vm307, %v2313, 0.0
      %v2363 = vadd.f32 %v2361, %v2362
      %v2364 = vsel %vm307, %v2314, 0.0
      %v2365 = vadd.f32 %v2363, %v2364
      %v2366 = vsel %vm307, %v2315, 0.0
      %v2367 = vadd.f32 %v2365, %v2366
      %v2368 = vsel %vm307, %v2316, 0.0
      %v2369 = vadd.f32 %v2367, %v2368
      %v2370 = vsel %vm307, %v2317, 0.0
      %v2371 = vadd.f32 %v2369, %v2370
      %v2372 = vsel %vm307, %v2318, 0.0
      %v2373 = vadd.f32 %v2371, %v2372
      %v2374 = vsel %vm307, %v2319, 0.0
      %v2375 = vadd.f32 %v2373, %v2374
      %v2376 = vsel %vm307, %v2320, 0.0
      %v2377 = vadd.f32 %v2375, %v2376
      %v2378 = vsel %vm307, %v2321, 0.0
      %v2379 = vadd.f32 %v2377, %v2378
      %v2380 = vsel %vm307, %v2322, 0.0
      %v2381 = vadd.f32 %v2379, %v2380
      %v2382 = vsel %vm307, %v2323, 0.0
      %v2383 = vadd.f32 %v2381, %v2382
      %v2384 = vsel %vm307, %v2324, 0.0
      %v2385 = vadd.f32 %v2383, %v2384
      %v2386 = vsel %vm307, %v2325, 0.0
      %v2387 = vadd.f32 %v2385, %v2386
      %v2388 = vsel %vm307, %v2326, 0.0
      %v2389 = vadd.f32 %v2387, %v2388
      %v2390 = vrot.slane %v2389, 4
      %v2391 = vadd.f32 %v2389, %v2390
      %v2392 = vrot.slane %v2391, 2
      %v2393 = vadd.f32 %v2391, %v2392
      %v2394 = vrot.slane %v2393, 1
      %v2395 = vadd.f32 %v2393, %v2394
      %v2397 = vsel %vm307, %v2294, 0
      %2399 = vmatpush.msra.mxu0 0.0
      %2400 = vmatpush.msra.mxu0 0.0
      %2401 = vmatpush.msra.mxu0 0.0
      %2402 = vmatpush.msra.mxu0 0.0
      %2403 = vmatpush.msra.mxu0 0.0
      %2404 = vmatpush.msra.mxu0 0.0
      %2405 = vmatpush.msra.mxu0 0.0
      %2406 = vmatpush.msra.mxu0 0.0
      %2407 = vmatpush.msra.mxu0 0.0
      %2408 = vmatpush.msra.mxu0 0.0
      %2409 = vmatpush.msra.mxu0 0.0
      %2410 = vmatpush.msra.mxu0 0.0
      %2411 = vmatpush.msra.mxu0 %v463
      %2412 = vmatpush.msra.mxu0 %v462
      %2413 = vmatpush.msra.mxu0 %v461
      %2414 = vmatpush.msra.mxu0 %v460
      %2415 = vmatmul.f32.gmra.mxu0 %v2397
      %v2416 = vpop.f32.mrf.mxu0
      %v2417 = vadd.f32 0.0, %v2416
      %2418 = vdwg.mxu0
      %v2420 = vsel %vm307, %v2395, 0
      %2422 = vmatpush.msra.mxu0 0.0
      %2423 = vmatpush.msra.mxu0 0.0
      %2424 = vmatpush.msra.mxu0 0.0
      %2425 = vmatpush.msra.mxu0 0.0
      %2426 = vmatpush.msra.mxu0 0.0
      %2427 = vmatpush.msra.mxu0 0.0
      %2428 = vmatpush.msra.mxu0 0.0
      %2429 = vmatpush.msra.mxu0 0.0
      %2430 = vmatpush.msra.mxu0 0.0
      %2431 = vmatpush.msra.mxu0 0.0
      %2432 = vmatpush.msra.mxu0 0.0
      %2433 = vmatpush.msra.mxu0 0.0
      %2434 = vmatpush.msra.mxu0 %v463
      %2435 = vmatpush.msra.mxu0 %v462
      %2436 = vmatpush.msra.mxu0 %v461
      %2437 = vmatpush.msra.mxu0 %v460
      %2438 = vmatmul.f32.gmra.mxu0 %v2420
      %v2439 = vpop.f32.mrf.mxu0
      %v2440 = vadd.f32 0.0, %v2439
      %2441 = vdwg.mxu0
      %v2442 = vmul.f32 %v2417, 0.001953125
      %v2443 = vmul.f32 %v2440, 0.001953125
      %v2444 = vmul.f32 %v2442, %v2442
      %v2445 = vsub.f32 %v2443, %v2444
      %v2446 = vmax.f32 %v2445, 0.0
      %v2447 = vadd.f32 %v2446, 1e-05
      %v2448 = vrsqrt.pop %v2447
      %v2449 = vmul.f32 %v2448, %v2447
      %v2450 = vmul.f32 %v2449, %v2448
      %v2451 = vmul.f32 0.5, %v2450
      %v2452 = vsub.f32 1.5, %v2451
      %v2453 = vmul.f32 %v2448, %v2452
      %vm2454 = vweird.f32 %v2447
      %vm2455 = vweird.f32 %v2448
      %vm2456 = vmor %vm2454, %vm2455
      %v2457 = vsel %vm2456, %v2448, %v2453
      %v2458 = vperm.slane %v2442, 0
      %v2459 = vsub.f32 %v2147, %v2458
      %v2460 = vsub.f32 %v2149, %v2458
      %v2461 = vsub.f32 %v2152, %v2458
      %v2462 = vsub.f32 %v2154, %v2458
      %v2463 = vsub.f32 %v2157, %v2458
      %v2464 = vsub.f32 %v2159, %v2458
      %v2465 = vsub.f32 %v2162, %v2458
      %v2466 = vsub.f32 %v2164, %v2458
      %v2467 = vsub.f32 %v2167, %v2458
      %v2468 = vsub.f32 %v2169, %v2458
      %v2469 = vsub.f32 %v2172, %v2458
      %v2470 = vsub.f32 %v2174, %v2458
      %v2471 = vsub.f32 %v2177, %v2458
      %v2472 = vsub.f32 %v2179, %v2458
      %v2473 = vsub.f32 %v2182, %v2458
      %v2474 = vsub.f32 %v2184, %v2458
      %v2475 = vsub.f32 %v2187, %v2458
      %v2476 = vsub.f32 %v2189, %v2458
      %v2477 = vsub.f32 %v2192, %v2458
      %v2478 = vsub.f32 %v2194, %v2458
      %v2479 = vsub.f32 %v2197, %v2458
      %v2480 = vsub.f32 %v2199, %v2458
      %v2481 = vsub.f32 %v2202, %v2458
      %v2482 = vsub.f32 %v2204, %v2458
      %v2483 = vsub.f32 %v2207, %v2458
      %v2484 = vsub.f32 %v2209, %v2458
      %v2485 = vsub.f32 %v2212, %v2458
      %v2486 = vsub.f32 %v2214, %v2458
      %v2487 = vsub.f32 %v2217, %v2458
      %v2488 = vsub.f32 %v2219, %v2458
      %v2489 = vsub.f32 %v2222, %v2458
      %v2490 = vsub.f32 %v2224, %v2458
      %v2491 = vperm.slane %v2457, 0
      %v2492 = vmul.f32 %v2459, %v2491
      %v2493 = vmul.f32 %v2460, %v2491
      %v2494 = vmul.f32 %v2461, %v2491
      %v2495 = vmul.f32 %v2462, %v2491
      %v2496 = vmul.f32 %v2463, %v2491
      %v2497 = vmul.f32 %v2464, %v2491
      %v2498 = vmul.f32 %v2465, %v2491
      %v2499 = vmul.f32 %v2466, %v2491
      %v2500 = vmul.f32 %v2467, %v2491
      %v2501 = vmul.f32 %v2468, %v2491
      %v2502 = vmul.f32 %v2469, %v2491
      %v2503 = vmul.f32 %v2470, %v2491
      %v2504 = vmul.f32 %v2471, %v2491
      %v2505 = vmul.f32 %v2472, %v2491
      %v2506 = vmul.f32 %v2473, %v2491
      %v2507 = vmul.f32 %v2474, %v2491
      %v2508 = vmul.f32 %v2475, %v2491
      %v2509 = vmul.f32 %v2476, %v2491
      %v2510 = vmul.f32 %v2477, %v2491
      %v2511 = vmul.f32 %v2478, %v2491
      %v2512 = vmul.f32 %v2479, %v2491
      %v2513 = vmul.f32 %v2480, %v2491
      %v2514 = vmul.f32 %v2481, %v2491
      %v2515 = vmul.f32 %v2482, %v2491
      %v2516 = vmul.f32 %v2483, %v2491
      %v2517 = vmul.f32 %v2484, %v2491
      %v2518 = vmul.f32 %v2485, %v2491
      %v2519 = vmul.f32 %v2486, %v2491
      %v2520 = vmul.f32 %v2487, %v2491
      %v2521 = vmul.f32 %v2488, %v2491
      %v2522 = vmul.f32 %v2489, %v2491
      %v2523 = vmul.f32 %v2490, %v2491
      %v2524 = vld [vmem:[%s3] sm:$0x1]
      %v2526 = vperm.slane %v2524, 0
      %v2528 = vmul.f32 %v2492, %v2526
      %v2529 = vmul.f32 %v2493, %v2526
      %v2530 = vmul.f32 %v2494, %v2526
      %v2531 = vmul.f32 %v2495, %v2526
      %v2532 = vmul.f32 %v2496, %v2526
      %v2533 = vmul.f32 %v2497, %v2526
      %v2534 = vmul.f32 %v2498, %v2526
      %v2535 = vmul.f32 %v2499, %v2526
      %v2536 = vmul.f32 %v2500, %v2526
      %v2537 = vmul.f32 %v2501, %v2526
      %v2538 = vmul.f32 %v2502, %v2526
      %v2539 = vmul.f32 %v2503, %v2526
      %v2540 = vmul.f32 %v2504, %v2526
      %v2541 = vmul.f32 %v2505, %v2526
      %v2542 = vmul.f32 %v2506, %v2526
      %v2543 = vmul.f32 %v2507, %v2526
      %v2544 = vmul.f32 %v2508, %v2526
      %v2545 = vmul.f32 %v2509, %v2526
      %v2546 = vmul.f32 %v2510, %v2526
      %v2547 = vmul.f32 %v2511, %v2526
      %v2548 = vmul.f32 %v2512, %v2526
      %v2549 = vmul.f32 %v2513, %v2526
      %v2550 = vmul.f32 %v2514, %v2526
      %v2551 = vmul.f32 %v2515, %v2526
      %v2552 = vmul.f32 %v2516, %v2526
      %v2553 = vmul.f32 %v2517, %v2526
      %v2554 = vmul.f32 %v2518, %v2526
      %v2555 = vmul.f32 %v2519, %v2526
      %v2556 = vmul.f32 %v2520, %v2526
      %v2557 = vmul.f32 %v2521, %v2526
      %v2558 = vmul.f32 %v2522, %v2526
      %v2559 = vmul.f32 %v2523, %v2526
      %v2560 = vld [vmem:[%s4] sm:$0x1]
      %v2562 = vperm.slane %v2560, 0
      %v2564 = vadd.f32 %v2528, %v2562
      %v2565 = vadd.f32 %v2529, %v2562
      %v2566 = vadd.f32 %v2530, %v2562
      %v2567 = vadd.f32 %v2531, %v2562
      %v2568 = vadd.f32 %v2532, %v2562
      %v2569 = vadd.f32 %v2533, %v2562
      %v2570 = vadd.f32 %v2534, %v2562
      %v2571 = vadd.f32 %v2535, %v2562
      %v2572 = vadd.f32 %v2536, %v2562
      %v2573 = vadd.f32 %v2537, %v2562
      %v2574 = vadd.f32 %v2538, %v2562
      %v2575 = vadd.f32 %v2539, %v2562
      %v2576 = vadd.f32 %v2540, %v2562
      %v2577 = vadd.f32 %v2541, %v2562
      %v2578 = vadd.f32 %v2542, %v2562
      %v2579 = vadd.f32 %v2543, %v2562
      %v2580 = vadd.f32 %v2544, %v2562
      %v2581 = vadd.f32 %v2545, %v2562
      %v2582 = vadd.f32 %v2546, %v2562
      %v2583 = vadd.f32 %v2547, %v2562
      %v2584 = vadd.f32 %v2548, %v2562
      %v2585 = vadd.f32 %v2549, %v2562
      %v2586 = vadd.f32 %v2550, %v2562
      %v2587 = vadd.f32 %v2551, %v2562
      %v2588 = vadd.f32 %v2552, %v2562
      %v2589 = vadd.f32 %v2553, %v2562
      %v2590 = vadd.f32 %v2554, %v2562
      %v2591 = vadd.f32 %v2555, %v2562
      %v2592 = vadd.f32 %v2556, %v2562
      %v2593 = vadd.f32 %v2557, %v2562
      %v2594 = vadd.f32 %v2558, %v2562
      %v2595 = vadd.f32 %v2559, %v2562
      %v2596 = vmax.f32 %v2564, 0.0
      %v2597 = vmax.f32 %v2565, 0.0
      %v2598 = vmax.f32 %v2566, 0.0
      %v2599 = vmax.f32 %v2567, 0.0
      %v2600 = vmax.f32 %v2568, 0.0
      %v2601 = vmax.f32 %v2569, 0.0
      %v2602 = vmax.f32 %v2570, 0.0
      %v2603 = vmax.f32 %v2571, 0.0
      %v2604 = vmax.f32 %v2572, 0.0
      %v2605 = vmax.f32 %v2573, 0.0
      %v2606 = vmax.f32 %v2574, 0.0
      %v2607 = vmax.f32 %v2575, 0.0
      %v2608 = vmax.f32 %v2576, 0.0
      %v2609 = vmax.f32 %v2577, 0.0
      %v2610 = vmax.f32 %v2578, 0.0
      %v2611 = vmax.f32 %v2579, 0.0
      %v2612 = vmax.f32 %v2580, 0.0
      %v2613 = vmax.f32 %v2581, 0.0
      %v2614 = vmax.f32 %v2582, 0.0
      %v2615 = vmax.f32 %v2583, 0.0
      %v2616 = vmax.f32 %v2584, 0.0
      %v2617 = vmax.f32 %v2585, 0.0
      %v2618 = vmax.f32 %v2586, 0.0
      %v2619 = vmax.f32 %v2587, 0.0
      %v2620 = vmax.f32 %v2588, 0.0
      %v2621 = vmax.f32 %v2589, 0.0
      %v2622 = vmax.f32 %v2590, 0.0
      %v2623 = vmax.f32 %v2591, 0.0
      %v2624 = vmax.f32 %v2592, 0.0
      %v2625 = vmax.f32 %v2593, 0.0
      %v2626 = vmax.f32 %v2594, 0.0
      %v2627 = vmax.f32 %v2595, 0.0
      %2628 = vst.msk [vmem:[%s427 + $0x1] sm:$0xff] %vm307, %v2596
      %2629 = vst.msk [vmem:[%s427 + $0x9] sm:$0xff] %vm307, %v2597
      %2630 = vst.msk [vmem:[%s427 + $0x19] sm:$0xff] %vm307, %v2598
      %2631 = vst.msk [vmem:[%s427 + $0x21] sm:$0xff] %vm307, %v2599
      %2632 = vst.msk [vmem:[%s427 + $0x31] sm:$0xff] %vm307, %v2600
      %2633 = vst.msk [vmem:[%s427 + $0x39] sm:$0xff] %vm307, %v2601
      %2634 = vst.msk [vmem:[%s427 + $0x49] sm:$0xff] %vm307, %v2602
      %2635 = vst.msk [vmem:[%s427 + $0x51] sm:$0xff] %vm307, %v2603
      %2636 = vst.msk [vmem:[%s427 + $0x61] sm:$0xff] %vm307, %v2604
      %2637 = vst.msk [vmem:[%s427 + $0x69] sm:$0xff] %vm307, %v2605
      %2638 = vst.msk [vmem:[%s427 + $0x79] sm:$0xff] %vm307, %v2606
      %2639 = vst.msk [vmem:[%s427 + $0x81] sm:$0xff] %vm307, %v2607
      %2640 = vst.msk [vmem:[%s427 + $0x91] sm:$0xff] %vm307, %v2608
      %2641 = vst.msk [vmem:[%s427 + $0x99] sm:$0xff] %vm307, %v2609
      %2642 = vst.msk [vmem:[%s427 + $0xa9] sm:$0xff] %vm307, %v2610
      %2643 = vst.msk [vmem:[%s427 + $0xb1] sm:$0xff] %vm307, %v2611
      %2644 = vst.msk [vmem:[%s427 + $0xc1] sm:$0xff] %vm307, %v2612
      %2645 = vst.msk [vmem:[%s427 + $0xc9] sm:$0xff] %vm307, %v2613
      %2646 = vst.msk [vmem:[%s427 + $0xd9] sm:$0xff] %vm307, %v2614
      %2647 = vst.msk [vmem:[%s427 + $0xe1] sm:$0xff] %vm307, %v2615
      %2648 = vst.msk [vmem:[%s427 + $0xf1] sm:$0xff] %vm307, %v2616
      %2649 = vst.msk [vmem:[%s427 + $0xf9] sm:$0xff] %vm307, %v2617
      %2650 = vst.msk [vmem:[%s427 + $0x109] sm:$0xff] %vm307, %v2618
      %2651 = vst.msk [vmem:[%s427 + $0x111] sm:$0xff] %vm307, %v2619
      %2652 = vst.msk [vmem:[%s427 + $0x121] sm:$0xff] %vm307, %v2620
      %2653 = vst.msk [vmem:[%s427 + $0x129] sm:$0xff] %vm307, %v2621
      %2654 = vst.msk [vmem:[%s427 + $0x139] sm:$0xff] %vm307, %v2622
      %2655 = vst.msk [vmem:[%s427 + $0x141] sm:$0xff] %vm307, %v2623
      %2656 = vst.msk [vmem:[%s427 + $0x151] sm:$0xff] %vm307, %v2624
      %2657 = vst.msk [vmem:[%s427 + $0x159] sm:$0xff] %vm307, %v2625
      %2658 = vst.msk [vmem:[%s427 + $0x169] sm:$0xff] %vm307, %v2626
      %2659 = vst.msk [vmem:[%s427 + $0x171] sm:$0xff] %vm307, %v2627
      %v2660 = vld [vmem:[#allocation2] sm:$0xff]
      %v2661 = vld [vmem:[#allocation2 + $0x8] sm:$0xff]
      %v2662 = vld [vmem:[#allocation2 + $0x18] sm:$0xff]
      %v2663 = vld [vmem:[#allocation2 + $0x20] sm:$0xff]
      %v2664 = vld [vmem:[#allocation2 + $0x30] sm:$0xff]
      %v2665 = vld [vmem:[#allocation2 + $0x38] sm:$0xff]
      %v2666 = vld [vmem:[#allocation2 + $0x48] sm:$0xff]
      %v2667 = vld [vmem:[#allocation2 + $0x50] sm:$0xff]
      %v2668 = vld [vmem:[#allocation2 + $0x60] sm:$0xff]
      %v2669 = vld [vmem:[#allocation2 + $0x68] sm:$0xff]
      %v2670 = vld [vmem:[#allocation2 + $0x78] sm:$0xff]
      %v2671 = vld [vmem:[#allocation2 + $0x80] sm:$0xff]
      %v2672 = vld [vmem:[#allocation2 + $0x90] sm:$0xff]
      %v2673 = vld [vmem:[#allocation2 + $0x98] sm:$0xff]
      %v2674 = vld [vmem:[#allocation2 + $0xa8] sm:$0xff]
      %v2675 = vld [vmem:[#allocation2 + $0xb0] sm:$0xff]
      %v2676 = vld [vmem:[#allocation2 + $0xc0] sm:$0xff]
      %v2677 = vld [vmem:[#allocation2 + $0xc8] sm:$0xff]
      %v2678 = vld [vmem:[#allocation2 + $0xd8] sm:$0xff]
      %v2679 = vld [vmem:[#allocation2 + $0xe0] sm:$0xff]
      %v2680 = vld [vmem:[#allocation2 + $0xf0] sm:$0xff]
      %v2681 = vld [vmem:[#allocation2 + $0xf8] sm:$0xff]
      %v2682 = vld [vmem:[#allocation2 + $0x108] sm:$0xff]
      %v2683 = vld [vmem:[#allocation2 + $0x110] sm:$0xff]
      %v2684 = vld [vmem:[#allocation2 + $0x120] sm:$0xff]
      %v2685 = vld [vmem:[#allocation2 + $0x128] sm:$0xff]
      %v2686 = vld [vmem:[#allocation2 + $0x138] sm:$0xff]
      %v2687 = vld [vmem:[#allocation2 + $0x140] sm:$0xff]
      %v2688 = vld [vmem:[#allocation2 + $0x150] sm:$0xff]
      %v2689 = vld [vmem:[#allocation2 + $0x158] sm:$0xff]
      %v2690 = vld [vmem:[#allocation2 + $0x168] sm:$0xff]
      %v2691 = vld [vmem:[#allocation2 + $0x170] sm:$0xff]
      %v2692 = vld [vmem:[#allocation2 + $0x1] sm:$0xff]
      %v2693 = vld [vmem:[#allocation2 + $0x9] sm:$0xff]
      %v2694 = vld [vmem:[#allocation2 + $0x19] sm:$0xff]
      %v2695 = vld [vmem:[#allocation2 + $0x21] sm:$0xff]
      %v2696 = vld [vmem:[#allocation2 + $0x31] sm:$0xff]
      %v2697 = vld [vmem:[#allocation2 + $0x39] sm:$0xff]
      %v2698 = vld [vmem:[#allocation2 + $0x49] sm:$0xff]
      %v2699 = vld [vmem:[#allocation2 + $0x51] sm:$0xff]
      %v2700 = vld [vmem:[#allocation2 + $0x61] sm:$0xff]
      %v2701 = vld [vmem:[#allocation2 + $0x69] sm:$0xff]
      %v2702 = vld [vmem:[#allocation2 + $0x79] sm:$0xff]
      %v2703 = vld [vmem:[#allocation2 + $0x81] sm:$0xff]
      %v2704 = vld [vmem:[#allocation2 + $0x91] sm:$0xff]
      %v2705 = vld [vmem:[#allocation2 + $0x99] sm:$0xff]
      %v2706 = vld [vmem:[#allocation2 + $0xa9] sm:$0xff]
      %v2707 = vld [vmem:[#allocation2 + $0xb1] sm:$0xff]
      %v2708 = vld [vmem:[#allocation2 + $0xc1] sm:$0xff]
      %v2709 = vld [vmem:[#allocation2 + $0xc9] sm:$0xff]
      %v2710 = vld [vmem:[#allocation2 + $0xd9] sm:$0xff]
      %v2711 = vld [vmem:[#allocation2 + $0xe1] sm:$0xff]
      %v2712 = vld [vmem:[#allocation2 + $0xf1] sm:$0xff]
      %v2713 = vld [vmem:[#allocation2 + $0xf9] sm:$0xff]
      %v2714 = vld [vmem:[#allocation2 + $0x109] sm:$0xff]
      %v2715 = vld [vmem:[#allocation2 + $0x111] sm:$0xff]
      %v2716 = vld [vmem:[#allocation2 + $0x121] sm:$0xff]
      %v2717 = vld [vmem:[#allocation2 + $0x129] sm:$0xff]
      %v2718 = vld [vmem:[#allocation2 + $0x139] sm:$0xff]
      %v2719 = vld [vmem:[#allocation2 + $0x141] sm:$0xff]
      %v2720 = vld [vmem:[#allocation2 + $0x151] sm:$0xff]
      %v2721 = vld [vmem:[#allocation2 + $0x159] sm:$0xff]
      %v2722 = vld [vmem:[#allocation2 + $0x169] sm:$0xff]
      %v2723 = vld [vmem:[#allocation2 + $0x171] sm:$0xff]
      %v2724 = vld [vmem:[#allocation2 + $0x2] sm:$0xff]
      %v2725 = vld [vmem:[#allocation2 + $0xa] sm:$0xff]
      %v2726 = vld [vmem:[#allocation2 + $0x1a] sm:$0xff]
      %v2727 = vld [vmem:[#allocation2 + $0x22] sm:$0xff]
      %v2728 = vld [vmem:[#allocation2 + $0x32] sm:$0xff]
      %v2729 = vld [vmem:[#allocation2 + $0x3a] sm:$0xff]
      %v2730 = vld [vmem:[#allocation2 + $0x4a] sm:$0xff]
      %v2731 = vld [vmem:[#allocation2 + $0x52] sm:$0xff]
      %v2732 = vld [vmem:[#allocation2 + $0x62] sm:$0xff]
      %v2733 = vld [vmem:[#allocation2 + $0x6a] sm:$0xff]
      %v2734 = vld [vmem:[#allocation2 + $0x7a] sm:$0xff]
      %v2735 = vld [vmem:[#allocation2 + $0x82] sm:$0xff]
      %v2736 = vld [vmem:[#allocation2 + $0x92] sm:$0xff]
      %v2737 = vld [vmem:[#allocation2 + $0x9a] sm:$0xff]
      %v2738 = vld [vmem:[#allocation2 + $0xaa] sm:$0xff]
      %v2739 = vld [vmem:[#allocation2 + $0xb2] sm:$0xff]
      %v2740 = vld [vmem:[#allocation2 + $0xc2] sm:$0xff]
      %v2741 = vld [vmem:[#allocation2 + $0xca] sm:$0xff]
      %v2742 = vld [vmem:[#allocation2 + $0xda] sm:$0xff]
      %v2743 = vld [vmem:[#allocation2 + $0xe2] sm:$0xff]
      %v2744 = vld [vmem:[#allocation2 + $0xf2] sm:$0xff]
      %v2745 = vld [vmem:[#allocation2 + $0xfa] sm:$0xff]
      %v2746 = vld [vmem:[#allocation2 + $0x10a] sm:$0xff]
      %v2747 = vld [vmem:[#allocation2 + $0x112] sm:$0xff]
      %v2748 = vld [vmem:[#allocation2 + $0x122] sm:$0xff]
      %v2749 = vld [vmem:[#allocation2 + $0x12a] sm:$0xff]
      %v2750 = vld [vmem:[#allocation2 + $0x13a] sm:$0xff]
      %v2751 = vld [vmem:[#allocation2 + $0x142] sm:$0xff]
      %v2752 = vld [vmem:[#allocation2 + $0x152] sm:$0xff]
      %v2753 = vld [vmem:[#allocation2 + $0x15a] sm:$0xff]
      %v2754 = vld [vmem:[#allocation2 + $0x16a] sm:$0xff]
      %v2755 = vld [vmem:[#allocation2 + $0x172] sm:$0xff]
      %v2756 = vld [vmem:[%s427] sm:$0xff]
      %v2757 = vld [vmem:[%s427 + $0x8] sm:$0xff]
      %v2758 = vld [vmem:[%s427 + $0x18] sm:$0xff]
      %v2759 = vld [vmem:[%s427 + $0x20] sm:$0xff]
      %v2760 = vld [vmem:[%s427 + $0x30] sm:$0xff]
      %v2761 = vld [vmem:[%s427 + $0x38] sm:$0xff]
      %v2762 = vld [vmem:[%s427 + $0x48] sm:$0xff]
      %v2763 = vld [vmem:[%s427 + $0x50] sm:$0xff]
      %v2764 = vld [vmem:[%s427 + $0x60] sm:$0xff]
      %v2765 = vld [vmem:[%s427 + $0x68] sm:$0xff]
      %v2766 = vld [vmem:[%s427 + $0x78] sm:$0xff]
      %v2767 = vld [vmem:[%s427 + $0x80] sm:$0xff]
      %v2768 = vld [vmem:[%s427 + $0x90] sm:$0xff]
      %v2769 = vld [vmem:[%s427 + $0x98] sm:$0xff]
      %v2770 = vld [vmem:[%s427 + $0xa8] sm:$0xff]
      %v2771 = vld [vmem:[%s427 + $0xb0] sm:$0xff]
      %v2772 = vld [vmem:[%s427 + $0xc0] sm:$0xff]
      %v2773 = vld [vmem:[%s427 + $0xc8] sm:$0xff]
      %v2774 = vld [vmem:[%s427 + $0xd8] sm:$0xff]
      %v2775 = vld [vmem:[%s427 + $0xe0] sm:$0xff]
      %v2776 = vld [vmem:[%s427 + $0xf0] sm:$0xff]
      %v2777 = vld [vmem:[%s427 + $0xf8] sm:$0xff]
      %v2778 = vld [vmem:[%s427 + $0x108] sm:$0xff]
      %v2779 = vld [vmem:[%s427 + $0x110] sm:$0xff]
      %v2780 = vld [vmem:[%s427 + $0x120] sm:$0xff]
      %v2781 = vld [vmem:[%s427 + $0x128] sm:$0xff]
      %v2782 = vld [vmem:[%s427 + $0x138] sm:$0xff]
      %v2783 = vld [vmem:[%s427 + $0x140] sm:$0xff]
      %v2784 = vld [vmem:[%s427 + $0x150] sm:$0xff]
      %v2785 = vld [vmem:[%s427 + $0x158] sm:$0xff]
      %v2786 = vld [vmem:[%s427 + $0x168] sm:$0xff]
      %v2787 = vld [vmem:[%s427 + $0x170] sm:$0xff]
      %v2788 = vld [vmem:[%s427 + $0x1] sm:$0xff]
      %v2789 = vld [vmem:[%s427 + $0x9] sm:$0xff]
      %v2790 = vld [vmem:[%s427 + $0x19] sm:$0xff]
      %v2791 = vld [vmem:[%s427 + $0x21] sm:$0xff]
      %v2792 = vld [vmem:[%s427 + $0x31] sm:$0xff]
      %v2793 = vld [vmem:[%s427 + $0x39] sm:$0xff]
      %v2794 = vld [vmem:[%s427 + $0x49] sm:$0xff]
      %v2795 = vld [vmem:[%s427 + $0x51] sm:$0xff]
      %v2796 = vld [vmem:[%s427 + $0x61] sm:$0xff]
      %v2797 = vld [vmem:[%s427 + $0x69] sm:$0xff]
      %v2798 = vld [vmem:[%s427 + $0x79] sm:$0xff]
      %v2799 = vld [vmem:[%s427 + $0x81] sm:$0xff]
      %v2800 = vld [vmem:[%s427 + $0x91] sm:$0xff]
      %v2801 = vld [vmem:[%s427 + $0x99] sm:$0xff]
      %v2802 = vld [vmem:[%s427 + $0xa9] sm:$0xff]
      %v2803 = vld [vmem:[%s427 + $0xb1] sm:$0xff]
      %v2804 = vld [vmem:[%s427 + $0xc1] sm:$0xff]
      %v2805 = vld [vmem:[%s427 + $0xc9] sm:$0xff]
      %v2806 = vld [vmem:[%s427 + $0xd9] sm:$0xff]
      %v2807 = vld [vmem:[%s427 + $0xe1] sm:$0xff]
      %v2808 = vld [vmem:[%s427 + $0xf1] sm:$0xff]
      %v2809 = vld [vmem:[%s427 + $0xf9] sm:$0xff]
      %v2810 = vld [vmem:[%s427 + $0x109] sm:$0xff]
      %v2811 = vld [vmem:[%s427 + $0x111] sm:$0xff]
      %v2812 = vld [vmem:[%s427 + $0x121] sm:$0xff]
      %v2813 = vld [vmem:[%s427 + $0x129] sm:$0xff]
      %v2814 = vld [vmem:[%s427 + $0x139] sm:$0xff]
      %v2815 = vld [vmem:[%s427 + $0x141] sm:$0xff]
      %v2816 = vld [vmem:[%s427 + $0x151] sm:$0xff]
      %v2817 = vld [vmem:[%s427 + $0x159] sm:$0xff]
      %v2818 = vld [vmem:[%s427 + $0x169] sm:$0xff]
      %v2819 = vld [vmem:[%s427 + $0x171] sm:$0xff]
      %v2820 = vld [vmem:[%s427 + $0x2] sm:$0xff]
      %v2821 = vld [vmem:[%s427 + $0xa] sm:$0xff]
      %v2822 = vld [vmem:[%s427 + $0x1a] sm:$0xff]
      %v2823 = vld [vmem:[%s427 + $0x22] sm:$0xff]
      %v2824 = vld [vmem:[%s427 + $0x32] sm:$0xff]
      %v2825 = vld [vmem:[%s427 + $0x3a] sm:$0xff]
      %v2826 = vld [vmem:[%s427 + $0x4a] sm:$0xff]
      %v2827 = vld [vmem:[%s427 + $0x52] sm:$0xff]
      %v2828 = vld [vmem:[%s427 + $0x62] sm:$0xff]
      %v2829 = vld [vmem:[%s427 + $0x6a] sm:$0xff]
      %v2830 = vld [vmem:[%s427 + $0x7a] sm:$0xff]
      %v2831 = vld [vmem:[%s427 + $0x82] sm:$0xff]
      %v2832 = vld [vmem:[%s427 + $0x92] sm:$0xff]
      %v2833 = vld [vmem:[%s427 + $0x9a] sm:$0xff]
      %v2834 = vld [vmem:[%s427 + $0xaa] sm:$0xff]
      %v2835 = vld [vmem:[%s427 + $0xb2] sm:$0xff]
      %v2836 = vld [vmem:[%s427 + $0xc2] sm:$0xff]
      %v2837 = vld [vmem:[%s427 + $0xca] sm:$0xff]
      %v2838 = vld [vmem:[%s427 + $0xda] sm:$0xff]
      %v2839 = vld [vmem:[%s427 + $0xe2] sm:$0xff]
      %v2840 = vld [vmem:[%s427 + $0xf2] sm:$0xff]
      %v2841 = vld [vmem:[%s427 + $0xfa] sm:$0xff]
      %v2842 = vld [vmem:[%s427 + $0x10a] sm:$0xff]
      %v2843 = vld [vmem:[%s427 + $0x112] sm:$0xff]
      %v2844 = vld [vmem:[%s427 + $0x122] sm:$0xff]
      %v2845 = vld [vmem:[%s427 + $0x12a] sm:$0xff]
      %v2846 = vld [vmem:[%s427 + $0x13a] sm:$0xff]
      %v2847 = vld [vmem:[%s427 + $0x142] sm:$0xff]
      %v2848 = vld [vmem:[%s427 + $0x152] sm:$0xff]
      %v2849 = vld [vmem:[%s427 + $0x15a] sm:$0xff]
      %v2850 = vld [vmem:[%s427 + $0x16a] sm:$0xff]
      %v2851 = vld [vmem:[%s427 + $0x172] sm:$0xff]
      %v2852 = vld [vmem:[%s656] sm:$0xff]
      %v2853 = vld [vmem:[%s656 + $0x8] sm:$0xff]
      %v2854 = vld [vmem:[%s656 + $0x18] sm:$0xff]
      %v2855 = vld [vmem:[%s656 + $0x20] sm:$0xff]
      %v2856 = vld [vmem:[%s656 + $0x30] sm:$0xff]
      %v2857 = vld [vmem:[%s656 + $0x38] sm:$0xff]
      %v2858 = vld [vmem:[%s656 + $0x48] sm:$0xff]
      %v2859 = vld [vmem:[%s656 + $0x50] sm:$0xff]
      %v2860 = vld [vmem:[%s656 + $0x60] sm:$0xff]
      %v2861 = vld [vmem:[%s656 + $0x68] sm:$0xff]
      %v2862 = vld [vmem:[%s656 + $0x78] sm:$0xff]
      %v2863 = vld [vmem:[%s656 + $0x80] sm:$0xff]
      %v2864 = vld [vmem:[%s656 + $0x90] sm:$0xff]
      %v2865 = vld [vmem:[%s656 + $0x98] sm:$0xff]
      %v2866 = vld [vmem:[%s656 + $0xa8] sm:$0xff]
      %v2867 = vld [vmem:[%s656 + $0xb0] sm:$0xff]
      %v2868 = vld [vmem:[%s656 + $0xc0] sm:$0xff]
      %v2869 = vld [vmem:[%s656 + $0xc8] sm:$0xff]
      %v2870 = vld [vmem:[%s656 + $0xd8] sm:$0xff]
      %v2871 = vld [vmem:[%s656 + $0xe0] sm:$0xff]
      %v2872 = vld [vmem:[%s656 + $0xf0] sm:$0xff]
      %v2873 = vld [vmem:[%s656 + $0xf8] sm:$0xff]
      %v2874 = vld [vmem:[%s656 + $0x108] sm:$0xff]
      %v2875 = vld [vmem:[%s656 + $0x110] sm:$0xff]
      %v2876 = vld [vmem:[%s656 + $0x120] sm:$0xff]
      %v2877 = vld [vmem:[%s656 + $0x128] sm:$0xff]
      %v2878 = vld [vmem:[%s656 + $0x138] sm:$0xff]
      %v2879 = vld [vmem:[%s656 + $0x140] sm:$0xff]
      %v2880 = vld [vmem:[%s656 + $0x150] sm:$0xff]
      %v2881 = vld [vmem:[%s656 + $0x158] sm:$0xff]
      %v2882 = vld [vmem:[%s656 + $0x168] sm:$0xff]
      %v2883 = vld [vmem:[%s656 + $0x170] sm:$0xff]
      %v2884 = vld [vmem:[%s656 + $0x1] sm:$0xff]
      %v2885 = vld [vmem:[%s656 + $0x9] sm:$0xff]
      %v2886 = vld [vmem:[%s656 + $0x19] sm:$0xff]
      %v2887 = vld [vmem:[%s656 + $0x21] sm:$0xff]
      %v2888 = vld [vmem:[%s656 + $0x31] sm:$0xff]
      %v2889 = vld [vmem:[%s656 + $0x39] sm:$0xff]
      %v2890 = vld [vmem:[%s656 + $0x49] sm:$0xff]
      %v2891 = vld [vmem:[%s656 + $0x51] sm:$0xff]
      %v2892 = vld [vmem:[%s656 + $0x61] sm:$0xff]
      %v2893 = vld [vmem:[%s656 + $0x69] sm:$0xff]
      %v2894 = vld [vmem:[%s656 + $0x79] sm:$0xff]
      %v2895 = vld [vmem:[%s656 + $0x81] sm:$0xff]
      %v2896 = vld [vmem:[%s656 + $0x91] sm:$0xff]
      %v2897 = vld [vmem:[%s656 + $0x99] sm:$0xff]
      %v2898 = vld [vmem:[%s656 + $0xa9] sm:$0xff]
      %v2899 = vld [vmem:[%s656 + $0xb1] sm:$0xff]
      %v2900 = vld [vmem:[%s656 + $0xc1] sm:$0xff]
      %v2901 = vld [vmem:[%s656 + $0xc9] sm:$0xff]
      %v2902 = vld [vmem:[%s656 + $0xd9] sm:$0xff]
      %v2903 = vld [vmem:[%s656 + $0xe1] sm:$0xff]
      %v2904 = vld [vmem:[%s656 + $0xf1] sm:$0xff]
      %v2905 = vld [vmem:[%s656 + $0xf9] sm:$0xff]
      %v2906 = vld [vmem:[%s656 + $0x109] sm:$0xff]
      %v2907 = vld [vmem:[%s656 + $0x111] sm:$0xff]
      %v2908 = vld [vmem:[%s656 + $0x121] sm:$0xff]
      %v2909 = vld [vmem:[%s656 + $0x129] sm:$0xff]
      %v2910 = vld [vmem:[%s656 + $0x139] sm:$0xff]
      %v2911 = vld [vmem:[%s656 + $0x141] sm:$0xff]
      %v2912 = vld [vmem:[%s656 + $0x151] sm:$0xff]
      %v2913 = vld [vmem:[%s656 + $0x159] sm:$0xff]
      %v2914 = vld [vmem:[%s656 + $0x169] sm:$0xff]
      %v2915 = vld [vmem:[%s656 + $0x171] sm:$0xff]
      %v2916 = vld [vmem:[%s656 + $0x2] sm:$0xff]
      %v2917 = vld [vmem:[%s656 + $0xa] sm:$0xff]
      %v2918 = vld [vmem:[%s656 + $0x1a] sm:$0xff]
      %v2919 = vld [vmem:[%s656 + $0x22] sm:$0xff]
      %v2920 = vld [vmem:[%s656 + $0x32] sm:$0xff]
      %v2921 = vld [vmem:[%s656 + $0x3a] sm:$0xff]
      %v2922 = vld [vmem:[%s656 + $0x4a] sm:$0xff]
      %v2923 = vld [vmem:[%s656 + $0x52] sm:$0xff]
      %v2924 = vld [vmem:[%s656 + $0x62] sm:$0xff]
      %v2925 = vld [vmem:[%s656 + $0x6a] sm:$0xff]
      %v2926 = vld [vmem:[%s656 + $0x7a] sm:$0xff]
      %v2927 = vld [vmem:[%s656 + $0x82] sm:$0xff]
      %v2928 = vld [vmem:[%s656 + $0x92] sm:$0xff]
      %v2929 = vld [vmem:[%s656 + $0x9a] sm:$0xff]
      %v2930 = vld [vmem:[%s656 + $0xaa] sm:$0xff]
      %v2931 = vld [vmem:[%s656 + $0xb2] sm:$0xff]
      %v2932 = vld [vmem:[%s656 + $0xc2] sm:$0xff]
      %v2933 = vld [vmem:[%s656 + $0xca] sm:$0xff]
      %v2934 = vld [vmem:[%s656 + $0xda] sm:$0xff]
      %v2935 = vld [vmem:[%s656 + $0xe2] sm:$0xff]
      %v2936 = vld [vmem:[%s656 + $0xf2] sm:$0xff]
      %v2937 = vld [vmem:[%s656 + $0xfa] sm:$0xff]
      %v2938 = vld [vmem:[%s656 + $0x10a] sm:$0xff]
      %v2939 = vld [vmem:[%s656 + $0x112] sm:$0xff]
      %v2940 = vld [vmem:[%s656 + $0x122] sm:$0xff]
      %v2941 = vld [vmem:[%s656 + $0x12a] sm:$0xff]
      %v2942 = vld [vmem:[%s656 + $0x13a] sm:$0xff]
      %v2943 = vld [vmem:[%s656 + $0x142] sm:$0xff]
      %v2944 = vld [vmem:[%s656 + $0x152] sm:$0xff]
      %v2945 = vld [vmem:[%s656 + $0x15a] sm:$0xff]
      %v2946 = vld [vmem:[%s656 + $0x16a] sm:$0xff]
      %v2947 = vld [vmem:[%s656 + $0x172] sm:$0xff]
      %2980 = vrot.lane.b32.xlu0 %v2692, 32
      %v2981 = vpop.permute.xlu0 %2980
      %2982 = vrot.lane.b32.xlu0 %v2693, 32
      %v2983 = vpop.permute.xlu0 %2982
      %2984 = vrot.lane.b32.xlu0 %v2694, 32
      %v2985 = vpop.permute.xlu0 %2984
      %2986 = vrot.lane.b32.xlu0 %v2695, 32
      %v2987 = vpop.permute.xlu0 %2986
      %2988 = vrot.lane.b32.xlu0 %v2696, 32
      %v2989 = vpop.permute.xlu0 %2988
      %2990 = vrot.lane.b32.xlu0 %v2697, 32
      %v2991 = vpop.permute.xlu0 %2990
      %2992 = vrot.lane.b32.xlu0 %v2698, 32
      %v2993 = vpop.permute.xlu0 %2992
      %2994 = vrot.lane.b32.xlu0 %v2699, 32
      %v2995 = vpop.permute.xlu0 %2994
      %2996 = vrot.lane.b32.xlu0 %v2700, 32
      %v2997 = vpop.permute.xlu0 %2996
      %2998 = vrot.lane.b32.xlu0 %v2701, 32
      %v2999 = vpop.permute.xlu0 %2998
      %3000 = vrot.lane.b32.xlu0 %v2702, 32
      %v3001 = vpop.permute.xlu0 %3000
      %3002 = vrot.lane.b32.xlu0 %v2703, 32
      %v3003 = vpop.permute.xlu0 %3002
      %3004 = vrot.lane.b32.xlu0 %v2704, 32
      %v3005 = vpop.permute.xlu0 %3004
      %3006 = vrot.lane.b32.xlu0 %v2705, 32
      %v3007 = vpop.permute.xlu0 %3006
      %3008 = vrot.lane.b32.xlu0 %v2706, 32
      %v3009 = vpop.permute.xlu0 %3008
      %3010 = vrot.lane.b32.xlu0 %v2707, 32
      %v3011 = vpop.permute.xlu0 %3010
      %3012 = vrot.lane.b32.xlu0 %v2708, 32
      %v3013 = vpop.permute.xlu0 %3012
      %3014 = vrot.lane.b32.xlu0 %v2709, 32
      %v3015 = vpop.permute.xlu0 %3014
      %3016 = vrot.lane.b32.xlu0 %v2710, 32
      %v3017 = vpop.permute.xlu0 %3016
      %3018 = vrot.lane.b32.xlu0 %v2711, 32
      %v3019 = vpop.permute.xlu0 %3018
      %3020 = vrot.lane.b32.xlu0 %v2712, 32
      %v3021 = vpop.permute.xlu0 %3020
      %3022 = vrot.lane.b32.xlu0 %v2713, 32
      %v3023 = vpop.permute.xlu0 %3022
      %3024 = vrot.lane.b32.xlu0 %v2714, 32
      %v3025 = vpop.permute.xlu0 %3024
      %3026 = vrot.lane.b32.xlu0 %v2715, 32
      %v3027 = vpop.permute.xlu0 %3026
      %3028 = vrot.lane.b32.xlu0 %v2716, 32
      %v3029 = vpop.permute.xlu0 %3028
      %3030 = vrot.lane.b32.xlu0 %v2717, 32
      %v3031 = vpop.permute.xlu0 %3030
      %3032 = vrot.lane.b32.xlu0 %v2718, 32
      %v3033 = vpop.permute.xlu0 %3032
      %3034 = vrot.lane.b32.xlu0 %v2719, 32
      %v3035 = vpop.permute.xlu0 %3034
      %3036 = vrot.lane.b32.xlu0 %v2720, 32
      %v3037 = vpop.permute.xlu0 %3036
      %3038 = vrot.lane.b32.xlu0 %v2721, 32
      %v3039 = vpop.permute.xlu0 %3038
      %3040 = vrot.lane.b32.xlu0 %v2722, 32
      %v3041 = vpop.permute.xlu0 %3040
      %3042 = vrot.lane.b32.xlu0 %v2723, 32
      %v3043 = vpop.permute.xlu0 %3042
      %3108 = vrot.lane.b32.xlu0 %v2724, 64
      %v3109 = vpop.permute.xlu0 %3108
      %3110 = vrot.lane.b32.xlu0 %v2725, 64
      %v3111 = vpop.permute.xlu0 %3110
      %3112 = vrot.lane.b32.xlu0 %v2726, 64
      %v3113 = vpop.permute.xlu0 %3112
      %3114 = vrot.lane.b32.xlu0 %v2727, 64
      %v3115 = vpop.permute.xlu0 %3114
      %3116 = vrot.lane.b32.xlu0 %v2728, 64
      %v3117 = vpop.permute.xlu0 %3116
      %3118 = vrot.lane.b32.xlu0 %v2729, 64
      %v3119 = vpop.permute.xlu0 %3118
      %3120 = vrot.lane.b32.xlu0 %v2730, 64
      %v3121 = vpop.permute.xlu0 %3120
      %3122 = vrot.lane.b32.xlu0 %v2731, 64
      %v3123 = vpop.permute.xlu0 %3122
      %3124 = vrot.lane.b32.xlu0 %v2732, 64
      %v3125 = vpop.permute.xlu0 %3124
      %3126 = vrot.lane.b32.xlu0 %v2733, 64
      %v3127 = vpop.permute.xlu0 %3126
      %3128 = vrot.lane.b32.xlu0 %v2734, 64
      %v3129 = vpop.permute.xlu0 %3128
      %3130 = vrot.lane.b32.xlu0 %v2735, 64
      %v3131 = vpop.permute.xlu0 %3130
      %3132 = vrot.lane.b32.xlu0 %v2736, 64
      %v3133 = vpop.permute.xlu0 %3132
      %3134 = vrot.lane.b32.xlu0 %v2737, 64
      %v3135 = vpop.permute.xlu0 %3134
      %3136 = vrot.lane.b32.xlu0 %v2738, 64
      %v3137 = vpop.permute.xlu0 %3136
      %3138 = vrot.lane.b32.xlu0 %v2739, 64
      %v3139 = vpop.permute.xlu0 %3138
      %3140 = vrot.lane.b32.xlu0 %v2740, 64
      %v3141 = vpop.permute.xlu0 %3140
      %3142 = vrot.lane.b32.xlu0 %v2741, 64
      %v3143 = vpop.permute.xlu0 %3142
      %3144 = vrot.lane.b32.xlu0 %v2742, 64
      %v3145 = vpop.permute.xlu0 %3144
      %3146 = vrot.lane.b32.xlu0 %v2743, 64
      %v3147 = vpop.permute.xlu0 %3146
      %3148 = vrot.lane.b32.xlu0 %v2744, 64
      %v3149 = vpop.permute.xlu0 %3148
      %3150 = vrot.lane.b32.xlu0 %v2745, 64
      %v3151 = vpop.permute.xlu0 %3150
      %3152 = vrot.lane.b32.xlu0 %v2746, 64
      %v3153 = vpop.permute.xlu0 %3152
      %3154 = vrot.lane.b32.xlu0 %v2747, 64
      %v3155 = vpop.permute.xlu0 %3154
      %3156 = vrot.lane.b32.xlu0 %v2748, 64
      %v3157 = vpop.permute.xlu0 %3156
      %3158 = vrot.lane.b32.xlu0 %v2749, 64
      %v3159 = vpop.permute.xlu0 %3158
      %3160 = vrot.lane.b32.xlu0 %v2750, 64
      %v3161 = vpop.permute.xlu0 %3160
      %3162 = vrot.lane.b32.xlu0 %v2751, 64
      %v3163 = vpop.permute.xlu0 %3162
      %3164 = vrot.lane.b32.xlu0 %v2752, 64
      %v3165 = vpop.permute.xlu0 %3164
      %3166 = vrot.lane.b32.xlu0 %v2753, 64
      %v3167 = vpop.permute.xlu0 %3166
      %3168 = vrot.lane.b32.xlu0 %v2754, 64
      %v3169 = vpop.permute.xlu0 %3168
      %3170 = vrot.lane.b32.xlu0 %v2755, 64
      %v3171 = vpop.permute.xlu0 %3170
      %3236 = vrot.lane.b32.xlu0 %v2756, 96
      %v3237 = vpop.permute.xlu0 %3236
      %3238 = vrot.lane.b32.xlu0 %v2757, 96
      %v3239 = vpop.permute.xlu0 %3238
      %3240 = vrot.lane.b32.xlu0 %v2758, 96
      %v3241 = vpop.permute.xlu0 %3240
      %3242 = vrot.lane.b32.xlu0 %v2759, 96
      %v3243 = vpop.permute.xlu0 %3242
      %3244 = vrot.lane.b32.xlu0 %v2760, 96
      %v3245 = vpop.permute.xlu0 %3244
      %3246 = vrot.lane.b32.xlu0 %v2761, 96
      %v3247 = vpop.permute.xlu0 %3246
      %3248 = vrot.lane.b32.xlu0 %v2762, 96
      %v3249 = vpop.permute.xlu0 %3248
      %3250 = vrot.lane.b32.xlu0 %v2763, 96
      %v3251 = vpop.permute.xlu0 %3250
      %3252 = vrot.lane.b32.xlu0 %v2764, 96
      %v3253 = vpop.permute.xlu0 %3252
      %3254 = vrot.lane.b32.xlu0 %v2765, 96
      %v3255 = vpop.permute.xlu0 %3254
      %3256 = vrot.lane.b32.xlu0 %v2766, 96
      %v3257 = vpop.permute.xlu0 %3256
      %3258 = vrot.lane.b32.xlu0 %v2767, 96
      %v3259 = vpop.permute.xlu0 %3258
      %3260 = vrot.lane.b32.xlu0 %v2768, 96
      %v3261 = vpop.permute.xlu0 %3260
      %3262 = vrot.lane.b32.xlu0 %v2769, 96
      %v3263 = vpop.permute.xlu0 %3262
      %3264 = vrot.lane.b32.xlu0 %v2770, 96
      %v3265 = vpop.permute.xlu0 %3264
      %3266 = vrot.lane.b32.xlu0 %v2771, 96
      %v3267 = vpop.permute.xlu0 %3266
      %3268 = vrot.lane.b32.xlu0 %v2772, 96
      %v3269 = vpop.permute.xlu0 %3268
      %3270 = vrot.lane.b32.xlu0 %v2773, 96
      %v3271 = vpop.permute.xlu0 %3270
      %3272 = vrot.lane.b32.xlu0 %v2774, 96
      %v3273 = vpop.permute.xlu0 %3272
      %3274 = vrot.lane.b32.xlu0 %v2775, 96
      %v3275 = vpop.permute.xlu0 %3274
      %3276 = vrot.lane.b32.xlu0 %v2776, 96
      %v3277 = vpop.permute.xlu0 %3276
      %3278 = vrot.lane.b32.xlu0 %v2777, 96
      %v3279 = vpop.permute.xlu0 %3278
      %3280 = vrot.lane.b32.xlu0 %v2778, 96
      %v3281 = vpop.permute.xlu0 %3280
      %3282 = vrot.lane.b32.xlu0 %v2779, 96
      %v3283 = vpop.permute.xlu0 %3282
      %3284 = vrot.lane.b32.xlu0 %v2780, 96
      %v3285 = vpop.permute.xlu0 %3284
      %3286 = vrot.lane.b32.xlu0 %v2781, 96
      %v3287 = vpop.permute.xlu0 %3286
      %3288 = vrot.lane.b32.xlu0 %v2782, 96
      %v3289 = vpop.permute.xlu0 %3288
      %3290 = vrot.lane.b32.xlu0 %v2783, 96
      %v3291 = vpop.permute.xlu0 %3290
      %3292 = vrot.lane.b32.xlu0 %v2784, 96
      %v3293 = vpop.permute.xlu0 %3292
      %3294 = vrot.lane.b32.xlu0 %v2785, 96
      %v3295 = vpop.permute.xlu0 %3294
      %3296 = vrot.lane.b32.xlu0 %v2786, 96
      %v3297 = vpop.permute.xlu0 %3296
      %3298 = vrot.lane.b32.xlu0 %v2787, 96
      %v3299 = vpop.permute.xlu0 %3298
      %3364 = vrot.lane.b32.xlu0 %v2820, 32
      %v3365 = vpop.permute.xlu0 %3364
      %3366 = vrot.lane.b32.xlu0 %v2821, 32
      %v3367 = vpop.permute.xlu0 %3366
      %3368 = vrot.lane.b32.xlu0 %v2822, 32
      %v3369 = vpop.permute.xlu0 %3368
      %3370 = vrot.lane.b32.xlu0 %v2823, 32
      %v3371 = vpop.permute.xlu0 %3370
      %3372 = vrot.lane.b32.xlu0 %v2824, 32
      %v3373 = vpop.permute.xlu0 %3372
      %3374 = vrot.lane.b32.xlu0 %v2825, 32
      %v3375 = vpop.permute.xlu0 %3374
      %3376 = vrot.lane.b32.xlu0 %v2826, 32
      %v3377 = vpop.permute.xlu0 %3376
      %3378 = vrot.lane.b32.xlu0 %v2827, 32
      %v3379 = vpop.permute.xlu0 %3378
      %3380 = vrot.lane.b32.xlu0 %v2828, 32
      %v3381 = vpop.permute.xlu0 %3380
      %3382 = vrot.lane.b32.xlu0 %v2829, 32
      %v3383 = vpop.permute.xlu0 %3382
      %3384 = vrot.lane.b32.xlu0 %v2830, 32
      %v3385 = vpop.permute.xlu0 %3384
      %3386 = vrot.lane.b32.xlu0 %v2831, 32
      %v3387 = vpop.permute.xlu0 %3386
      %3388 = vrot.lane.b32.xlu0 %v2832, 32
      %v3389 = vpop.permute.xlu0 %3388
      %3390 = vrot.lane.b32.xlu0 %v2833, 32
      %v3391 = vpop.permute.xlu0 %3390
      %3392 = vrot.lane.b32.xlu0 %v2834, 32
      %v3393 = vpop.permute.xlu0 %3392
      %3394 = vrot.lane.b32.xlu0 %v2835, 32
      %v3395 = vpop.permute.xlu0 %3394
      %3396 = vrot.lane.b32.xlu0 %v2836, 32
      %v3397 = vpop.permute.xlu0 %3396
      %3398 = vrot.lane.b32.xlu0 %v2837, 32
      %v3399 = vpop.permute.xlu0 %3398
      %3400 = vrot.lane.b32.xlu0 %v2838, 32
      %v3401 = vpop.permute.xlu0 %3400
      %3402 = vrot.lane.b32.xlu0 %v2839, 32
      %v3403 = vpop.permute.xlu0 %3402
      %3404 = vrot.lane.b32.xlu0 %v2840, 32
      %v3405 = vpop.permute.xlu0 %3404
      %3406 = vrot.lane.b32.xlu0 %v2841, 32
      %v3407 = vpop.permute.xlu0 %3406
      %3408 = vrot.lane.b32.xlu0 %v2842, 32
      %v3409 = vpop.permute.xlu0 %3408
      %3410 = vrot.lane.b32.xlu0 %v2843, 32
      %v3411 = vpop.permute.xlu0 %3410
      %3412 = vrot.lane.b32.xlu0 %v2844, 32
      %v3413 = vpop.permute.xlu0 %3412
      %3414 = vrot.lane.b32.xlu0 %v2845, 32
      %v3415 = vpop.permute.xlu0 %3414
      %3416 = vrot.lane.b32.xlu0 %v2846, 32
      %v3417 = vpop.permute.xlu0 %3416
      %3418 = vrot.lane.b32.xlu0 %v2847, 32
      %v3419 = vpop.permute.xlu0 %3418
      %3420 = vrot.lane.b32.xlu0 %v2848, 32
      %v3421 = vpop.permute.xlu0 %3420
      %3422 = vrot.lane.b32.xlu0 %v2849, 32
      %v3423 = vpop.permute.xlu0 %3422
      %3424 = vrot.lane.b32.xlu0 %v2850, 32
      %v3425 = vpop.permute.xlu0 %3424
      %3426 = vrot.lane.b32.xlu0 %v2851, 32
      %v3427 = vpop.permute.xlu0 %3426
      %3492 = vrot.lane.b32.xlu0 %v2852, 64
      %v3493 = vpop.permute.xlu0 %3492
      %3494 = vrot.lane.b32.xlu0 %v2853, 64
      %v3495 = vpop.permute.xlu0 %3494
      %3496 = vrot.lane.b32.xlu0 %v2854, 64
      %v3497 = vpop.permute.xlu0 %3496
      %3498 = vrot.lane.b32.xlu0 %v2855, 64
      %v3499 = vpop.permute.xlu0 %3498
      %3500 = vrot.lane.b32.xlu0 %v2856, 64
      %v3501 = vpop.permute.xlu0 %3500
      %3502 = vrot.lane.b32.xlu0 %v2857, 64
      %v3503 = vpop.permute.xlu0 %3502
      %3504 = vrot.lane.b32.xlu0 %v2858, 64
      %v3505 = vpop.permute.xlu0 %3504
      %3506 = vrot.lane.b32.xlu0 %v2859, 64
      %v3507 = vpop.permute.xlu0 %3506
      %3508 = vrot.lane.b32.xlu0 %v2860, 64
      %v3509 = vpop.permute.xlu0 %3508
      %3510 = vrot.lane.b32.xlu0 %v2861, 64
      %v3511 = vpop.permute.xlu0 %3510
      %3512 = vrot.lane.b32.xlu0 %v2862, 64
      %v3513 = vpop.permute.xlu0 %3512
      %3514 = vrot.lane.b32.xlu0 %v2863, 64
      %v3515 = vpop.permute.xlu0 %3514
      %3516 = vrot.lane.b32.xlu0 %v2864, 64
      %v3517 = vpop.permute.xlu0 %3516
      %3518 = vrot.lane.b32.xlu0 %v2865, 64
      %v3519 = vpop.permute.xlu0 %3518
      %3520 = vrot.lane.b32.xlu0 %v2866, 64
      %v3521 = vpop.permute.xlu0 %3520
      %3522 = vrot.lane.b32.xlu0 %v2867, 64
      %v3523 = vpop.permute.xlu0 %3522
      %3524 = vrot.lane.b32.xlu0 %v2868, 64
      %v3525 = vpop.permute.xlu0 %3524
      %3526 = vrot.lane.b32.xlu0 %v2869, 64
      %v3527 = vpop.permute.xlu0 %3526
      %3528 = vrot.lane.b32.xlu0 %v2870, 64
      %v3529 = vpop.permute.xlu0 %3528
      %3530 = vrot.lane.b32.xlu0 %v2871, 64
      %v3531 = vpop.permute.xlu0 %3530
      %3532 = vrot.lane.b32.xlu0 %v2872, 64
      %v3533 = vpop.permute.xlu0 %3532
      %3534 = vrot.lane.b32.xlu0 %v2873, 64
      %v3535 = vpop.permute.xlu0 %3534
      %3536 = vrot.lane.b32.xlu0 %v2874, 64
      %v3537 = vpop.permute.xlu0 %3536
      %3538 = vrot.lane.b32.xlu0 %v2875, 64
      %v3539 = vpop.permute.xlu0 %3538
      %3540 = vrot.lane.b32.xlu0 %v2876, 64
      %v3541 = vpop.permute.xlu0 %3540
      %3542 = vrot.lane.b32.xlu0 %v2877, 64
      %v3543 = vpop.permute.xlu0 %3542
      %3544 = vrot.lane.b32.xlu0 %v2878, 64
      %v3545 = vpop.permute.xlu0 %3544
      %3546 = vrot.lane.b32.xlu0 %v2879, 64
      %v3547 = vpop.permute.xlu0 %3546
      %3548 = vrot.lane.b32.xlu0 %v2880, 64
      %v3549 = vpop.permute.xlu0 %3548
      %3550 = vrot.lane.b32.xlu0 %v2881, 64
      %v3551 = vpop.permute.xlu0 %3550
      %3552 = vrot.lane.b32.xlu0 %v2882, 64
      %v3553 = vpop.permute.xlu0 %3552
      %3554 = vrot.lane.b32.xlu0 %v2883, 64
      %v3555 = vpop.permute.xlu0 %3554
      %3620 = vrot.lane.b32.xlu0 %v2884, 96
      %v3621 = vpop.permute.xlu0 %3620
      %3622 = vrot.lane.b32.xlu0 %v2885, 96
      %v3623 = vpop.permute.xlu0 %3622
      %3624 = vrot.lane.b32.xlu0 %v2886, 96
      %v3625 = vpop.permute.xlu0 %3624
      %3626 = vrot.lane.b32.xlu0 %v2887, 96
      %v3627 = vpop.permute.xlu0 %3626
      %3628 = vrot.lane.b32.xlu0 %v2888, 96
      %v3629 = vpop.permute.xlu0 %3628
      %3630 = vrot.lane.b32.xlu0 %v2889, 96
      %v3631 = vpop.permute.xlu0 %3630
      %3632 = vrot.lane.b32.xlu0 %v2890, 96
      %v3633 = vpop.permute.xlu0 %3632
      %3634 = vrot.lane.b32.xlu0 %v2891, 96
      %v3635 = vpop.permute.xlu0 %3634
      %3636 = vrot.lane.b32.xlu0 %v2892, 96
      %v3637 = vpop.permute.xlu0 %3636
      %3638 = vrot.lane.b32.xlu0 %v2893, 96
      %v3639 = vpop.permute.xlu0 %3638
      %3640 = vrot.lane.b32.xlu0 %v2894, 96
      %v3641 = vpop.permute.xlu0 %3640
      %3642 = vrot.lane.b32.xlu0 %v2895, 96
      %v3643 = vpop.permute.xlu0 %3642
      %3644 = vrot.lane.b32.xlu0 %v2896, 96
      %v3645 = vpop.permute.xlu0 %3644
      %3646 = vrot.lane.b32.xlu0 %v2897, 96
      %v3647 = vpop.permute.xlu0 %3646
      %3648 = vrot.lane.b32.xlu0 %v2898, 96
      %v3649 = vpop.permute.xlu0 %3648
      %3650 = vrot.lane.b32.xlu0 %v2899, 96
      %v3651 = vpop.permute.xlu0 %3650
      %3652 = vrot.lane.b32.xlu0 %v2900, 96
      %v3653 = vpop.permute.xlu0 %3652
      %3654 = vrot.lane.b32.xlu0 %v2901, 96
      %v3655 = vpop.permute.xlu0 %3654
      %3656 = vrot.lane.b32.xlu0 %v2902, 96
      %v3657 = vpop.permute.xlu0 %3656
      %3658 = vrot.lane.b32.xlu0 %v2903, 96
      %v3659 = vpop.permute.xlu0 %3658
      %3660 = vrot.lane.b32.xlu0 %v2904, 96
      %v3661 = vpop.permute.xlu0 %3660
      %3662 = vrot.lane.b32.xlu0 %v2905, 96
      %v3663 = vpop.permute.xlu0 %3662
      %3664 = vrot.lane.b32.xlu0 %v2906, 96
      %v3665 = vpop.permute.xlu0 %3664
      %3666 = vrot.lane.b32.xlu0 %v2907, 96
      %v3667 = vpop.permute.xlu0 %3666
      %3668 = vrot.lane.b32.xlu0 %v2908, 96
      %v3669 = vpop.permute.xlu0 %3668
      %3670 = vrot.lane.b32.xlu0 %v2909, 96
      %v3671 = vpop.permute.xlu0 %3670
      %3672 = vrot.lane.b32.xlu0 %v2910, 96
      %v3673 = vpop.permute.xlu0 %3672
      %3674 = vrot.lane.b32.xlu0 %v2911, 96
      %v3675 = vpop.permute.xlu0 %3674
      %3676 = vrot.lane.b32.xlu0 %v2912, 96
      %v3677 = vpop.permute.xlu0 %3676
      %3678 = vrot.lane.b32.xlu0 %v2913, 96
      %v3679 = vpop.permute.xlu0 %3678
      %3680 = vrot.lane.b32.xlu0 %v2914, 96
      %v3681 = vpop.permute.xlu0 %3680
      %3682 = vrot.lane.b32.xlu0 %v2915, 96
      %v3683 = vpop.permute.xlu0 %3682
      %v3716 = vsel %vm307, %v2660, %v2981
      %v3717 = vsel %vm307, %v2661, %v2983
      %v3718 = vsel %vm307, %v2662, %v2985
      %v3719 = vsel %vm307, %v2663, %v2987
      %v3720 = vsel %vm307, %v2664, %v2989
      %v3721 = vsel %vm307, %v2665, %v2991
      %v3722 = vsel %vm307, %v2666, %v2993
      %v3723 = vsel %vm307, %v2667, %v2995
      %v3724 = vsel %vm307, %v2668, %v2997
      %v3725 = vsel %vm307, %v2669, %v2999
      %v3726 = vsel %vm307, %v2670, %v3001
      %v3727 = vsel %vm307, %v2671, %v3003
      %v3728 = vsel %vm307, %v2672, %v3005
      %v3729 = vsel %vm307, %v2673, %v3007
      %v3730 = vsel %vm307, %v2674, %v3009
      %v3731 = vsel %vm307, %v2675, %v3011
      %v3732 = vsel %vm307, %v2676, %v3013
      %v3733 = vsel %vm307, %v2677, %v3015
      %v3734 = vsel %vm307, %v2678, %v3017
      %v3735 = vsel %vm307, %v2679, %v3019
      %v3736 = vsel %vm307, %v2680, %v3021
      %v3737 = vsel %vm307, %v2681, %v3023
      %v3738 = vsel %vm307, %v2682, %v3025
      %v3739 = vsel %vm307, %v2683, %v3027
      %v3740 = vsel %vm307, %v2684, %v3029
      %v3741 = vsel %vm307, %v2685, %v3031
      %v3742 = vsel %vm307, %v2686, %v3033
      %v3743 = vsel %vm307, %v2687, %v3035
      %v3744 = vsel %vm307, %v2688, %v3037
      %v3745 = vsel %vm307, %v2689, %v3039
      %v3746 = vsel %vm307, %v2690, %v3041
      %v3747 = vsel %vm307, %v2691, %v3043
      %v3748 = vsel %vm1553, %v3716, %v3109
      %v3749 = vsel %vm1553, %v3717, %v3111
      %v3750 = vsel %vm1553, %v3718, %v3113
      %v3751 = vsel %vm1553, %v3719, %v3115
      %v3752 = vsel %vm1553, %v3720, %v3117
      %v3753 = vsel %vm1553, %v3721, %v3119
      %v3754 = vsel %vm1553, %v3722, %v3121
      %v3755 = vsel %vm1553, %v3723, %v3123
      %v3756 = vsel %vm1553, %v3724, %v3125
      %v3757 = vsel %vm1553, %v3725, %v3127
      %v3758 = vsel %vm1553, %v3726, %v3129
      %v3759 = vsel %vm1553, %v3727, %v3131
      %v3760 = vsel %vm1553, %v3728, %v3133
      %v3761 = vsel %vm1553, %v3729, %v3135
      %v3762 = vsel %vm1553, %v3730, %v3137
      %v3763 = vsel %vm1553, %v3731, %v3139
      %v3764 = vsel %vm1553, %v3732, %v3141
      %v3765 = vsel %vm1553, %v3733, %v3143
      %v3766 = vsel %vm1553, %v3734, %v3145
      %v3767 = vsel %vm1553, %v3735, %v3147
      %v3768 = vsel %vm1553, %v3736, %v3149
      %v3769 = vsel %vm1553, %v3737, %v3151
      %v3770 = vsel %vm1553, %v3738, %v3153
      %v3771 = vsel %vm1553, %v3739, %v3155
      %v3772 = vsel %vm1553, %v3740, %v3157
      %v3773 = vsel %vm1553, %v3741, %v3159
      %v3774 = vsel %vm1553, %v3742, %v3161
      %v3775 = vsel %vm1553, %v3743, %v3163
      %v3776 = vsel %vm1553, %v3744, %v3165
      %v3777 = vsel %vm1553, %v3745, %v3167
      %v3778 = vsel %vm1553, %v3746, %v3169
      %v3779 = vsel %vm1553, %v3747, %v3171
      %v3780 = vsel %vm1586, %v3748, %v3237
      %v3781 = vsel %vm1586, %v3749, %v3239
      %v3782 = vsel %vm1586, %v3750, %v3241
      %v3783 = vsel %vm1586, %v3751, %v3243
      %v3784 = vsel %vm1586, %v3752, %v3245
      %v3785 = vsel %vm1586, %v3753, %v3247
      %v3786 = vsel %vm1586, %v3754, %v3249
      %v3787 = vsel %vm1586, %v3755, %v3251
      %v3788 = vsel %vm1586, %v3756, %v3253
      %v3789 = vsel %vm1586, %v3757, %v3255
      %v3790 = vsel %vm1586, %v3758, %v3257
      %v3791 = vsel %vm1586, %v3759, %v3259
      %v3792 = vsel %vm1586, %v3760, %v3261
      %v3793 = vsel %vm1586, %v3761, %v3263
      %v3794 = vsel %vm1586, %v3762, %v3265
      %v3795 = vsel %vm1586, %v3763, %v3267
      %v3796 = vsel %vm1586, %v3764, %v3269
      %v3797 = vsel %vm1586, %v3765, %v3271
      %v3798 = vsel %vm1586, %v3766, %v3273
      %v3799 = vsel %vm1586, %v3767, %v3275
      %v3800 = vsel %vm1586, %v3768, %v3277
      %v3801 = vsel %vm1586, %v3769, %v3279
      %v3802 = vsel %vm1586, %v3770, %v3281
      %v3803 = vsel %vm1586, %v3771, %v3283
      %v3804 = vsel %vm1586, %v3772, %v3285
      %v3805 = vsel %vm1586, %v3773, %v3287
      %v3806 = vsel %vm1586, %v3774, %v3289
      %v3807 = vsel %vm1586, %v3775, %v3291
      %v3808 = vsel %vm1586, %v3776, %v3293
      %v3809 = vsel %vm1586, %v3777, %v3295
      %v3810 = vsel %vm1586, %v3778, %v3297
      %v3811 = vsel %vm1586, %v3779, %v3299
      %v3812 = vsel %vm307, %v2788, %v3365
      %v3813 = vsel %vm307, %v2789, %v3367
      %v3814 = vsel %vm307, %v2790, %v3369
      %v3815 = vsel %vm307, %v2791, %v3371
      %v3816 = vsel %vm307, %v2792, %v3373
      %v3817 = vsel %vm307, %v2793, %v3375
      %v3818 = vsel %vm307, %v2794, %v3377
      %v3819 = vsel %vm307, %v2795, %v3379
      %v3820 = vsel %vm307, %v2796, %v3381
      %v3821 = vsel %vm307, %v2797, %v3383
      %v3822 = vsel %vm307, %v2798, %v3385
      %v3823 = vsel %vm307, %v2799, %v3387
      %v3824 = vsel %vm307, %v2800, %v3389
      %v3825 = vsel %vm307, %v2801, %v3391
      %v3826 = vsel %vm307, %v2802, %v3393
      %v3827 = vsel %vm307, %v2803, %v3395
      %v3828 = vsel %vm307, %v2804, %v3397
      %v3829 = vsel %vm307, %v2805, %v3399
      %v3830 = vsel %vm307, %v2806, %v3401
      %v3831 = vsel %vm307, %v2807, %v3403
      %v3832 = vsel %vm307, %v2808, %v3405
      %v3833 = vsel %vm307, %v2809, %v3407
      %v3834 = vsel %vm307, %v2810, %v3409
      %v3835 = vsel %vm307, %v2811, %v3411
      %v3836 = vsel %vm307, %v2812, %v3413
      %v3837 = vsel %vm307, %v2813, %v3415
      %v3838 = vsel %vm307, %v2814, %v3417
      %v3839 = vsel %vm307, %v2815, %v3419
      %v3840 = vsel %vm307, %v2816, %v3421
      %v3841 = vsel %vm307, %v2817, %v3423
      %v3842 = vsel %vm307, %v2818, %v3425
      %v3843 = vsel %vm307, %v2819, %v3427
      %v3844 = vsel %vm1553, %v3812, %v3493
      %v3845 = vsel %vm1553, %v3813, %v3495
      %v3846 = vsel %vm1553, %v3814, %v3497
      %v3847 = vsel %vm1553, %v3815, %v3499
      %v3848 = vsel %vm1553, %v3816, %v3501
      %v3849 = vsel %vm1553, %v3817, %v3503
      %v3850 = vsel %vm1553, %v3818, %v3505
      %v3851 = vsel %vm1553, %v3819, %v3507
      %v3852 = vsel %vm1553, %v3820, %v3509
      %v3853 = vsel %vm1553, %v3821, %v3511
      %v3854 = vsel %vm1553, %v3822, %v3513
      %v3855 = vsel %vm1553, %v3823, %v3515
      %v3856 = vsel %vm1553, %v3824, %v3517
      %v3857 = vsel %vm1553, %v3825, %v3519
      %v3858 = vsel %vm1553, %v3826, %v3521
      %v3859 = vsel %vm1553, %v3827, %v3523
      %v3860 = vsel %vm1553, %v3828, %v3525
      %v3861 = vsel %vm1553, %v3829, %v3527
      %v3862 = vsel %vm1553, %v3830, %v3529
      %v3863 = vsel %vm1553, %v3831, %v3531
      %v3864 = vsel %vm1553, %v3832, %v3533
      %v3865 = vsel %vm1553, %v3833, %v3535
      %v3866 = vsel %vm1553, %v3834, %v3537
      %v3867 = vsel %vm1553, %v3835, %v3539
      %v3868 = vsel %vm1553, %v3836, %v3541
      %v3869 = vsel %vm1553, %v3837, %v3543
      %v3870 = vsel %vm1553, %v3838, %v3545
      %v3871 = vsel %vm1553, %v3839, %v3547
      %v3872 = vsel %vm1553, %v3840, %v3549
      %v3873 = vsel %vm1553, %v3841, %v3551
      %v3874 = vsel %vm1553, %v3842, %v3553
      %v3875 = vsel %vm1553, %v3843, %v3555
      %v3876 = vsel %vm1586, %v3844, %v3621
      %v3877 = vsel %vm1586, %v3845, %v3623
      %v3878 = vsel %vm1586, %v3846, %v3625
      %v3879 = vsel %vm1586, %v3847, %v3627
      %v3880 = vsel %vm1586, %v3848, %v3629
      %v3881 = vsel %vm1586, %v3849, %v3631
      %v3882 = vsel %vm1586, %v3850, %v3633
      %v3883 = vsel %vm1586, %v3851, %v3635
      %v3884 = vsel %vm1586, %v3852, %v3637
      %v3885 = vsel %vm1586, %v3853, %v3639
      %v3886 = vsel %vm1586, %v3854, %v3641
      %v3887 = vsel %vm1586, %v3855, %v3643
      %v3888 = vsel %vm1586, %v3856, %v3645
      %v3889 = vsel %vm1586, %v3857, %v3647
      %v3890 = vsel %vm1586, %v3858, %v3649
      %v3891 = vsel %vm1586, %v3859, %v3651
      %v3892 = vsel %vm1586, %v3860, %v3653
      %v3893 = vsel %vm1586, %v3861, %v3655
      %v3894 = vsel %vm1586, %v3862, %v3657
      %v3895 = vsel %vm1586, %v3863, %v3659
      %v3896 = vsel %vm1586, %v3864, %v3661
      %v3897 = vsel %vm1586, %v3865, %v3663
      %v3898 = vsel %vm1586, %v3866, %v3665
      %v3899 = vsel %vm1586, %v3867, %v3667
      %v3900 = vsel %vm1586, %v3868, %v3669
      %v3901 = vsel %vm1586, %v3869, %v3671
      %v3902 = vsel %vm1586, %v3870, %v3673
      %v3903 = vsel %vm1586, %v3871, %v3675
      %v3904 = vsel %vm1586, %v3872, %v3677
      %v3905 = vsel %vm1586, %v3873, %v3679
      %v3906 = vsel %vm1586, %v3874, %v3681
      %v3907 = vsel %vm1586, %v3875, %v3683
      %v3908 = vpack.c.bf16 %v3781, %v3780
      %v3909 = vpack.c.bf16 %v3877, %v3876
      %v3910 = vpack.c.bf16 %v2917, %v2916
      %v3911 = vpack.c.bf16 %v3783, %v3782
      %v3912 = vpack.c.bf16 %v3879, %v3878
      %v3913 = vpack.c.bf16 %v2919, %v2918
      %v3914 = vpack.c.bf16 %v3785, %v3784
      %v3915 = vpack.c.bf16 %v3881, %v3880
      %v3916 = vpack.c.bf16 %v2921, %v2920
      %v3917 = vpack.c.bf16 %v3787, %v3786
      %v3918 = vpack.c.bf16 %v3883, %v3882
      %v3919 = vpack.c.bf16 %v2923, %v2922
      %v3920 = vpack.c.bf16 %v3789, %v3788
      %v3921 = vpack.c.bf16 %v3885, %v3884
      %v3922 = vpack.c.bf16 %v2925, %v2924
      %v3923 = vpack.c.bf16 %v3791, %v3790
      %v3924 = vpack.c.bf16 %v3887, %v3886
      %v3925 = vpack.c.bf16 %v2927, %v2926
      %v3926 = vpack.c.bf16 %v3793, %v3792
      %v3927 = vpack.c.bf16 %v3889, %v3888
      %v3928 = vpack.c.bf16 %v2929, %v2928
      %v3929 = vpack.c.bf16 %v3795, %v3794
      %v3930 = vpack.c.bf16 %v3891, %v3890
      %v3931 = vpack.c.bf16 %v2931, %v2930
      %v3932 = vpack.c.bf16 %v3797, %v3796
      %v3933 = vpack.c.bf16 %v3893, %v3892
      %v3934 = vpack.c.bf16 %v2933, %v2932
      %v3935 = vpack.c.bf16 %v3799, %v3798
      %v3936 = vpack.c.bf16 %v3895, %v3894
      %v3937 = vpack.c.bf16 %v2935, %v2934
      %v3938 = vpack.c.bf16 %v3801, %v3800
      %v3939 = vpack.c.bf16 %v3897, %v3896
      %v3940 = vpack.c.bf16 %v2937, %v2936
      %v3941 = vpack.c.bf16 %v3803, %v3802
      %v3942 = vpack.c.bf16 %v3899, %v3898
      %v3943 = vpack.c.bf16 %v2939, %v2938
      %v3944 = vpack.c.bf16 %v3805, %v3804
      %v3945 = vpack.c.bf16 %v3901, %v3900
      %v3946 = vpack.c.bf16 %v2941, %v2940
      %v3947 = vpack.c.bf16 %v3807, %v3806
      %v3948 = vpack.c.bf16 %v3903, %v3902
      %v3949 = vpack.c.bf16 %v2943, %v2942
      %v3950 = vpack.c.bf16 %v3809, %v3808
      %v3951 = vpack.c.bf16 %v3905, %v3904
      %v3952 = vpack.c.bf16 %v2945, %v2944
      %v3953 = vpack.c.bf16 %v3811, %v3810
      %v3954 = vpack.c.bf16 %v3907, %v3906
      %v3955 = vpack.c.bf16 %v2947, %v2946
      %s3956 = scalar_lea.vmem %s1, 144
      %v3957 = vld [vmem:[%s3956] sm:$0xf]
      %v3958 = vld [vmem:[%s3956 + $0x4] sm:$0xf]
      %v3959 = vld [vmem:[%s3956 + $0x8] sm:$0xf]
      %v3960 = vld [vmem:[%s3956 + $0xc] sm:$0xf]
      %v3961 = vld [vmem:[%s3956 + $0x10] sm:$0xf]
      %v3962 = vld [vmem:[%s3956 + $0x14] sm:$0xf]
      %v3963 = vld [vmem:[%s3956 + $0x18] sm:$0xf]
      %v3964 = vld [vmem:[%s3956 + $0x1c] sm:$0xf]
      %v3965 = vld [vmem:[%s3956 + $0x20] sm:$0xf]
      %v3966 = vld [vmem:[%s3956 + $0x24] sm:$0xf]
      %v3967 = vld [vmem:[%s3956 + $0x28] sm:$0xf]
      %v3968 = vld [vmem:[%s3956 + $0x2c] sm:$0xf]
      %v3969 = vld [vmem:[%s3956 + $0x30] sm:$0xf]
      %v3970 = vld [vmem:[%s3956 + $0x34] sm:$0xf]
      %v3971 = vld [vmem:[%s3956 + $0x38] sm:$0xf]
      %v3972 = vld [vmem:[%s3956 + $0x3c] sm:$0xf]
      %v3973 = vld [vmem:[%s3956 + $0x40] sm:$0xf]
      %v3974 = vld [vmem:[%s3956 + $0x44] sm:$0xf]
      %v3975 = vld [vmem:[%s3956 + $0x48] sm:$0xf]
      %v3976 = vld [vmem:[%s3956 + $0x4c] sm:$0xf]
      %v3977 = vld [vmem:[%s3956 + $0x50] sm:$0xf]
      %v3978 = vld [vmem:[%s3956 + $0x54] sm:$0xf]
      %v3979 = vld [vmem:[%s3956 + $0x58] sm:$0xf]
      %v3980 = vld [vmem:[%s3956 + $0x5c] sm:$0xf]
      %v3981 = vld [vmem:[%s3956 + $0x60] sm:$0xf]
      %v3982 = vld [vmem:[%s3956 + $0x64] sm:$0xf]
      %v3983 = vld [vmem:[%s3956 + $0x68] sm:$0xf]
      %v3984 = vld [vmem:[%s3956 + $0x6c] sm:$0xf]
      %v3985 = vld [vmem:[%s3956 + $0x70] sm:$0xf]
      %v3986 = vld [vmem:[%s3956 + $0x74] sm:$0xf]
      %v3987 = vld [vmem:[%s3956 + $0x78] sm:$0xf]
      %v3988 = vld [vmem:[%s3956 + $0x7c] sm:$0xf]
      %v3989 = vld [vmem:[%s3956 + $0x80] sm:$0xf]
      %v3990 = vld [vmem:[%s3956 + $0x84] sm:$0xf]
      %v3991 = vld [vmem:[%s3956 + $0x88] sm:$0xf]
      %v3992 = vld [vmem:[%s3956 + $0x8c] sm:$0xf]
      %s3993 = scalar_lea.vmem %s2, 1
      %v3994 = vld [vmem:[%s3993] sm:$0x1]
      %v3996 = vperm.slane %v3994, 0
      %v4034 = vunpack.c.l.b16 %v3957
      %v4035 = vunpack.c.l.b16 %v3958
      %v4036 = vunpack.c.l.b16 %v3959
      %v4037 = vunpack.c.l.b16 %v3960
      %v4038 = vunpack.c.l.b16 %v3961
      %v4039 = vunpack.c.l.b16 %v3962
      %v4040 = vunpack.c.l.b16 %v3963
      %v4041 = vunpack.c.l.b16 %v3964
      %v4042 = vunpack.c.l.b16 %v3965
      %v4043 = vunpack.c.l.b16 %v3966
      %v4044 = vunpack.c.l.b16 %v3967
      %v4045 = vunpack.c.l.b16 %v3968
      %v4046 = vunpack.c.l.b16 %v3969
      %v4047 = vunpack.c.l.b16 %v3970
      %v4048 = vunpack.c.l.b16 %v3971
      %v4049 = vunpack.c.l.b16 %v3972
      %v4050 = vunpack.c.l.b16 %v3973
      %v4051 = vunpack.c.l.b16 %v3974
      %v4052 = vunpack.c.l.b16 %v3975
      %v4053 = vunpack.c.l.b16 %v3976
      %v4054 = vunpack.c.l.b16 %v3977
      %v4055 = vunpack.c.l.b16 %v3978
      %v4056 = vunpack.c.l.b16 %v3979
      %v4057 = vunpack.c.l.b16 %v3980
      %v4058 = vunpack.c.l.b16 %v3981
      %v4059 = vunpack.c.l.b16 %v3982
      %v4060 = vunpack.c.l.b16 %v3983
      %v4061 = vunpack.c.l.b16 %v3984
      %v4062 = vunpack.c.l.b16 %v3985
      %v4063 = vunpack.c.l.b16 %v3986
      %v4064 = vunpack.c.l.b16 %v3987
      %v4065 = vunpack.c.l.b16 %v3988
      %v4066 = vunpack.c.l.b16 %v3989
      %v4067 = vunpack.c.l.b16 %v3990
      %v4068 = vunpack.c.l.b16 %v3991
      %v4069 = vunpack.c.l.b16 %v3992
      %v4070 = vpack.c.b16 %v4035, %v4034
      %v4071 = vpack.c.b16 %v4037, %v4036
      %v4072 = vpack.c.b16 %v4039, %v4038
      %v4073 = vpack.c.b16 %v4041, %v4040
      %v4074 = vpack.c.b16 %v4043, %v4042
      %v4075 = vpack.c.b16 %v4045, %v4044
      %v4076 = vpack.c.b16 %v4047, %v4046
      %v4077 = vpack.c.b16 %v4049, %v4048
      %v4078 = vpack.c.b16 %v4051, %v4050
      %v4079 = vpack.c.b16 %v4053, %v4052
      %v4080 = vpack.c.b16 %v4055, %v4054
      %v4081 = vpack.c.b16 %v4057, %v4056
      %v4082 = vpack.c.b16 %v4059, %v4058
      %v4083 = vpack.c.b16 %v4061, %v4060
      %v4084 = vpack.c.b16 %v4063, %v4062
      %v4085 = vpack.c.b16 %v4065, %v4064
      %v4086 = vpack.c.b16 %v4067, %v4066
      %v4087 = vpack.c.b16 %v4069, %v4068
      %v4107 = vsel %vm307, %v3910, 0
      %v4110 = vsel %vm307, %v3913, 0
      %v4113 = vsel %vm307, %v3916, 0
      %v4116 = vsel %vm307, %v3919, 0
      %v4119 = vsel %vm307, %v3922, 0
      %v4122 = vsel %vm307, %v3925, 0
      %v4125 = vsel %vm307, %v3928, 0
      %v4128 = vsel %vm307, %v3931, 0
      %v4131 = vsel %vm307, %v3934, 0
      %v4134 = vsel %vm307, %v3937, 0
      %v4137 = vsel %vm307, %v3940, 0
      %v4140 = vsel %vm307, %v3943, 0
      %v4143 = vsel %vm307, %v3946, 0
      %v4146 = vsel %vm307, %v3949, 0
      %v4149 = vsel %vm307, %v3952, 0
      %v4152 = vsel %vm307, %v3955, 0
      %4154 = vmatpush.bf16.msra.mxu0 %v4077
      %4155 = vmatpush.bf16.msra.mxu0 %v4076
      %4156 = vmatpush.bf16.msra.mxu0 %v4075
      %4157 = vmatpush.bf16.msra.mxu0 %v4074
      %4158 = vmatpush.bf16.msra.mxu0 %v4073
      %4159 = vmatpush.bf16.msra.mxu0 %v4072
      %4160 = vmatpush.bf16.msra.mxu0 %v4071
      %4161 = vmatpush.bf16.msra.mxu0 %v4070
      %4162 = vmatmul.bf16.gmra.mxu0 %v3908
      %v4163 = vpop.f32.mrf.mxu0
      %v4164 = vadd.f32 %v3996, %v4163
      %v4165 = vpop.f32.mrf.mxu0
      %v4166 = vadd.f32 %v3996, %v4165
      %4167 = vmatmul.bf16.gmra.mxu0 %v3911
      %v4168 = vpop.f32.mrf.mxu0
      %v4169 = vadd.f32 %v3996, %v4168
      %v4170 = vpop.f32.mrf.mxu0
      %v4171 = vadd.f32 %v3996, %v4170
      %4172 = vmatmul.bf16.gmra.mxu0 %v3914
      %v4173 = vpop.f32.mrf.mxu0
      %v4174 = vadd.f32 %v3996, %v4173
      %v4175 = vpop.f32.mrf.mxu0
      %v4176 = vadd.f32 %v3996, %v4175
      %4177 = vmatmul.bf16.gmra.mxu0 %v3917
      %v4178 = vpop.f32.mrf.mxu0
      %v4179 = vadd.f32 %v3996, %v4178
      %v4180 = vpop.f32.mrf.mxu0
      %v4181 = vadd.f32 %v3996, %v4180
      %4182 = vmatmul.bf16.gmra.mxu0 %v3920
      %v4183 = vpop.f32.mrf.mxu0
      %v4184 = vadd.f32 %v3996, %v4183
      %v4185 = vpop.f32.mrf.mxu0
      %v4186 = vadd.f32 %v3996, %v4185
      %4187 = vmatmul.bf16.gmra.mxu0 %v3923
      %v4188 = vpop.f32.mrf.mxu0
      %v4189 = vadd.f32 %v3996, %v4188
      %v4190 = vpop.f32.mrf.mxu0
      %v4191 = vadd.f32 %v3996, %v4190
      %4192 = vmatmul.bf16.gmra.mxu0 %v3926
      %v4193 = vpop.f32.mrf.mxu0
      %v4194 = vadd.f32 %v3996, %v4193
      %v4195 = vpop.f32.mrf.mxu0
      %v4196 = vadd.f32 %v3996, %v4195
      %4197 = vmatmul.bf16.gmra.mxu0 %v3929
      %v4198 = vpop.f32.mrf.mxu0
      %v4199 = vadd.f32 %v3996, %v4198
      %v4200 = vpop.f32.mrf.mxu0
      %v4201 = vadd.f32 %v3996, %v4200
      %4202 = vmatmul.bf16.gmra.mxu0 %v3932
      %v4203 = vpop.f32.mrf.mxu0
      %v4204 = vadd.f32 %v3996, %v4203
      %v4205 = vpop.f32.mrf.mxu0
      %v4206 = vadd.f32 %v3996, %v4205
      %4207 = vmatmul.bf16.gmra.mxu0 %v3935
      %v4208 = vpop.f32.mrf.mxu0
      %v4209 = vadd.f32 %v3996, %v4208
      %v4210 = vpop.f32.mrf.mxu0
      %v4211 = vadd.f32 %v3996, %v4210
      %4212 = vmatmul.bf16.gmra.mxu0 %v3938
      %v4213 = vpop.f32.mrf.mxu0
      %v4214 = vadd.f32 %v3996, %v4213
      %v4215 = vpop.f32.mrf.mxu0
      %v4216 = vadd.f32 %v3996, %v4215
      %4217 = vmatmul.bf16.gmra.mxu0 %v3941
      %v4218 = vpop.f32.mrf.mxu0
      %v4219 = vadd.f32 %v3996, %v4218
      %v4220 = vpop.f32.mrf.mxu0
      %v4221 = vadd.f32 %v3996, %v4220
      %4222 = vmatmul.bf16.gmra.mxu0 %v3944
      %v4223 = vpop.f32.mrf.mxu0
      %v4224 = vadd.f32 %v3996, %v4223
      %v4225 = vpop.f32.mrf.mxu0
      %v4226 = vadd.f32 %v3996, %v4225
      %4227 = vmatmul.bf16.gmra.mxu0 %v3947
      %v4228 = vpop.f32.mrf.mxu0
      %v4229 = vadd.f32 %v3996, %v4228
      %v4230 = vpop.f32.mrf.mxu0
      %v4231 = vadd.f32 %v3996, %v4230
      %4232 = vmatmul.bf16.gmra.mxu0 %v3950
      %v4233 = vpop.f32.mrf.mxu0
      %v4234 = vadd.f32 %v3996, %v4233
      %v4235 = vpop.f32.mrf.mxu0
      %v4236 = vadd.f32 %v3996, %v4235
      %4237 = vmatmul.bf16.gmra.mxu0 %v3953
      %v4238 = vpop.f32.mrf.mxu0
      %v4239 = vadd.f32 %v3996, %v4238
      %v4240 = vpop.f32.mrf.mxu0
      %v4241 = vadd.f32 %v3996, %v4240
      %4242 = vdwg.mxu0
      %4243 = vmatpush.bf16.msra.mxu0 %v4085
      %4244 = vmatpush.bf16.msra.mxu0 %v4084
      %4245 = vmatpush.bf16.msra.mxu0 %v4083
      %4246 = vmatpush.bf16.msra.mxu0 %v4082
      %4247 = vmatpush.bf16.msra.mxu0 %v4081
      %4248 = vmatpush.bf16.msra.mxu0 %v4080
      %4249 = vmatpush.bf16.msra.mxu0 %v4079
      %4250 = vmatpush.bf16.msra.mxu0 %v4078
      %4251 = vmatmul.bf16.gmra.mxu0 %v3909
      %v4252 = vpop.f32.mrf.mxu0
      %v4253 = vadd.f32 %v4164, %v4252
      %v4254 = vpop.f32.mrf.mxu0
      %v4255 = vadd.f32 %v4166, %v4254
      %4256 = vmatmul.bf16.gmra.mxu0 %v3912
      %v4257 = vpop.f32.mrf.mxu0
      %v4258 = vadd.f32 %v4169, %v4257
      %v4259 = vpop.f32.mrf.mxu0
      %v4260 = vadd.f32 %v4171, %v4259
      %4261 = vmatmul.bf16.gmra.mxu0 %v3915
      %v4262 = vpop.f32.mrf.mxu0
      %v4263 = vadd.f32 %v4174, %v4262
      %v4264 = vpop.f32.mrf.mxu0
      %v4265 = vadd.f32 %v4176, %v4264
      %4266 = vmatmul.bf16.gmra.mxu0 %v3918
      %v4267 = vpop.f32.mrf.mxu0
      %v4268 = vadd.f32 %v4179, %v4267
      %v4269 = vpop.f32.mrf.mxu0
      %v4270 = vadd.f32 %v4181, %v4269
      %4271 = vmatmul.bf16.gmra.mxu0 %v3921
      %v4272 = vpop.f32.mrf.mxu0
      %v4273 = vadd.f32 %v4184, %v4272
      %v4274 = vpop.f32.mrf.mxu0
      %v4275 = vadd.f32 %v4186, %v4274
      %4276 = vmatmul.bf16.gmra.mxu0 %v3924
      %v4277 = vpop.f32.mrf.mxu0
      %v4278 = vadd.f32 %v4189, %v4277
      %v4279 = vpop.f32.mrf.mxu0
      %v4280 = vadd.f32 %v4191, %v4279
      %4281 = vmatmul.bf16.gmra.mxu0 %v3927
      %v4282 = vpop.f32.mrf.mxu0
      %v4283 = vadd.f32 %v4194, %v4282
      %v4284 = vpop.f32.mrf.mxu0
      %v4285 = vadd.f32 %v4196, %v4284
      %4286 = vmatmul.bf16.gmra.mxu0 %v3930
      %v4287 = vpop.f32.mrf.mxu0
      %v4288 = vadd.f32 %v4199, %v4287
      %v4289 = vpop.f32.mrf.mxu0
      %v4290 = vadd.f32 %v4201, %v4289
      %4291 = vmatmul.bf16.gmra.mxu0 %v3933
      %v4292 = vpop.f32.mrf.mxu0
      %v4293 = vadd.f32 %v4204, %v4292
      %v4294 = vpop.f32.mrf.mxu0
      %v4295 = vadd.f32 %v4206, %v4294
      %4296 = vmatmul.bf16.gmra.mxu0 %v3936
      %v4297 = vpop.f32.mrf.mxu0
      %v4298 = vadd.f32 %v4209, %v4297
      %v4299 = vpop.f32.mrf.mxu0
      %v4300 = vadd.f32 %v4211, %v4299
      %4301 = vmatmul.bf16.gmra.mxu0 %v3939
      %v4302 = vpop.f32.mrf.mxu0
      %v4303 = vadd.f32 %v4214, %v4302
      %v4304 = vpop.f32.mrf.mxu0
      %v4305 = vadd.f32 %v4216, %v4304
      %4306 = vmatmul.bf16.gmra.mxu0 %v3942
      %v4307 = vpop.f32.mrf.mxu0
      %v4308 = vadd.f32 %v4219, %v4307
      %v4309 = vpop.f32.mrf.mxu0
      %v4310 = vadd.f32 %v4221, %v4309
      %4311 = vmatmul.bf16.gmra.mxu0 %v3945
      %v4312 = vpop.f32.mrf.mxu0
      %v4313 = vadd.f32 %v4224, %v4312
      %v4314 = vpop.f32.mrf.mxu0
      %v4315 = vadd.f32 %v4226, %v4314
      %4316 = vmatmul.bf16.gmra.mxu0 %v3948
      %v4317 = vpop.f32.mrf.mxu0
      %v4318 = vadd.f32 %v4229, %v4317
      %v4319 = vpop.f32.mrf.mxu0
      %v4320 = vadd.f32 %v4231, %v4319
      %4321 = vmatmul.bf16.gmra.mxu0 %v3951
      %v4322 = vpop.f32.mrf.mxu0
      %v4323 = vadd.f32 %v4234, %v4322
      %v4324 = vpop.f32.mrf.mxu0
      %v4325 = vadd.f32 %v4236, %v4324
      %4326 = vmatmul.bf16.gmra.mxu0 %v3954
      %v4327 = vpop.f32.mrf.mxu0
      %v4328 = vadd.f32 %v4239, %v4327
      %v4329 = vpop.f32.mrf.mxu0
      %v4330 = vadd.f32 %v4241, %v4329
      %4331 = vdwg.mxu0
      %4332 = vmatpush.bf16.msra.mxu0 0
      %4333 = vmatpush.bf16.msra.mxu0 0
      %4334 = vmatpush.bf16.msra.mxu0 0
      %4335 = vmatpush.bf16.msra.mxu0 0
      %4336 = vmatpush.bf16.msra.mxu0 0
      %4337 = vmatpush.bf16.msra.mxu0 0
      %4338 = vmatpush.bf16.msra.mxu0 %v4087
      %4339 = vmatpush.bf16.msra.mxu0 %v4086
      %4340 = vmatmul.bf16.gmra.mxu0 %v4107
      %v4341 = vpop.f32.mrf.mxu0
      %v4342 = vadd.f32 %v4253, %v4341
      %v4343 = vpop.f32.mrf.mxu0
      %v4344 = vadd.f32 %v4255, %v4343
      %4345 = vmatmul.bf16.gmra.mxu0 %v4110
      %v4346 = vpop.f32.mrf.mxu0
      %v4347 = vadd.f32 %v4258, %v4346
      %v4348 = vpop.f32.mrf.mxu0
      %v4349 = vadd.f32 %v4260, %v4348
      %4350 = vmatmul.bf16.gmra.mxu0 %v4113
      %v4351 = vpop.f32.mrf.mxu0
      %v4352 = vadd.f32 %v4263, %v4351
      %v4353 = vpop.f32.mrf.mxu0
      %v4354 = vadd.f32 %v4265, %v4353
      %4355 = vmatmul.bf16.gmra.mxu0 %v4116
      %v4356 = vpop.f32.mrf.mxu0
      %v4357 = vadd.f32 %v4268, %v4356
      %v4358 = vpop.f32.mrf.mxu0
      %v4359 = vadd.f32 %v4270, %v4358
      %4360 = vmatmul.bf16.gmra.mxu0 %v4119
      %v4361 = vpop.f32.mrf.mxu0
      %v4362 = vadd.f32 %v4273, %v4361
      %v4363 = vpop.f32.mrf.mxu0
      %v4364 = vadd.f32 %v4275, %v4363
      %4365 = vmatmul.bf16.gmra.mxu0 %v4122
      %v4366 = vpop.f32.mrf.mxu0
      %v4367 = vadd.f32 %v4278, %v4366
      %v4368 = vpop.f32.mrf.mxu0
      %v4369 = vadd.f32 %v4280, %v4368
      %4370 = vmatmul.bf16.gmra.mxu0 %v4125
      %v4371 = vpop.f32.mrf.mxu0
      %v4372 = vadd.f32 %v4283, %v4371
      %v4373 = vpop.f32.mrf.mxu0
      %v4374 = vadd.f32 %v4285, %v4373
      %4375 = vmatmul.bf16.gmra.mxu0 %v4128
      %v4376 = vpop.f32.mrf.mxu0
      %v4377 = vadd.f32 %v4288, %v4376
      %v4378 = vpop.f32.mrf.mxu0
      %v4379 = vadd.f32 %v4290, %v4378
      %4380 = vmatmul.bf16.gmra.mxu0 %v4131
      %v4381 = vpop.f32.mrf.mxu0
      %v4382 = vadd.f32 %v4293, %v4381
      %v4383 = vpop.f32.mrf.mxu0
      %v4384 = vadd.f32 %v4295, %v4383
      %4385 = vmatmul.bf16.gmra.mxu0 %v4134
      %v4386 = vpop.f32.mrf.mxu0
      %v4387 = vadd.f32 %v4298, %v4386
      %v4388 = vpop.f32.mrf.mxu0
      %v4389 = vadd.f32 %v4300, %v4388
      %4390 = vmatmul.bf16.gmra.mxu0 %v4137
      %v4391 = vpop.f32.mrf.mxu0
      %v4392 = vadd.f32 %v4303, %v4391
      %v4393 = vpop.f32.mrf.mxu0
      %v4394 = vadd.f32 %v4305, %v4393
      %4395 = vmatmul.bf16.gmra.mxu0 %v4140
      %v4396 = vpop.f32.mrf.mxu0
      %v4397 = vadd.f32 %v4308, %v4396
      %v4398 = vpop.f32.mrf.mxu0
      %v4399 = vadd.f32 %v4310, %v4398
      %4400 = vmatmul.bf16.gmra.mxu0 %v4143
      %v4401 = vpop.f32.mrf.mxu0
      %v4402 = vadd.f32 %v4313, %v4401
      %v4403 = vpop.f32.mrf.mxu0
      %v4404 = vadd.f32 %v4315, %v4403
      %4405 = vmatmul.bf16.gmra.mxu0 %v4146
      %v4406 = vpop.f32.mrf.mxu0
      %v4407 = vadd.f32 %v4318, %v4406
      %v4408 = vpop.f32.mrf.mxu0
      %v4409 = vadd.f32 %v4320, %v4408
      %4410 = vmatmul.bf16.gmra.mxu0 %v4149
      %v4411 = vpop.f32.mrf.mxu0
      %v4412 = vadd.f32 %v4323, %v4411
      %v4413 = vpop.f32.mrf.mxu0
      %v4414 = vadd.f32 %v4325, %v4413
      %4415 = vmatmul.bf16.gmra.mxu0 %v4152
      %v4416 = vpop.f32.mrf.mxu0
      %v4417 = vadd.f32 %v4328, %v4416
      %v4418 = vpop.f32.mrf.mxu0
      %v4419 = vadd.f32 %v4330, %v4418
      %4420 = vdwg.mxu0
      %v4421 = vsel %vm307, %v4342, 0.0
      %v4422 = vsel %vm307, %v4344, 0.0
      %v4423 = vadd.f32 %v4421, %v4422
      %v4424 = vsel %vm307, %v4347, 0.0
      %v4425 = vadd.f32 %v4423, %v4424
      %v4426 = vsel %vm307, %v4349, 0.0
      %v4427 = vadd.f32 %v4425, %v4426
      %v4428 = vsel %vm307, %v4352, 0.0
      %v4429 = vadd.f32 %v4427, %v4428
      %v4430 = vsel %vm307, %v4354, 0.0
      %v4431 = vadd.f32 %v4429, %v4430
      %v4432 = vsel %vm307, %v4357, 0.0
      %v4433 = vadd.f32 %v4431, %v4432
      %v4434 = vsel %vm307, %v4359, 0.0
      %v4435 = vadd.f32 %v4433, %v4434
      %v4436 = vsel %vm307, %v4362, 0.0
      %v4437 = vadd.f32 %v4435, %v4436
      %v4438 = vsel %vm307, %v4364, 0.0
      %v4439 = vadd.f32 %v4437, %v4438
      %v4440 = vsel %vm307, %v4367, 0.0
      %v4441 = vadd.f32 %v4439, %v4440
      %v4442 = vsel %vm307, %v4369, 0.0
      %v4443 = vadd.f32 %v4441, %v4442
      %v4444 = vsel %vm307, %v4372, 0.0
      %v4445 = vadd.f32 %v4443, %v4444
      %v4446 = vsel %vm307, %v4374, 0.0
      %v4447 = vadd.f32 %v4445, %v4446
      %v4448 = vsel %vm307, %v4377, 0.0
      %v4449 = vadd.f32 %v4447, %v4448
      %v4450 = vsel %vm307, %v4379, 0.0
      %v4451 = vadd.f32 %v4449, %v4450
      %v4452 = vsel %vm307, %v4382, 0.0
      %v4453 = vadd.f32 %v4451, %v4452
      %v4454 = vsel %vm307, %v4384, 0.0
      %v4455 = vadd.f32 %v4453, %v4454
      %v4456 = vsel %vm307, %v4387, 0.0
      %v4457 = vadd.f32 %v4455, %v4456
      %v4458 = vsel %vm307, %v4389, 0.0
      %v4459 = vadd.f32 %v4457, %v4458
      %v4460 = vsel %vm307, %v4392, 0.0
      %v4461 = vadd.f32 %v4459, %v4460
      %v4462 = vsel %vm307, %v4394, 0.0
      %v4463 = vadd.f32 %v4461, %v4462
      %v4464 = vsel %vm307, %v4397, 0.0
      %v4465 = vadd.f32 %v4463, %v4464
      %v4466 = vsel %vm307, %v4399, 0.0
      %v4467 = vadd.f32 %v4465, %v4466
      %v4468 = vsel %vm307, %v4402, 0.0
      %v4469 = vadd.f32 %v4467, %v4468
      %v4470 = vsel %vm307, %v4404, 0.0
      %v4471 = vadd.f32 %v4469, %v4470
      %v4472 = vsel %vm307, %v4407, 0.0
      %v4473 = vadd.f32 %v4471, %v4472
      %v4474 = vsel %vm307, %v4409, 0.0
      %v4475 = vadd.f32 %v4473, %v4474
      %v4476 = vsel %vm307, %v4412, 0.0
      %v4477 = vadd.f32 %v4475, %v4476
      %v4478 = vsel %vm307, %v4414, 0.0
      %v4479 = vadd.f32 %v4477, %v4478
      %v4480 = vsel %vm307, %v4417, 0.0
      %v4481 = vadd.f32 %v4479, %v4480
      %v4482 = vsel %vm307, %v4419, 0.0
      %v4483 = vadd.f32 %v4481, %v4482
      %v4484 = vrot.slane %v4483, 4
      %v4485 = vadd.f32 %v4483, %v4484
      %v4486 = vrot.slane %v4485, 2
      %v4487 = vadd.f32 %v4485, %v4486
      %v4488 = vrot.slane %v4487, 1
      %v4489 = vadd.f32 %v4487, %v4488
      %v4490 = vmul.f32 %v4342, %v4342
      %v4491 = vmul.f32 %v4344, %v4344
      %v4492 = vmul.f32 %v4347, %v4347
      %v4493 = vmul.f32 %v4349, %v4349
      %v4494 = vmul.f32 %v4352, %v4352
      %v4495 = vmul.f32 %v4354, %v4354
      %v4496 = vmul.f32 %v4357, %v4357
      %v4497 = vmul.f32 %v4359, %v4359
      %v4498 = vmul.f32 %v4362, %v4362
      %v4499 = vmul.f32 %v4364, %v4364
      %v4500 = vmul.f32 %v4367, %v4367
      %v4501 = vmul.f32 %v4369, %v4369
      %v4502 = vmul.f32 %v4372, %v4372
      %v4503 = vmul.f32 %v4374, %v4374
      %v4504 = vmul.f32 %v4377, %v4377
      %v4505 = vmul.f32 %v4379, %v4379
      %v4506 = vmul.f32 %v4382, %v4382
      %v4507 = vmul.f32 %v4384, %v4384
      %v4508 = vmul.f32 %v4387, %v4387
      %v4509 = vmul.f32 %v4389, %v4389
      %v4510 = vmul.f32 %v4392, %v4392
      %v4511 = vmul.f32 %v4394, %v4394
      %v4512 = vmul.f32 %v4397, %v4397
      %v4513 = vmul.f32 %v4399, %v4399
      %v4514 = vmul.f32 %v4402, %v4402
      %v4515 = vmul.f32 %v4404, %v4404
      %v4516 = vmul.f32 %v4407, %v4407
      %v4517 = vmul.f32 %v4409, %v4409
      %v4518 = vmul.f32 %v4412, %v4412
      %v4519 = vmul.f32 %v4414, %v4414
      %v4520 = vmul.f32 %v4417, %v4417
      %v4521 = vmul.f32 %v4419, %v4419
      %v4522 = vsel %vm307, %v4490, 0.0
      %v4523 = vsel %vm307, %v4491, 0.0
      %v4524 = vadd.f32 %v4522, %v4523
      %v4525 = vsel %vm307, %v4492, 0.0
      %v4526 = vadd.f32 %v4524, %v4525
      %v4527 = vsel %vm307, %v4493, 0.0
      %v4528 = vadd.f32 %v4526, %v4527
      %v4529 = vsel %vm307, %v4494, 0.0
      %v4530 = vadd.f32 %v4528, %v4529
      %v4531 = vsel %vm307, %v4495, 0.0
      %v4532 = vadd.f32 %v4530, %v4531
      %v4533 = vsel %vm307, %v4496, 0.0
      %v4534 = vadd.f32 %v4532, %v4533
      %v4535 = vsel %vm307, %v4497, 0.0
      %v4536 = vadd.f32 %v4534, %v4535
      %v4537 = vsel %vm307, %v4498, 0.0
      %v4538 = vadd.f32 %v4536, %v4537
      %v4539 = vsel %vm307, %v4499, 0.0
      %v4540 = vadd.f32 %v4538, %v4539
      %v4541 = vsel %vm307, %v4500, 0.0
      %v4542 = vadd.f32 %v4540, %v4541
      %v4543 = vsel %vm307, %v4501, 0.0
      %v4544 = vadd.f32 %v4542, %v4543
      %v4545 = vsel %vm307, %v4502, 0.0
      %v4546 = vadd.f32 %v4544, %v4545
      %v4547 = vsel %vm307, %v4503, 0.0
      %v4548 = vadd.f32 %v4546, %v4547
      %v4549 = vsel %vm307, %v4504, 0.0
      %v4550 = vadd.f32 %v4548, %v4549
      %v4551 = vsel %vm307, %v4505, 0.0
      %v4552 = vadd.f32 %v4550, %v4551
      %v4553 = vsel %vm307, %v4506, 0.0
      %v4554 = vadd.f32 %v4552, %v4553
      %v4555 = vsel %vm307, %v4507, 0.0
      %v4556 = vadd.f32 %v4554, %v4555
      %v4557 = vsel %vm307, %v4508, 0.0
      %v4558 = vadd.f32 %v4556, %v4557
      %v4559 = vsel %vm307, %v4509, 0.0
      %v4560 = vadd.f32 %v4558, %v4559
      %v4561 = vsel %vm307, %v4510, 0.0
      %v4562 = vadd.f32 %v4560, %v4561
      %v4563 = vsel %vm307, %v4511, 0.0
      %v4564 = vadd.f32 %v4562, %v4563
      %v4565 = vsel %vm307, %v4512, 0.0
      %v4566 = vadd.f32 %v4564, %v4565
      %v4567 = vsel %vm307, %v4513, 0.0
      %v4568 = vadd.f32 %v4566, %v4567
      %v4569 = vsel %vm307, %v4514, 0.0
      %v4570 = vadd.f32 %v4568, %v4569
      %v4571 = vsel %vm307, %v4515, 0.0
      %v4572 = vadd.f32 %v4570, %v4571
      %v4573 = vsel %vm307, %v4516, 0.0
      %v4574 = vadd.f32 %v4572, %v4573
      %v4575 = vsel %vm307, %v4517, 0.0
      %v4576 = vadd.f32 %v4574, %v4575
      %v4577 = vsel %vm307, %v4518, 0.0
      %v4578 = vadd.f32 %v4576, %v4577
      %v4579 = vsel %vm307, %v4519, 0.0
      %v4580 = vadd.f32 %v4578, %v4579
      %v4581 = vsel %vm307, %v4520, 0.0
      %v4582 = vadd.f32 %v4580, %v4581
      %v4583 = vsel %vm307, %v4521, 0.0
      %v4584 = vadd.f32 %v4582, %v4583
      %v4585 = vrot.slane %v4584, 4
      %v4586 = vadd.f32 %v4584, %v4585
      %v4587 = vrot.slane %v4586, 2
      %v4588 = vadd.f32 %v4586, %v4587
      %v4589 = vrot.slane %v4588, 1
      %v4590 = vadd.f32 %v4588, %v4589
      %v4592 = vsel %vm307, %v4489, 0
      %4594 = vmatpush.msra.mxu0 0.0
      %4595 = vmatpush.msra.mxu0 0.0
      %4596 = vmatpush.msra.mxu0 0.0
      %4597 = vmatpush.msra.mxu0 0.0
      %4598 = vmatpush.msra.mxu0 0.0
      %4599 = vmatpush.msra.mxu0 0.0
      %4600 = vmatpush.msra.mxu0 0.0
      %4601 = vmatpush.msra.mxu0 0.0
      %4602 = vmatpush.msra.mxu0 0.0
      %4603 = vmatpush.msra.mxu0 0.0
      %4604 = vmatpush.msra.mxu0 0.0
      %4605 = vmatpush.msra.mxu0 0.0
      %4606 = vmatpush.msra.mxu0 %v463
      %4607 = vmatpush.msra.mxu0 %v462
      %4608 = vmatpush.msra.mxu0 %v461
      %4609 = vmatpush.msra.mxu0 %v460
      %4610 = vmatmul.f32.gmra.mxu0 %v4592
      %v4611 = vpop.f32.mrf.mxu0
      %v4612 = vadd.f32 0.0, %v4611
      %4613 = vdwg.mxu0
      %v4615 = vsel %vm307, %v4590, 0
      %4617 = vmatpush.msra.mxu0 0.0
      %4618 = vmatpush.msra.mxu0 0.0
      %4619 = vmatpush.msra.mxu0 0.0
      %4620 = vmatpush.msra.mxu0 0.0
      %4621 = vmatpush.msra.mxu0 0.0
      %4622 = vmatpush.msra.mxu0 0.0
      %4623 = vmatpush.msra.mxu0 0.0
      %4624 = vmatpush.msra.mxu0 0.0
      %4625 = vmatpush.msra.mxu0 0.0
      %4626 = vmatpush.msra.mxu0 0.0
      %4627 = vmatpush.msra.mxu0 0.0
      %4628 = vmatpush.msra.mxu0 0.0
      %4629 = vmatpush.msra.mxu0 %v463
      %4630 = vmatpush.msra.mxu0 %v462
      %4631 = vmatpush.msra.mxu0 %v461
      %4632 = vmatpush.msra.mxu0 %v460
      %4633 = vmatmul.f32.gmra.mxu0 %v4615
      %v4634 = vpop.f32.mrf.mxu0
      %v4635 = vadd.f32 0.0, %v4634
      %4636 = vdwg.mxu0
      %v4637 = vmul.f32 %v4612, 0.001953125
      %v4638 = vmul.f32 %v4635, 0.001953125
      %v4639 = vmul.f32 %v4637, %v4637
      %v4640 = vsub.f32 %v4638, %v4639
      %v4641 = vmax.f32 %v4640, 0.0
      %v4642 = vadd.f32 %v4641, 1e-05
      %v4643 = vrsqrt.pop %v4642
      %v4644 = vmul.f32 %v4643, %v4642
      %v4645 = vmul.f32 %v4644, %v4643
      %v4646 = vmul.f32 0.5, %v4645
      %v4647 = vsub.f32 1.5, %v4646
      %v4648 = vmul.f32 %v4643, %v4647
      %vm4649 = vweird.f32 %v4642
      %vm4650 = vweird.f32 %v4643
      %vm4651 = vmor %vm4649, %vm4650
      %v4652 = vsel %vm4651, %v4643, %v4648
      %v4653 = vperm.slane %v4637, 0
      %v4654 = vsub.f32 %v4342, %v4653
      %v4655 = vsub.f32 %v4344, %v4653
      %v4656 = vsub.f32 %v4347, %v4653
      %v4657 = vsub.f32 %v4349, %v4653
      %v4658 = vsub.f32 %v4352, %v4653
      %v4659 = vsub.f32 %v4354, %v4653
      %v4660 = vsub.f32 %v4357, %v4653
      %v4661 = vsub.f32 %v4359, %v4653
      %v4662 = vsub.f32 %v4362, %v4653
      %v4663 = vsub.f32 %v4364, %v4653
      %v4664 = vsub.f32 %v4367, %v4653
      %v4665 = vsub.f32 %v4369, %v4653
      %v4666 = vsub.f32 %v4372, %v4653
      %v4667 = vsub.f32 %v4374, %v4653
      %v4668 = vsub.f32 %v4377, %v4653
      %v4669 = vsub.f32 %v4379, %v4653
      %v4670 = vsub.f32 %v4382, %v4653
      %v4671 = vsub.f32 %v4384, %v4653
      %v4672 = vsub.f32 %v4387, %v4653
      %v4673 = vsub.f32 %v4389, %v4653
      %v4674 = vsub.f32 %v4392, %v4653
      %v4675 = vsub.f32 %v4394, %v4653
      %v4676 = vsub.f32 %v4397, %v4653
      %v4677 = vsub.f32 %v4399, %v4653
      %v4678 = vsub.f32 %v4402, %v4653
      %v4679 = vsub.f32 %v4404, %v4653
      %v4680 = vsub.f32 %v4407, %v4653
      %v4681 = vsub.f32 %v4409, %v4653
      %v4682 = vsub.f32 %v4412, %v4653
      %v4683 = vsub.f32 %v4414, %v4653
      %v4684 = vsub.f32 %v4417, %v4653
      %v4685 = vsub.f32 %v4419, %v4653
      %v4686 = vperm.slane %v4652, 0
      %v4687 = vmul.f32 %v4654, %v4686
      %v4688 = vmul.f32 %v4655, %v4686
      %v4689 = vmul.f32 %v4656, %v4686
      %v4690 = vmul.f32 %v4657, %v4686
      %v4691 = vmul.f32 %v4658, %v4686
      %v4692 = vmul.f32 %v4659, %v4686
      %v4693 = vmul.f32 %v4660, %v4686
      %v4694 = vmul.f32 %v4661, %v4686
      %v4695 = vmul.f32 %v4662, %v4686
      %v4696 = vmul.f32 %v4663, %v4686
      %v4697 = vmul.f32 %v4664, %v4686
      %v4698 = vmul.f32 %v4665, %v4686
      %v4699 = vmul.f32 %v4666, %v4686
      %v4700 = vmul.f32 %v4667, %v4686
      %v4701 = vmul.f32 %v4668, %v4686
      %v4702 = vmul.f32 %v4669, %v4686
      %v4703 = vmul.f32 %v4670, %v4686
      %v4704 = vmul.f32 %v4671, %v4686
      %v4705 = vmul.f32 %v4672, %v4686
      %v4706 = vmul.f32 %v4673, %v4686
      %v4707 = vmul.f32 %v4674, %v4686
      %v4708 = vmul.f32 %v4675, %v4686
      %v4709 = vmul.f32 %v4676, %v4686
      %v4710 = vmul.f32 %v4677, %v4686
      %v4711 = vmul.f32 %v4678, %v4686
      %v4712 = vmul.f32 %v4679, %v4686
      %v4713 = vmul.f32 %v4680, %v4686
      %v4714 = vmul.f32 %v4681, %v4686
      %v4715 = vmul.f32 %v4682, %v4686
      %v4716 = vmul.f32 %v4683, %v4686
      %v4717 = vmul.f32 %v4684, %v4686
      %v4718 = vmul.f32 %v4685, %v4686
      %s4719 = scalar_lea.vmem %s3, 1
      %v4720 = vld [vmem:[%s4719] sm:$0x1]
      %v4722 = vperm.slane %v4720, 0
      %v4724 = vmul.f32 %v4687, %v4722
      %v4725 = vmul.f32 %v4688, %v4722
      %v4726 = vmul.f32 %v4689, %v4722
      %v4727 = vmul.f32 %v4690, %v4722
      %v4728 = vmul.f32 %v4691, %v4722
      %v4729 = vmul.f32 %v4692, %v4722
      %v4730 = vmul.f32 %v4693, %v4722
      %v4731 = vmul.f32 %v4694, %v4722
      %v4732 = vmul.f32 %v4695, %v4722
      %v4733 = vmul.f32 %v4696, %v4722
      %v4734 = vmul.f32 %v4697, %v4722
      %v4735 = vmul.f32 %v4698, %v4722
      %v4736 = vmul.f32 %v4699, %v4722
      %v4737 = vmul.f32 %v4700, %v4722
      %v4738 = vmul.f32 %v4701, %v4722
      %v4739 = vmul.f32 %v4702, %v4722
      %v4740 = vmul.f32 %v4703, %v4722
      %v4741 = vmul.f32 %v4704, %v4722
      %v4742 = vmul.f32 %v4705, %v4722
      %v4743 = vmul.f32 %v4706, %v4722
      %v4744 = vmul.f32 %v4707, %v4722
      %v4745 = vmul.f32 %v4708, %v4722
      %v4746 = vmul.f32 %v4709, %v4722
      %v4747 = vmul.f32 %v4710, %v4722
      %v4748 = vmul.f32 %v4711, %v4722
      %v4749 = vmul.f32 %v4712, %v4722
      %v4750 = vmul.f32 %v4713, %v4722
      %v4751 = vmul.f32 %v4714, %v4722
      %v4752 = vmul.f32 %v4715, %v4722
      %v4753 = vmul.f32 %v4716, %v4722
      %v4754 = vmul.f32 %v4717, %v4722
      %v4755 = vmul.f32 %v4718, %v4722
      %s4756 = scalar_lea.vmem %s4, 1
      %v4757 = vld [vmem:[%s4756] sm:$0x1]
      %v4759 = vperm.slane %v4757, 0
      %v4761 = vadd.f32 %v4724, %v4759
      %v4762 = vadd.f32 %v4725, %v4759
      %v4763 = vadd.f32 %v4726, %v4759
      %v4764 = vadd.f32 %v4727, %v4759
      %v4765 = vadd.f32 %v4728, %v4759
      %v4766 = vadd.f32 %v4729, %v4759
      %v4767 = vadd.f32 %v4730, %v4759
      %v4768 = vadd.f32 %v4731, %v4759
      %v4769 = vadd.f32 %v4732, %v4759
      %v4770 = vadd.f32 %v4733, %v4759
      %v4771 = vadd.f32 %v4734, %v4759
      %v4772 = vadd.f32 %v4735, %v4759
      %v4773 = vadd.f32 %v4736, %v4759
      %v4774 = vadd.f32 %v4737, %v4759
      %v4775 = vadd.f32 %v4738, %v4759
      %v4776 = vadd.f32 %v4739, %v4759
      %v4777 = vadd.f32 %v4740, %v4759
      %v4778 = vadd.f32 %v4741, %v4759
      %v4779 = vadd.f32 %v4742, %v4759
      %v4780 = vadd.f32 %v4743, %v4759
      %v4781 = vadd.f32 %v4744, %v4759
      %v4782 = vadd.f32 %v4745, %v4759
      %v4783 = vadd.f32 %v4746, %v4759
      %v4784 = vadd.f32 %v4747, %v4759
      %v4785 = vadd.f32 %v4748, %v4759
      %v4786 = vadd.f32 %v4749, %v4759
      %v4787 = vadd.f32 %v4750, %v4759
      %v4788 = vadd.f32 %v4751, %v4759
      %v4789 = vadd.f32 %v4752, %v4759
      %v4790 = vadd.f32 %v4753, %v4759
      %v4791 = vadd.f32 %v4754, %v4759
      %v4792 = vadd.f32 %v4755, %v4759
      %v4793 = vmax.f32 %v4761, 0.0
      %v4794 = vmax.f32 %v4762, 0.0
      %v4795 = vmax.f32 %v4763, 0.0
      %v4796 = vmax.f32 %v4764, 0.0
      %v4797 = vmax.f32 %v4765, 0.0
      %v4798 = vmax.f32 %v4766, 0.0
      %v4799 = vmax.f32 %v4767, 0.0
      %v4800 = vmax.f32 %v4768, 0.0
      %v4801 = vmax.f32 %v4769, 0.0
      %v4802 = vmax.f32 %v4770, 0.0
      %v4803 = vmax.f32 %v4771, 0.0
      %v4804 = vmax.f32 %v4772, 0.0
      %v4805 = vmax.f32 %v4773, 0.0
      %v4806 = vmax.f32 %v4774, 0.0
      %v4807 = vmax.f32 %v4775, 0.0
      %v4808 = vmax.f32 %v4776, 0.0
      %v4809 = vmax.f32 %v4777, 0.0
      %v4810 = vmax.f32 %v4778, 0.0
      %v4811 = vmax.f32 %v4779, 0.0
      %v4812 = vmax.f32 %v4780, 0.0
      %v4813 = vmax.f32 %v4781, 0.0
      %v4814 = vmax.f32 %v4782, 0.0
      %v4815 = vmax.f32 %v4783, 0.0
      %v4816 = vmax.f32 %v4784, 0.0
      %v4817 = vmax.f32 %v4785, 0.0
      %v4818 = vmax.f32 %v4786, 0.0
      %v4819 = vmax.f32 %v4787, 0.0
      %v4820 = vmax.f32 %v4788, 0.0
      %v4821 = vmax.f32 %v4789, 0.0
      %v4822 = vmax.f32 %v4790, 0.0
      %v4823 = vmax.f32 %v4791, 0.0
      %v4824 = vmax.f32 %v4792, 0.0
      %4825 = vst.msk [vmem:[%s427 + $0x1] sm:$0xff] %vm307, %v4793
      %4826 = vst.msk [vmem:[%s427 + $0x9] sm:$0xff] %vm307, %v4794
      %4827 = vst.msk [vmem:[%s427 + $0x19] sm:$0xff] %vm307, %v4795
      %4828 = vst.msk [vmem:[%s427 + $0x21] sm:$0xff] %vm307, %v4796
      %4829 = vst.msk [vmem:[%s427 + $0x31] sm:$0xff] %vm307, %v4797
      %4830 = vst.msk [vmem:[%s427 + $0x39] sm:$0xff] %vm307, %v4798
      %4831 = vst.msk [vmem:[%s427 + $0x49] sm:$0xff] %vm307, %v4799
      %4832 = vst.msk [vmem:[%s427 + $0x51] sm:$0xff] %vm307, %v4800
      %4833 = vst.msk [vmem:[%s427 + $0x61] sm:$0xff] %vm307, %v4801
      %4834 = vst.msk [vmem:[%s427 + $0x69] sm:$0xff] %vm307, %v4802
      %4835 = vst.msk [vmem:[%s427 + $0x79] sm:$0xff] %vm307, %v4803
      %4836 = vst.msk [vmem:[%s427 + $0x81] sm:$0xff] %vm307, %v4804
      %4837 = vst.msk [vmem:[%s427 + $0x91] sm:$0xff] %vm307, %v4805
      %4838 = vst.msk [vmem:[%s427 + $0x99] sm:$0xff] %vm307, %v4806
      %4839 = vst.msk [vmem:[%s427 + $0xa9] sm:$0xff] %vm307, %v4807
      %4840 = vst.msk [vmem:[%s427 + $0xb1] sm:$0xff] %vm307, %v4808
      %4841 = vst.msk [vmem:[%s427 + $0xc1] sm:$0xff] %vm307, %v4809
      %4842 = vst.msk [vmem:[%s427 + $0xc9] sm:$0xff] %vm307, %v4810
      %4843 = vst.msk [vmem:[%s427 + $0xd9] sm:$0xff] %vm307, %v4811
      %4844 = vst.msk [vmem:[%s427 + $0xe1] sm:$0xff] %vm307, %v4812
      %4845 = vst.msk [vmem:[%s427 + $0xf1] sm:$0xff] %vm307, %v4813
      %4846 = vst.msk [vmem:[%s427 + $0xf9] sm:$0xff] %vm307, %v4814
      %4847 = vst.msk [vmem:[%s427 + $0x109] sm:$0xff] %vm307, %v4815
      %4848 = vst.msk [vmem:[%s427 + $0x111] sm:$0xff] %vm307, %v4816
      %4849 = vst.msk [vmem:[%s427 + $0x121] sm:$0xff] %vm307, %v4817
      %4850 = vst.msk [vmem:[%s427 + $0x129] sm:$0xff] %vm307, %v4818
      %4851 = vst.msk [vmem:[%s427 + $0x139] sm:$0xff] %vm307, %v4819
      %4852 = vst.msk [vmem:[%s427 + $0x141] sm:$0xff] %vm307, %v4820
      %4853 = vst.msk [vmem:[%s427 + $0x151] sm:$0xff] %vm307, %v4821
      %4854 = vst.msk [vmem:[%s427 + $0x159] sm:$0xff] %vm307, %v4822
      %4855 = vst.msk [vmem:[%s427 + $0x169] sm:$0xff] %vm307, %v4823
      %4856 = vst.msk [vmem:[%s427 + $0x171] sm:$0xff] %vm307, %v4824
      %v4857 = vld [vmem:[#allocation2] sm:$0xff]
      %v4858 = vld [vmem:[#allocation2 + $0x8] sm:$0xff]
      %v4859 = vld [vmem:[#allocation2 + $0x18] sm:$0xff]
      %v4860 = vld [vmem:[#allocation2 + $0x20] sm:$0xff]
      %v4861 = vld [vmem:[#allocation2 + $0x30] sm:$0xff]
      %v4862 = vld [vmem:[#allocation2 + $0x38] sm:$0xff]
      %v4863 = vld [vmem:[#allocation2 + $0x48] sm:$0xff]
      %v4864 = vld [vmem:[#allocation2 + $0x50] sm:$0xff]
      %v4865 = vld [vmem:[#allocation2 + $0x60] sm:$0xff]
      %v4866 = vld [vmem:[#allocation2 + $0x68] sm:$0xff]
      %v4867 = vld [vmem:[#allocation2 + $0x78] sm:$0xff]
      %v4868 = vld [vmem:[#allocation2 + $0x80] sm:$0xff]
      %v4869 = vld [vmem:[#allocation2 + $0x90] sm:$0xff]
      %v4870 = vld [vmem:[#allocation2 + $0x98] sm:$0xff]
      %v4871 = vld [vmem:[#allocation2 + $0xa8] sm:$0xff]
      %v4872 = vld [vmem:[#allocation2 + $0xb0] sm:$0xff]
      %v4873 = vld [vmem:[#allocation2 + $0xc0] sm:$0xff]
      %v4874 = vld [vmem:[#allocation2 + $0xc8] sm:$0xff]
      %v4875 = vld [vmem:[#allocation2 + $0xd8] sm:$0xff]
      %v4876 = vld [vmem:[#allocation2 + $0xe0] sm:$0xff]
      %v4877 = vld [vmem:[#allocation2 + $0xf0] sm:$0xff]
      %v4878 = vld [vmem:[#allocation2 + $0xf8] sm:$0xff]
      %v4879 = vld [vmem:[#allocation2 + $0x108] sm:$0xff]
      %v4880 = vld [vmem:[#allocation2 + $0x110] sm:$0xff]
      %v4881 = vld [vmem:[#allocation2 + $0x120] sm:$0xff]
      %v4882 = vld [vmem:[#allocation2 + $0x128] sm:$0xff]
      %v4883 = vld [vmem:[#allocation2 + $0x138] sm:$0xff]
      %v4884 = vld [vmem:[#allocation2 + $0x140] sm:$0xff]
      %v4885 = vld [vmem:[#allocation2 + $0x150] sm:$0xff]
      %v4886 = vld [vmem:[#allocation2 + $0x158] sm:$0xff]
      %v4887 = vld [vmem:[#allocation2 + $0x168] sm:$0xff]
      %v4888 = vld [vmem:[#allocation2 + $0x170] sm:$0xff]
      %v4889 = vld [vmem:[#allocation2 + $0x1] sm:$0xff]
      %v4890 = vld [vmem:[#allocation2 + $0x9] sm:$0xff]
      %v4891 = vld [vmem:[#allocation2 + $0x19] sm:$0xff]
      %v4892 = vld [vmem:[#allocation2 + $0x21] sm:$0xff]
      %v4893 = vld [vmem:[#allocation2 + $0x31] sm:$0xff]
      %v4894 = vld [vmem:[#allocation2 + $0x39] sm:$0xff]
      %v4895 = vld [vmem:[#allocation2 + $0x49] sm:$0xff]
      %v4896 = vld [vmem:[#allocation2 + $0x51] sm:$0xff]
      %v4897 = vld [vmem:[#allocation2 + $0x61] sm:$0xff]
      %v4898 = vld [vmem:[#allocation2 + $0x69] sm:$0xff]
      %v4899 = vld [vmem:[#allocation2 + $0x79] sm:$0xff]
      %v4900 = vld [vmem:[#allocation2 + $0x81] sm:$0xff]
      %v4901 = vld [vmem:[#allocation2 + $0x91] sm:$0xff]
      %v4902 = vld [vmem:[#allocation2 + $0x99] sm:$0xff]
      %v4903 = vld [vmem:[#allocation2 + $0xa9] sm:$0xff]
      %v4904 = vld [vmem:[#allocation2 + $0xb1] sm:$0xff]
      %v4905 = vld [vmem:[#allocation2 + $0xc1] sm:$0xff]
      %v4906 = vld [vmem:[#allocation2 + $0xc9] sm:$0xff]
      %v4907 = vld [vmem:[#allocation2 + $0xd9] sm:$0xff]
      %v4908 = vld [vmem:[#allocation2 + $0xe1] sm:$0xff]
      %v4909 = vld [vmem:[#allocation2 + $0xf1] sm:$0xff]
      %v4910 = vld [vmem:[#allocation2 + $0xf9] sm:$0xff]
      %v4911 = vld [vmem:[#allocation2 + $0x109] sm:$0xff]
      %v4912 = vld [vmem:[#allocation2 + $0x111] sm:$0xff]
      %v4913 = vld [vmem:[#allocation2 + $0x121] sm:$0xff]
      %v4914 = vld [vmem:[#allocation2 + $0x129] sm:$0xff]
      %v4915 = vld [vmem:[#allocation2 + $0x139] sm:$0xff]
      %v4916 = vld [vmem:[#allocation2 + $0x141] sm:$0xff]
      %v4917 = vld [vmem:[#allocation2 + $0x151] sm:$0xff]
      %v4918 = vld [vmem:[#allocation2 + $0x159] sm:$0xff]
      %v4919 = vld [vmem:[#allocation2 + $0x169] sm:$0xff]
      %v4920 = vld [vmem:[#allocation2 + $0x171] sm:$0xff]
      %v4921 = vld [vmem:[#allocation2 + $0x2] sm:$0xff]
      %v4922 = vld [vmem:[#allocation2 + $0xa] sm:$0xff]
      %v4923 = vld [vmem:[#allocation2 + $0x1a] sm:$0xff]
      %v4924 = vld [vmem:[#allocation2 + $0x22] sm:$0xff]
      %v4925 = vld [vmem:[#allocation2 + $0x32] sm:$0xff]
      %v4926 = vld [vmem:[#allocation2 + $0x3a] sm:$0xff]
      %v4927 = vld [vmem:[#allocation2 + $0x4a] sm:$0xff]
      %v4928 = vld [vmem:[#allocation2 + $0x52] sm:$0xff]
      %v4929 = vld [vmem:[#allocation2 + $0x62] sm:$0xff]
      %v4930 = vld [vmem:[#allocation2 + $0x6a] sm:$0xff]
      %v4931 = vld [vmem:[#allocation2 + $0x7a] sm:$0xff]
      %v4932 = vld [vmem:[#allocation2 + $0x82] sm:$0xff]
      %v4933 = vld [vmem:[#allocation2 + $0x92] sm:$0xff]
      %v4934 = vld [vmem:[#allocation2 + $0x9a] sm:$0xff]
      %v4935 = vld [vmem:[#allocation2 + $0xaa] sm:$0xff]
      %v4936 = vld [vmem:[#allocation2 + $0xb2] sm:$0xff]
      %v4937 = vld [vmem:[#allocation2 + $0xc2] sm:$0xff]
      %v4938 = vld [vmem:[#allocation2 + $0xca] sm:$0xff]
      %v4939 = vld [vmem:[#allocation2 + $0xda] sm:$0xff]
      %v4940 = vld [vmem:[#allocation2 + $0xe2] sm:$0xff]
      %v4941 = vld [vmem:[#allocation2 + $0xf2] sm:$0xff]
      %v4942 = vld [vmem:[#allocation2 + $0xfa] sm:$0xff]
      %v4943 = vld [vmem:[#allocation2 + $0x10a] sm:$0xff]
      %v4944 = vld [vmem:[#allocation2 + $0x112] sm:$0xff]
      %v4945 = vld [vmem:[#allocation2 + $0x122] sm:$0xff]
      %v4946 = vld [vmem:[#allocation2 + $0x12a] sm:$0xff]
      %v4947 = vld [vmem:[#allocation2 + $0x13a] sm:$0xff]
      %v4948 = vld [vmem:[#allocation2 + $0x142] sm:$0xff]
      %v4949 = vld [vmem:[#allocation2 + $0x152] sm:$0xff]
      %v4950 = vld [vmem:[#allocation2 + $0x15a] sm:$0xff]
      %v4951 = vld [vmem:[#allocation2 + $0x16a] sm:$0xff]
      %v4952 = vld [vmem:[#allocation2 + $0x172] sm:$0xff]
      %v4953 = vld [vmem:[%s427] sm:$0xff]
      %v4954 = vld [vmem:[%s427 + $0x8] sm:$0xff]
      %v4955 = vld [vmem:[%s427 + $0x18] sm:$0xff]
      %v4956 = vld [vmem:[%s427 + $0x20] sm:$0xff]
      %v4957 = vld [vmem:[%s427 + $0x30] sm:$0xff]
      %v4958 = vld [vmem:[%s427 + $0x38] sm:$0xff]
      %v4959 = vld [vmem:[%s427 + $0x48] sm:$0xff]
      %v4960 = vld [vmem:[%s427 + $0x50] sm:$0xff]
      %v4961 = vld [vmem:[%s427 + $0x60] sm:$0xff]
      %v4962 = vld [vmem:[%s427 + $0x68] sm:$0xff]
      %v4963 = vld [vmem:[%s427 + $0x78] sm:$0xff]
      %v4964 = vld [vmem:[%s427 + $0x80] sm:$0xff]
      %v4965 = vld [vmem:[%s427 + $0x90] sm:$0xff]
      %v4966 = vld [vmem:[%s427 + $0x98] sm:$0xff]
      %v4967 = vld [vmem:[%s427 + $0xa8] sm:$0xff]
      %v4968 = vld [vmem:[%s427 + $0xb0] sm:$0xff]
      %v4969 = vld [vmem:[%s427 + $0xc0] sm:$0xff]
      %v4970 = vld [vmem:[%s427 + $0xc8] sm:$0xff]
      %v4971 = vld [vmem:[%s427 + $0xd8] sm:$0xff]
      %v4972 = vld [vmem:[%s427 + $0xe0] sm:$0xff]
      %v4973 = vld [vmem:[%s427 + $0xf0] sm:$0xff]
      %v4974 = vld [vmem:[%s427 + $0xf8] sm:$0xff]
      %v4975 = vld [vmem:[%s427 + $0x108] sm:$0xff]
      %v4976 = vld [vmem:[%s427 + $0x110] sm:$0xff]
      %v4977 = vld [vmem:[%s427 + $0x120] sm:$0xff]
      %v4978 = vld [vmem:[%s427 + $0x128] sm:$0xff]
      %v4979 = vld [vmem:[%s427 + $0x138] sm:$0xff]
      %v4980 = vld [vmem:[%s427 + $0x140] sm:$0xff]
      %v4981 = vld [vmem:[%s427 + $0x150] sm:$0xff]
      %v4982 = vld [vmem:[%s427 + $0x158] sm:$0xff]
      %v4983 = vld [vmem:[%s427 + $0x168] sm:$0xff]
      %v4984 = vld [vmem:[%s427 + $0x170] sm:$0xff]
      %v4985 = vld [vmem:[%s427 + $0x1] sm:$0xff]
      %v4986 = vld [vmem:[%s427 + $0x9] sm:$0xff]
      %v4987 = vld [vmem:[%s427 + $0x19] sm:$0xff]
      %v4988 = vld [vmem:[%s427 + $0x21] sm:$0xff]
      %v4989 = vld [vmem:[%s427 + $0x31] sm:$0xff]
      %v4990 = vld [vmem:[%s427 + $0x39] sm:$0xff]
      %v4991 = vld [vmem:[%s427 + $0x49] sm:$0xff]
      %v4992 = vld [vmem:[%s427 + $0x51] sm:$0xff]
      %v4993 = vld [vmem:[%s427 + $0x61] sm:$0xff]
      %v4994 = vld [vmem:[%s427 + $0x69] sm:$0xff]
      %v4995 = vld [vmem:[%s427 + $0x79] sm:$0xff]
      %v4996 = vld [vmem:[%s427 + $0x81] sm:$0xff]
      %v4997 = vld [vmem:[%s427 + $0x91] sm:$0xff]
      %v4998 = vld [vmem:[%s427 + $0x99] sm:$0xff]
      %v4999 = vld [vmem:[%s427 + $0xa9] sm:$0xff]
      %v5000 = vld [vmem:[%s427 + $0xb1] sm:$0xff]
      %v5001 = vld [vmem:[%s427 + $0xc1] sm:$0xff]
      %v5002 = vld [vmem:[%s427 + $0xc9] sm:$0xff]
      %v5003 = vld [vmem:[%s427 + $0xd9] sm:$0xff]
      %v5004 = vld [vmem:[%s427 + $0xe1] sm:$0xff]
      %v5005 = vld [vmem:[%s427 + $0xf1] sm:$0xff]
      %v5006 = vld [vmem:[%s427 + $0xf9] sm:$0xff]
      %v5007 = vld [vmem:[%s427 + $0x109] sm:$0xff]
      %v5008 = vld [vmem:[%s427 + $0x111] sm:$0xff]
      %v5009 = vld [vmem:[%s427 + $0x121] sm:$0xff]
      %v5010 = vld [vmem:[%s427 + $0x129] sm:$0xff]
      %v5011 = vld [vmem:[%s427 + $0x139] sm:$0xff]
      %v5012 = vld [vmem:[%s427 + $0x141] sm:$0xff]
      %v5013 = vld [vmem:[%s427 + $0x151] sm:$0xff]
      %v5014 = vld [vmem:[%s427 + $0x159] sm:$0xff]
      %v5015 = vld [vmem:[%s427 + $0x169] sm:$0xff]
      %v5016 = vld [vmem:[%s427 + $0x171] sm:$0xff]
      %v5017 = vld [vmem:[%s427 + $0x2] sm:$0xff]
      %v5018 = vld [vmem:[%s427 + $0xa] sm:$0xff]
      %v5019 = vld [vmem:[%s427 + $0x1a] sm:$0xff]
      %v5020 = vld [vmem:[%s427 + $0x22] sm:$0xff]
      %v5021 = vld [vmem:[%s427 + $0x32] sm:$0xff]
      %v5022 = vld [vmem:[%s427 + $0x3a] sm:$0xff]
      %v5023 = vld [vmem:[%s427 + $0x4a] sm:$0xff]
      %v5024 = vld [vmem:[%s427 + $0x52] sm:$0xff]
      %v5025 = vld [vmem:[%s427 + $0x62] sm:$0xff]
      %v5026 = vld [vmem:[%s427 + $0x6a] sm:$0xff]
      %v5027 = vld [vmem:[%s427 + $0x7a] sm:$0xff]
      %v5028 = vld [vmem:[%s427 + $0x82] sm:$0xff]
      %v5029 = vld [vmem:[%s427 + $0x92] sm:$0xff]
      %v5030 = vld [vmem:[%s427 + $0x9a] sm:$0xff]
      %v5031 = vld [vmem:[%s427 + $0xaa] sm:$0xff]
      %v5032 = vld [vmem:[%s427 + $0xb2] sm:$0xff]
      %v5033 = vld [vmem:[%s427 + $0xc2] sm:$0xff]
      %v5034 = vld [vmem:[%s427 + $0xca] sm:$0xff]
      %v5035 = vld [vmem:[%s427 + $0xda] sm:$0xff]
      %v5036 = vld [vmem:[%s427 + $0xe2] sm:$0xff]
      %v5037 = vld [vmem:[%s427 + $0xf2] sm:$0xff]
      %v5038 = vld [vmem:[%s427 + $0xfa] sm:$0xff]
      %v5039 = vld [vmem:[%s427 + $0x10a] sm:$0xff]
      %v5040 = vld [vmem:[%s427 + $0x112] sm:$0xff]
      %v5041 = vld [vmem:[%s427 + $0x122] sm:$0xff]
      %v5042 = vld [vmem:[%s427 + $0x12a] sm:$0xff]
      %v5043 = vld [vmem:[%s427 + $0x13a] sm:$0xff]
      %v5044 = vld [vmem:[%s427 + $0x142] sm:$0xff]
      %v5045 = vld [vmem:[%s427 + $0x152] sm:$0xff]
      %v5046 = vld [vmem:[%s427 + $0x15a] sm:$0xff]
      %v5047 = vld [vmem:[%s427 + $0x16a] sm:$0xff]
      %v5048 = vld [vmem:[%s427 + $0x172] sm:$0xff]
      %v5049 = vld [vmem:[%s656] sm:$0xff]
      %v5050 = vld [vmem:[%s656 + $0x8] sm:$0xff]
      %v5051 = vld [vmem:[%s656 + $0x18] sm:$0xff]
      %v5052 = vld [vmem:[%s656 + $0x20] sm:$0xff]
      %v5053 = vld [vmem:[%s656 + $0x30] sm:$0xff]
      %v5054 = vld [vmem:[%s656 + $0x38] sm:$0xff]
      %v5055 = vld [vmem:[%s656 + $0x48] sm:$0xff]
      %v5056 = vld [vmem:[%s656 + $0x50] sm:$0xff]
      %v5057 = vld [vmem:[%s656 + $0x60] sm:$0xff]
      %v5058 = vld [vmem:[%s656 + $0x68] sm:$0xff]
      %v5059 = vld [vmem:[%s656 + $0x78] sm:$0xff]
      %v5060 = vld [vmem:[%s656 + $0x80] sm:$0xff]
      %v5061 = vld [vmem:[%s656 + $0x90] sm:$0xff]
      %v5062 = vld [vmem:[%s656 + $0x98] sm:$0xff]
      %v5063 = vld [vmem:[%s656 + $0xa8] sm:$0xff]
      %v5064 = vld [vmem:[%s656 + $0xb0] sm:$0xff]
      %v5065 = vld [vmem:[%s656 + $0xc0] sm:$0xff]
      %v5066 = vld [vmem:[%s656 + $0xc8] sm:$0xff]
      %v5067 = vld [vmem:[%s656 + $0xd8] sm:$0xff]
      %v5068 = vld [vmem:[%s656 + $0xe0] sm:$0xff]
      %v5069 = vld [vmem:[%s656 + $0xf0] sm:$0xff]
      %v5070 = vld [vmem:[%s656 + $0xf8] sm:$0xff]
      %v5071 = vld [vmem:[%s656 + $0x108] sm:$0xff]
      %v5072 = vld [vmem:[%s656 + $0x110] sm:$0xff]
      %v5073 = vld [vmem:[%s656 + $0x120] sm:$0xff]
      %v5074 = vld [vmem:[%s656 + $0x128] sm:$0xff]
      %v5075 = vld [vmem:[%s656 + $0x138] sm:$0xff]
      %v5076 = vld [vmem:[%s656 + $0x140] sm:$0xff]
      %v5077 = vld [vmem:[%s656 + $0x150] sm:$0xff]
      %v5078 = vld [vmem:[%s656 + $0x158] sm:$0xff]
      %v5079 = vld [vmem:[%s656 + $0x168] sm:$0xff]
      %v5080 = vld [vmem:[%s656 + $0x170] sm:$0xff]
      %v5081 = vld [vmem:[%s656 + $0x1] sm:$0xff]
      %v5082 = vld [vmem:[%s656 + $0x9] sm:$0xff]
      %v5083 = vld [vmem:[%s656 + $0x19] sm:$0xff]
      %v5084 = vld [vmem:[%s656 + $0x21] sm:$0xff]
      %v5085 = vld [vmem:[%s656 + $0x31] sm:$0xff]
      %v5086 = vld [vmem:[%s656 + $0x39] sm:$0xff]
      %v5087 = vld [vmem:[%s656 + $0x49] sm:$0xff]
      %v5088 = vld [vmem:[%s656 + $0x51] sm:$0xff]
      %v5089 = vld [vmem:[%s656 + $0x61] sm:$0xff]
      %v5090 = vld [vmem:[%s656 + $0x69] sm:$0xff]
      %v5091 = vld [vmem:[%s656 + $0x79] sm:$0xff]
      %v5092 = vld [vmem:[%s656 + $0x81] sm:$0xff]
      %v5093 = vld [vmem:[%s656 + $0x91] sm:$0xff]
      %v5094 = vld [vmem:[%s656 + $0x99] sm:$0xff]
      %v5095 = vld [vmem:[%s656 + $0xa9] sm:$0xff]
      %v5096 = vld [vmem:[%s656 + $0xb1] sm:$0xff]
      %v5097 = vld [vmem:[%s656 + $0xc1] sm:$0xff]
      %v5098 = vld [vmem:[%s656 + $0xc9] sm:$0xff]
      %v5099 = vld [vmem:[%s656 + $0xd9] sm:$0xff]
      %v5100 = vld [vmem:[%s656 + $0xe1] sm:$0xff]
      %v5101 = vld [vmem:[%s656 + $0xf1] sm:$0xff]
      %v5102 = vld [vmem:[%s656 + $0xf9] sm:$0xff]
      %v5103 = vld [vmem:[%s656 + $0x109] sm:$0xff]
      %v5104 = vld [vmem:[%s656 + $0x111] sm:$0xff]
      %v5105 = vld [vmem:[%s656 + $0x121] sm:$0xff]
      %v5106 = vld [vmem:[%s656 + $0x129] sm:$0xff]
      %v5107 = vld [vmem:[%s656 + $0x139] sm:$0xff]
      %v5108 = vld [vmem:[%s656 + $0x141] sm:$0xff]
      %v5109 = vld [vmem:[%s656 + $0x151] sm:$0xff]
      %v5110 = vld [vmem:[%s656 + $0x159] sm:$0xff]
      %v5111 = vld [vmem:[%s656 + $0x169] sm:$0xff]
      %v5112 = vld [vmem:[%s656 + $0x171] sm:$0xff]
      %v5113 = vld [vmem:[%s656 + $0x2] sm:$0xff]
      %v5114 = vld [vmem:[%s656 + $0xa] sm:$0xff]
      %v5115 = vld [vmem:[%s656 + $0x1a] sm:$0xff]
      %v5116 = vld [vmem:[%s656 + $0x22] sm:$0xff]
      %v5117 = vld [vmem:[%s656 + $0x32] sm:$0xff]
      %v5118 = vld [vmem:[%s656 + $0x3a] sm:$0xff]
      %v5119 = vld [vmem:[%s656 + $0x4a] sm:$0xff]
      %v5120 = vld [vmem:[%s656 + $0x52] sm:$0xff]
      %v5121 = vld [vmem:[%s656 + $0x62] sm:$0xff]
      %v5122 = vld [vmem:[%s656 + $0x6a] sm:$0xff]
      %v5123 = vld [vmem:[%s656 + $0x7a] sm:$0xff]
      %v5124 = vld [vmem:[%s656 + $0x82] sm:$0xff]
      %v5125 = vld [vmem:[%s656 + $0x92] sm:$0xff]
      %v5126 = vld [vmem:[%s656 + $0x9a] sm:$0xff]
      %v5127 = vld [vmem:[%s656 + $0xaa] sm:$0xff]
      %v5128 = vld [vmem:[%s656 + $0xb2] sm:$0xff]
      %v5129 = vld [vmem:[%s656 + $0xc2] sm:$0xff]
      %v5130 = vld [vmem:[%s656 + $0xca] sm:$0xff]
      %v5131 = vld [vmem:[%s656 + $0xda] sm:$0xff]
      %v5132 = vld [vmem:[%s656 + $0xe2] sm:$0xff]
      %v5133 = vld [vmem:[%s656 + $0xf2] sm:$0xff]
      %v5134 = vld [vmem:[%s656 + $0xfa] sm:$0xff]
      %v5135 = vld [vmem:[%s656 + $0x10a] sm:$0xff]
      %v5136 = vld [vmem:[%s656 + $0x112] sm:$0xff]
      %v5137 = vld [vmem:[%s656 + $0x122] sm:$0xff]
      %v5138 = vld [vmem:[%s656 + $0x12a] sm:$0xff]
      %v5139 = vld [vmem:[%s656 + $0x13a] sm:$0xff]
      %v5140 = vld [vmem:[%s656 + $0x142] sm:$0xff]
      %v5141 = vld [vmem:[%s656 + $0x152] sm:$0xff]
      %v5142 = vld [vmem:[%s656 + $0x15a] sm:$0xff]
      %v5143 = vld [vmem:[%s656 + $0x16a] sm:$0xff]
      %v5144 = vld [vmem:[%s656 + $0x172] sm:$0xff]
      %5177 = vrot.lane.b32.xlu0 %v4889, 32
      %v5178 = vpop.permute.xlu0 %5177
      %5179 = vrot.lane.b32.xlu0 %v4890, 32
      %v5180 = vpop.permute.xlu0 %5179
      %5181 = vrot.lane.b32.xlu0 %v4891, 32
      %v5182 = vpop.permute.xlu0 %5181
      %5183 = vrot.lane.b32.xlu0 %v4892, 32
      %v5184 = vpop.permute.xlu0 %5183
      %5185 = vrot.lane.b32.xlu0 %v4893, 32
      %v5186 = vpop.permute.xlu0 %5185
      %5187 = vrot.lane.b32.xlu0 %v4894, 32
      %v5188 = vpop.permute.xlu0 %5187
      %5189 = vrot.lane.b32.xlu0 %v4895, 32
      %v5190 = vpop.permute.xlu0 %5189
      %5191 = vrot.lane.b32.xlu0 %v4896, 32
      %v5192 = vpop.permute.xlu0 %5191
      %5193 = vrot.lane.b32.xlu0 %v4897, 32
      %v5194 = vpop.permute.xlu0 %5193
      %5195 = vrot.lane.b32.xlu0 %v4898, 32
      %v5196 = vpop.permute.xlu0 %5195
      %5197 = vrot.lane.b32.xlu0 %v4899, 32
      %v5198 = vpop.permute.xlu0 %5197
      %5199 = vrot.lane.b32.xlu0 %v4900, 32
      %v5200 = vpop.permute.xlu0 %5199
      %5201 = vrot.lane.b32.xlu0 %v4901, 32
      %v5202 = vpop.permute.xlu0 %5201
      %5203 = vrot.lane.b32.xlu0 %v4902, 32
      %v5204 = vpop.permute.xlu0 %5203
      %5205 = vrot.lane.b32.xlu0 %v4903, 32
      %v5206 = vpop.permute.xlu0 %5205
      %5207 = vrot.lane.b32.xlu0 %v4904, 32
      %v5208 = vpop.permute.xlu0 %5207
      %5209 = vrot.lane.b32.xlu0 %v4905, 32
      %v5210 = vpop.permute.xlu0 %5209
      %5211 = vrot.lane.b32.xlu0 %v4906, 32
      %v5212 = vpop.permute.xlu0 %5211
      %5213 = vrot.lane.b32.xlu0 %v4907, 32
      %v5214 = vpop.permute.xlu0 %5213
      %5215 = vrot.lane.b32.xlu0 %v4908, 32
      %v5216 = vpop.permute.xlu0 %5215
      %5217 = vrot.lane.b32.xlu0 %v4909, 32
      %v5218 = vpop.permute.xlu0 %5217
      %5219 = vrot.lane.b32.xlu0 %v4910, 32
      %v5220 = vpop.permute.xlu0 %5219
      %5221 = vrot.lane.b32.xlu0 %v4911, 32
      %v5222 = vpop.permute.xlu0 %5221
      %5223 = vrot.lane.b32.xlu0 %v4912, 32
      %v5224 = vpop.permute.xlu0 %5223
      %5225 = vrot.lane.b32.xlu0 %v4913, 32
      %v5226 = vpop.permute.xlu0 %5225
      %5227 = vrot.lane.b32.xlu0 %v4914, 32
      %v5228 = vpop.permute.xlu0 %5227
      %5229 = vrot.lane.b32.xlu0 %v4915, 32
      %v5230 = vpop.permute.xlu0 %5229
      %5231 = vrot.lane.b32.xlu0 %v4916, 32
      %v5232 = vpop.permute.xlu0 %5231
      %5233 = vrot.lane.b32.xlu0 %v4917, 32
      %v5234 = vpop.permute.xlu0 %5233
      %5235 = vrot.lane.b32.xlu0 %v4918, 32
      %v5236 = vpop.permute.xlu0 %5235
      %5237 = vrot.lane.b32.xlu0 %v4919, 32
      %v5238 = vpop.permute.xlu0 %5237
      %5239 = vrot.lane.b32.xlu0 %v4920, 32
      %v5240 = vpop.permute.xlu0 %5239
      %5305 = vrot.lane.b32.xlu0 %v4921, 64
      %v5306 = vpop.permute.xlu0 %5305
      %5307 = vrot.lane.b32.xlu0 %v4922, 64
      %v5308 = vpop.permute.xlu0 %5307
      %5309 = vrot.lane.b32.xlu0 %v4923, 64
      %v5310 = vpop.permute.xlu0 %5309
      %5311 = vrot.lane.b32.xlu0 %v4924, 64
      %v5312 = vpop.permute.xlu0 %5311
      %5313 = vrot.lane.b32.xlu0 %v4925, 64
      %v5314 = vpop.permute.xlu0 %5313
      %5315 = vrot.lane.b32.xlu0 %v4926, 64
      %v5316 = vpop.permute.xlu0 %5315
      %5317 = vrot.lane.b32.xlu0 %v4927, 64
      %v5318 = vpop.permute.xlu0 %5317
      %5319 = vrot.lane.b32.xlu0 %v4928, 64
      %v5320 = vpop.permute.xlu0 %5319
      %5321 = vrot.lane.b32.xlu0 %v4929, 64
      %v5322 = vpop.permute.xlu0 %5321
      %5323 = vrot.lane.b32.xlu0 %v4930, 64
      %v5324 = vpop.permute.xlu0 %5323
      %5325 = vrot.lane.b32.xlu0 %v4931, 64
      %v5326 = vpop.permute.xlu0 %5325
      %5327 = vrot.lane.b32.xlu0 %v4932, 64
      %v5328 = vpop.permute.xlu0 %5327
      %5329 = vrot.lane.b32.xlu0 %v4933, 64
      %v5330 = vpop.permute.xlu0 %5329
      %5331 = vrot.lane.b32.xlu0 %v4934, 64
      %v5332 = vpop.permute.xlu0 %5331
      %5333 = vrot.lane.b32.xlu0 %v4935, 64
      %v5334 = vpop.permute.xlu0 %5333
      %5335 = vrot.lane.b32.xlu0 %v4936, 64
      %v5336 = vpop.permute.xlu0 %5335
      %5337 = vrot.lane.b32.xlu0 %v4937, 64
      %v5338 = vpop.permute.xlu0 %5337
      %5339 = vrot.lane.b32.xlu0 %v4938, 64
      %v5340 = vpop.permute.xlu0 %5339
      %5341 = vrot.lane.b32.xlu0 %v4939, 64
      %v5342 = vpop.permute.xlu0 %5341
      %5343 = vrot.lane.b32.xlu0 %v4940, 64
      %v5344 = vpop.permute.xlu0 %5343
      %5345 = vrot.lane.b32.xlu0 %v4941, 64
      %v5346 = vpop.permute.xlu0 %5345
      %5347 = vrot.lane.b32.xlu0 %v4942, 64
      %v5348 = vpop.permute.xlu0 %5347
      %5349 = vrot.lane.b32.xlu0 %v4943, 64
      %v5350 = vpop.permute.xlu0 %5349
      %5351 = vrot.lane.b32.xlu0 %v4944, 64
      %v5352 = vpop.permute.xlu0 %5351
      %5353 = vrot.lane.b32.xlu0 %v4945, 64
      %v5354 = vpop.permute.xlu0 %5353
      %5355 = vrot.lane.b32.xlu0 %v4946, 64
      %v5356 = vpop.permute.xlu0 %5355
      %5357 = vrot.lane.b32.xlu0 %v4947, 64
      %v5358 = vpop.permute.xlu0 %5357
      %5359 = vrot.lane.b32.xlu0 %v4948, 64
      %v5360 = vpop.permute.xlu0 %5359
      %5361 = vrot.lane.b32.xlu0 %v4949, 64
      %v5362 = vpop.permute.xlu0 %5361
      %5363 = vrot.lane.b32.xlu0 %v4950, 64
      %v5364 = vpop.permute.xlu0 %5363
      %5365 = vrot.lane.b32.xlu0 %v4951, 64
      %v5366 = vpop.permute.xlu0 %5365
      %5367 = vrot.lane.b32.xlu0 %v4952, 64
      %v5368 = vpop.permute.xlu0 %5367
      %5433 = vrot.lane.b32.xlu0 %v4953, 96
      %v5434 = vpop.permute.xlu0 %5433
      %5435 = vrot.lane.b32.xlu0 %v4954, 96
      %v5436 = vpop.permute.xlu0 %5435
      %5437 = vrot.lane.b32.xlu0 %v4955, 96
      %v5438 = vpop.permute.xlu0 %5437
      %5439 = vrot.lane.b32.xlu0 %v4956, 96
      %v5440 = vpop.permute.xlu0 %5439
      %5441 = vrot.lane.b32.xlu0 %v4957, 96
      %v5442 = vpop.permute.xlu0 %5441
      %5443 = vrot.lane.b32.xlu0 %v4958, 96
      %v5444 = vpop.permute.xlu0 %5443
      %5445 = vrot.lane.b32.xlu0 %v4959, 96
      %v5446 = vpop.permute.xlu0 %5445
      %5447 = vrot.lane.b32.xlu0 %v4960, 96
      %v5448 = vpop.permute.xlu0 %5447
      %5449 = vrot.lane.b32.xlu0 %v4961, 96
      %v5450 = vpop.permute.xlu0 %5449
      %5451 = vrot.lane.b32.xlu0 %v4962, 96
      %v5452 = vpop.permute.xlu0 %5451
      %5453 = vrot.lane.b32.xlu0 %v4963, 96
      %v5454 = vpop.permute.xlu0 %5453
      %5455 = vrot.lane.b32.xlu0 %v4964, 96
      %v5456 = vpop.permute.xlu0 %5455
      %5457 = vrot.lane.b32.xlu0 %v4965, 96
      %v5458 = vpop.permute.xlu0 %5457
      %5459 = vrot.lane.b32.xlu0 %v4966, 96
      %v5460 = vpop.permute.xlu0 %5459
      %5461 = vrot.lane.b32.xlu0 %v4967, 96
      %v5462 = vpop.permute.xlu0 %5461
      %5463 = vrot.lane.b32.xlu0 %v4968, 96
      %v5464 = vpop.permute.xlu0 %5463
      %5465 = vrot.lane.b32.xlu0 %v4969, 96
      %v5466 = vpop.permute.xlu0 %5465
      %5467 = vrot.lane.b32.xlu0 %v4970, 96
      %v5468 = vpop.permute.xlu0 %5467
      %5469 = vrot.lane.b32.xlu0 %v4971, 96
      %v5470 = vpop.permute.xlu0 %5469
      %5471 = vrot.lane.b32.xlu0 %v4972, 96
      %v5472 = vpop.permute.xlu0 %5471
      %5473 = vrot.lane.b32.xlu0 %v4973, 96
      %v5474 = vpop.permute.xlu0 %5473
      %5475 = vrot.lane.b32.xlu0 %v4974, 96
      %v5476 = vpop.permute.xlu0 %5475
      %5477 = vrot.lane.b32.xlu0 %v4975, 96
      %v5478 = vpop.permute.xlu0 %5477
      %5479 = vrot.lane.b32.xlu0 %v4976, 96
      %v5480 = vpop.permute.xlu0 %5479
      %5481 = vrot.lane.b32.xlu0 %v4977, 96
      %v5482 = vpop.permute.xlu0 %5481
      %5483 = vrot.lane.b32.xlu0 %v4978, 96
      %v5484 = vpop.permute.xlu0 %5483
      %5485 = vrot.lane.b32.xlu0 %v4979, 96
      %v5486 = vpop.permute.xlu0 %5485
      %5487 = vrot.lane.b32.xlu0 %v4980, 96
      %v5488 = vpop.permute.xlu0 %5487
      %5489 = vrot.lane.b32.xlu0 %v4981, 96
      %v5490 = vpop.permute.xlu0 %5489
      %5491 = vrot.lane.b32.xlu0 %v4982, 96
      %v5492 = vpop.permute.xlu0 %5491
      %5493 = vrot.lane.b32.xlu0 %v4983, 96
      %v5494 = vpop.permute.xlu0 %5493
      %5495 = vrot.lane.b32.xlu0 %v4984, 96
      %v5496 = vpop.permute.xlu0 %5495
      %5561 = vrot.lane.b32.xlu0 %v5017, 32
      %v5562 = vpop.permute.xlu0 %5561
      %5563 = vrot.lane.b32.xlu0 %v5018, 32
      %v5564 = vpop.permute.xlu0 %5563
      %5565 = vrot.lane.b32.xlu0 %v5019, 32
      %v5566 = vpop.permute.xlu0 %5565
      %5567 = vrot.lane.b32.xlu0 %v5020, 32
      %v5568 = vpop.permute.xlu0 %5567
      %5569 = vrot.lane.b32.xlu0 %v5021, 32
      %v5570 = vpop.permute.xlu0 %5569
      %5571 = vrot.lane.b32.xlu0 %v5022, 32
      %v5572 = vpop.permute.xlu0 %5571
      %5573 = vrot.lane.b32.xlu0 %v5023, 32
      %v5574 = vpop.permute.xlu0 %5573
      %5575 = vrot.lane.b32.xlu0 %v5024, 32
      %v5576 = vpop.permute.xlu0 %5575
      %5577 = vrot.lane.b32.xlu0 %v5025, 32
      %v5578 = vpop.permute.xlu0 %5577
      %5579 = vrot.lane.b32.xlu0 %v5026, 32
      %v5580 = vpop.permute.xlu0 %5579
      %5581 = vrot.lane.b32.xlu0 %v5027, 32
      %v5582 = vpop.permute.xlu0 %5581
      %5583 = vrot.lane.b32.xlu0 %v5028, 32
      %v5584 = vpop.permute.xlu0 %5583
      %5585 = vrot.lane.b32.xlu0 %v5029, 32
      %v5586 = vpop.permute.xlu0 %5585
      %5587 = vrot.lane.b32.xlu0 %v5030, 32
      %v5588 = vpop.permute.xlu0 %5587
      %5589 = vrot.lane.b32.xlu0 %v5031, 32
      %v5590 = vpop.permute.xlu0 %5589
      %5591 = vrot.lane.b32.xlu0 %v5032, 32
      %v5592 = vpop.permute.xlu0 %5591
      %5593 = vrot.lane.b32.xlu0 %v5033, 32
      %v5594 = vpop.permute.xlu0 %5593
      %5595 = vrot.lane.b32.xlu0 %v5034, 32
      %v5596 = vpop.permute.xlu0 %5595
      %5597 = vrot.lane.b32.xlu0 %v5035, 32
      %v5598 = vpop.permute.xlu0 %5597
      %5599 = vrot.lane.b32.xlu0 %v5036, 32
      %v5600 = vpop.permute.xlu0 %5599
      %5601 = vrot.lane.b32.xlu0 %v5037, 32
      %v5602 = vpop.permute.xlu0 %5601
      %5603 = vrot.lane.b32.xlu0 %v5038, 32
      %v5604 = vpop.permute.xlu0 %5603
      %5605 = vrot.lane.b32.xlu0 %v5039, 32
      %v5606 = vpop.permute.xlu0 %5605
      %5607 = vrot.lane.b32.xlu0 %v5040, 32
      %v5608 = vpop.permute.xlu0 %5607
      %5609 = vrot.lane.b32.xlu0 %v5041, 32
      %v5610 = vpop.permute.xlu0 %5609
      %5611 = vrot.lane.b32.xlu0 %v5042, 32
      %v5612 = vpop.permute.xlu0 %5611
      %5613 = vrot.lane.b32.xlu0 %v5043, 32
      %v5614 = vpop.permute.xlu0 %5613
      %5615 = vrot.lane.b32.xlu0 %v5044, 32
      %v5616 = vpop.permute.xlu0 %5615
      %5617 = vrot.lane.b32.xlu0 %v5045, 32
      %v5618 = vpop.permute.xlu0 %5617
      %5619 = vrot.lane.b32.xlu0 %v5046, 32
      %v5620 = vpop.permute.xlu0 %5619
      %5621 = vrot.lane.b32.xlu0 %v5047, 32
      %v5622 = vpop.permute.xlu0 %5621
      %5623 = vrot.lane.b32.xlu0 %v5048, 32
      %v5624 = vpop.permute.xlu0 %5623
      %5689 = vrot.lane.b32.xlu0 %v5049, 64
      %v5690 = vpop.permute.xlu0 %5689
      %5691 = vrot.lane.b32.xlu0 %v5050, 64
      %v5692 = vpop.permute.xlu0 %5691
      %5693 = vrot.lane.b32.xlu0 %v5051, 64
      %v5694 = vpop.permute.xlu0 %5693
      %5695 = vrot.lane.b32.xlu0 %v5052, 64
      %v5696 = vpop.permute.xlu0 %5695
      %5697 = vrot.lane.b32.xlu0 %v5053, 64
      %v5698 = vpop.permute.xlu0 %5697
      %5699 = vrot.lane.b32.xlu0 %v5054, 64
      %v5700 = vpop.permute.xlu0 %5699
      %5701 = vrot.lane.b32.xlu0 %v5055, 64
      %v5702 = vpop.permute.xlu0 %5701
      %5703 = vrot.lane.b32.xlu0 %v5056, 64
      %v5704 = vpop.permute.xlu0 %5703
      %5705 = vrot.lane.b32.xlu0 %v5057, 64
      %v5706 = vpop.permute.xlu0 %5705
      %5707 = vrot.lane.b32.xlu0 %v5058, 64
      %v5708 = vpop.permute.xlu0 %5707
      %5709 = vrot.lane.b32.xlu0 %v5059, 64
      %v5710 = vpop.permute.xlu0 %5709
      %5711 = vrot.lane.b32.xlu0 %v5060, 64
      %v5712 = vpop.permute.xlu0 %5711
      %5713 = vrot.lane.b32.xlu0 %v5061, 64
      %v5714 = vpop.permute.xlu0 %5713
      %5715 = vrot.lane.b32.xlu0 %v5062, 64
      %v5716 = vpop.permute.xlu0 %5715
      %5717 = vrot.lane.b32.xlu0 %v5063, 64
      %v5718 = vpop.permute.xlu0 %5717
      %5719 = vrot.lane.b32.xlu0 %v5064, 64
      %v5720 = vpop.permute.xlu0 %5719
      %5721 = vrot.lane.b32.xlu0 %v5065, 64
      %v5722 = vpop.permute.xlu0 %5721
      %5723 = vrot.lane.b32.xlu0 %v5066, 64
      %v5724 = vpop.permute.xlu0 %5723
      %5725 = vrot.lane.b32.xlu0 %v5067, 64
      %v5726 = vpop.permute.xlu0 %5725
      %5727 = vrot.lane.b32.xlu0 %v5068, 64
      %v5728 = vpop.permute.xlu0 %5727
      %5729 = vrot.lane.b32.xlu0 %v5069, 64
      %v5730 = vpop.permute.xlu0 %5729
      %5731 = vrot.lane.b32.xlu0 %v5070, 64
      %v5732 = vpop.permute.xlu0 %5731
      %5733 = vrot.lane.b32.xlu0 %v5071, 64
      %v5734 = vpop.permute.xlu0 %5733
      %5735 = vrot.lane.b32.xlu0 %v5072, 64
      %v5736 = vpop.permute.xlu0 %5735
      %5737 = vrot.lane.b32.xlu0 %v5073, 64
      %v5738 = vpop.permute.xlu0 %5737
      %5739 = vrot.lane.b32.xlu0 %v5074, 64
      %v5740 = vpop.permute.xlu0 %5739
      %5741 = vrot.lane.b32.xlu0 %v5075, 64
      %v5742 = vpop.permute.xlu0 %5741
      %5743 = vrot.lane.b32.xlu0 %v5076, 64
      %v5744 = vpop.permute.xlu0 %5743
      %5745 = vrot.lane.b32.xlu0 %v5077, 64
      %v5746 = vpop.permute.xlu0 %5745
      %5747 = vrot.lane.b32.xlu0 %v5078, 64
      %v5748 = vpop.permute.xlu0 %5747
      %5749 = vrot.lane.b32.xlu0 %v5079, 64
      %v5750 = vpop.permute.xlu0 %5749
      %5751 = vrot.lane.b32.xlu0 %v5080, 64
      %v5752 = vpop.permute.xlu0 %5751
      %5817 = vrot.lane.b32.xlu0 %v5081, 96
      %v5818 = vpop.permute.xlu0 %5817
      %5819 = vrot.lane.b32.xlu0 %v5082, 96
      %v5820 = vpop.permute.xlu0 %5819
      %5821 = vrot.lane.b32.xlu0 %v5083, 96
      %v5822 = vpop.permute.xlu0 %5821
      %5823 = vrot.lane.b32.xlu0 %v5084, 96
      %v5824 = vpop.permute.xlu0 %5823
      %5825 = vrot.lane.b32.xlu0 %v5085, 96
      %v5826 = vpop.permute.xlu0 %5825
      %5827 = vrot.lane.b32.xlu0 %v5086, 96
      %v5828 = vpop.permute.xlu0 %5827
      %5829 = vrot.lane.b32.xlu0 %v5087, 96
      %v5830 = vpop.permute.xlu0 %5829
      %5831 = vrot.lane.b32.xlu0 %v5088, 96
      %v5832 = vpop.permute.xlu0 %5831
      %5833 = vrot.lane.b32.xlu0 %v5089, 96
      %v5834 = vpop.permute.xlu0 %5833
      %5835 = vrot.lane.b32.xlu0 %v5090, 96
      %v5836 = vpop.permute.xlu0 %5835
      %5837 = vrot.lane.b32.xlu0 %v5091, 96
      %v5838 = vpop.permute.xlu0 %5837
      %5839 = vrot.lane.b32.xlu0 %v5092, 96
      %v5840 = vpop.permute.xlu0 %5839
      %5841 = vrot.lane.b32.xlu0 %v5093, 96
      %v5842 = vpop.permute.xlu0 %5841
      %5843 = vrot.lane.b32.xlu0 %v5094, 96
      %v5844 = vpop.permute.xlu0 %5843
      %5845 = vrot.lane.b32.xlu0 %v5095, 96
      %v5846 = vpop.permute.xlu0 %5845
      %5847 = vrot.lane.b32.xlu0 %v5096, 96
      %v5848 = vpop.permute.xlu0 %5847
      %5849 = vrot.lane.b32.xlu0 %v5097, 96
      %v5850 = vpop.permute.xlu0 %5849
      %5851 = vrot.lane.b32.xlu0 %v5098, 96
      %v5852 = vpop.permute.xlu0 %5851
      %5853 = vrot.lane.b32.xlu0 %v5099, 96
      %v5854 = vpop.permute.xlu0 %5853
      %5855 = vrot.lane.b32.xlu0 %v5100, 96
      %v5856 = vpop.permute.xlu0 %5855
      %5857 = vrot.lane.b32.xlu0 %v5101, 96
      %v5858 = vpop.permute.xlu0 %5857
      %5859 = vrot.lane.b32.xlu0 %v5102, 96
      %v5860 = vpop.permute.xlu0 %5859
      %5861 = vrot.lane.b32.xlu0 %v5103, 96
      %v5862 = vpop.permute.xlu0 %5861
      %5863 = vrot.lane.b32.xlu0 %v5104, 96
      %v5864 = vpop.permute.xlu0 %5863
      %5865 = vrot.lane.b32.xlu0 %v5105, 96
      %v5866 = vpop.permute.xlu0 %5865
      %5867 = vrot.lane.b32.xlu0 %v5106, 96
      %v5868 = vpop.permute.xlu0 %5867
      %5869 = vrot.lane.b32.xlu0 %v5107, 96
      %v5870 = vpop.permute.xlu0 %5869
      %5871 = vrot.lane.b32.xlu0 %v5108, 96
      %v5872 = vpop.permute.xlu0 %5871
      %5873 = vrot.lane.b32.xlu0 %v5109, 96
      %v5874 = vpop.permute.xlu0 %5873
      %5875 = vrot.lane.b32.xlu0 %v5110, 96
      %v5876 = vpop.permute.xlu0 %5875
      %5877 = vrot.lane.b32.xlu0 %v5111, 96
      %v5878 = vpop.permute.xlu0 %5877
      %5879 = vrot.lane.b32.xlu0 %v5112, 96
      %v5880 = vpop.permute.xlu0 %5879
      %v5913 = vsel %vm307, %v4857, %v5178
      %v5914 = vsel %vm307, %v4858, %v5180
      %v5915 = vsel %vm307, %v4859, %v5182
      %v5916 = vsel %vm307, %v4860, %v5184
      %v5917 = vsel %vm307, %v4861, %v5186
      %v5918 = vsel %vm307, %v4862, %v5188
      %v5919 = vsel %vm307, %v4863, %v5190
      %v5920 = vsel %vm307, %v4864, %v5192
      %v5921 = vsel %vm307, %v4865, %v5194
      %v5922 = vsel %vm307, %v4866, %v5196
      %v5923 = vsel %vm307, %v4867, %v5198
      %v5924 = vsel %vm307, %v4868, %v5200
      %v5925 = vsel %vm307, %v4869, %v5202
      %v5926 = vsel %vm307, %v4870, %v5204
      %v5927 = vsel %vm307, %v4871, %v5206
      %v5928 = vsel %vm307, %v4872, %v5208
      %v5929 = vsel %vm307, %v4873, %v5210
      %v5930 = vsel %vm307, %v4874, %v5212
      %v5931 = vsel %vm307, %v4875, %v5214
      %v5932 = vsel %vm307, %v4876, %v5216
      %v5933 = vsel %vm307, %v4877, %v5218
      %v5934 = vsel %vm307, %v4878, %v5220
      %v5935 = vsel %vm307, %v4879, %v5222
      %v5936 = vsel %vm307, %v4880, %v5224
      %v5937 = vsel %vm307, %v4881, %v5226
      %v5938 = vsel %vm307, %v4882, %v5228
      %v5939 = vsel %vm307, %v4883, %v5230
      %v5940 = vsel %vm307, %v4884, %v5232
      %v5941 = vsel %vm307, %v4885, %v5234
      %v5942 = vsel %vm307, %v4886, %v5236
      %v5943 = vsel %vm307, %v4887, %v5238
      %v5944 = vsel %vm307, %v4888, %v5240
      %v5945 = vsel %vm1553, %v5913, %v5306
      %v5946 = vsel %vm1553, %v5914, %v5308
      %v5947 = vsel %vm1553, %v5915, %v5310
      %v5948 = vsel %vm1553, %v5916, %v5312
      %v5949 = vsel %vm1553, %v5917, %v5314
      %v5950 = vsel %vm1553, %v5918, %v5316
      %v5951 = vsel %vm1553, %v5919, %v5318
      %v5952 = vsel %vm1553, %v5920, %v5320
      %v5953 = vsel %vm1553, %v5921, %v5322
      %v5954 = vsel %vm1553, %v5922, %v5324
      %v5955 = vsel %vm1553, %v5923, %v5326
      %v5956 = vsel %vm1553, %v5924, %v5328
      %v5957 = vsel %vm1553, %v5925, %v5330
      %v5958 = vsel %vm1553, %v5926, %v5332
      %v5959 = vsel %vm1553, %v5927, %v5334
      %v5960 = vsel %vm1553, %v5928, %v5336
      %v5961 = vsel %vm1553, %v5929, %v5338
      %v5962 = vsel %vm1553, %v5930, %v5340
      %v5963 = vsel %vm1553, %v5931, %v5342
      %v5964 = vsel %vm1553, %v5932, %v5344
      %v5965 = vsel %vm1553, %v5933, %v5346
      %v5966 = vsel %vm1553, %v5934, %v5348
      %v5967 = vsel %vm1553, %v5935, %v5350
      %v5968 = vsel %vm1553, %v5936, %v5352
      %v5969 = vsel %vm1553, %v5937, %v5354
      %v5970 = vsel %vm1553, %v5938, %v5356
      %v5971 = vsel %vm1553, %v5939, %v5358
      %v5972 = vsel %vm1553, %v5940, %v5360
      %v5973 = vsel %vm1553, %v5941, %v5362
      %v5974 = vsel %vm1553, %v5942, %v5364
      %v5975 = vsel %vm1553, %v5943, %v5366
      %v5976 = vsel %vm1553, %v5944, %v5368
      %v5977 = vsel %vm1586, %v5945, %v5434
      %v5978 = vsel %vm1586, %v5946, %v5436
      %v5979 = vsel %vm1586, %v5947, %v5438
      %v5980 = vsel %vm1586, %v5948, %v5440
      %v5981 = vsel %vm1586, %v5949, %v5442
      %v5982 = vsel %vm1586, %v5950, %v5444
      %v5983 = vsel %vm1586, %v5951, %v5446
      %v5984 = vsel %vm1586, %v5952, %v5448
      %v5985 = vsel %vm1586, %v5953, %v5450
      %v5986 = vsel %vm1586, %v5954, %v5452
      %v5987 = vsel %vm1586, %v5955, %v5454
      %v5988 = vsel %vm1586, %v5956, %v5456
      %v5989 = vsel %vm1586, %v5957, %v5458
      %v5990 = vsel %vm1586, %v5958, %v5460
      %v5991 = vsel %vm1586, %v5959, %v5462
      %v5992 = vsel %vm1586, %v5960, %v5464
      %v5993 = vsel %vm1586, %v5961, %v5466
      %v5994 = vsel %vm1586, %v5962, %v5468
      %v5995 = vsel %vm1586, %v5963, %v5470
      %v5996 = vsel %vm1586, %v5964, %v5472
      %v5997 = vsel %vm1586, %v5965, %v5474
      %v5998 = vsel %vm1586, %v5966, %v5476
      %v5999 = vsel %vm1586, %v5967, %v5478
      %v6000 = vsel %vm1586, %v5968, %v5480
      %v6001 = vsel %vm1586, %v5969, %v5482
      %v6002 = vsel %vm1586, %v5970, %v5484
      %v6003 = vsel %vm1586, %v5971, %v5486
      %v6004 = vsel %vm1586, %v5972, %v5488
      %v6005 = vsel %vm1586, %v5973, %v5490
      %v6006 = vsel %vm1586, %v5974, %v5492
      %v6007 = vsel %vm1586, %v5975, %v5494
      %v6008 = vsel %vm1586, %v5976, %v5496
      %v6009 = vsel %vm307, %v4985, %v5562
      %v6010 = vsel %vm307, %v4986, %v5564
      %v6011 = vsel %vm307, %v4987, %v5566
      %v6012 = vsel %vm307, %v4988, %v5568
      %v6013 = vsel %vm307, %v4989, %v5570
      %v6014 = vsel %vm307, %v4990, %v5572
      %v6015 = vsel %vm307, %v4991, %v5574
      %v6016 = vsel %vm307, %v4992, %v5576
      %v6017 = vsel %vm307, %v4993, %v5578
      %v6018 = vsel %vm307, %v4994, %v5580
      %v6019 = vsel %vm307, %v4995, %v5582
      %v6020 = vsel %vm307, %v4996, %v5584
      %v6021 = vsel %vm307, %v4997, %v5586
      %v6022 = vsel %vm307, %v4998, %v5588
      %v6023 = vsel %vm307, %v4999, %v5590
      %v6024 = vsel %vm307, %v5000, %v5592
      %v6025 = vsel %vm307, %v5001, %v5594
      %v6026 = vsel %vm307, %v5002, %v5596
      %v6027 = vsel %vm307, %v5003, %v5598
      %v6028 = vsel %vm307, %v5004, %v5600
      %v6029 = vsel %vm307, %v5005, %v5602
      %v6030 = vsel %vm307, %v5006, %v5604
      %v6031 = vsel %vm307, %v5007, %v5606
      %v6032 = vsel %vm307, %v5008, %v5608
      %v6033 = vsel %vm307, %v5009, %v5610
      %v6034 = vsel %vm307, %v5010, %v5612
      %v6035 = vsel %vm307, %v5011, %v5614
      %v6036 = vsel %vm307, %v5012, %v5616
      %v6037 = vsel %vm307, %v5013, %v5618
      %v6038 = vsel %vm307, %v5014, %v5620
      %v6039 = vsel %vm307, %v5015, %v5622
      %v6040 = vsel %vm307, %v5016, %v5624
      %v6041 = vsel %vm1553, %v6009, %v5690
      %v6042 = vsel %vm1553, %v6010, %v5692
      %v6043 = vsel %vm1553, %v6011, %v5694
      %v6044 = vsel %vm1553, %v6012, %v5696
      %v6045 = vsel %vm1553, %v6013, %v5698
      %v6046 = vsel %vm1553, %v6014, %v5700
      %v6047 = vsel %vm1553, %v6015, %v5702
      %v6048 = vsel %vm1553, %v6016, %v5704
      %v6049 = vsel %vm1553, %v6017, %v5706
      %v6050 = vsel %vm1553, %v6018, %v5708
      %v6051 = vsel %vm1553, %v6019, %v5710
      %v6052 = vsel %vm1553, %v6020, %v5712
      %v6053 = vsel %vm1553, %v6021, %v5714
      %v6054 = vsel %vm1553, %v6022, %v5716
      %v6055 = vsel %vm1553, %v6023, %v5718
      %v6056 = vsel %vm1553, %v6024, %v5720
      %v6057 = vsel %vm1553, %v6025, %v5722
      %v6058 = vsel %vm1553, %v6026, %v5724
      %v6059 = vsel %vm1553, %v6027, %v5726
      %v6060 = vsel %vm1553, %v6028, %v5728
      %v6061 = vsel %vm1553, %v6029, %v5730
      %v6062 = vsel %vm1553, %v6030, %v5732
      %v6063 = vsel %vm1553, %v6031, %v5734
      %v6064 = vsel %vm1553, %v6032, %v5736
      %v6065 = vsel %vm1553, %v6033, %v5738
      %v6066 = vsel %vm1553, %v6034, %v5740
      %v6067 = vsel %vm1553, %v6035, %v5742
      %v6068 = vsel %vm1553, %v6036, %v5744
      %v6069 = vsel %vm1553, %v6037, %v5746
      %v6070 = vsel %vm1553, %v6038, %v5748
      %v6071 = vsel %vm1553, %v6039, %v5750
      %v6072 = vsel %vm1553, %v6040, %v5752
      %v6073 = vsel %vm1586, %v6041, %v5818
      %v6074 = vsel %vm1586, %v6042, %v5820
      %v6075 = vsel %vm1586, %v6043, %v5822
      %v6076 = vsel %vm1586, %v6044, %v5824
      %v6077 = vsel %vm1586, %v6045, %v5826
      %v6078 = vsel %vm1586, %v6046, %v5828
      %v6079 = vsel %vm1586, %v6047, %v5830
      %v6080 = vsel %vm1586, %v6048, %v5832
      %v6081 = vsel %vm1586, %v6049, %v5834
      %v6082 = vsel %vm1586, %v6050, %v5836
      %v6083 = vsel %vm1586, %v6051, %v5838
      %v6084 = vsel %vm1586, %v6052, %v5840
      %v6085 = vsel %vm1586, %v6053, %v5842
      %v6086 = vsel %vm1586, %v6054, %v5844
      %v6087 = vsel %vm1586, %v6055, %v5846
      %v6088 = vsel %vm1586, %v6056, %v5848
      %v6089 = vsel %vm1586, %v6057, %v5850
      %v6090 = vsel %vm1586, %v6058, %v5852
      %v6091 = vsel %vm1586, %v6059, %v5854
      %v6092 = vsel %vm1586, %v6060, %v5856
      %v6093 = vsel %vm1586, %v6061, %v5858
      %v6094 = vsel %vm1586, %v6062, %v5860
      %v6095 = vsel %vm1586, %v6063, %v5862
      %v6096 = vsel %vm1586, %v6064, %v5864
      %v6097 = vsel %vm1586, %v6065, %v5866
      %v6098 = vsel %vm1586, %v6066, %v5868
      %v6099 = vsel %vm1586, %v6067, %v5870
      %v6100 = vsel %vm1586, %v6068, %v5872
      %v6101 = vsel %vm1586, %v6069, %v5874
      %v6102 = vsel %vm1586, %v6070, %v5876
      %v6103 = vsel %vm1586, %v6071, %v5878
      %v6104 = vsel %vm1586, %v6072, %v5880
      %v6105 = vpack.c.bf16 %v5978, %v5977
      %v6106 = vpack.c.bf16 %v6074, %v6073
      %v6107 = vpack.c.bf16 %v5114, %v5113
      %v6108 = vpack.c.bf16 %v5980, %v5979
      %v6109 = vpack.c.bf16 %v6076, %v6075
      %v6110 = vpack.c.bf16 %v5116, %v5115
      %v6111 = vpack.c.bf16 %v5982, %v5981
      %v6112 = vpack.c.bf16 %v6078, %v6077
      %v6113 = vpack.c.bf16 %v5118, %v5117
      %v6114 = vpack.c.bf16 %v5984, %v5983
      %v6115 = vpack.c.bf16 %v6080, %v6079
      %v6116 = vpack.c.bf16 %v5120, %v5119
      %v6117 = vpack.c.bf16 %v5986, %v5985
      %v6118 = vpack.c.bf16 %v6082, %v6081
      %v6119 = vpack.c.bf16 %v5122, %v5121
      %v6120 = vpack.c.bf16 %v5988, %v5987
      %v6121 = vpack.c.bf16 %v6084, %v6083
      %v6122 = vpack.c.bf16 %v5124, %v5123
      %v6123 = vpack.c.bf16 %v5990, %v5989
      %v6124 = vpack.c.bf16 %v6086, %v6085
      %v6125 = vpack.c.bf16 %v5126, %v5125
      %v6126 = vpack.c.bf16 %v5992, %v5991
      %v6127 = vpack.c.bf16 %v6088, %v6087
      %v6128 = vpack.c.bf16 %v5128, %v5127
      %v6129 = vpack.c.bf16 %v5994, %v5993
      %v6130 = vpack.c.bf16 %v6090, %v6089
      %v6131 = vpack.c.bf16 %v5130, %v5129
      %v6132 = vpack.c.bf16 %v5996, %v5995
      %v6133 = vpack.c.bf16 %v6092, %v6091
      %v6134 = vpack.c.bf16 %v5132, %v5131
      %v6135 = vpack.c.bf16 %v5998, %v5997
      %v6136 = vpack.c.bf16 %v6094, %v6093
      %v6137 = vpack.c.bf16 %v5134, %v5133
      %v6138 = vpack.c.bf16 %v6000, %v5999
      %v6139 = vpack.c.bf16 %v6096, %v6095
      %v6140 = vpack.c.bf16 %v5136, %v5135
      %v6141 = vpack.c.bf16 %v6002, %v6001
      %v6142 = vpack.c.bf16 %v6098, %v6097
      %v6143 = vpack.c.bf16 %v5138, %v5137
      %v6144 = vpack.c.bf16 %v6004, %v6003
      %v6145 = vpack.c.bf16 %v6100, %v6099
      %v6146 = vpack.c.bf16 %v5140, %v5139
      %v6147 = vpack.c.bf16 %v6006, %v6005
      %v6148 = vpack.c.bf16 %v6102, %v6101
      %v6149 = vpack.c.bf16 %v5142, %v5141
      %v6150 = vpack.c.bf16 %v6008, %v6007
      %v6151 = vpack.c.bf16 %v6104, %v6103
      %v6152 = vpack.c.bf16 %v5144, %v5143
      %s6153 = scalar_lea.vmem %s1, 288
      %v6154 = vld [vmem:[%s6153] sm:$0xf]
      %v6155 = vld [vmem:[%s6153 + $0x4] sm:$0xf]
      %v6156 = vld [vmem:[%s6153 + $0x8] sm:$0xf]
      %v6157 = vld [vmem:[%s6153 + $0xc] sm:$0xf]
      %v6158 = vld [vmem:[%s6153 + $0x10] sm:$0xf]
      %v6159 = vld [vmem:[%s6153 + $0x14] sm:$0xf]
      %v6160 = vld [vmem:[%s6153 + $0x18] sm:$0xf]
      %v6161 = vld [vmem:[%s6153 + $0x1c] sm:$0xf]
      %v6162 = vld [vmem:[%s6153 + $0x20] sm:$0xf]
      %v6163 = vld [vmem:[%s6153 + $0x24] sm:$0xf]
      %v6164 = vld [vmem:[%s6153 + $0x28] sm:$0xf]
      %v6165 = vld [vmem:[%s6153 + $0x2c] sm:$0xf]
      %v6166 = vld [vmem:[%s6153 + $0x30] sm:$0xf]
      %v6167 = vld [vmem:[%s6153 + $0x34] sm:$0xf]
      %v6168 = vld [vmem:[%s6153 + $0x38] sm:$0xf]
      %v6169 = vld [vmem:[%s6153 + $0x3c] sm:$0xf]
      %v6170 = vld [vmem:[%s6153 + $0x40] sm:$0xf]
      %v6171 = vld [vmem:[%s6153 + $0x44] sm:$0xf]
      %v6172 = vld [vmem:[%s6153 + $0x48] sm:$0xf]
      %v6173 = vld [vmem:[%s6153 + $0x4c] sm:$0xf]
      %v6174 = vld [vmem:[%s6153 + $0x50] sm:$0xf]
      %v6175 = vld [vmem:[%s6153 + $0x54] sm:$0xf]
      %v6176 = vld [vmem:[%s6153 + $0x58] sm:$0xf]
      %v6177 = vld [vmem:[%s6153 + $0x5c] sm:$0xf]
      %v6178 = vld [vmem:[%s6153 + $0x60] sm:$0xf]
      %v6179 = vld [vmem:[%s6153 + $0x64] sm:$0xf]
      %v6180 = vld [vmem:[%s6153 + $0x68] sm:$0xf]
      %v6181 = vld [vmem:[%s6153 + $0x6c] sm:$0xf]
      %v6182 = vld [vmem:[%s6153 + $0x70] sm:$0xf]
      %v6183 = vld [vmem:[%s6153 + $0x74] sm:$0xf]
      %v6184 = vld [vmem:[%s6153 + $0x78] sm:$0xf]
      %v6185 = vld [vmem:[%s6153 + $0x7c] sm:$0xf]
      %v6186 = vld [vmem:[%s6153 + $0x80] sm:$0xf]
      %v6187 = vld [vmem:[%s6153 + $0x84] sm:$0xf]
      %v6188 = vld [vmem:[%s6153 + $0x88] sm:$0xf]
      %v6189 = vld [vmem:[%s6153 + $0x8c] sm:$0xf]
      %s6190 = scalar_lea.vmem %s2, 2
      %v6191 = vld [vmem:[%s6190] sm:$0x1]
      %v6193 = vperm.slane %v6191, 0
      %v6231 = vunpack.c.l.b16 %v6154
      %v6232 = vunpack.c.l.b16 %v6155
      %v6233 = vunpack.c.l.b16 %v6156
      %v6234 = vunpack.c.l.b16 %v6157
      %v6235 = vunpack.c.l.b16 %v6158
      %v6236 = vunpack.c.l.b16 %v6159
      %v6237 = vunpack.c.l.b16 %v6160
      %v6238 = vunpack.c.l.b16 %v6161
      %v6239 = vunpack.c.l.b16 %v6162
      %v6240 = vunpack.c.l.b16 %v6163
      %v6241 = vunpack.c.l.b16 %v6164
      %v6242 = vunpack.c.l.b16 %v6165
      %v6243 = vunpack.c.l.b16 %v6166
      %v6244 = vunpack.c.l.b16 %v6167
      %v6245 = vunpack.c.l.b16 %v6168
      %v6246 = vunpack.c.l.b16 %v6169
      %v6247 = vunpack.c.l.b16 %v6170
      %v6248 = vunpack.c.l.b16 %v6171
      %v6249 = vunpack.c.l.b16 %v6172
      %v6250 = vunpack.c.l.b16 %v6173
      %v6251 = vunpack.c.l.b16 %v6174
      %v6252 = vunpack.c.l.b16 %v6175
      %v6253 = vunpack.c.l.b16 %v6176
      %v6254 = vunpack.c.l.b16 %v6177
      %v6255 = vunpack.c.l.b16 %v6178
      %v6256 = vunpack.c.l.b16 %v6179
      %v6257 = vunpack.c.l.b16 %v6180
      %v6258 = vunpack.c.l.b16 %v6181
      %v6259 = vunpack.c.l.b16 %v6182
      %v6260 = vunpack.c.l.b16 %v6183
      %v6261 = vunpack.c.l.b16 %v6184
      %v6262 = vunpack.c.l.b16 %v6185
      %v6263 = vunpack.c.l.b16 %v6186
      %v6264 = vunpack.c.l.b16 %v6187
      %v6265 = vunpack.c.l.b16 %v6188
      %v6266 = vunpack.c.l.b16 %v6189
      %v6267 = vpack.c.b16 %v6232, %v6231
      %v6268 = vpack.c.b16 %v6234, %v6233
      %v6269 = vpack.c.b16 %v6236, %v6235
      %v6270 = vpack.c.b16 %v6238, %v6237
      %v6271 = vpack.c.b16 %v6240, %v6239
      %v6272 = vpack.c.b16 %v6242, %v6241
      %v6273 = vpack.c.b16 %v6244, %v6243
      %v6274 = vpack.c.b16 %v6246, %v6245
      %v6275 = vpack.c.b16 %v6248, %v6247
      %v6276 = vpack.c.b16 %v6250, %v6249
      %v6277 = vpack.c.b16 %v6252, %v6251
      %v6278 = vpack.c.b16 %v6254, %v6253
      %v6279 = vpack.c.b16 %v6256, %v6255
      %v6280 = vpack.c.b16 %v6258, %v6257
      %v6281 = vpack.c.b16 %v6260, %v6259
      %v6282 = vpack.c.b16 %v6262, %v6261
      %v6283 = vpack.c.b16 %v6264, %v6263
      %v6284 = vpack.c.b16 %v6266, %v6265
      %v6304 = vsel %vm307, %v6107, 0
      %v6307 = vsel %vm307, %v6110, 0
      %v6310 = vsel %vm307, %v6113, 0
      %v6313 = vsel %vm307, %v6116, 0
      %v6316 = vsel %vm307, %v6119, 0
      %v6319 = vsel %vm307, %v6122, 0
      %v6322 = vsel %vm307, %v6125, 0
      %v6325 = vsel %vm307, %v6128, 0
      %v6328 = vsel %vm307, %v6131, 0
      %v6331 = vsel %vm307, %v6134, 0
      %v6334 = vsel %vm307, %v6137, 0
      %v6337 = vsel %vm307, %v6140, 0
      %v6340 = vsel %vm307, %v6143, 0
      %v6343 = vsel %vm307, %v6146, 0
      %v6346 = vsel %vm307, %v6149, 0
      %v6349 = vsel %vm307, %v6152, 0
      %6351 = vmatpush.bf16.msra.mxu0 %v6274
      %6352 = vmatpush.bf16.msra.mxu0 %v6273
      %6353 = vmatpush.bf16.msra.mxu0 %v6272
      %6354 = vmatpush.bf16.msra.mxu0 %v6271
      %6355 = vmatpush.bf16.msra.mxu0 %v6270
      %6356 = vmatpush.bf16.msra.mxu0 %v6269
      %6357 = vmatpush.bf16.msra.mxu0 %v6268
      %6358 = vmatpush.bf16.msra.mxu0 %v6267
      %6359 = vmatmul.bf16.gmra.mxu0 %v6105
      %v6360 = vpop.f32.mrf.mxu0
      %v6361 = vadd.f32 %v6193, %v6360
      %v6362 = vpop.f32.mrf.mxu0
      %v6363 = vadd.f32 %v6193, %v6362
      %6364 = vmatmul.bf16.gmra.mxu0 %v6108
      %v6365 = vpop.f32.mrf.mxu0
      %v6366 = vadd.f32 %v6193, %v6365
      %v6367 = vpop.f32.mrf.mxu0
      %v6368 = vadd.f32 %v6193, %v6367
      %6369 = vmatmul.bf16.gmra.mxu0 %v6111
      %v6370 = vpop.f32.mrf.mxu0
      %v6371 = vadd.f32 %v6193, %v6370
      %v6372 = vpop.f32.mrf.mxu0
      %v6373 = vadd.f32 %v6193, %v6372
      %6374 = vmatmul.bf16.gmra.mxu0 %v6114
      %v6375 = vpop.f32.mrf.mxu0
      %v6376 = vadd.f32 %v6193, %v6375
      %v6377 = vpop.f32.mrf.mxu0
      %v6378 = vadd.f32 %v6193, %v6377
      %6379 = vmatmul.bf16.gmra.mxu0 %v6117
      %v6380 = vpop.f32.mrf.mxu0
      %v6381 = vadd.f32 %v6193, %v6380
      %v6382 = vpop.f32.mrf.mxu0
      %v6383 = vadd.f32 %v6193, %v6382
      %6384 = vmatmul.bf16.gmra.mxu0 %v6120
      %v6385 = vpop.f32.mrf.mxu0
      %v6386 = vadd.f32 %v6193, %v6385
      %v6387 = vpop.f32.mrf.mxu0
      %v6388 = vadd.f32 %v6193, %v6387
      %6389 = vmatmul.bf16.gmra.mxu0 %v6123
      %v6390 = vpop.f32.mrf.mxu0
      %v6391 = vadd.f32 %v6193, %v6390
      %v6392 = vpop.f32.mrf.mxu0
      %v6393 = vadd.f32 %v6193, %v6392
      %6394 = vmatmul.bf16.gmra.mxu0 %v6126
      %v6395 = vpop.f32.mrf.mxu0
      %v6396 = vadd.f32 %v6193, %v6395
      %v6397 = vpop.f32.mrf.mxu0
      %v6398 = vadd.f32 %v6193, %v6397
      %6399 = vmatmul.bf16.gmra.mxu0 %v6129
      %v6400 = vpop.f32.mrf.mxu0
      %v6401 = vadd.f32 %v6193, %v6400
      %v6402 = vpop.f32.mrf.mxu0
      %v6403 = vadd.f32 %v6193, %v6402
      %6404 = vmatmul.bf16.gmra.mxu0 %v6132
      %v6405 = vpop.f32.mrf.mxu0
      %v6406 = vadd.f32 %v6193, %v6405
      %v6407 = vpop.f32.mrf.mxu0
      %v6408 = vadd.f32 %v6193, %v6407
      %6409 = vmatmul.bf16.gmra.mxu0 %v6135
      %v6410 = vpop.f32.mrf.mxu0
      %v6411 = vadd.f32 %v6193, %v6410
      %v6412 = vpop.f32.mrf.mxu0
      %v6413 = vadd.f32 %v6193, %v6412
      %6414 = vmatmul.bf16.gmra.mxu0 %v6138
      %v6415 = vpop.f32.mrf.mxu0
      %v6416 = vadd.f32 %v6193, %v6415
      %v6417 = vpop.f32.mrf.mxu0
      %v6418 = vadd.f32 %v6193, %v6417
      %6419 = vmatmul.bf16.gmra.mxu0 %v6141
      %v6420 = vpop.f32.mrf.mxu0
      %v6421 = vadd.f32 %v6193, %v6420
      %v6422 = vpop.f32.mrf.mxu0
      %v6423 = vadd.f32 %v6193, %v6422
      %6424 = vmatmul.bf16.gmra.mxu0 %v6144
      %v6425 = vpop.f32.mrf.mxu0
      %v6426 = vadd.f32 %v6193, %v6425
      %v6427 = vpop.f32.mrf.mxu0
      %v6428 = vadd.f32 %v6193, %v6427
      %6429 = vmatmul.bf16.gmra.mxu0 %v6147
      %v6430 = vpop.f32.mrf.mxu0
      %v6431 = vadd.f32 %v6193, %v6430
      %v6432 = vpop.f32.mrf.mxu0
      %v6433 = vadd.f32 %v6193, %v6432
      %6434 = vmatmul.bf16.gmra.mxu0 %v6150
      %v6435 = vpop.f32.mrf.mxu0
      %v6436 = vadd.f32 %v6193, %v6435
      %v6437 = vpop.f32.mrf.mxu0
      %v6438 = vadd.f32 %v6193, %v6437
      %6439 = vdwg.mxu0
      %6440 = vmatpush.bf16.msra.mxu0 %v6282
      %6441 = vmatpush.bf16.msra.mxu0 %v6281
      %6442 = vmatpush.bf16.msra.mxu0 %v6280
      %6443 = vmatpush.bf16.msra.mxu0 %v6279
      %6444 = vmatpush.bf16.msra.mxu0 %v6278
      %6445 = vmatpush.bf16.msra.mxu0 %v6277
      %6446 = vmatpush.bf16.msra.mxu0 %v6276
      %6447 = vmatpush.bf16.msra.mxu0 %v6275
      %6448 = vmatmul.bf16.gmra.mxu0 %v6106
      %v6449 = vpop.f32.mrf.mxu0
      %v6450 = vadd.f32 %v6361, %v6449
      %v6451 = vpop.f32.mrf.mxu0
      %v6452 = vadd.f32 %v6363, %v6451
      %6453 = vmatmul.bf16.gmra.mxu0 %v6109
      %v6454 = vpop.f32.mrf.mxu0
      %v6455 = vadd.f32 %v6366, %v6454
      %v6456 = vpop.f32.mrf.mxu0
      %v6457 = vadd.f32 %v6368, %v6456
      %6458 = vmatmul.bf16.gmra.mxu0 %v6112
      %v6459 = vpop.f32.mrf.mxu0
      %v6460 = vadd.f32 %v6371, %v6459
      %v6461 = vpop.f32.mrf.mxu0
      %v6462 = vadd.f32 %v6373, %v6461
      %6463 = vmatmul.bf16.gmra.mxu0 %v6115
      %v6464 = vpop.f32.mrf.mxu0
      %v6465 = vadd.f32 %v6376, %v6464
      %v6466 = vpop.f32.mrf.mxu0
      %v6467 = vadd.f32 %v6378, %v6466
      %6468 = vmatmul.bf16.gmra.mxu0 %v6118
      %v6469 = vpop.f32.mrf.mxu0
      %v6470 = vadd.f32 %v6381, %v6469
      %v6471 = vpop.f32.mrf.mxu0
      %v6472 = vadd.f32 %v6383, %v6471
      %6473 = vmatmul.bf16.gmra.mxu0 %v6121
      %v6474 = vpop.f32.mrf.mxu0
      %v6475 = vadd.f32 %v6386, %v6474
      %v6476 = vpop.f32.mrf.mxu0
      %v6477 = vadd.f32 %v6388, %v6476
      %6478 = vmatmul.bf16.gmra.mxu0 %v6124
      %v6479 = vpop.f32.mrf.mxu0
      %v6480 = vadd.f32 %v6391, %v6479
      %v6481 = vpop.f32.mrf.mxu0
      %v6482 = vadd.f32 %v6393, %v6481
      %6483 = vmatmul.bf16.gmra.mxu0 %v6127
      %v6484 = vpop.f32.mrf.mxu0
      %v6485 = vadd.f32 %v6396, %v6484
      %v6486 = vpop.f32.mrf.mxu0
      %v6487 = vadd.f32 %v6398, %v6486
      %6488 = vmatmul.bf16.gmra.mxu0 %v6130
      %v6489 = vpop.f32.mrf.mxu0
      %v6490 = vadd.f32 %v6401, %v6489
      %v6491 = vpop.f32.mrf.mxu0
      %v6492 = vadd.f32 %v6403, %v6491
      %6493 = vmatmul.bf16.gmra.mxu0 %v6133
      %v6494 = vpop.f32.mrf.mxu0
      %v6495 = vadd.f32 %v6406, %v6494
      %v6496 = vpop.f32.mrf.mxu0
      %v6497 = vadd.f32 %v6408, %v6496
      %6498 = vmatmul.bf16.gmra.mxu0 %v6136
      %v6499 = vpop.f32.mrf.mxu0
      %v6500 = vadd.f32 %v6411, %v6499
      %v6501 = vpop.f32.mrf.mxu0
      %v6502 = vadd.f32 %v6413, %v6501
      %6503 = vmatmul.bf16.gmra.mxu0 %v6139
      %v6504 = vpop.f32.mrf.mxu0
      %v6505 = vadd.f32 %v6416, %v6504
      %v6506 = vpop.f32.mrf.mxu0
      %v6507 = vadd.f32 %v6418, %v6506
      %6508 = vmatmul.bf16.gmra.mxu0 %v6142
      %v6509 = vpop.f32.mrf.mxu0
      %v6510 = vadd.f32 %v6421, %v6509
      %v6511 = vpop.f32.mrf.mxu0
      %v6512 = vadd.f32 %v6423, %v6511
      %6513 = vmatmul.bf16.gmra.mxu0 %v6145
      %v6514 = vpop.f32.mrf.mxu0
      %v6515 = vadd.f32 %v6426, %v6514
      %v6516 = vpop.f32.mrf.mxu0
      %v6517 = vadd.f32 %v6428, %v6516
      %6518 = vmatmul.bf16.gmra.mxu0 %v6148
      %v6519 = vpop.f32.mrf.mxu0
      %v6520 = vadd.f32 %v6431, %v6519
      %v6521 = vpop.f32.mrf.mxu0
      %v6522 = vadd.f32 %v6433, %v6521
      %6523 = vmatmul.bf16.gmra.mxu0 %v6151
      %v6524 = vpop.f32.mrf.mxu0
      %v6525 = vadd.f32 %v6436, %v6524
      %v6526 = vpop.f32.mrf.mxu0
      %v6527 = vadd.f32 %v6438, %v6526
      %6528 = vdwg.mxu0
      %6529 = vmatpush.bf16.msra.mxu0 0
      %6530 = vmatpush.bf16.msra.mxu0 0
      %6531 = vmatpush.bf16.msra.mxu0 0
      %6532 = vmatpush.bf16.msra.mxu0 0
      %6533 = vmatpush.bf16.msra.mxu0 0
      %6534 = vmatpush.bf16.msra.mxu0 0
      %6535 = vmatpush.bf16.msra.mxu0 %v6284
      %6536 = vmatpush.bf16.msra.mxu0 %v6283
      %6537 = vmatmul.bf16.gmra.mxu0 %v6304
      %v6538 = vpop.f32.mrf.mxu0
      %v6539 = vadd.f32 %v6450, %v6538
      %v6540 = vpop.f32.mrf.mxu0
      %v6541 = vadd.f32 %v6452, %v6540
      %6542 = vmatmul.bf16.gmra.mxu0 %v6307
      %v6543 = vpop.f32.mrf.mxu0
      %v6544 = vadd.f32 %v6455, %v6543
      %v6545 = vpop.f32.mrf.mxu0
      %v6546 = vadd.f32 %v6457, %v6545
      %6547 = vmatmul.bf16.gmra.mxu0 %v6310
      %v6548 = vpop.f32.mrf.mxu0
      %v6549 = vadd.f32 %v6460, %v6548
      %v6550 = vpop.f32.mrf.mxu0
      %v6551 = vadd.f32 %v6462, %v6550
      %6552 = vmatmul.bf16.gmra.mxu0 %v6313
      %v6553 = vpop.f32.mrf.mxu0
      %v6554 = vadd.f32 %v6465, %v6553
      %v6555 = vpop.f32.mrf.mxu0
      %v6556 = vadd.f32 %v6467, %v6555
      %6557 = vmatmul.bf16.gmra.mxu0 %v6316
      %v6558 = vpop.f32.mrf.mxu0
      %v6559 = vadd.f32 %v6470, %v6558
      %v6560 = vpop.f32.mrf.mxu0
      %v6561 = vadd.f32 %v6472, %v6560
      %6562 = vmatmul.bf16.gmra.mxu0 %v6319
      %v6563 = vpop.f32.mrf.mxu0
      %v6564 = vadd.f32 %v6475, %v6563
      %v6565 = vpop.f32.mrf.mxu0
      %v6566 = vadd.f32 %v6477, %v6565
      %6567 = vmatmul.bf16.gmra.mxu0 %v6322
      %v6568 = vpop.f32.mrf.mxu0
      %v6569 = vadd.f32 %v6480, %v6568
      %v6570 = vpop.f32.mrf.mxu0
      %v6571 = vadd.f32 %v6482, %v6570
      %6572 = vmatmul.bf16.gmra.mxu0 %v6325
      %v6573 = vpop.f32.mrf.mxu0
      %v6574 = vadd.f32 %v6485, %v6573
      %v6575 = vpop.f32.mrf.mxu0
      %v6576 = vadd.f32 %v6487, %v6575
      %6577 = vmatmul.bf16.gmra.mxu0 %v6328
      %v6578 = vpop.f32.mrf.mxu0
      %v6579 = vadd.f32 %v6490, %v6578
      %v6580 = vpop.f32.mrf.mxu0
      %v6581 = vadd.f32 %v6492, %v6580
      %6582 = vmatmul.bf16.gmra.mxu0 %v6331
      %v6583 = vpop.f32.mrf.mxu0
      %v6584 = vadd.f32 %v6495, %v6583
      %v6585 = vpop.f32.mrf.mxu0
      %v6586 = vadd.f32 %v6497, %v6585
      %6587 = vmatmul.bf16.gmra.mxu0 %v6334
      %v6588 = vpop.f32.mrf.mxu0
      %v6589 = vadd.f32 %v6500, %v6588
      %v6590 = vpop.f32.mrf.mxu0
      %v6591 = vadd.f32 %v6502, %v6590
      %6592 = vmatmul.bf16.gmra.mxu0 %v6337
      %v6593 = vpop.f32.mrf.mxu0
      %v6594 = vadd.f32 %v6505, %v6593
      %v6595 = vpop.f32.mrf.mxu0
      %v6596 = vadd.f32 %v6507, %v6595
      %6597 = vmatmul.bf16.gmra.mxu0 %v6340
      %v6598 = vpop.f32.mrf.mxu0
      %v6599 = vadd.f32 %v6510, %v6598
      %v6600 = vpop.f32.mrf.mxu0
      %v6601 = vadd.f32 %v6512, %v6600
      %6602 = vmatmul.bf16.gmra.mxu0 %v6343
      %v6603 = vpop.f32.mrf.mxu0
      %v6604 = vadd.f32 %v6515, %v6603
      %v6605 = vpop.f32.mrf.mxu0
      %v6606 = vadd.f32 %v6517, %v6605
      %6607 = vmatmul.bf16.gmra.mxu0 %v6346
      %v6608 = vpop.f32.mrf.mxu0
      %v6609 = vadd.f32 %v6520, %v6608
      %v6610 = vpop.f32.mrf.mxu0
      %v6611 = vadd.f32 %v6522, %v6610
      %6612 = vmatmul.bf16.gmra.mxu0 %v6349
      %v6613 = vpop.f32.mrf.mxu0
      %v6614 = vadd.f32 %v6525, %v6613
      %v6615 = vpop.f32.mrf.mxu0
      %v6616 = vadd.f32 %v6527, %v6615
      %6617 = vdwg.mxu0
      %v6618 = vsel %vm307, %v6539, 0.0
      %v6619 = vsel %vm307, %v6541, 0.0
      %v6620 = vadd.f32 %v6618, %v6619
      %v6621 = vsel %vm307, %v6544, 0.0
      %v6622 = vadd.f32 %v6620, %v6621
      %v6623 = vsel %vm307, %v6546, 0.0
      %v6624 = vadd.f32 %v6622, %v6623
      %v6625 = vsel %vm307, %v6549, 0.0
      %v6626 = vadd.f32 %v6624, %v6625
      %v6627 = vsel %vm307, %v6551, 0.0
      %v6628 = vadd.f32 %v6626, %v6627
      %v6629 = vsel %vm307, %v6554, 0.0
      %v6630 = vadd.f32 %v6628, %v6629
      %v6631 = vsel %vm307, %v6556, 0.0
      %v6632 = vadd.f32 %v6630, %v6631
      %v6633 = vsel %vm307, %v6559, 0.0
      %v6634 = vadd.f32 %v6632, %v6633
      %v6635 = vsel %vm307, %v6561, 0.0
      %v6636 = vadd.f32 %v6634, %v6635
      %v6637 = vsel %vm307, %v6564, 0.0
      %v6638 = vadd.f32 %v6636, %v6637
      %v6639 = vsel %vm307, %v6566, 0.0
      %v6640 = vadd.f32 %v6638, %v6639
      %v6641 = vsel %vm307, %v6569, 0.0
      %v6642 = vadd.f32 %v6640, %v6641
      %v6643 = vsel %vm307, %v6571, 0.0
      %v6644 = vadd.f32 %v6642, %v6643
      %v6645 = vsel %vm307, %v6574, 0.0
      %v6646 = vadd.f32 %v6644, %v6645
      %v6647 = vsel %vm307, %v6576, 0.0
      %v6648 = vadd.f32 %v6646, %v6647
      %v6649 = vsel %vm307, %v6579, 0.0
      %v6650 = vadd.f32 %v6648, %v6649
      %v6651 = vsel %vm307, %v6581, 0.0
      %v6652 = vadd.f32 %v6650, %v6651
      %v6653 = vsel %vm307, %v6584, 0.0
      %v6654 = vadd.f32 %v6652, %v6653
      %v6655 = vsel %vm307, %v6586, 0.0
      %v6656 = vadd.f32 %v6654, %v6655
      %v6657 = vsel %vm307, %v6589, 0.0
      %v6658 = vadd.f32 %v6656, %v6657
      %v6659 = vsel %vm307, %v6591, 0.0
      %v6660 = vadd.f32 %v6658, %v6659
      %v6661 = vsel %vm307, %v6594, 0.0
      %v6662 = vadd.f32 %v6660, %v6661
      %v6663 = vsel %vm307, %v6596, 0.0
      %v6664 = vadd.f32 %v6662, %v6663
      %v6665 = vsel %vm307, %v6599, 0.0
      %v6666 = vadd.f32 %v6664, %v6665
      %v6667 = vsel %vm307, %v6601, 0.0
      %v6668 = vadd.f32 %v6666, %v6667
      %v6669 = vsel %vm307, %v6604, 0.0
      %v6670 = vadd.f32 %v6668, %v6669
      %v6671 = vsel %vm307, %v6606, 0.0
      %v6672 = vadd.f32 %v6670, %v6671
      %v6673 = vsel %vm307, %v6609, 0.0
      %v6674 = vadd.f32 %v6672, %v6673
      %v6675 = vsel %vm307, %v6611, 0.0
      %v6676 = vadd.f32 %v6674, %v6675
      %v6677 = vsel %vm307, %v6614, 0.0
      %v6678 = vadd.f32 %v6676, %v6677
      %v6679 = vsel %vm307, %v6616, 0.0
      %v6680 = vadd.f32 %v6678, %v6679
      %v6681 = vrot.slane %v6680, 4
      %v6682 = vadd.f32 %v6680, %v6681
      %v6683 = vrot.slane %v6682, 2
      %v6684 = vadd.f32 %v6682, %v6683
      %v6685 = vrot.slane %v6684, 1
      %v6686 = vadd.f32 %v6684, %v6685
      %v6687 = vmul.f32 %v6539, %v6539
      %v6688 = vmul.f32 %v6541, %v6541
      %v6689 = vmul.f32 %v6544, %v6544
      %v6690 = vmul.f32 %v6546, %v6546
      %v6691 = vmul.f32 %v6549, %v6549
      %v6692 = vmul.f32 %v6551, %v6551
      %v6693 = vmul.f32 %v6554, %v6554
      %v6694 = vmul.f32 %v6556, %v6556
      %v6695 = vmul.f32 %v6559, %v6559
      %v6696 = vmul.f32 %v6561, %v6561
      %v6697 = vmul.f32 %v6564, %v6564
      %v6698 = vmul.f32 %v6566, %v6566
      %v6699 = vmul.f32 %v6569, %v6569
      %v6700 = vmul.f32 %v6571, %v6571
      %v6701 = vmul.f32 %v6574, %v6574
      %v6702 = vmul.f32 %v6576, %v6576
      %v6703 = vmul.f32 %v6579, %v6579
      %v6704 = vmul.f32 %v6581, %v6581
      %v6705 = vmul.f32 %v6584, %v6584
      %v6706 = vmul.f32 %v6586, %v6586
      %v6707 = vmul.f32 %v6589, %v6589
      %v6708 = vmul.f32 %v6591, %v6591
      %v6709 = vmul.f32 %v6594, %v6594
      %v6710 = vmul.f32 %v6596, %v6596
      %v6711 = vmul.f32 %v6599, %v6599
      %v6712 = vmul.f32 %v6601, %v6601
      %v6713 = vmul.f32 %v6604, %v6604
      %v6714 = vmul.f32 %v6606, %v6606
      %v6715 = vmul.f32 %v6609, %v6609
      %v6716 = vmul.f32 %v6611, %v6611
      %v6717 = vmul.f32 %v6614, %v6614
      %v6718 = vmul.f32 %v6616, %v6616
      %v6719 = vsel %vm307, %v6687, 0.0
      %v6720 = vsel %vm307, %v6688, 0.0
      %v6721 = vadd.f32 %v6719, %v6720
      %v6722 = vsel %vm307, %v6689, 0.0
      %v6723 = vadd.f32 %v6721, %v6722
      %v6724 = vsel %vm307, %v6690, 0.0
      %v6725 = vadd.f32 %v6723, %v6724
      %v6726 = vsel %vm307, %v6691, 0.0
      %v6727 = vadd.f32 %v6725, %v6726
      %v6728 = vsel %vm307, %v6692, 0.0
      %v6729 = vadd.f32 %v6727, %v6728
      %v6730 = vsel %vm307, %v6693, 0.0
      %v6731 = vadd.f32 %v6729, %v6730
      %v6732 = vsel %vm307, %v6694, 0.0
      %v6733 = vadd.f32 %v6731, %v6732
      %v6734 = vsel %vm307, %v6695, 0.0
      %v6735 = vadd.f32 %v6733, %v6734
      %v6736 = vsel %vm307, %v6696, 0.0
      %v6737 = vadd.f32 %v6735, %v6736
      %v6738 = vsel %vm307, %v6697, 0.0
      %v6739 = vadd.f32 %v6737, %v6738
      %v6740 = vsel %vm307, %v6698, 0.0
      %v6741 = vadd.f32 %v6739, %v6740
      %v6742 = vsel %vm307, %v6699, 0.0
      %v6743 = vadd.f32 %v6741, %v6742
      %v6744 = vsel %vm307, %v6700, 0.0
      %v6745 = vadd.f32 %v6743, %v6744
      %v6746 = vsel %vm307, %v6701, 0.0
      %v6747 = vadd.f32 %v6745, %v6746
      %v6748 = vsel %vm307, %v6702, 0.0
      %v6749 = vadd.f32 %v6747, %v6748
      %v6750 = vsel %vm307, %v6703, 0.0
      %v6751 = vadd.f32 %v6749, %v6750
      %v6752 = vsel %vm307, %v6704, 0.0
      %v6753 = vadd.f32 %v6751, %v6752
      %v6754 = vsel %vm307, %v6705, 0.0
      %v6755 = vadd.f32 %v6753, %v6754
      %v6756 = vsel %vm307, %v6706, 0.0
      %v6757 = vadd.f32 %v6755, %v6756
      %v6758 = vsel %vm307, %v6707, 0.0
      %v6759 = vadd.f32 %v6757, %v6758
      %v6760 = vsel %vm307, %v6708, 0.0
      %v6761 = vadd.f32 %v6759, %v6760
      %v6762 = vsel %vm307, %v6709, 0.0
      %v6763 = vadd.f32 %v6761, %v6762
      %v6764 = vsel %vm307, %v6710, 0.0
      %v6765 = vadd.f32 %v6763, %v6764
      %v6766 = vsel %vm307, %v6711, 0.0
      %v6767 = vadd.f32 %v6765, %v6766
      %v6768 = vsel %vm307, %v6712, 0.0
      %v6769 = vadd.f32 %v6767, %v6768
      %v6770 = vsel %vm307, %v6713, 0.0
      %v6771 = vadd.f32 %v6769, %v6770
      %v6772 = vsel %vm307, %v6714, 0.0
      %v6773 = vadd.f32 %v6771, %v6772
      %v6774 = vsel %vm307, %v6715, 0.0
      %v6775 = vadd.f32 %v6773, %v6774
      %v6776 = vsel %vm307, %v6716, 0.0
      %v6777 = vadd.f32 %v6775, %v6776
      %v6778 = vsel %vm307, %v6717, 0.0
      %v6779 = vadd.f32 %v6777, %v6778
      %v6780 = vsel %vm307, %v6718, 0.0
      %v6781 = vadd.f32 %v6779, %v6780
      %v6782 = vrot.slane %v6781, 4
      %v6783 = vadd.f32 %v6781, %v6782
      %v6784 = vrot.slane %v6783, 2
      %v6785 = vadd.f32 %v6783, %v6784
      %v6786 = vrot.slane %v6785, 1
      %v6787 = vadd.f32 %v6785, %v6786
      %v6789 = vsel %vm307, %v6686, 0
      %6791 = vmatpush.msra.mxu0 0.0
      %6792 = vmatpush.msra.mxu0 0.0
      %6793 = vmatpush.msra.mxu0 0.0
      %6794 = vmatpush.msra.mxu0 0.0
      %6795 = vmatpush.msra.mxu0 0.0
      %6796 = vmatpush.msra.mxu0 0.0
      %6797 = vmatpush.msra.mxu0 0.0
      %6798 = vmatpush.msra.mxu0 0.0
      %6799 = vmatpush.msra.mxu0 0.0
      %6800 = vmatpush.msra.mxu0 0.0
      %6801 = vmatpush.msra.mxu0 0.0
      %6802 = vmatpush.msra.mxu0 0.0
      %6803 = vmatpush.msra.mxu0 %v463
      %6804 = vmatpush.msra.mxu0 %v462
      %6805 = vmatpush.msra.mxu0 %v461
      %6806 = vmatpush.msra.mxu0 %v460
      %6807 = vmatmul.f32.gmra.mxu0 %v6789
      %v6808 = vpop.f32.mrf.mxu0
      %v6809 = vadd.f32 0.0, %v6808
      %6810 = vdwg.mxu0
      %v6812 = vsel %vm307, %v6787, 0
      %6814 = vmatpush.msra.mxu0 0.0
      %6815 = vmatpush.msra.mxu0 0.0
      %6816 = vmatpush.msra.mxu0 0.0
      %6817 = vmatpush.msra.mxu0 0.0
      %6818 = vmatpush.msra.mxu0 0.0
      %6819 = vmatpush.msra.mxu0 0.0
      %6820 = vmatpush.msra.mxu0 0.0
      %6821 = vmatpush.msra.mxu0 0.0
      %6822 = vmatpush.msra.mxu0 0.0
      %6823 = vmatpush.msra.mxu0 0.0
      %6824 = vmatpush.msra.mxu0 0.0
      %6825 = vmatpush.msra.mxu0 0.0
      %6826 = vmatpush.msra.mxu0 %v463
      %6827 = vmatpush.msra.mxu0 %v462
      %6828 = vmatpush.msra.mxu0 %v461
      %6829 = vmatpush.msra.mxu0 %v460
      %6830 = vmatmul.f32.gmra.mxu0 %v6812
      %v6831 = vpop.f32.mrf.mxu0
      %v6832 = vadd.f32 0.0, %v6831
      %6833 = vdwg.mxu0
      %v6834 = vmul.f32 %v6809, 0.001953125
      %v6835 = vmul.f32 %v6832, 0.001953125
      %v6836 = vmul.f32 %v6834, %v6834
      %v6837 = vsub.f32 %v6835, %v6836
      %v6838 = vmax.f32 %v6837, 0.0
      %v6839 = vadd.f32 %v6838, 1e-05
      %v6840 = vrsqrt.pop %v6839
      %v6841 = vmul.f32 %v6840, %v6839
      %v6842 = vmul.f32 %v6841, %v6840
      %v6843 = vmul.f32 0.5, %v6842
      %v6844 = vsub.f32 1.5, %v6843
      %v6845 = vmul.f32 %v6840, %v6844
      %vm6846 = vweird.f32 %v6839
      %vm6847 = vweird.f32 %v6840
      %vm6848 = vmor %vm6846, %vm6847
      %v6849 = vsel %vm6848, %v6840, %v6845
      %v6850 = vperm.slane %v6834, 0
      %v6851 = vsub.f32 %v6539, %v6850
      %v6852 = vsub.f32 %v6541, %v6850
      %v6853 = vsub.f32 %v6544, %v6850
      %v6854 = vsub.f32 %v6546, %v6850
      %v6855 = vsub.f32 %v6549, %v6850
      %v6856 = vsub.f32 %v6551, %v6850
      %v6857 = vsub.f32 %v6554, %v6850
      %v6858 = vsub.f32 %v6556, %v6850
      %v6859 = vsub.f32 %v6559, %v6850
      %v6860 = vsub.f32 %v6561, %v6850
      %v6861 = vsub.f32 %v6564, %v6850
      %v6862 = vsub.f32 %v6566, %v6850
      %v6863 = vsub.f32 %v6569, %v6850
      %v6864 = vsub.f32 %v6571, %v6850
      %v6865 = vsub.f32 %v6574, %v6850
      %v6866 = vsub.f32 %v6576, %v6850
      %v6867 = vsub.f32 %v6579, %v6850
      %v6868 = vsub.f32 %v6581, %v6850
      %v6869 = vsub.f32 %v6584, %v6850
      %v6870 = vsub.f32 %v6586, %v6850
      %v6871 = vsub.f32 %v6589, %v6850
      %v6872 = vsub.f32 %v6591, %v6850
      %v6873 = vsub.f32 %v6594, %v6850
      %v6874 = vsub.f32 %v6596, %v6850
      %v6875 = vsub.f32 %v6599, %v6850
      %v6876 = vsub.f32 %v6601, %v6850
      %v6877 = vsub.f32 %v6604, %v6850
      %v6878 = vsub.f32 %v6606, %v6850
      %v6879 = vsub.f32 %v6609, %v6850
      %v6880 = vsub.f32 %v6611, %v6850
      %v6881 = vsub.f32 %v6614, %v6850
      %v6882 = vsub.f32 %v6616, %v6850
      %v6883 = vperm.slane %v6849, 0
      %v6884 = vmul.f32 %v6851, %v6883
      %v6885 = vmul.f32 %v6852, %v6883
      %v6886 = vmul.f32 %v6853, %v6883
      %v6887 = vmul.f32 %v6854, %v6883
      %v6888 = vmul.f32 %v6855, %v6883
      %v6889 = vmul.f32 %v6856, %v6883
      %v6890 = vmul.f32 %v6857, %v6883
      %v6891 = vmul.f32 %v6858, %v6883
      %v6892 = vmul.f32 %v6859, %v6883
      %v6893 = vmul.f32 %v6860, %v6883
      %v6894 = vmul.f32 %v6861, %v6883
      %v6895 = vmul.f32 %v6862, %v6883
      %v6896 = vmul.f32 %v6863, %v6883
      %v6897 = vmul.f32 %v6864, %v6883
      %v6898 = vmul.f32 %v6865, %v6883
      %v6899 = vmul.f32 %v6866, %v6883
      %v6900 = vmul.f32 %v6867, %v6883
      %v6901 = vmul.f32 %v6868, %v6883
      %v6902 = vmul.f32 %v6869, %v6883
      %v6903 = vmul.f32 %v6870, %v6883
      %v6904 = vmul.f32 %v6871, %v6883
      %v6905 = vmul.f32 %v6872, %v6883
      %v6906 = vmul.f32 %v6873, %v6883
      %v6907 = vmul.f32 %v6874, %v6883
      %v6908 = vmul.f32 %v6875, %v6883
      %v6909 = vmul.f32 %v6876, %v6883
      %v6910 = vmul.f32 %v6877, %v6883
      %v6911 = vmul.f32 %v6878, %v6883
      %v6912 = vmul.f32 %v6879, %v6883
      %v6913 = vmul.f32 %v6880, %v6883
      %v6914 = vmul.f32 %v6881, %v6883
      %v6915 = vmul.f32 %v6882, %v6883
      %s6916 = scalar_lea.vmem %s3, 2
      %v6917 = vld [vmem:[%s6916] sm:$0x1]
      %v6919 = vperm.slane %v6917, 0
      %v6921 = vmul.f32 %v6884, %v6919
      %v6922 = vmul.f32 %v6885, %v6919
      %v6923 = vmul.f32 %v6886, %v6919
      %v6924 = vmul.f32 %v6887, %v6919
      %v6925 = vmul.f32 %v6888, %v6919
      %v6926 = vmul.f32 %v6889, %v6919
      %v6927 = vmul.f32 %v6890, %v6919
      %v6928 = vmul.f32 %v6891, %v6919
      %v6929 = vmul.f32 %v6892, %v6919
      %v6930 = vmul.f32 %v6893, %v6919
      %v6931 = vmul.f32 %v6894, %v6919
      %v6932 = vmul.f32 %v6895, %v6919
      %v6933 = vmul.f32 %v6896, %v6919
      %v6934 = vmul.f32 %v6897, %v6919
      %v6935 = vmul.f32 %v6898, %v6919
      %v6936 = vmul.f32 %v6899, %v6919
      %v6937 = vmul.f32 %v6900, %v6919
      %v6938 = vmul.f32 %v6901, %v6919
      %v6939 = vmul.f32 %v6902, %v6919
      %v6940 = vmul.f32 %v6903, %v6919
      %v6941 = vmul.f32 %v6904, %v6919
      %v6942 = vmul.f32 %v6905, %v6919
      %v6943 = vmul.f32 %v6906, %v6919
      %v6944 = vmul.f32 %v6907, %v6919
      %v6945 = vmul.f32 %v6908, %v6919
      %v6946 = vmul.f32 %v6909, %v6919
      %v6947 = vmul.f32 %v6910, %v6919
      %v6948 = vmul.f32 %v6911, %v6919
      %v6949 = vmul.f32 %v6912, %v6919
      %v6950 = vmul.f32 %v6913, %v6919
      %v6951 = vmul.f32 %v6914, %v6919
      %v6952 = vmul.f32 %v6915, %v6919
      %s6953 = scalar_lea.vmem %s4, 2
      %v6954 = vld [vmem:[%s6953] sm:$0x1]
      %v6956 = vperm.slane %v6954, 0
      %v6958 = vadd.f32 %v6921, %v6956
      %v6959 = vadd.f32 %v6922, %v6956
      %v6960 = vadd.f32 %v6923, %v6956
      %v6961 = vadd.f32 %v6924, %v6956
      %v6962 = vadd.f32 %v6925, %v6956
      %v6963 = vadd.f32 %v6926, %v6956
      %v6964 = vadd.f32 %v6927, %v6956
      %v6965 = vadd.f32 %v6928, %v6956
      %v6966 = vadd.f32 %v6929, %v6956
      %v6967 = vadd.f32 %v6930, %v6956
      %v6968 = vadd.f32 %v6931, %v6956
      %v6969 = vadd.f32 %v6932, %v6956
      %v6970 = vadd.f32 %v6933, %v6956
      %v6971 = vadd.f32 %v6934, %v6956
      %v6972 = vadd.f32 %v6935, %v6956
      %v6973 = vadd.f32 %v6936, %v6956
      %v6974 = vadd.f32 %v6937, %v6956
      %v6975 = vadd.f32 %v6938, %v6956
      %v6976 = vadd.f32 %v6939, %v6956
      %v6977 = vadd.f32 %v6940, %v6956
      %v6978 = vadd.f32 %v6941, %v6956
      %v6979 = vadd.f32 %v6942, %v6956
      %v6980 = vadd.f32 %v6943, %v6956
      %v6981 = vadd.f32 %v6944, %v6956
      %v6982 = vadd.f32 %v6945, %v6956
      %v6983 = vadd.f32 %v6946, %v6956
      %v6984 = vadd.f32 %v6947, %v6956
      %v6985 = vadd.f32 %v6948, %v6956
      %v6986 = vadd.f32 %v6949, %v6956
      %v6987 = vadd.f32 %v6950, %v6956
      %v6988 = vadd.f32 %v6951, %v6956
      %v6989 = vadd.f32 %v6952, %v6956
      %v6990 = vmax.f32 %v6958, 0.0
      %v6991 = vmax.f32 %v6959, 0.0
      %v6992 = vmax.f32 %v6960, 0.0
      %v6993 = vmax.f32 %v6961, 0.0
      %v6994 = vmax.f32 %v6962, 0.0
      %v6995 = vmax.f32 %v6963, 0.0
      %v6996 = vmax.f32 %v6964, 0.0
      %v6997 = vmax.f32 %v6965, 0.0
      %v6998 = vmax.f32 %v6966, 0.0
      %v6999 = vmax.f32 %v6967, 0.0
      %v7000 = vmax.f32 %v6968, 0.0
      %v7001 = vmax.f32 %v6969, 0.0
      %v7002 = vmax.f32 %v6970, 0.0
      %v7003 = vmax.f32 %v6971, 0.0
      %v7004 = vmax.f32 %v6972, 0.0
      %v7005 = vmax.f32 %v6973, 0.0
      %v7006 = vmax.f32 %v6974, 0.0
      %v7007 = vmax.f32 %v6975, 0.0
      %v7008 = vmax.f32 %v6976, 0.0
      %v7009 = vmax.f32 %v6977, 0.0
      %v7010 = vmax.f32 %v6978, 0.0
      %v7011 = vmax.f32 %v6979, 0.0
      %v7012 = vmax.f32 %v6980, 0.0
      %v7013 = vmax.f32 %v6981, 0.0
      %v7014 = vmax.f32 %v6982, 0.0
      %v7015 = vmax.f32 %v6983, 0.0
      %v7016 = vmax.f32 %v6984, 0.0
      %v7017 = vmax.f32 %v6985, 0.0
      %v7018 = vmax.f32 %v6986, 0.0
      %v7019 = vmax.f32 %v6987, 0.0
      %v7020 = vmax.f32 %v6988, 0.0
      %v7021 = vmax.f32 %v6989, 0.0
      %7022 = vst.msk [vmem:[%s427 + $0x1] sm:$0xff] %vm307, %v6990
      %7023 = vst.msk [vmem:[%s427 + $0x9] sm:$0xff] %vm307, %v6991
      %7024 = vst.msk [vmem:[%s427 + $0x19] sm:$0xff] %vm307, %v6992
      %7025 = vst.msk [vmem:[%s427 + $0x21] sm:$0xff] %vm307, %v6993
      %7026 = vst.msk [vmem:[%s427 + $0x31] sm:$0xff] %vm307, %v6994
      %7027 = vst.msk [vmem:[%s427 + $0x39] sm:$0xff] %vm307, %v6995
      %7028 = vst.msk [vmem:[%s427 + $0x49] sm:$0xff] %vm307, %v6996
      %7029 = vst.msk [vmem:[%s427 + $0x51] sm:$0xff] %vm307, %v6997
      %7030 = vst.msk [vmem:[%s427 + $0x61] sm:$0xff] %vm307, %v6998
      %7031 = vst.msk [vmem:[%s427 + $0x69] sm:$0xff] %vm307, %v6999
      %7032 = vst.msk [vmem:[%s427 + $0x79] sm:$0xff] %vm307, %v7000
      %7033 = vst.msk [vmem:[%s427 + $0x81] sm:$0xff] %vm307, %v7001
      %7034 = vst.msk [vmem:[%s427 + $0x91] sm:$0xff] %vm307, %v7002
      %7035 = vst.msk [vmem:[%s427 + $0x99] sm:$0xff] %vm307, %v7003
      %7036 = vst.msk [vmem:[%s427 + $0xa9] sm:$0xff] %vm307, %v7004
      %7037 = vst.msk [vmem:[%s427 + $0xb1] sm:$0xff] %vm307, %v7005
      %7038 = vst.msk [vmem:[%s427 + $0xc1] sm:$0xff] %vm307, %v7006
      %7039 = vst.msk [vmem:[%s427 + $0xc9] sm:$0xff] %vm307, %v7007
      %7040 = vst.msk [vmem:[%s427 + $0xd9] sm:$0xff] %vm307, %v7008
      %7041 = vst.msk [vmem:[%s427 + $0xe1] sm:$0xff] %vm307, %v7009
      %7042 = vst.msk [vmem:[%s427 + $0xf1] sm:$0xff] %vm307, %v7010
      %7043 = vst.msk [vmem:[%s427 + $0xf9] sm:$0xff] %vm307, %v7011
      %7044 = vst.msk [vmem:[%s427 + $0x109] sm:$0xff] %vm307, %v7012
      %7045 = vst.msk [vmem:[%s427 + $0x111] sm:$0xff] %vm307, %v7013
      %7046 = vst.msk [vmem:[%s427 + $0x121] sm:$0xff] %vm307, %v7014
      %7047 = vst.msk [vmem:[%s427 + $0x129] sm:$0xff] %vm307, %v7015
      %7048 = vst.msk [vmem:[%s427 + $0x139] sm:$0xff] %vm307, %v7016
      %7049 = vst.msk [vmem:[%s427 + $0x141] sm:$0xff] %vm307, %v7017
      %7050 = vst.msk [vmem:[%s427 + $0x151] sm:$0xff] %vm307, %v7018
      %7051 = vst.msk [vmem:[%s427 + $0x159] sm:$0xff] %vm307, %v7019
      %7052 = vst.msk [vmem:[%s427 + $0x169] sm:$0xff] %vm307, %v7020
      %7053 = vst.msk [vmem:[%s427 + $0x171] sm:$0xff] %vm307, %v7021
      %v7054 = vld [vmem:[#allocation2] sm:$0xff]
      %v7055 = vld [vmem:[#allocation2 + $0x8] sm:$0xff]
      %v7056 = vld [vmem:[#allocation2 + $0x18] sm:$0xff]
      %v7057 = vld [vmem:[#allocation2 + $0x20] sm:$0xff]
      %v7058 = vld [vmem:[#allocation2 + $0x30] sm:$0xff]
      %v7059 = vld [vmem:[#allocation2 + $0x38] sm:$0xff]
      %v7060 = vld [vmem:[#allocation2 + $0x48] sm:$0xff]
      %v7061 = vld [vmem:[#allocation2 + $0x50] sm:$0xff]
      %v7062 = vld [vmem:[#allocation2 + $0x60] sm:$0xff]
      %v7063 = vld [vmem:[#allocation2 + $0x68] sm:$0xff]
      %v7064 = vld [vmem:[#allocation2 + $0x78] sm:$0xff]
      %v7065 = vld [vmem:[#allocation2 + $0x80] sm:$0xff]
      %v7066 = vld [vmem:[#allocation2 + $0x90] sm:$0xff]
      %v7067 = vld [vmem:[#allocation2 + $0x98] sm:$0xff]
      %v7068 = vld [vmem:[#allocation2 + $0xa8] sm:$0xff]
      %v7069 = vld [vmem:[#allocation2 + $0xb0] sm:$0xff]
      %v7070 = vld [vmem:[#allocation2 + $0xc0] sm:$0xff]
      %v7071 = vld [vmem:[#allocation2 + $0xc8] sm:$0xff]
      %v7072 = vld [vmem:[#allocation2 + $0xd8] sm:$0xff]
      %v7073 = vld [vmem:[#allocation2 + $0xe0] sm:$0xff]
      %v7074 = vld [vmem:[#allocation2 + $0xf0] sm:$0xff]
      %v7075 = vld [vmem:[#allocation2 + $0xf8] sm:$0xff]
      %v7076 = vld [vmem:[#allocation2 + $0x108] sm:$0xff]
      %v7077 = vld [vmem:[#allocation2 + $0x110] sm:$0xff]
      %v7078 = vld [vmem:[#allocation2 + $0x120] sm:$0xff]
      %v7079 = vld [vmem:[#allocation2 + $0x128] sm:$0xff]
      %v7080 = vld [vmem:[#allocation2 + $0x138] sm:$0xff]
      %v7081 = vld [vmem:[#allocation2 + $0x140] sm:$0xff]
      %v7082 = vld [vmem:[#allocation2 + $0x150] sm:$0xff]
      %v7083 = vld [vmem:[#allocation2 + $0x158] sm:$0xff]
      %v7084 = vld [vmem:[#allocation2 + $0x168] sm:$0xff]
      %v7085 = vld [vmem:[#allocation2 + $0x170] sm:$0xff]
      %v7086 = vld [vmem:[#allocation2 + $0x1] sm:$0xff]
      %v7087 = vld [vmem:[#allocation2 + $0x9] sm:$0xff]
      %v7088 = vld [vmem:[#allocation2 + $0x19] sm:$0xff]
      %v7089 = vld [vmem:[#allocation2 + $0x21] sm:$0xff]
      %v7090 = vld [vmem:[#allocation2 + $0x31] sm:$0xff]
      %v7091 = vld [vmem:[#allocation2 + $0x39] sm:$0xff]
      %v7092 = vld [vmem:[#allocation2 + $0x49] sm:$0xff]
      %v7093 = vld [vmem:[#allocation2 + $0x51] sm:$0xff]
      %v7094 = vld [vmem:[#allocation2 + $0x61] sm:$0xff]
      %v7095 = vld [vmem:[#allocation2 + $0x69] sm:$0xff]
      %v7096 = vld [vmem:[#allocation2 + $0x79] sm:$0xff]
      %v7097 = vld [vmem:[#allocation2 + $0x81] sm:$0xff]
      %v7098 = vld [vmem:[#allocation2 + $0x91] sm:$0xff]
      %v7099 = vld [vmem:[#allocation2 + $0x99] sm:$0xff]
      %v7100 = vld [vmem:[#allocation2 + $0xa9] sm:$0xff]
      %v7101 = vld [vmem:[#allocation2 + $0xb1] sm:$0xff]
      %v7102 = vld [vmem:[#allocation2 + $0xc1] sm:$0xff]
      %v7103 = vld [vmem:[#allocation2 + $0xc9] sm:$0xff]
      %v7104 = vld [vmem:[#allocation2 + $0xd9] sm:$0xff]
      %v7105 = vld [vmem:[#allocation2 + $0xe1] sm:$0xff]
      %v7106 = vld [vmem:[#allocation2 + $0xf1] sm:$0xff]
      %v7107 = vld [vmem:[#allocation2 + $0xf9] sm:$0xff]
      %v7108 = vld [vmem:[#allocation2 + $0x109] sm:$0xff]
      %v7109 = vld [vmem:[#allocation2 + $0x111] sm:$0xff]
      %v7110 = vld [vmem:[#allocation2 + $0x121] sm:$0xff]
      %v7111 = vld [vmem:[#allocation2 + $0x129] sm:$0xff]
      %v7112 = vld [vmem:[#allocation2 + $0x139] sm:$0xff]
      %v7113 = vld [vmem:[#allocation2 + $0x141] sm:$0xff]
      %v7114 = vld [vmem:[#allocation2 + $0x151] sm:$0xff]
      %v7115 = vld [vmem:[#allocation2 + $0x159] sm:$0xff]
      %v7116 = vld [vmem:[#allocation2 + $0x169] sm:$0xff]
      %v7117 = vld [vmem:[#allocation2 + $0x171] sm:$0xff]
      %v7118 = vld [vmem:[#allocation2 + $0x2] sm:$0xff]
      %v7119 = vld [vmem:[#allocation2 + $0xa] sm:$0xff]
      %v7120 = vld [vmem:[#allocation2 + $0x1a] sm:$0xff]
      %v7121 = vld [vmem:[#allocation2 + $0x22] sm:$0xff]
      %v7122 = vld [vmem:[#allocation2 + $0x32] sm:$0xff]
      %v7123 = vld [vmem:[#allocation2 + $0x3a] sm:$0xff]
      %v7124 = vld [vmem:[#allocation2 + $0x4a] sm:$0xff]
      %v7125 = vld [vmem:[#allocation2 + $0x52] sm:$0xff]
      %v7126 = vld [vmem:[#allocation2 + $0x62] sm:$0xff]
      %v7127 = vld [vmem:[#allocation2 + $0x6a] sm:$0xff]
      %v7128 = vld [vmem:[#allocation2 + $0x7a] sm:$0xff]
      %v7129 = vld [vmem:[#allocation2 + $0x82] sm:$0xff]
      %v7130 = vld [vmem:[#allocation2 + $0x92] sm:$0xff]
      %v7131 = vld [vmem:[#allocation2 + $0x9a] sm:$0xff]
      %v7132 = vld [vmem:[#allocation2 + $0xaa] sm:$0xff]
      %v7133 = vld [vmem:[#allocation2 + $0xb2] sm:$0xff]
      %v7134 = vld [vmem:[#allocation2 + $0xc2] sm:$0xff]
      %v7135 = vld [vmem:[#allocation2 + $0xca] sm:$0xff]
      %v7136 = vld [vmem:[#allocation2 + $0xda] sm:$0xff]
      %v7137 = vld [vmem:[#allocation2 + $0xe2] sm:$0xff]
      %v7138 = vld [vmem:[#allocation2 + $0xf2] sm:$0xff]
      %v7139 = vld [vmem:[#allocation2 + $0xfa] sm:$0xff]
      %v7140 = vld [vmem:[#allocation2 + $0x10a] sm:$0xff]
      %v7141 = vld [vmem:[#allocation2 + $0x112] sm:$0xff]
      %v7142 = vld [vmem:[#allocation2 + $0x122] sm:$0xff]
      %v7143 = vld [vmem:[#allocation2 + $0x12a] sm:$0xff]
      %v7144 = vld [vmem:[#allocation2 + $0x13a] sm:$0xff]
      %v7145 = vld [vmem:[#allocation2 + $0x142] sm:$0xff]
      %v7146 = vld [vmem:[#allocation2 + $0x152] sm:$0xff]
      %v7147 = vld [vmem:[#allocation2 + $0x15a] sm:$0xff]
      %v7148 = vld [vmem:[#allocation2 + $0x16a] sm:$0xff]
      %v7149 = vld [vmem:[#allocation2 + $0x172] sm:$0xff]
      %v7150 = vld [vmem:[%s427] sm:$0xff]
      %v7151 = vld [vmem:[%s427 + $0x8] sm:$0xff]
      %v7152 = vld [vmem:[%s427 + $0x18] sm:$0xff]
      %v7153 = vld [vmem:[%s427 + $0x20] sm:$0xff]
      %v7154 = vld [vmem:[%s427 + $0x30] sm:$0xff]
      %v7155 = vld [vmem:[%s427 + $0x38] sm:$0xff]
      %v7156 = vld [vmem:[%s427 + $0x48] sm:$0xff]
      %v7157 = vld [vmem:[%s427 + $0x50] sm:$0xff]
      %v7158 = vld [vmem:[%s427 + $0x60] sm:$0xff]
      %v7159 = vld [vmem:[%s427 + $0x68] sm:$0xff]
      %v7160 = vld [vmem:[%s427 + $0x78] sm:$0xff]
      %v7161 = vld [vmem:[%s427 + $0x80] sm:$0xff]
      %v7162 = vld [vmem:[%s427 + $0x90] sm:$0xff]
      %v7163 = vld [vmem:[%s427 + $0x98] sm:$0xff]
      %v7164 = vld [vmem:[%s427 + $0xa8] sm:$0xff]
      %v7165 = vld [vmem:[%s427 + $0xb0] sm:$0xff]
      %v7166 = vld [vmem:[%s427 + $0xc0] sm:$0xff]
      %v7167 = vld [vmem:[%s427 + $0xc8] sm:$0xff]
      %v7168 = vld [vmem:[%s427 + $0xd8] sm:$0xff]
      %v7169 = vld [vmem:[%s427 + $0xe0] sm:$0xff]
      %v7170 = vld [vmem:[%s427 + $0xf0] sm:$0xff]
      %v7171 = vld [vmem:[%s427 + $0xf8] sm:$0xff]
      %v7172 = vld [vmem:[%s427 + $0x108] sm:$0xff]
      %v7173 = vld [vmem:[%s427 + $0x110] sm:$0xff]
      %v7174 = vld [vmem:[%s427 + $0x120] sm:$0xff]
      %v7175 = vld [vmem:[%s427 + $0x128] sm:$0xff]
      %v7176 = vld [vmem:[%s427 + $0x138] sm:$0xff]
      %v7177 = vld [vmem:[%s427 + $0x140] sm:$0xff]
      %v7178 = vld [vmem:[%s427 + $0x150] sm:$0xff]
      %v7179 = vld [vmem:[%s427 + $0x158] sm:$0xff]
      %v7180 = vld [vmem:[%s427 + $0x168] sm:$0xff]
      %v7181 = vld [vmem:[%s427 + $0x170] sm:$0xff]
      %v7182 = vld [vmem:[%s427 + $0x1] sm:$0xff]
      %v7183 = vld [vmem:[%s427 + $0x9] sm:$0xff]
      %v7184 = vld [vmem:[%s427 + $0x19] sm:$0xff]
      %v7185 = vld [vmem:[%s427 + $0x21] sm:$0xff]
      %v7186 = vld [vmem:[%s427 + $0x31] sm:$0xff]
      %v7187 = vld [vmem:[%s427 + $0x39] sm:$0xff]
      %v7188 = vld [vmem:[%s427 + $0x49] sm:$0xff]
      %v7189 = vld [vmem:[%s427 + $0x51] sm:$0xff]
      %v7190 = vld [vmem:[%s427 + $0x61] sm:$0xff]
      %v7191 = vld [vmem:[%s427 + $0x69] sm:$0xff]
      %v7192 = vld [vmem:[%s427 + $0x79] sm:$0xff]
      %v7193 = vld [vmem:[%s427 + $0x81] sm:$0xff]
      %v7194 = vld [vmem:[%s427 + $0x91] sm:$0xff]
      %v7195 = vld [vmem:[%s427 + $0x99] sm:$0xff]
      %v7196 = vld [vmem:[%s427 + $0xa9] sm:$0xff]
      %v7197 = vld [vmem:[%s427 + $0xb1] sm:$0xff]
      %v7198 = vld [vmem:[%s427 + $0xc1] sm:$0xff]
      %v7199 = vld [vmem:[%s427 + $0xc9] sm:$0xff]
      %v7200 = vld [vmem:[%s427 + $0xd9] sm:$0xff]
      %v7201 = vld [vmem:[%s427 + $0xe1] sm:$0xff]
      %v7202 = vld [vmem:[%s427 + $0xf1] sm:$0xff]
      %v7203 = vld [vmem:[%s427 + $0xf9] sm:$0xff]
      %v7204 = vld [vmem:[%s427 + $0x109] sm:$0xff]
      %v7205 = vld [vmem:[%s427 + $0x111] sm:$0xff]
      %v7206 = vld [vmem:[%s427 + $0x121] sm:$0xff]
      %v7207 = vld [vmem:[%s427 + $0x129] sm:$0xff]
      %v7208 = vld [vmem:[%s427 + $0x139] sm:$0xff]
      %v7209 = vld [vmem:[%s427 + $0x141] sm:$0xff]
      %v7210 = vld [vmem:[%s427 + $0x151] sm:$0xff]
      %v7211 = vld [vmem:[%s427 + $0x159] sm:$0xff]
      %v7212 = vld [vmem:[%s427 + $0x169] sm:$0xff]
      %v7213 = vld [vmem:[%s427 + $0x171] sm:$0xff]
      %v7214 = vld [vmem:[%s427 + $0x2] sm:$0xff]
      %v7215 = vld [vmem:[%s427 + $0xa] sm:$0xff]
      %v7216 = vld [vmem:[%s427 + $0x1a] sm:$0xff]
      %v7217 = vld [vmem:[%s427 + $0x22] sm:$0xff]
      %v7218 = vld [vmem:[%s427 + $0x32] sm:$0xff]
      %v7219 = vld [vmem:[%s427 + $0x3a] sm:$0xff]
      %v7220 = vld [vmem:[%s427 + $0x4a] sm:$0xff]
      %v7221 = vld [vmem:[%s427 + $0x52] sm:$0xff]
      %v7222 = vld [vmem:[%s427 + $0x62] sm:$0xff]
      %v7223 = vld [vmem:[%s427 + $0x6a] sm:$0xff]
      %v7224 = vld [vmem:[%s427 + $0x7a] sm:$0xff]
      %v7225 = vld [vmem:[%s427 + $0x82] sm:$0xff]
      %v7226 = vld [vmem:[%s427 + $0x92] sm:$0xff]
      %v7227 = vld [vmem:[%s427 + $0x9a] sm:$0xff]
      %v7228 = vld [vmem:[%s427 + $0xaa] sm:$0xff]
      %v7229 = vld [vmem:[%s427 + $0xb2] sm:$0xff]
      %v7230 = vld [vmem:[%s427 + $0xc2] sm:$0xff]
      %v7231 = vld [vmem:[%s427 + $0xca] sm:$0xff]
      %v7232 = vld [vmem:[%s427 + $0xda] sm:$0xff]
      %v7233 = vld [vmem:[%s427 + $0xe2] sm:$0xff]
      %v7234 = vld [vmem:[%s427 + $0xf2] sm:$0xff]
      %v7235 = vld [vmem:[%s427 + $0xfa] sm:$0xff]
      %v7236 = vld [vmem:[%s427 + $0x10a] sm:$0xff]
      %v7237 = vld [vmem:[%s427 + $0x112] sm:$0xff]
      %v7238 = vld [vmem:[%s427 + $0x122] sm:$0xff]
      %v7239 = vld [vmem:[%s427 + $0x12a] sm:$0xff]
      %v7240 = vld [vmem:[%s427 + $0x13a] sm:$0xff]
      %v7241 = vld [vmem:[%s427 + $0x142] sm:$0xff]
      %v7242 = vld [vmem:[%s427 + $0x152] sm:$0xff]
      %v7243 = vld [vmem:[%s427 + $0x15a] sm:$0xff]
      %v7244 = vld [vmem:[%s427 + $0x16a] sm:$0xff]
      %v7245 = vld [vmem:[%s427 + $0x172] sm:$0xff]
      %v7246 = vld [vmem:[%s656] sm:$0xff]
      %v7247 = vld [vmem:[%s656 + $0x8] sm:$0xff]
      %v7248 = vld [vmem:[%s656 + $0x18] sm:$0xff]
      %v7249 = vld [vmem:[%s656 + $0x20] sm:$0xff]
      %v7250 = vld [vmem:[%s656 + $0x30] sm:$0xff]
      %v7251 = vld [vmem:[%s656 + $0x38] sm:$0xff]
      %v7252 = vld [vmem:[%s656 + $0x48] sm:$0xff]
      %v7253 = vld [vmem:[%s656 + $0x50] sm:$0xff]
      %v7254 = vld [vmem:[%s656 + $0x60] sm:$0xff]
      %v7255 = vld [vmem:[%s656 + $0x68] sm:$0xff]
      %v7256 = vld [vmem:[%s656 + $0x78] sm:$0xff]
      %v7257 = vld [vmem:[%s656 + $0x80] sm:$0xff]
      %v7258 = vld [vmem:[%s656 + $0x90] sm:$0xff]
      %v7259 = vld [vmem:[%s656 + $0x98] sm:$0xff]
      %v7260 = vld [vmem:[%s656 + $0xa8] sm:$0xff]
      %v7261 = vld [vmem:[%s656 + $0xb0] sm:$0xff]
      %v7262 = vld [vmem:[%s656 + $0xc0] sm:$0xff]
      %v7263 = vld [vmem:[%s656 + $0xc8] sm:$0xff]
      %v7264 = vld [vmem:[%s656 + $0xd8] sm:$0xff]
      %v7265 = vld [vmem:[%s656 + $0xe0] sm:$0xff]
      %v7266 = vld [vmem:[%s656 + $0xf0] sm:$0xff]
      %v7267 = vld [vmem:[%s656 + $0xf8] sm:$0xff]
      %v7268 = vld [vmem:[%s656 + $0x108] sm:$0xff]
      %v7269 = vld [vmem:[%s656 + $0x110] sm:$0xff]
      %v7270 = vld [vmem:[%s656 + $0x120] sm:$0xff]
      %v7271 = vld [vmem:[%s656 + $0x128] sm:$0xff]
      %v7272 = vld [vmem:[%s656 + $0x138] sm:$0xff]
      %v7273 = vld [vmem:[%s656 + $0x140] sm:$0xff]
      %v7274 = vld [vmem:[%s656 + $0x150] sm:$0xff]
      %v7275 = vld [vmem:[%s656 + $0x158] sm:$0xff]
      %v7276 = vld [vmem:[%s656 + $0x168] sm:$0xff]
      %v7277 = vld [vmem:[%s656 + $0x170] sm:$0xff]
      %v7278 = vld [vmem:[%s656 + $0x1] sm:$0xff]
      %v7279 = vld [vmem:[%s656 + $0x9] sm:$0xff]
      %v7280 = vld [vmem:[%s656 + $0x19] sm:$0xff]
      %v7281 = vld [vmem:[%s656 + $0x21] sm:$0xff]
      %v7282 = vld [vmem:[%s656 + $0x31] sm:$0xff]
      %v7283 = vld [vmem:[%s656 + $0x39] sm:$0xff]
      %v7284 = vld [vmem:[%s656 + $0x49] sm:$0xff]
      %v7285 = vld [vmem:[%s656 + $0x51] sm:$0xff]
      %v7286 = vld [vmem:[%s656 + $0x61] sm:$0xff]
      %v7287 = vld [vmem:[%s656 + $0x69] sm:$0xff]
      %v7288 = vld [vmem:[%s656 + $0x79] sm:$0xff]
      %v7289 = vld [vmem:[%s656 + $0x81] sm:$0xff]
      %v7290 = vld [vmem:[%s656 + $0x91] sm:$0xff]
      %v7291 = vld [vmem:[%s656 + $0x99] sm:$0xff]
      %v7292 = vld [vmem:[%s656 + $0xa9] sm:$0xff]
      %v7293 = vld [vmem:[%s656 + $0xb1] sm:$0xff]
      %v7294 = vld [vmem:[%s656 + $0xc1] sm:$0xff]
      %v7295 = vld [vmem:[%s656 + $0xc9] sm:$0xff]
      %v7296 = vld [vmem:[%s656 + $0xd9] sm:$0xff]
      %v7297 = vld [vmem:[%s656 + $0xe1] sm:$0xff]
      %v7298 = vld [vmem:[%s656 + $0xf1] sm:$0xff]
      %v7299 = vld [vmem:[%s656 + $0xf9] sm:$0xff]
      %v7300 = vld [vmem:[%s656 + $0x109] sm:$0xff]
      %v7301 = vld [vmem:[%s656 + $0x111] sm:$0xff]
      %v7302 = vld [vmem:[%s656 + $0x121] sm:$0xff]
      %v7303 = vld [vmem:[%s656 + $0x129] sm:$0xff]
      %v7304 = vld [vmem:[%s656 + $0x139] sm:$0xff]
      %v7305 = vld [vmem:[%s656 + $0x141] sm:$0xff]
      %v7306 = vld [vmem:[%s656 + $0x151] sm:$0xff]
      %v7307 = vld [vmem:[%s656 + $0x159] sm:$0xff]
      %v7308 = vld [vmem:[%s656 + $0x169] sm:$0xff]
      %v7309 = vld [vmem:[%s656 + $0x171] sm:$0xff]
      %v7310 = vld [vmem:[%s656 + $0x2] sm:$0xff]
      %v7311 = vld [vmem:[%s656 + $0xa] sm:$0xff]
      %v7312 = vld [vmem:[%s656 + $0x1a] sm:$0xff]
      %v7313 = vld [vmem:[%s656 + $0x22] sm:$0xff]
      %v7314 = vld [vmem:[%s656 + $0x32] sm:$0xff]
      %v7315 = vld [vmem:[%s656 + $0x3a] sm:$0xff]
      %v7316 = vld [vmem:[%s656 + $0x4a] sm:$0xff]
      %v7317 = vld [vmem:[%s656 + $0x52] sm:$0xff]
      %v7318 = vld [vmem:[%s656 + $0x62] sm:$0xff]
      %v7319 = vld [vmem:[%s656 + $0x6a] sm:$0xff]
      %v7320 = vld [vmem:[%s656 + $0x7a] sm:$0xff]
      %v7321 = vld [vmem:[%s656 + $0x82] sm:$0xff]
      %v7322 = vld [vmem:[%s656 + $0x92] sm:$0xff]
      %v7323 = vld [vmem:[%s656 + $0x9a] sm:$0xff]
      %v7324 = vld [vmem:[%s656 + $0xaa] sm:$0xff]
      %v7325 = vld [vmem:[%s656 + $0xb2] sm:$0xff]
      %v7326 = vld [vmem:[%s656 + $0xc2] sm:$0xff]
      %v7327 = vld [vmem:[%s656 + $0xca] sm:$0xff]
      %v7328 = vld [vmem:[%s656 + $0xda] sm:$0xff]
      %v7329 = vld [vmem:[%s656 + $0xe2] sm:$0xff]
      %v7330 = vld [vmem:[%s656 + $0xf2] sm:$0xff]
      %v7331 = vld [vmem:[%s656 + $0xfa] sm:$0xff]
      %v7332 = vld [vmem:[%s656 + $0x10a] sm:$0xff]
      %v7333 = vld [vmem:[%s656 + $0x112] sm:$0xff]
      %v7334 = vld [vmem:[%s656 + $0x122] sm:$0xff]
      %v7335 = vld [vmem:[%s656 + $0x12a] sm:$0xff]
      %v7336 = vld [vmem:[%s656 + $0x13a] sm:$0xff]
      %v7337 = vld [vmem:[%s656 + $0x142] sm:$0xff]
      %v7338 = vld [vmem:[%s656 + $0x152] sm:$0xff]
      %v7339 = vld [vmem:[%s656 + $0x15a] sm:$0xff]
      %v7340 = vld [vmem:[%s656 + $0x16a] sm:$0xff]
      %v7341 = vld [vmem:[%s656 + $0x172] sm:$0xff]
      %7374 = vrot.lane.b32.xlu0 %v7086, 32
      %v7375 = vpop.permute.xlu0 %7374
      %7376 = vrot.lane.b32.xlu0 %v7087, 32
      %v7377 = vpop.permute.xlu0 %7376
      %7378 = vrot.lane.b32.xlu0 %v7088, 32
      %v7379 = vpop.permute.xlu0 %7378
      %7380 = vrot.lane.b32.xlu0 %v7089, 32
      %v7381 = vpop.permute.xlu0 %7380
      %7382 = vrot.lane.b32.xlu0 %v7090, 32
      %v7383 = vpop.permute.xlu0 %7382
      %7384 = vrot.lane.b32.xlu0 %v7091, 32
      %v7385 = vpop.permute.xlu0 %7384
      %7386 = vrot.lane.b32.xlu0 %v7092, 32
      %v7387 = vpop.permute.xlu0 %7386
      %7388 = vrot.lane.b32.xlu0 %v7093, 32
      %v7389 = vpop.permute.xlu0 %7388
      %7390 = vrot.lane.b32.xlu0 %v7094, 32
      %v7391 = vpop.permute.xlu0 %7390
      %7392 = vrot.lane.b32.xlu0 %v7095, 32
      %v7393 = vpop.permute.xlu0 %7392
      %7394 = vrot.lane.b32.xlu0 %v7096, 32
      %v7395 = vpop.permute.xlu0 %7394
      %7396 = vrot.lane.b32.xlu0 %v7097, 32
      %v7397 = vpop.permute.xlu0 %7396
      %7398 = vrot.lane.b32.xlu0 %v7098, 32
      %v7399 = vpop.permute.xlu0 %7398
      %7400 = vrot.lane.b32.xlu0 %v7099, 32
      %v7401 = vpop.permute.xlu0 %7400
      %7402 = vrot.lane.b32.xlu0 %v7100, 32
      %v7403 = vpop.permute.xlu0 %7402
      %7404 = vrot.lane.b32.xlu0 %v7101, 32
      %v7405 = vpop.permute.xlu0 %7404
      %7406 = vrot.lane.b32.xlu0 %v7102, 32
      %v7407 = vpop.permute.xlu0 %7406
      %7408 = vrot.lane.b32.xlu0 %v7103, 32
      %v7409 = vpop.permute.xlu0 %7408
      %7410 = vrot.lane.b32.xlu0 %v7104, 32
      %v7411 = vpop.permute.xlu0 %7410
      %7412 = vrot.lane.b32.xlu0 %v7105, 32
      %v7413 = vpop.permute.xlu0 %7412
      %7414 = vrot.lane.b32.xlu0 %v7106, 32
      %v7415 = vpop.permute.xlu0 %7414
      %7416 = vrot.lane.b32.xlu0 %v7107, 32
      %v7417 = vpop.permute.xlu0 %7416
      %7418 = vrot.lane.b32.xlu0 %v7108, 32
      %v7419 = vpop.permute.xlu0 %7418
      %7420 = vrot.lane.b32.xlu0 %v7109, 32
      %v7421 = vpop.permute.xlu0 %7420
      %7422 = vrot.lane.b32.xlu0 %v7110, 32
      %v7423 = vpop.permute.xlu0 %7422
      %7424 = vrot.lane.b32.xlu0 %v7111, 32
      %v7425 = vpop.permute.xlu0 %7424
      %7426 = vrot.lane.b32.xlu0 %v7112, 32
      %v7427 = vpop.permute.xlu0 %7426
      %7428 = vrot.lane.b32.xlu0 %v7113, 32
      %v7429 = vpop.permute.xlu0 %7428
      %7430 = vrot.lane.b32.xlu0 %v7114, 32
      %v7431 = vpop.permute.xlu0 %7430
      %7432 = vrot.lane.b32.xlu0 %v7115, 32
      %v7433 = vpop.permute.xlu0 %7432
      %7434 = vrot.lane.b32.xlu0 %v7116, 32
      %v7435 = vpop.permute.xlu0 %7434
      %7436 = vrot.lane.b32.xlu0 %v7117, 32
      %v7437 = vpop.permute.xlu0 %7436
      %7502 = vrot.lane.b32.xlu0 %v7118, 64
      %v7503 = vpop.permute.xlu0 %7502
      %7504 = vrot.lane.b32.xlu0 %v7119, 64
      %v7505 = vpop.permute.xlu0 %7504
      %7506 = vrot.lane.b32.xlu0 %v7120, 64
      %v7507 = vpop.permute.xlu0 %7506
      %7508 = vrot.lane.b32.xlu0 %v7121, 64
      %v7509 = vpop.permute.xlu0 %7508
      %7510 = vrot.lane.b32.xlu0 %v7122, 64
      %v7511 = vpop.permute.xlu0 %7510
      %7512 = vrot.lane.b32.xlu0 %v7123, 64
      %v7513 = vpop.permute.xlu0 %7512
      %7514 = vrot.lane.b32.xlu0 %v7124, 64
      %v7515 = vpop.permute.xlu0 %7514
      %7516 = vrot.lane.b32.xlu0 %v7125, 64
      %v7517 = vpop.permute.xlu0 %7516
      %7518 = vrot.lane.b32.xlu0 %v7126, 64
      %v7519 = vpop.permute.xlu0 %7518
      %7520 = vrot.lane.b32.xlu0 %v7127, 64
      %v7521 = vpop.permute.xlu0 %7520
      %7522 = vrot.lane.b32.xlu0 %v7128, 64
      %v7523 = vpop.permute.xlu0 %7522
      %7524 = vrot.lane.b32.xlu0 %v7129, 64
      %v7525 = vpop.permute.xlu0 %7524
      %7526 = vrot.lane.b32.xlu0 %v7130, 64
      %v7527 = vpop.permute.xlu0 %7526
      %7528 = vrot.lane.b32.xlu0 %v7131, 64
      %v7529 = vpop.permute.xlu0 %7528
      %7530 = vrot.lane.b32.xlu0 %v7132, 64
      %v7531 = vpop.permute.xlu0 %7530
      %7532 = vrot.lane.b32.xlu0 %v7133, 64
      %v7533 = vpop.permute.xlu0 %7532
      %7534 = vrot.lane.b32.xlu0 %v7134, 64
      %v7535 = vpop.permute.xlu0 %7534
      %7536 = vrot.lane.b32.xlu0 %v7135, 64
      %v7537 = vpop.permute.xlu0 %7536
      %7538 = vrot.lane.b32.xlu0 %v7136, 64
      %v7539 = vpop.permute.xlu0 %7538
      %7540 = vrot.lane.b32.xlu0 %v7137, 64
      %v7541 = vpop.permute.xlu0 %7540
      %7542 = vrot.lane.b32.xlu0 %v7138, 64
      %v7543 = vpop.permute.xlu0 %7542
      %7544 = vrot.lane.b32.xlu0 %v7139, 64
      %v7545 = vpop.permute.xlu0 %7544
      %7546 = vrot.lane.b32.xlu0 %v7140, 64
      %v7547 = vpop.permute.xlu0 %7546
      %7548 = vrot.lane.b32.xlu0 %v7141, 64
      %v7549 = vpop.permute.xlu0 %7548
      %7550 = vrot.lane.b32.xlu0 %v7142, 64
      %v7551 = vpop.permute.xlu0 %7550
      %7552 = vrot.lane.b32.xlu0 %v7143, 64
      %v7553 = vpop.permute.xlu0 %7552
      %7554 = vrot.lane.b32.xlu0 %v7144, 64
      %v7555 = vpop.permute.xlu0 %7554
      %7556 = vrot.lane.b32.xlu0 %v7145, 64
      %v7557 = vpop.permute.xlu0 %7556
      %7558 = vrot.lane.b32.xlu0 %v7146, 64
      %v7559 = vpop.permute.xlu0 %7558
      %7560 = vrot.lane.b32.xlu0 %v7147, 64
      %v7561 = vpop.permute.xlu0 %7560
      %7562 = vrot.lane.b32.xlu0 %v7148, 64
      %v7563 = vpop.permute.xlu0 %7562
      %7564 = vrot.lane.b32.xlu0 %v7149, 64
      %v7565 = vpop.permute.xlu0 %7564
      %7630 = vrot.lane.b32.xlu0 %v7150, 96
      %v7631 = vpop.permute.xlu0 %7630
      %7632 = vrot.lane.b32.xlu0 %v7151, 96
      %v7633 = vpop.permute.xlu0 %7632
      %7634 = vrot.lane.b32.xlu0 %v7152, 96
      %v7635 = vpop.permute.xlu0 %7634
      %7636 = vrot.lane.b32.xlu0 %v7153, 96
      %v7637 = vpop.permute.xlu0 %7636
      %7638 = vrot.lane.b32.xlu0 %v7154, 96
      %v7639 = vpop.permute.xlu0 %7638
      %7640 = vrot.lane.b32.xlu0 %v7155, 96
      %v7641 = vpop.permute.xlu0 %7640
      %7642 = vrot.lane.b32.xlu0 %v7156, 96
      %v7643 = vpop.permute.xlu0 %7642
      %7644 = vrot.lane.b32.xlu0 %v7157, 96
      %v7645 = vpop.permute.xlu0 %7644
      %7646 = vrot.lane.b32.xlu0 %v7158, 96
      %v7647 = vpop.permute.xlu0 %7646
      %7648 = vrot.lane.b32.xlu0 %v7159, 96
      %v7649 = vpop.permute.xlu0 %7648
      %7650 = vrot.lane.b32.xlu0 %v7160, 96
      %v7651 = vpop.permute.xlu0 %7650
      %7652 = vrot.lane.b32.xlu0 %v7161, 96
      %v7653 = vpop.permute.xlu0 %7652
      %7654 = vrot.lane.b32.xlu0 %v7162, 96
      %v7655 = vpop.permute.xlu0 %7654
      %7656 = vrot.lane.b32.xlu0 %v7163, 96
      %v7657 = vpop.permute.xlu0 %7656
      %7658 = vrot.lane.b32.xlu0 %v7164, 96
      %v7659 = vpop.permute.xlu0 %7658
      %7660 = vrot.lane.b32.xlu0 %v7165, 96
      %v7661 = vpop.permute.xlu0 %7660
      %7662 = vrot.lane.b32.xlu0 %v7166, 96
      %v7663 = vpop.permute.xlu0 %7662
      %7664 = vrot.lane.b32.xlu0 %v7167, 96
      %v7665 = vpop.permute.xlu0 %7664
      %7666 = vrot.lane.b32.xlu0 %v7168, 96
      %v7667 = vpop.permute.xlu0 %7666
      %7668 = vrot.lane.b32.xlu0 %v7169, 96
      %v7669 = vpop.permute.xlu0 %7668
      %7670 = vrot.lane.b32.xlu0 %v7170, 96
      %v7671 = vpop.permute.xlu0 %7670
      %7672 = vrot.lane.b32.xlu0 %v7171, 96
      %v7673 = vpop.permute.xlu0 %7672
      %7674 = vrot.lane.b32.xlu0 %v7172, 96
      %v7675 = vpop.permute.xlu0 %7674
      %7676 = vrot.lane.b32.xlu0 %v7173, 96
      %v7677 = vpop.permute.xlu0 %7676
      %7678 = vrot.lane.b32.xlu0 %v7174, 96
      %v7679 = vpop.permute.xlu0 %7678
      %7680 = vrot.lane.b32.xlu0 %v7175, 96
      %v7681 = vpop.permute.xlu0 %7680
      %7682 = vrot.lane.b32.xlu0 %v7176, 96
      %v7683 = vpop.permute.xlu0 %7682
      %7684 = vrot.lane.b32.xlu0 %v7177, 96
      %v7685 = vpop.permute.xlu0 %7684
      %7686 = vrot.lane.b32.xlu0 %v7178, 96
      %v7687 = vpop.permute.xlu0 %7686
      %7688 = vrot.lane.b32.xlu0 %v7179, 96
      %v7689 = vpop.permute.xlu0 %7688
      %7690 = vrot.lane.b32.xlu0 %v7180, 96
      %v7691 = vpop.permute.xlu0 %7690
      %7692 = vrot.lane.b32.xlu0 %v7181, 96
      %v7693 = vpop.permute.xlu0 %7692
      %7758 = vrot.lane.b32.xlu0 %v7214, 32
      %v7759 = vpop.permute.xlu0 %7758
      %7760 = vrot.lane.b32.xlu0 %v7215, 32
      %v7761 = vpop.permute.xlu0 %7760
      %7762 = vrot.lane.b32.xlu0 %v7216, 32
      %v7763 = vpop.permute.xlu0 %7762
      %7764 = vrot.lane.b32.xlu0 %v7217, 32
      %v7765 = vpop.permute.xlu0 %7764
      %7766 = vrot.lane.b32.xlu0 %v7218, 32
      %v7767 = vpop.permute.xlu0 %7766
      %7768 = vrot.lane.b32.xlu0 %v7219, 32
      %v7769 = vpop.permute.xlu0 %7768
      %7770 = vrot.lane.b32.xlu0 %v7220, 32
      %v7771 = vpop.permute.xlu0 %7770
      %7772 = vrot.lane.b32.xlu0 %v7221, 32
      %v7773 = vpop.permute.xlu0 %7772
      %7774 = vrot.lane.b32.xlu0 %v7222, 32
      %v7775 = vpop.permute.xlu0 %7774
      %7776 = vrot.lane.b32.xlu0 %v7223, 32
      %v7777 = vpop.permute.xlu0 %7776
      %7778 = vrot.lane.b32.xlu0 %v7224, 32
      %v7779 = vpop.permute.xlu0 %7778
      %7780 = vrot.lane.b32.xlu0 %v7225, 32
      %v7781 = vpop.permute.xlu0 %7780
      %7782 = vrot.lane.b32.xlu0 %v7226, 32
      %v7783 = vpop.permute.xlu0 %7782
      %7784 = vrot.lane.b32.xlu0 %v7227, 32
      %v7785 = vpop.permute.xlu0 %7784
      %7786 = vrot.lane.b32.xlu0 %v7228, 32
      %v7787 = vpop.permute.xlu0 %7786
      %7788 = vrot.lane.b32.xlu0 %v7229, 32
      %v7789 = vpop.permute.xlu0 %7788
      %7790 = vrot.lane.b32.xlu0 %v7230, 32
      %v7791 = vpop.permute.xlu0 %7790
      %7792 = vrot.lane.b32.xlu0 %v7231, 32
      %v7793 = vpop.permute.xlu0 %7792
      %7794 = vrot.lane.b32.xlu0 %v7232, 32
      %v7795 = vpop.permute.xlu0 %7794
      %7796 = vrot.lane.b32.xlu0 %v7233, 32
      %v7797 = vpop.permute.xlu0 %7796
      %7798 = vrot.lane.b32.xlu0 %v7234, 32
      %v7799 = vpop.permute.xlu0 %7798
      %7800 = vrot.lane.b32.xlu0 %v7235, 32
      %v7801 = vpop.permute.xlu0 %7800
      %7802 = vrot.lane.b32.xlu0 %v7236, 32
      %v7803 = vpop.permute.xlu0 %7802
      %7804 = vrot.lane.b32.xlu0 %v7237, 32
      %v7805 = vpop.permute.xlu0 %7804
      %7806 = vrot.lane.b32.xlu0 %v7238, 32
      %v7807 = vpop.permute.xlu0 %7806
      %7808 = vrot.lane.b32.xlu0 %v7239, 32
      %v7809 = vpop.permute.xlu0 %7808
      %7810 = vrot.lane.b32.xlu0 %v7240, 32
      %v7811 = vpop.permute.xlu0 %7810
      %7812 = vrot.lane.b32.xlu0 %v7241, 32
      %v7813 = vpop.permute.xlu0 %7812
      %7814 = vrot.lane.b32.xlu0 %v7242, 32
      %v7815 = vpop.permute.xlu0 %7814
      %7816 = vrot.lane.b32.xlu0 %v7243, 32
      %v7817 = vpop.permute.xlu0 %7816
      %7818 = vrot.lane.b32.xlu0 %v7244, 32
      %v7819 = vpop.permute.xlu0 %7818
      %7820 = vrot.lane.b32.xlu0 %v7245, 32
      %v7821 = vpop.permute.xlu0 %7820
      %7886 = vrot.lane.b32.xlu0 %v7246, 64
      %v7887 = vpop.permute.xlu0 %7886
      %7888 = vrot.lane.b32.xlu0 %v7247, 64
      %v7889 = vpop.permute.xlu0 %7888
      %7890 = vrot.lane.b32.xlu0 %v7248, 64
      %v7891 = vpop.permute.xlu0 %7890
      %7892 = vrot.lane.b32.xlu0 %v7249, 64
      %v7893 = vpop.permute.xlu0 %7892
      %7894 = vrot.lane.b32.xlu0 %v7250, 64
      %v7895 = vpop.permute.xlu0 %7894
      %7896 = vrot.lane.b32.xlu0 %v7251, 64
      %v7897 = vpop.permute.xlu0 %7896
      %7898 = vrot.lane.b32.xlu0 %v7252, 64
      %v7899 = vpop.permute.xlu0 %7898
      %7900 = vrot.lane.b32.xlu0 %v7253, 64
      %v7901 = vpop.permute.xlu0 %7900
      %7902 = vrot.lane.b32.xlu0 %v7254, 64
      %v7903 = vpop.permute.xlu0 %7902
      %7904 = vrot.lane.b32.xlu0 %v7255, 64
      %v7905 = vpop.permute.xlu0 %7904
      %7906 = vrot.lane.b32.xlu0 %v7256, 64
      %v7907 = vpop.permute.xlu0 %7906
      %7908 = vrot.lane.b32.xlu0 %v7257, 64
      %v7909 = vpop.permute.xlu0 %7908
      %7910 = vrot.lane.b32.xlu0 %v7258, 64
      %v7911 = vpop.permute.xlu0 %7910
      %7912 = vrot.lane.b32.xlu0 %v7259, 64
      %v7913 = vpop.permute.xlu0 %7912
      %7914 = vrot.lane.b32.xlu0 %v7260, 64
      %v7915 = vpop.permute.xlu0 %7914
      %7916 = vrot.lane.b32.xlu0 %v7261, 64
      %v7917 = vpop.permute.xlu0 %7916
      %7918 = vrot.lane.b32.xlu0 %v7262, 64
      %v7919 = vpop.permute.xlu0 %7918
      %7920 = vrot.lane.b32.xlu0 %v7263, 64
      %v7921 = vpop.permute.xlu0 %7920
      %7922 = vrot.lane.b32.xlu0 %v7264, 64
      %v7923 = vpop.permute.xlu0 %7922
      %7924 = vrot.lane.b32.xlu0 %v7265, 64
      %v7925 = vpop.permute.xlu0 %7924
      %7926 = vrot.lane.b32.xlu0 %v7266, 64
      %v7927 = vpop.permute.xlu0 %7926
      %7928 = vrot.lane.b32.xlu0 %v7267, 64
      %v7929 = vpop.permute.xlu0 %7928
      %7930 = vrot.lane.b32.xlu0 %v7268, 64
      %v7931 = vpop.permute.xlu0 %7930
      %7932 = vrot.lane.b32.xlu0 %v7269, 64
      %v7933 = vpop.permute.xlu0 %7932
      %7934 = vrot.lane.b32.xlu0 %v7270, 64
      %v7935 = vpop.permute.xlu0 %7934
      %7936 = vrot.lane.b32.xlu0 %v7271, 64
      %v7937 = vpop.permute.xlu0 %7936
      %7938 = vrot.lane.b32.xlu0 %v7272, 64
      %v7939 = vpop.permute.xlu0 %7938
      %7940 = vrot.lane.b32.xlu0 %v7273, 64
      %v7941 = vpop.permute.xlu0 %7940
      %7942 = vrot.lane.b32.xlu0 %v7274, 64
      %v7943 = vpop.permute.xlu0 %7942
      %7944 = vrot.lane.b32.xlu0 %v7275, 64
      %v7945 = vpop.permute.xlu0 %7944
      %7946 = vrot.lane.b32.xlu0 %v7276, 64
      %v7947 = vpop.permute.xlu0 %7946
      %7948 = vrot.lane.b32.xlu0 %v7277, 64
      %v7949 = vpop.permute.xlu0 %7948
      %8014 = vrot.lane.b32.xlu0 %v7278, 96
      %v8015 = vpop.permute.xlu0 %8014
      %8016 = vrot.lane.b32.xlu0 %v7279, 96
      %v8017 = vpop.permute.xlu0 %8016
      %8018 = vrot.lane.b32.xlu0 %v7280, 96
      %v8019 = vpop.permute.xlu0 %8018
      %8020 = vrot.lane.b32.xlu0 %v7281, 96
      %v8021 = vpop.permute.xlu0 %8020
      %8022 = vrot.lane.b32.xlu0 %v7282, 96
      %v8023 = vpop.permute.xlu0 %8022
      %8024 = vrot.lane.b32.xlu0 %v7283, 96
      %v8025 = vpop.permute.xlu0 %8024
      %8026 = vrot.lane.b32.xlu0 %v7284, 96
      %v8027 = vpop.permute.xlu0 %8026
      %8028 = vrot.lane.b32.xlu0 %v7285, 96
      %v8029 = vpop.permute.xlu0 %8028
      %8030 = vrot.lane.b32.xlu0 %v7286, 96
      %v8031 = vpop.permute.xlu0 %8030
      %8032 = vrot.lane.b32.xlu0 %v7287, 96
      %v8033 = vpop.permute.xlu0 %8032
      %8034 = vrot.lane.b32.xlu0 %v7288, 96
      %v8035 = vpop.permute.xlu0 %8034
      %8036 = vrot.lane.b32.xlu0 %v7289, 96
      %v8037 = vpop.permute.xlu0 %8036
      %8038 = vrot.lane.b32.xlu0 %v7290, 96
      %v8039 = vpop.permute.xlu0 %8038
      %8040 = vrot.lane.b32.xlu0 %v7291, 96
      %v8041 = vpop.permute.xlu0 %8040
      %8042 = vrot.lane.b32.xlu0 %v7292, 96
      %v8043 = vpop.permute.xlu0 %8042
      %8044 = vrot.lane.b32.xlu0 %v7293, 96
      %v8045 = vpop.permute.xlu0 %8044
      %8046 = vrot.lane.b32.xlu0 %v7294, 96
      %v8047 = vpop.permute.xlu0 %8046
      %8048 = vrot.lane.b32.xlu0 %v7295, 96
      %v8049 = vpop.permute.xlu0 %8048
      %8050 = vrot.lane.b32.xlu0 %v7296, 96
      %v8051 = vpop.permute.xlu0 %8050
      %8052 = vrot.lane.b32.xlu0 %v7297, 96
      %v8053 = vpop.permute.xlu0 %8052
      %8054 = vrot.lane.b32.xlu0 %v7298, 96
      %v8055 = vpop.permute.xlu0 %8054
      %8056 = vrot.lane.b32.xlu0 %v7299, 96
      %v8057 = vpop.permute.xlu0 %8056
      %8058 = vrot.lane.b32.xlu0 %v7300, 96
      %v8059 = vpop.permute.xlu0 %8058
      %8060 = vrot.lane.b32.xlu0 %v7301, 96
      %v8061 = vpop.permute.xlu0 %8060
      %8062 = vrot.lane.b32.xlu0 %v7302, 96
      %v8063 = vpop.permute.xlu0 %8062
      %8064 = vrot.lane.b32.xlu0 %v7303, 96
      %v8065 = vpop.permute.xlu0 %8064
      %8066 = vrot.lane.b32.xlu0 %v7304, 96
      %v8067 = vpop.permute.xlu0 %8066
      %8068 = vrot.lane.b32.xlu0 %v7305, 96
      %v8069 = vpop.permute.xlu0 %8068
      %8070 = vrot.lane.b32.xlu0 %v7306, 96
      %v8071 = vpop.permute.xlu0 %8070
      %8072 = vrot.lane.b32.xlu0 %v7307, 96
      %v8073 = vpop.permute.xlu0 %8072
      %8074 = vrot.lane.b32.xlu0 %v7308, 96
      %v8075 = vpop.permute.xlu0 %8074
      %8076 = vrot.lane.b32.xlu0 %v7309, 96
      %v8077 = vpop.permute.xlu0 %8076
      %v8110 = vsel %vm307, %v7054, %v7375
      %v8111 = vsel %vm307, %v7055, %v7377
      %v8112 = vsel %vm307, %v7056, %v7379
      %v8113 = vsel %vm307, %v7057, %v7381
      %v8114 = vsel %vm307, %v7058, %v7383
      %v8115 = vsel %vm307, %v7059, %v7385
      %v8116 = vsel %vm307, %v7060, %v7387
      %v8117 = vsel %vm307, %v7061, %v7389
      %v8118 = vsel %vm307, %v7062, %v7391
      %v8119 = vsel %vm307, %v7063, %v7393
      %v8120 = vsel %vm307, %v7064, %v7395
      %v8121 = vsel %vm307, %v7065, %v7397
      %v8122 = vsel %vm307, %v7066, %v7399
      %v8123 = vsel %vm307, %v7067, %v7401
      %v8124 = vsel %vm307, %v7068, %v7403
      %v8125 = vsel %vm307, %v7069, %v7405
      %v8126 = vsel %vm307, %v7070, %v7407
      %v8127 = vsel %vm307, %v7071, %v7409
      %v8128 = vsel %vm307, %v7072, %v7411
      %v8129 = vsel %vm307, %v7073, %v7413
      %v8130 = vsel %vm307, %v7074, %v7415
      %v8131 = vsel %vm307, %v7075, %v7417
      %v8132 = vsel %vm307, %v7076, %v7419
      %v8133 = vsel %vm307, %v7077, %v7421
      %v8134 = vsel %vm307, %v7078, %v7423
      %v8135 = vsel %vm307, %v7079, %v7425
      %v8136 = vsel %vm307, %v7080, %v7427
      %v8137 = vsel %vm307, %v7081, %v7429
      %v8138 = vsel %vm307, %v7082, %v7431
      %v8139 = vsel %vm307, %v7083, %v7433
      %v8140 = vsel %vm307, %v7084, %v7435
      %v8141 = vsel %vm307, %v7085, %v7437
      %v8142 = vsel %vm1553, %v8110, %v7503
      %v8143 = vsel %vm1553, %v8111, %v7505
      %v8144 = vsel %vm1553, %v8112, %v7507
      %v8145 = vsel %vm1553, %v8113, %v7509
      %v8146 = vsel %vm1553, %v8114, %v7511
      %v8147 = vsel %vm1553, %v8115, %v7513
      %v8148 = vsel %vm1553, %v8116, %v7515
      %v8149 = vsel %vm1553, %v8117, %v7517
      %v8150 = vsel %vm1553, %v8118, %v7519
      %v8151 = vsel %vm1553, %v8119, %v7521
      %v8152 = vsel %vm1553, %v8120, %v7523
      %v8153 = vsel %vm1553, %v8121, %v7525
      %v8154 = vsel %vm1553, %v8122, %v7527
      %v8155 = vsel %vm1553, %v8123, %v7529
      %v8156 = vsel %vm1553, %v8124, %v7531
      %v8157 = vsel %vm1553, %v8125, %v7533
      %v8158 = vsel %vm1553, %v8126, %v7535
      %v8159 = vsel %vm1553, %v8127, %v7537
      %v8160 = vsel %vm1553, %v8128, %v7539
      %v8161 = vsel %vm1553, %v8129, %v7541
      %v8162 = vsel %vm1553, %v8130, %v7543
      %v8163 = vsel %vm1553, %v8131, %v7545
      %v8164 = vsel %vm1553, %v8132, %v7547
      %v8165 = vsel %vm1553, %v8133, %v7549
      %v8166 = vsel %vm1553, %v8134, %v7551
      %v8167 = vsel %vm1553, %v8135, %v7553
      %v8168 = vsel %vm1553, %v8136, %v7555
      %v8169 = vsel %vm1553, %v8137, %v7557
      %v8170 = vsel %vm1553, %v8138, %v7559
      %v8171 = vsel %vm1553, %v8139, %v7561
      %v8172 = vsel %vm1553, %v8140, %v7563
      %v8173 = vsel %vm1553, %v8141, %v7565
      %v8174 = vsel %vm1586, %v8142, %v7631
      %v8175 = vsel %vm1586, %v8143, %v7633
      %v8176 = vsel %vm1586, %v8144, %v7635
      %v8177 = vsel %vm1586, %v8145, %v7637
      %v8178 = vsel %vm1586, %v8146, %v7639
      %v8179 = vsel %vm1586, %v8147, %v7641
      %v8180 = vsel %vm1586, %v8148, %v7643
      %v8181 = vsel %vm1586, %v8149, %v7645
      %v8182 = vsel %vm1586, %v8150, %v7647
      %v8183 = vsel %vm1586, %v8151, %v7649
      %v8184 = vsel %vm1586, %v8152, %v7651
      %v8185 = vsel %vm1586, %v8153, %v7653
      %v8186 = vsel %vm1586, %v8154, %v7655
      %v8187 = vsel %vm1586, %v8155, %v7657
      %v8188 = vsel %vm1586, %v8156, %v7659
      %v8189 = vsel %vm1586, %v8157, %v7661
      %v8190 = vsel %vm1586, %v8158, %v7663
      %v8191 = vsel %vm1586, %v8159, %v7665
      %v8192 = vsel %vm1586, %v8160, %v7667
      %v8193 = vsel %vm1586, %v8161, %v7669
      %v8194 = vsel %vm1586, %v8162, %v7671
      %v8195 = vsel %vm1586, %v8163, %v7673
      %v8196 = vsel %vm1586, %v8164, %v7675
      %v8197 = vsel %vm1586, %v8165, %v7677
      %v8198 = vsel %vm1586, %v8166, %v7679
      %v8199 = vsel %vm1586, %v8167, %v7681
      %v8200 = vsel %vm1586, %v8168, %v7683
      %v8201 = vsel %vm1586, %v8169, %v7685
      %v8202 = vsel %vm1586, %v8170, %v7687
      %v8203 = vsel %vm1586, %v8171, %v7689
      %v8204 = vsel %vm1586, %v8172, %v7691
      %v8205 = vsel %vm1586, %v8173, %v7693
      %v8206 = vsel %vm307, %v7182, %v7759
      %v8207 = vsel %vm307, %v7183, %v7761
      %v8208 = vsel %vm307, %v7184, %v7763
      %v8209 = vsel %vm307, %v7185, %v7765
      %v8210 = vsel %vm307, %v7186, %v7767
      %v8211 = vsel %vm307, %v7187, %v7769
      %v8212 = vsel %vm307, %v7188, %v7771
      %v8213 = vsel %vm307, %v7189, %v7773
      %v8214 = vsel %vm307, %v7190, %v7775
      %v8215 = vsel %vm307, %v7191, %v7777
      %v8216 = vsel %vm307, %v7192, %v7779
      %v8217 = vsel %vm307, %v7193, %v7781
      %v8218 = vsel %vm307, %v7194, %v7783
      %v8219 = vsel %vm307, %v7195, %v7785
      %v8220 = vsel %vm307, %v7196, %v7787
      %v8221 = vsel %vm307, %v7197, %v7789
      %v8222 = vsel %vm307, %v7198, %v7791
      %v8223 = vsel %vm307, %v7199, %v7793
      %v8224 = vsel %vm307, %v7200, %v7795
      %v8225 = vsel %vm307, %v7201, %v7797
      %v8226 = vsel %vm307, %v7202, %v7799
      %v8227 = vsel %vm307, %v7203, %v7801
      %v8228 = vsel %vm307, %v7204, %v7803
      %v8229 = vsel %vm307, %v7205, %v7805
      %v8230 = vsel %vm307, %v7206, %v7807
      %v8231 = vsel %vm307, %v7207, %v7809
      %v8232 = vsel %vm307, %v7208, %v7811
      %v8233 = vsel %vm307, %v7209, %v7813
      %v8234 = vsel %vm307, %v7210, %v7815
      %v8235 = vsel %vm307, %v7211, %v7817
      %v8236 = vsel %vm307, %v7212, %v7819
      %v8237 = vsel %vm307, %v7213, %v7821
      %v8238 = vsel %vm1553, %v8206, %v7887
      %v8239 = vsel %vm1553, %v8207, %v7889
      %v8240 = vsel %vm1553, %v8208, %v7891
      %v8241 = vsel %vm1553, %v8209, %v7893
      %v8242 = vsel %vm1553, %v8210, %v7895
      %v8243 = vsel %vm1553, %v8211, %v7897
      %v8244 = vsel %vm1553, %v8212, %v7899
      %v8245 = vsel %vm1553, %v8213, %v7901
      %v8246 = vsel %vm1553, %v8214, %v7903
      %v8247 = vsel %vm1553, %v8215, %v7905
      %v8248 = vsel %vm1553, %v8216, %v7907
      %v8249 = vsel %vm1553, %v8217, %v7909
      %v8250 = vsel %vm1553, %v8218, %v7911
      %v8251 = vsel %vm1553, %v8219, %v7913
      %v8252 = vsel %vm1553, %v8220, %v7915
      %v8253 = vsel %vm1553, %v8221, %v7917
      %v8254 = vsel %vm1553, %v8222, %v7919
      %v8255 = vsel %vm1553, %v8223, %v7921
      %v8256 = vsel %vm1553, %v8224, %v7923
      %v8257 = vsel %vm1553, %v8225, %v7925
      %v8258 = vsel %vm1553, %v8226, %v7927
      %v8259 = vsel %vm1553, %v8227, %v7929
      %v8260 = vsel %vm1553, %v8228, %v7931
      %v8261 = vsel %vm1553, %v8229, %v7933
      %v8262 = vsel %vm1553, %v8230, %v7935
      %v8263 = vsel %vm1553, %v8231, %v7937
      %v8264 = vsel %vm1553, %v8232, %v7939
      %v8265 = vsel %vm1553, %v8233, %v7941
      %v8266 = vsel %vm1553, %v8234, %v7943
      %v8267 = vsel %vm1553, %v8235, %v7945
      %v8268 = vsel %vm1553, %v8236, %v7947
      %v8269 = vsel %vm1553, %v8237, %v7949
      %v8270 = vsel %vm1586, %v8238, %v8015
      %v8271 = vsel %vm1586, %v8239, %v8017
      %v8272 = vsel %vm1586, %v8240, %v8019
      %v8273 = vsel %vm1586, %v8241, %v8021
      %v8274 = vsel %vm1586, %v8242, %v8023
      %v8275 = vsel %vm1586, %v8243, %v8025
      %v8276 = vsel %vm1586, %v8244, %v8027
      %v8277 = vsel %vm1586, %v8245, %v8029
      %v8278 = vsel %vm1586, %v8246, %v8031
      %v8279 = vsel %vm1586, %v8247, %v8033
      %v8280 = vsel %vm1586, %v8248, %v8035
      %v8281 = vsel %vm1586, %v8249, %v8037
      %v8282 = vsel %vm1586, %v8250, %v8039
      %v8283 = vsel %vm1586, %v8251, %v8041
      %v8284 = vsel %vm1586, %v8252, %v8043
      %v8285 = vsel %vm1586, %v8253, %v8045
      %v8286 = vsel %vm1586, %v8254, %v8047
      %v8287 = vsel %vm1586, %v8255, %v8049
      %v8288 = vsel %vm1586, %v8256, %v8051
      %v8289 = vsel %vm1586, %v8257, %v8053
      %v8290 = vsel %vm1586, %v8258, %v8055
      %v8291 = vsel %vm1586, %v8259, %v8057
      %v8292 = vsel %vm1586, %v8260, %v8059
      %v8293 = vsel %vm1586, %v8261, %v8061
      %v8294 = vsel %vm1586, %v8262, %v8063
      %v8295 = vsel %vm1586, %v8263, %v8065
      %v8296 = vsel %vm1586, %v8264, %v8067
      %v8297 = vsel %vm1586, %v8265, %v8069
      %v8298 = vsel %vm1586, %v8266, %v8071
      %v8299 = vsel %vm1586, %v8267, %v8073
      %v8300 = vsel %vm1586, %v8268, %v8075
      %v8301 = vsel %vm1586, %v8269, %v8077
      %v8302 = vpack.c.bf16 %v8175, %v8174
      %v8303 = vpack.c.bf16 %v8271, %v8270
      %v8304 = vpack.c.bf16 %v7311, %v7310
      %v8305 = vpack.c.bf16 %v8177, %v8176
      %v8306 = vpack.c.bf16 %v8273, %v8272
      %v8307 = vpack.c.bf16 %v7313, %v7312
      %v8308 = vpack.c.bf16 %v8179, %v8178
      %v8309 = vpack.c.bf16 %v8275, %v8274
      %v8310 = vpack.c.bf16 %v7315, %v7314
      %v8311 = vpack.c.bf16 %v8181, %v8180
      %v8312 = vpack.c.bf16 %v8277, %v8276
      %v8313 = vpack.c.bf16 %v7317, %v7316
      %v8314 = vpack.c.bf16 %v8183, %v8182
      %v8315 = vpack.c.bf16 %v8279, %v8278
      %v8316 = vpack.c.bf16 %v7319, %v7318
      %v8317 = vpack.c.bf16 %v8185, %v8184
      %v8318 = vpack.c.bf16 %v8281, %v8280
      %v8319 = vpack.c.bf16 %v7321, %v7320
      %v8320 = vpack.c.bf16 %v8187, %v8186
      %v8321 = vpack.c.bf16 %v8283, %v8282
      %v8322 = vpack.c.bf16 %v7323, %v7322
      %v8323 = vpack.c.bf16 %v8189, %v8188
      %v8324 = vpack.c.bf16 %v8285, %v8284
      %v8325 = vpack.c.bf16 %v7325, %v7324
      %v8326 = vpack.c.bf16 %v8191, %v8190
      %v8327 = vpack.c.bf16 %v8287, %v8286
      %v8328 = vpack.c.bf16 %v7327, %v7326
      %v8329 = vpack.c.bf16 %v8193, %v8192
      %v8330 = vpack.c.bf16 %v8289, %v8288
      %v8331 = vpack.c.bf16 %v7329, %v7328
      %v8332 = vpack.c.bf16 %v8195, %v8194
      %v8333 = vpack.c.bf16 %v8291, %v8290
      %v8334 = vpack.c.bf16 %v7331, %v7330
      %v8335 = vpack.c.bf16 %v8197, %v8196
      %v8336 = vpack.c.bf16 %v8293, %v8292
      %v8337 = vpack.c.bf16 %v7333, %v7332
      %v8338 = vpack.c.bf16 %v8199, %v8198
      %v8339 = vpack.c.bf16 %v8295, %v8294
      %v8340 = vpack.c.bf16 %v7335, %v7334
      %v8341 = vpack.c.bf16 %v8201, %v8200
      %v8342 = vpack.c.bf16 %v8297, %v8296
      %v8343 = vpack.c.bf16 %v7337, %v7336
      %v8344 = vpack.c.bf16 %v8203, %v8202
      %v8345 = vpack.c.bf16 %v8299, %v8298
      %v8346 = vpack.c.bf16 %v7339, %v7338
      %v8347 = vpack.c.bf16 %v8205, %v8204
      %v8348 = vpack.c.bf16 %v8301, %v8300
      %v8349 = vpack.c.bf16 %v7341, %v7340
      %v8350 = vld [vmem:[%s6] sm:$0xf]
      %v8351 = vld [vmem:[%s6 + $0x4] sm:$0xf]
      %v8352 = vld [vmem:[%s6 + $0x8] sm:$0xf]
      %v8353 = vld [vmem:[%s6 + $0xc] sm:$0xf]
      %v8354 = vld [vmem:[%s6 + $0x10] sm:$0xf]
      %v8355 = vld [vmem:[%s6 + $0x14] sm:$0xf]
      %v8356 = vld [vmem:[%s6 + $0x18] sm:$0xf]
      %v8357 = vld [vmem:[%s6 + $0x1c] sm:$0xf]
      %v8358 = vld [vmem:[%s6 + $0x20] sm:$0xf]
      %v8359 = vld [vmem:[%s6 + $0x24] sm:$0xf]
      %v8360 = vld [vmem:[%s6 + $0x28] sm:$0xf]
      %v8361 = vld [vmem:[%s6 + $0x2c] sm:$0xf]
      %v8362 = vld [vmem:[%s6 + $0x30] sm:$0xf]
      %v8363 = vld [vmem:[%s6 + $0x34] sm:$0xf]
      %v8364 = vld [vmem:[%s6 + $0x38] sm:$0xf]
      %v8365 = vld [vmem:[%s6 + $0x3c] sm:$0xf]
      %v8366 = vld [vmem:[%s6 + $0x40] sm:$0xf]
      %v8367 = vld [vmem:[%s6 + $0x44] sm:$0xf]
      %v8368 = vld [vmem:[%s6 + $0x48] sm:$0xf]
      %v8369 = vld [vmem:[%s6 + $0x4c] sm:$0xf]
      %v8370 = vld [vmem:[%s6 + $0x50] sm:$0xf]
      %v8371 = vld [vmem:[%s6 + $0x54] sm:$0xf]
      %v8372 = vld [vmem:[%s6 + $0x58] sm:$0xf]
      %v8373 = vld [vmem:[%s6 + $0x5c] sm:$0xf]
      %v8374 = vld [vmem:[%s6 + $0x60] sm:$0xf]
      %v8375 = vld [vmem:[%s6 + $0x64] sm:$0xf]
      %v8376 = vld [vmem:[%s6 + $0x68] sm:$0xf]
      %v8377 = vld [vmem:[%s6 + $0x6c] sm:$0xf]
      %v8378 = vld [vmem:[%s6 + $0x70] sm:$0xf]
      %v8379 = vld [vmem:[%s6 + $0x74] sm:$0xf]
      %v8380 = vld [vmem:[%s6 + $0x78] sm:$0xf]
      %v8381 = vld [vmem:[%s6 + $0x7c] sm:$0xf]
      %v8382 = vld [vmem:[%s6 + $0x80] sm:$0xf]
      %v8383 = vld [vmem:[%s6 + $0x84] sm:$0xf]
      %v8384 = vld [vmem:[%s6 + $0x88] sm:$0xf]
      %v8385 = vld [vmem:[%s6 + $0x8c] sm:$0xf]
      %v8386 = vld [vmem:[%s7] sm:$0x1]
      %v8388 = vperm.slane %v8386, 0
      %v8426 = vunpack.c.l.b16 %v8350
      %v8427 = vunpack.c.l.b16 %v8351
      %v8428 = vunpack.c.l.b16 %v8352
      %v8429 = vunpack.c.l.b16 %v8353
      %v8430 = vunpack.c.l.b16 %v8354
      %v8431 = vunpack.c.l.b16 %v8355
      %v8432 = vunpack.c.l.b16 %v8356
      %v8433 = vunpack.c.l.b16 %v8357
      %v8434 = vunpack.c.l.b16 %v8358
      %v8435 = vunpack.c.l.b16 %v8359
      %v8436 = vunpack.c.l.b16 %v8360
      %v8437 = vunpack.c.l.b16 %v8361
      %v8438 = vunpack.c.l.b16 %v8362
      %v8439 = vunpack.c.l.b16 %v8363
      %v8440 = vunpack.c.l.b16 %v8364
      %v8441 = vunpack.c.l.b16 %v8365
      %v8442 = vunpack.c.l.b16 %v8366
      %v8443 = vunpack.c.l.b16 %v8367
      %v8444 = vunpack.c.l.b16 %v8368
      %v8445 = vunpack.c.l.b16 %v8369
      %v8446 = vunpack.c.l.b16 %v8370
      %v8447 = vunpack.c.l.b16 %v8371
      %v8448 = vunpack.c.l.b16 %v8372
      %v8449 = vunpack.c.l.b16 %v8373
      %v8450 = vunpack.c.l.b16 %v8374
      %v8451 = vunpack.c.l.b16 %v8375
      %v8452 = vunpack.c.l.b16 %v8376
      %v8453 = vunpack.c.l.b16 %v8377
      %v8454 = vunpack.c.l.b16 %v8378
      %v8455 = vunpack.c.l.b16 %v8379
      %v8456 = vunpack.c.l.b16 %v8380
      %v8457 = vunpack.c.l.b16 %v8381
      %v8458 = vunpack.c.l.b16 %v8382
      %v8459 = vunpack.c.l.b16 %v8383
      %v8460 = vunpack.c.l.b16 %v8384
      %v8461 = vunpack.c.l.b16 %v8385
      %v8462 = vpack.c.b16 %v8427, %v8426
      %v8463 = vpack.c.b16 %v8429, %v8428
      %v8464 = vpack.c.b16 %v8431, %v8430
      %v8465 = vpack.c.b16 %v8433, %v8432
      %v8466 = vpack.c.b16 %v8435, %v8434
      %v8467 = vpack.c.b16 %v8437, %v8436
      %v8468 = vpack.c.b16 %v8439, %v8438
      %v8469 = vpack.c.b16 %v8441, %v8440
      %v8470 = vpack.c.b16 %v8443, %v8442
      %v8471 = vpack.c.b16 %v8445, %v8444
      %v8472 = vpack.c.b16 %v8447, %v8446
      %v8473 = vpack.c.b16 %v8449, %v8448
      %v8474 = vpack.c.b16 %v8451, %v8450
      %v8475 = vpack.c.b16 %v8453, %v8452
      %v8476 = vpack.c.b16 %v8455, %v8454
      %v8477 = vpack.c.b16 %v8457, %v8456
      %v8478 = vpack.c.b16 %v8459, %v8458
      %v8479 = vpack.c.b16 %v8461, %v8460
      %v8499 = vsel %vm307, %v8304, 0
      %v8502 = vsel %vm307, %v8307, 0
      %v8505 = vsel %vm307, %v8310, 0
      %v8508 = vsel %vm307, %v8313, 0
      %v8511 = vsel %vm307, %v8316, 0
      %v8514 = vsel %vm307, %v8319, 0
      %v8517 = vsel %vm307, %v8322, 0
      %v8520 = vsel %vm307, %v8325, 0
      %v8523 = vsel %vm307, %v8328, 0
      %v8526 = vsel %vm307, %v8331, 0
      %v8529 = vsel %vm307, %v8334, 0
      %v8532 = vsel %vm307, %v8337, 0
      %v8535 = vsel %vm307, %v8340, 0
      %v8538 = vsel %vm307, %v8343, 0
      %v8541 = vsel %vm307, %v8346, 0
      %v8544 = vsel %vm307, %v8349, 0
      %8546 = vmatpush.bf16.msra.mxu0 %v8469
      %8547 = vmatpush.bf16.msra.mxu0 %v8468
      %8548 = vmatpush.bf16.msra.mxu0 %v8467
      %8549 = vmatpush.bf16.msra.mxu0 %v8466
      %8550 = vmatpush.bf16.msra.mxu0 %v8465
      %8551 = vmatpush.bf16.msra.mxu0 %v8464
      %8552 = vmatpush.bf16.msra.mxu0 %v8463
      %8553 = vmatpush.bf16.msra.mxu0 %v8462
      %8554 = vmatmul.bf16.gmra.mxu0 %v8302
      %v8555 = vpop.f32.mrf.mxu0
      %v8556 = vadd.f32 %v8388, %v8555
      %v8557 = vpop.f32.mrf.mxu0
      %v8558 = vadd.f32 %v8388, %v8557
      %8559 = vmatmul.bf16.gmra.mxu0 %v8305
      %v8560 = vpop.f32.mrf.mxu0
      %v8561 = vadd.f32 %v8388, %v8560
      %v8562 = vpop.f32.mrf.mxu0
      %v8563 = vadd.f32 %v8388, %v8562
      %8564 = vmatmul.bf16.gmra.mxu0 %v8308
      %v8565 = vpop.f32.mrf.mxu0
      %v8566 = vadd.f32 %v8388, %v8565
      %v8567 = vpop.f32.mrf.mxu0
      %v8568 = vadd.f32 %v8388, %v8567
      %8569 = vmatmul.bf16.gmra.mxu0 %v8311
      %v8570 = vpop.f32.mrf.mxu0
      %v8571 = vadd.f32 %v8388, %v8570
      %v8572 = vpop.f32.mrf.mxu0
      %v8573 = vadd.f32 %v8388, %v8572
      %8574 = vmatmul.bf16.gmra.mxu0 %v8314
      %v8575 = vpop.f32.mrf.mxu0
      %v8576 = vadd.f32 %v8388, %v8575
      %v8577 = vpop.f32.mrf.mxu0
      %v8578 = vadd.f32 %v8388, %v8577
      %8579 = vmatmul.bf16.gmra.mxu0 %v8317
      %v8580 = vpop.f32.mrf.mxu0
      %v8581 = vadd.f32 %v8388, %v8580
      %v8582 = vpop.f32.mrf.mxu0
      %v8583 = vadd.f32 %v8388, %v8582
      %8584 = vmatmul.bf16.gmra.mxu0 %v8320
      %v8585 = vpop.f32.mrf.mxu0
      %v8586 = vadd.f32 %v8388, %v8585
      %v8587 = vpop.f32.mrf.mxu0
      %v8588 = vadd.f32 %v8388, %v8587
      %8589 = vmatmul.bf16.gmra.mxu0 %v8323
      %v8590 = vpop.f32.mrf.mxu0
      %v8591 = vadd.f32 %v8388, %v8590
      %v8592 = vpop.f32.mrf.mxu0
      %v8593 = vadd.f32 %v8388, %v8592
      %8594 = vmatmul.bf16.gmra.mxu0 %v8326
      %v8595 = vpop.f32.mrf.mxu0
      %v8596 = vadd.f32 %v8388, %v8595
      %v8597 = vpop.f32.mrf.mxu0
      %v8598 = vadd.f32 %v8388, %v8597
      %8599 = vmatmul.bf16.gmra.mxu0 %v8329
      %v8600 = vpop.f32.mrf.mxu0
      %v8601 = vadd.f32 %v8388, %v8600
      %v8602 = vpop.f32.mrf.mxu0
      %v8603 = vadd.f32 %v8388, %v8602
      %8604 = vmatmul.bf16.gmra.mxu0 %v8332
      %v8605 = vpop.f32.mrf.mxu0
      %v8606 = vadd.f32 %v8388, %v8605
      %v8607 = vpop.f32.mrf.mxu0
      %v8608 = vadd.f32 %v8388, %v8607
      %8609 = vmatmul.bf16.gmra.mxu0 %v8335
      %v8610 = vpop.f32.mrf.mxu0
      %v8611 = vadd.f32 %v8388, %v8610
      %v8612 = vpop.f32.mrf.mxu0
      %v8613 = vadd.f32 %v8388, %v8612
      %8614 = vmatmul.bf16.gmra.mxu0 %v8338
      %v8615 = vpop.f32.mrf.mxu0
      %v8616 = vadd.f32 %v8388, %v8615
      %v8617 = vpop.f32.mrf.mxu0
      %v8618 = vadd.f32 %v8388, %v8617
      %8619 = vmatmul.bf16.gmra.mxu0 %v8341
      %v8620 = vpop.f32.mrf.mxu0
      %v8621 = vadd.f32 %v8388, %v8620
      %v8622 = vpop.f32.mrf.mxu0
      %v8623 = vadd.f32 %v8388, %v8622
      %8624 = vmatmul.bf16.gmra.mxu0 %v8344
      %v8625 = vpop.f32.mrf.mxu0
      %v8626 = vadd.f32 %v8388, %v8625
      %v8627 = vpop.f32.mrf.mxu0
      %v8628 = vadd.f32 %v8388, %v8627
      %8629 = vmatmul.bf16.gmra.mxu0 %v8347
      %v8630 = vpop.f32.mrf.mxu0
      %v8631 = vadd.f32 %v8388, %v8630
      %v8632 = vpop.f32.mrf.mxu0
      %v8633 = vadd.f32 %v8388, %v8632
      %8634 = vdwg.mxu0
      %8635 = vmatpush.bf16.msra.mxu0 %v8477
      %8636 = vmatpush.bf16.msra.mxu0 %v8476
      %8637 = vmatpush.bf16.msra.mxu0 %v8475
      %8638 = vmatpush.bf16.msra.mxu0 %v8474
      %8639 = vmatpush.bf16.msra.mxu0 %v8473
      %8640 = vmatpush.bf16.msra.mxu0 %v8472
      %8641 = vmatpush.bf16.msra.mxu0 %v8471
      %8642 = vmatpush.bf16.msra.mxu0 %v8470
      %8643 = vmatmul.bf16.gmra.mxu0 %v8303
      %v8644 = vpop.f32.mrf.mxu0
      %v8645 = vadd.f32 %v8556, %v8644
      %v8646 = vpop.f32.mrf.mxu0
      %v8647 = vadd.f32 %v8558, %v8646
      %8648 = vmatmul.bf16.gmra.mxu0 %v8306
      %v8649 = vpop.f32.mrf.mxu0
      %v8650 = vadd.f32 %v8561, %v8649
      %v8651 = vpop.f32.mrf.mxu0
      %v8652 = vadd.f32 %v8563, %v8651
      %8653 = vmatmul.bf16.gmra.mxu0 %v8309
      %v8654 = vpop.f32.mrf.mxu0
      %v8655 = vadd.f32 %v8566, %v8654
      %v8656 = vpop.f32.mrf.mxu0
      %v8657 = vadd.f32 %v8568, %v8656
      %8658 = vmatmul.bf16.gmra.mxu0 %v8312
      %v8659 = vpop.f32.mrf.mxu0
      %v8660 = vadd.f32 %v8571, %v8659
      %v8661 = vpop.f32.mrf.mxu0
      %v8662 = vadd.f32 %v8573, %v8661
      %8663 = vmatmul.bf16.gmra.mxu0 %v8315
      %v8664 = vpop.f32.mrf.mxu0
      %v8665 = vadd.f32 %v8576, %v8664
      %v8666 = vpop.f32.mrf.mxu0
      %v8667 = vadd.f32 %v8578, %v8666
      %8668 = vmatmul.bf16.gmra.mxu0 %v8318
      %v8669 = vpop.f32.mrf.mxu0
      %v8670 = vadd.f32 %v8581, %v8669
      %v8671 = vpop.f32.mrf.mxu0
      %v8672 = vadd.f32 %v8583, %v8671
      %8673 = vmatmul.bf16.gmra.mxu0 %v8321
      %v8674 = vpop.f32.mrf.mxu0
      %v8675 = vadd.f32 %v8586, %v8674
      %v8676 = vpop.f32.mrf.mxu0
      %v8677 = vadd.f32 %v8588, %v8676
      %8678 = vmatmul.bf16.gmra.mxu0 %v8324
      %v8679 = vpop.f32.mrf.mxu0
      %v8680 = vadd.f32 %v8591, %v8679
      %v8681 = vpop.f32.mrf.mxu0
      %v8682 = vadd.f32 %v8593, %v8681
      %8683 = vmatmul.bf16.gmra.mxu0 %v8327
      %v8684 = vpop.f32.mrf.mxu0
      %v8685 = vadd.f32 %v8596, %v8684
      %v8686 = vpop.f32.mrf.mxu0
      %v8687 = vadd.f32 %v8598, %v8686
      %8688 = vmatmul.bf16.gmra.mxu0 %v8330
      %v8689 = vpop.f32.mrf.mxu0
      %v8690 = vadd.f32 %v8601, %v8689
      %v8691 = vpop.f32.mrf.mxu0
      %v8692 = vadd.f32 %v8603, %v8691
      %8693 = vmatmul.bf16.gmra.mxu0 %v8333
      %v8694 = vpop.f32.mrf.mxu0
      %v8695 = vadd.f32 %v8606, %v8694
      %v8696 = vpop.f32.mrf.mxu0
      %v8697 = vadd.f32 %v8608, %v8696
      %8698 = vmatmul.bf16.gmra.mxu0 %v8336
      %v8699 = vpop.f32.mrf.mxu0
      %v8700 = vadd.f32 %v8611, %v8699
      %v8701 = vpop.f32.mrf.mxu0
      %v8702 = vadd.f32 %v8613, %v8701
      %8703 = vmatmul.bf16.gmra.mxu0 %v8339
      %v8704 = vpop.f32.mrf.mxu0
      %v8705 = vadd.f32 %v8616, %v8704
      %v8706 = vpop.f32.mrf.mxu0
      %v8707 = vadd.f32 %v8618, %v8706
      %8708 = vmatmul.bf16.gmra.mxu0 %v8342
      %v8709 = vpop.f32.mrf.mxu0
      %v8710 = vadd.f32 %v8621, %v8709
      %v8711 = vpop.f32.mrf.mxu0
      %v8712 = vadd.f32 %v8623, %v8711
      %8713 = vmatmul.bf16.gmra.mxu0 %v8345
      %v8714 = vpop.f32.mrf.mxu0
      %v8715 = vadd.f32 %v8626, %v8714
      %v8716 = vpop.f32.mrf.mxu0
      %v8717 = vadd.f32 %v8628, %v8716
      %8718 = vmatmul.bf16.gmra.mxu0 %v8348
      %v8719 = vpop.f32.mrf.mxu0
      %v8720 = vadd.f32 %v8631, %v8719
      %v8721 = vpop.f32.mrf.mxu0
      %v8722 = vadd.f32 %v8633, %v8721
      %8723 = vdwg.mxu0
      %8724 = vmatpush.bf16.msra.mxu0 0
      %8725 = vmatpush.bf16.msra.mxu0 0
      %8726 = vmatpush.bf16.msra.mxu0 0
      %8727 = vmatpush.bf16.msra.mxu0 0
      %8728 = vmatpush.bf16.msra.mxu0 0
      %8729 = vmatpush.bf16.msra.mxu0 0
      %8730 = vmatpush.bf16.msra.mxu0 %v8479
      %8731 = vmatpush.bf16.msra.mxu0 %v8478
      %8732 = vmatmul.bf16.gmra.mxu0 %v8499
      %v8733 = vpop.f32.mrf.mxu0
      %v8734 = vadd.f32 %v8645, %v8733
      %v8735 = vpop.f32.mrf.mxu0
      %v8736 = vadd.f32 %v8647, %v8735
      %8737 = vmatmul.bf16.gmra.mxu0 %v8502
      %v8738 = vpop.f32.mrf.mxu0
      %v8739 = vadd.f32 %v8650, %v8738
      %v8740 = vpop.f32.mrf.mxu0
      %v8741 = vadd.f32 %v8652, %v8740
      %8742 = vmatmul.bf16.gmra.mxu0 %v8505
      %v8743 = vpop.f32.mrf.mxu0
      %v8744 = vadd.f32 %v8655, %v8743
      %v8745 = vpop.f32.mrf.mxu0
      %v8746 = vadd.f32 %v8657, %v8745
      %8747 = vmatmul.bf16.gmra.mxu0 %v8508
      %v8748 = vpop.f32.mrf.mxu0
      %v8749 = vadd.f32 %v8660, %v8748
      %v8750 = vpop.f32.mrf.mxu0
      %v8751 = vadd.f32 %v8662, %v8750
      %8752 = vmatmul.bf16.gmra.mxu0 %v8511
      %v8753 = vpop.f32.mrf.mxu0
      %v8754 = vadd.f32 %v8665, %v8753
      %v8755 = vpop.f32.mrf.mxu0
      %v8756 = vadd.f32 %v8667, %v8755
      %8757 = vmatmul.bf16.gmra.mxu0 %v8514
      %v8758 = vpop.f32.mrf.mxu0
      %v8759 = vadd.f32 %v8670, %v8758
      %v8760 = vpop.f32.mrf.mxu0
      %v8761 = vadd.f32 %v8672, %v8760
      %8762 = vmatmul.bf16.gmra.mxu0 %v8517
      %v8763 = vpop.f32.mrf.mxu0
      %v8764 = vadd.f32 %v8675, %v8763
      %v8765 = vpop.f32.mrf.mxu0
      %v8766 = vadd.f32 %v8677, %v8765
      %8767 = vmatmul.bf16.gmra.mxu0 %v8520
      %v8768 = vpop.f32.mrf.mxu0
      %v8769 = vadd.f32 %v8680, %v8768
      %v8770 = vpop.f32.mrf.mxu0
      %v8771 = vadd.f32 %v8682, %v8770
      %8772 = vmatmul.bf16.gmra.mxu0 %v8523
      %v8773 = vpop.f32.mrf.mxu0
      %v8774 = vadd.f32 %v8685, %v8773
      %v8775 = vpop.f32.mrf.mxu0
      %v8776 = vadd.f32 %v8687, %v8775
      %8777 = vmatmul.bf16.gmra.mxu0 %v8526
      %v8778 = vpop.f32.mrf.mxu0
      %v8779 = vadd.f32 %v8690, %v8778
      %v8780 = vpop.f32.mrf.mxu0
      %v8781 = vadd.f32 %v8692, %v8780
      %8782 = vmatmul.bf16.gmra.mxu0 %v8529
      %v8783 = vpop.f32.mrf.mxu0
      %v8784 = vadd.f32 %v8695, %v8783
      %v8785 = vpop.f32.mrf.mxu0
      %v8786 = vadd.f32 %v8697, %v8785
      %8787 = vmatmul.bf16.gmra.mxu0 %v8532
      %v8788 = vpop.f32.mrf.mxu0
      %v8789 = vadd.f32 %v8700, %v8788
      %v8790 = vpop.f32.mrf.mxu0
      %v8791 = vadd.f32 %v8702, %v8790
      %8792 = vmatmul.bf16.gmra.mxu0 %v8535
      %v8793 = vpop.f32.mrf.mxu0
      %v8794 = vadd.f32 %v8705, %v8793
      %v8795 = vpop.f32.mrf.mxu0
      %v8796 = vadd.f32 %v8707, %v8795
      %8797 = vmatmul.bf16.gmra.mxu0 %v8538
      %v8798 = vpop.f32.mrf.mxu0
      %v8799 = vadd.f32 %v8710, %v8798
      %v8800 = vpop.f32.mrf.mxu0
      %v8801 = vadd.f32 %v8712, %v8800
      %8802 = vmatmul.bf16.gmra.mxu0 %v8541
      %v8803 = vpop.f32.mrf.mxu0
      %v8804 = vadd.f32 %v8715, %v8803
      %v8805 = vpop.f32.mrf.mxu0
      %v8806 = vadd.f32 %v8717, %v8805
      %8807 = vmatmul.bf16.gmra.mxu0 %v8544
      %v8808 = vpop.f32.mrf.mxu0
      %v8809 = vadd.f32 %v8720, %v8808
      %v8810 = vpop.f32.mrf.mxu0
      %v8811 = vadd.f32 %v8722, %v8810
      %8812 = vdwg.mxu0
      %v8813 = vlaneseq
      %v8814 = vand.u32 %v8813, 127
      %vm8815 = vcmp.lt.s32.totalorder %v8814, 4
      %v8816 = vmax.f32 %v8734, 0.0
      %v8817 = vmax.f32 %v8736, 0.0
      %v8818 = vmax.f32 %v8739, 0.0
      %v8819 = vmax.f32 %v8741, 0.0
      %v8820 = vmax.f32 %v8744, 0.0
      %v8821 = vmax.f32 %v8746, 0.0
      %v8822 = vmax.f32 %v8749, 0.0
      %v8823 = vmax.f32 %v8751, 0.0
      %v8824 = vmax.f32 %v8754, 0.0
      %v8825 = vmax.f32 %v8756, 0.0
      %v8826 = vmax.f32 %v8759, 0.0
      %v8827 = vmax.f32 %v8761, 0.0
      %v8828 = vmax.f32 %v8764, 0.0
      %v8829 = vmax.f32 %v8766, 0.0
      %v8830 = vmax.f32 %v8769, 0.0
      %v8831 = vmax.f32 %v8771, 0.0
      %v8832 = vmax.f32 %v8774, 0.0
      %v8833 = vmax.f32 %v8776, 0.0
      %v8834 = vmax.f32 %v8779, 0.0
      %v8835 = vmax.f32 %v8781, 0.0
      %v8836 = vmax.f32 %v8784, 0.0
      %v8837 = vmax.f32 %v8786, 0.0
      %v8838 = vmax.f32 %v8789, 0.0
      %v8839 = vmax.f32 %v8791, 0.0
      %v8840 = vmax.f32 %v8794, 0.0
      %v8841 = vmax.f32 %v8796, 0.0
      %v8842 = vmax.f32 %v8799, 0.0
      %v8843 = vmax.f32 %v8801, 0.0
      %v8844 = vmax.f32 %v8804, 0.0
      %v8845 = vmax.f32 %v8806, 0.0
      %v8846 = vmax.f32 %v8809, 0.0
      %v8847 = vmax.f32 %v8811, 0.0
      %v8848 = vsel %vm8815, %v8816, %v8734
      %v8849 = vsel %vm8815, %v8817, %v8736
      %v8850 = vsel %vm8815, %v8818, %v8739
      %v8851 = vsel %vm8815, %v8819, %v8741
      %v8852 = vsel %vm8815, %v8820, %v8744
      %v8853 = vsel %vm8815, %v8821, %v8746
      %v8854 = vsel %vm8815, %v8822, %v8749
      %v8855 = vsel %vm8815, %v8823, %v8751
      %v8856 = vsel %vm8815, %v8824, %v8754
      %v8857 = vsel %vm8815, %v8825, %v8756
      %v8858 = vsel %vm8815, %v8826, %v8759
      %v8859 = vsel %vm8815, %v8827, %v8761
      %v8860 = vsel %vm8815, %v8828, %v8764
      %v8861 = vsel %vm8815, %v8829, %v8766
      %v8862 = vsel %vm8815, %v8830, %v8769
      %v8863 = vsel %vm8815, %v8831, %v8771
      %v8864 = vsel %vm8815, %v8832, %v8774
      %v8865 = vsel %vm8815, %v8833, %v8776
      %v8866 = vsel %vm8815, %v8834, %v8779
      %v8867 = vsel %vm8815, %v8835, %v8781
      %v8868 = vsel %vm8815, %v8836, %v8784
      %v8869 = vsel %vm8815, %v8837, %v8786
      %v8870 = vsel %vm8815, %v8838, %v8789
      %v8871 = vsel %vm8815, %v8839, %v8791
      %v8872 = vsel %vm8815, %v8840, %v8794
      %v8873 = vsel %vm8815, %v8841, %v8796
      %v8874 = vsel %vm8815, %v8842, %v8799
      %v8875 = vsel %vm8815, %v8843, %v8801
      %v8876 = vsel %vm8815, %v8844, %v8804
      %v8877 = vsel %vm8815, %v8845, %v8806
      %v8878 = vsel %vm8815, %v8846, %v8809
      %v8879 = vsel %vm8815, %v8847, %v8811
      %vm8880 = vcmask 64512
      %8881 = vst.msk [vmem:[%s305] sm:$0xff] %vm8880, %v8848
      %8882 = vst.msk [vmem:[%s305 + $0x8] sm:$0xff] %vm8880, %v8849
      %8883 = vst.msk [vmem:[%s305 + $0x10] sm:$0xff] %vm8880, %v8850
      %8884 = vst.msk [vmem:[%s305 + $0x18] sm:$0xff] %vm8880, %v8851
      %8885 = vst.msk [vmem:[%s305 + $0x20] sm:$0xff] %vm8880, %v8852
      %8886 = vst.msk [vmem:[%s305 + $0x28] sm:$0xff] %vm8880, %v8853
      %8887 = vst.msk [vmem:[%s305 + $0x30] sm:$0xff] %vm8880, %v8854
      %8888 = vst.msk [vmem:[%s305 + $0x38] sm:$0xff] %vm8880, %v8855
      %8889 = vst.msk [vmem:[%s305 + $0x40] sm:$0xff] %vm8880, %v8856
      %8890 = vst.msk [vmem:[%s305 + $0x48] sm:$0xff] %vm8880, %v8857
      %8891 = vst.msk [vmem:[%s305 + $0x50] sm:$0xff] %vm8880, %v8858
      %8892 = vst.msk [vmem:[%s305 + $0x58] sm:$0xff] %vm8880, %v8859
      %8893 = vst.msk [vmem:[%s305 + $0x60] sm:$0xff] %vm8880, %v8860
      %8894 = vst.msk [vmem:[%s305 + $0x68] sm:$0xff] %vm8880, %v8861
      %8895 = vst.msk [vmem:[%s305 + $0x70] sm:$0xff] %vm8880, %v8862
      %8896 = vst.msk [vmem:[%s305 + $0x78] sm:$0xff] %vm8880, %v8863
      %8897 = vst.msk [vmem:[%s305 + $0x80] sm:$0xff] %vm8880, %v8864
      %8898 = vst.msk [vmem:[%s305 + $0x88] sm:$0xff] %vm8880, %v8865
      %8899 = vst.msk [vmem:[%s305 + $0x90] sm:$0xff] %vm8880, %v8866
      %8900 = vst.msk [vmem:[%s305 + $0x98] sm:$0xff] %vm8880, %v8867
      %8901 = vst.msk [vmem:[%s305 + $0xa0] sm:$0xff] %vm8880, %v8868
      %8902 = vst.msk [vmem:[%s305 + $0xa8] sm:$0xff] %vm8880, %v8869
      %8903 = vst.msk [vmem:[%s305 + $0xb0] sm:$0xff] %vm8880, %v8870
      %8904 = vst.msk [vmem:[%s305 + $0xb8] sm:$0xff] %vm8880, %v8871
      %8905 = vst.msk [vmem:[%s305 + $0xc0] sm:$0xff] %vm8880, %v8872
      %8906 = vst.msk [vmem:[%s305 + $0xc8] sm:$0xff] %vm8880, %v8873
      %8907 = vst.msk [vmem:[%s305 + $0xd0] sm:$0xff] %vm8880, %v8874
      %8908 = vst.msk [vmem:[%s305 + $0xd8] sm:$0xff] %vm8880, %v8875
      %8909 = vst.msk [vmem:[%s305 + $0xe0] sm:$0xff] %vm8880, %v8876
      %8910 = vst.msk [vmem:[%s305 + $0xe8] sm:$0xff] %vm8880, %v8877
      %8911 = vst.msk [vmem:[%s305 + $0xf0] sm:$0xff] %vm8880, %v8878
      %8912 = vst.msk [vmem:[%s305 + $0xf8] sm:$0xff] %vm8880, %v8879
      %p8913 = scmp.lt.s32.totalorder %s19, 1
      %s8914 = scalar_select %p8913, %s19, 1
      %s8915 = smul.addr %s8914, 32
      %s8916 = smul.addr %s8915, 8
      %s8917 = scalar_lea.vmem %s8, %s8916
      // Predicated region
      $region53: #{tpu_custom_call.1} parent=51 // pred_check
        %p8918 = pneg %p210
      $region54: #{tpu_custom_call.1} parent=51 // pred_check_branch
        %8920 = sbr.rel (%p8918) target = $region56
      $region55: #{tpu_custom_call.1} parent=51 // pred_region
        _
      $region56: #{tpu_custom_call.1} parent=51 // pred_fallthru
        _
    $region52: #{tpu_custom_call.1} parent=5 // pred_fallthru
      _
    %p8921 = scmp.le.s32.totalorder 2, %s14
    // Predicated region
    $region57: #{tpu_custom_call.1} parent=5 // pred_check
      %p8922 = pneg %p8921
    $region58: #{tpu_custom_call.1} parent=5 // pred_check_branch
      %8924 = sbr.rel (%p8922) target = $region60
    $region59: #{tpu_custom_call.1} parent=5 // pred_region
      %s8925 = ssub.s32 %s14, 2
      // Predicated region
      $region61: #{tpu_custom_call.1} parent=59 // pred_check
        %p8926 = pneg %p216
      $region62: #{tpu_custom_call.1} parent=59 // pred_check_branch
        %8928 = sbr.rel (%p8926) target = $region64
      $region63: #{tpu_custom_call.1} parent=59 // pred_region
        %p8929 = scmp.lt.s32.totalorder %s20, 1
        %s8930 = scalar_select %p8929, %s20, 1
        %s8931 = smul.addr %s8930, 32
        %s8932 = smul.addr %s8931, 8
        %s8933 = scalar_lea.vmem %s8, %s8932
      $region64: #{tpu_custom_call.1} parent=59 // pred_fallthru
        _
    $region60: #{tpu_custom_call.1} parent=5 // pred_fallthru
      _
  $region6: #{tpu_custom_call.1} parent=0 // loop_footer
    %s18 = sadd.s32 1, %s14
  $region7: #{tpu_custom_call.1} parent=0 // loop_footer_branch
    %13 = sbr.rel target = $region3
  $region8: #{tpu_custom_call.1} parent=0 // loop_exit
    _

</llo_original>
